<compile_context>
chip_gen: v7x
topology: tpu7x:2x2x1
jax: 0.10.0
libtpu: 0.0.40
codegen_flags: <defaults>
</compile_context>

<pallas_src>
import functools

import jax
import jax.numpy as jnp
from jax.experimental import pallas as pl
from jax.experimental.pallas import tpu as pltpu


def _conv_kernel(x_ref, w_ref, b_ref, o_ref, *,
                 Cin, Cout, KH, KW, H_out, W_out, stride):
    """Direct convolution on one (upsampled + reflection-padded) batch element.

    x_ref : (1, Cin, Hp, Wp)    padded input tile (VMEM)
    w_ref : (Cout*Cin*KH*KW,)   flattened conv weights (SMEM, scalar reads)
    b_ref : (Cout,)             bias (SMEM, scalar reads)
    o_ref : (1, Cout, H_out, W_out)   NCHW output tile
    """
    # Per-output-channel accumulators: (H_out, W_out) slabs kept in registers,
    # width on the lane axis.  Channels are a small fully-unrolled outer dim,
    # so they never occupy the 128-wide lane axis.
    acc = [jnp.zeros((H_out, W_out), jnp.float32) for _ in range(Cout)]

    for ci in range(Cin):
        xc = x_ref[0, ci].astype(jnp.float32)                 # (Hp, Wp)
        for kh in range(KH):
            for kw in range(KW):
                # Tap window; a plain slice when stride == 1 (no reshape ever).
                patch = xc[kh: kh + stride * H_out: stride,
                           kw: kw + stride * W_out: stride]   # (H_out, W_out)
                base = (ci * KH + kh) * KW + kw
                for co in range(Cout):
                    w = w_ref[co * (Cin * KH * KW) + base]    # SMEM scalar
                    acc[co] = acc[co] + w * patch             # VPU FMA

    for co in range(Cout):
        o_ref[0, co] = (acc[co] + b_ref[co]).astype(o_ref.dtype)


def _reflect_upsample_index(i, pad, length_up, up):
    """Padded-output index -> source index in the ORIGINAL (pre-upsample) image."""
    j = i - pad
    if j < 0:
        j = -j
    elif j >= length_up:
        j = 2 * length_up - 2 - j
    return j // up


def upsample_conv_layer(x_nchw, weight, bias, *, kernel_size, stride, upsample=None):
    """Forward pass equivalent to UpsampleConvLayer.forward (NCHW in / NCHW out)."""
    N, Cin, H, W = x_nchw.shape
    Cout = weight.shape[0]
    KH = KW = kernel_size
    up = int(upsample) if upsample else 1
    pad = kernel_size // 2

    Hu, Wu = H * up, W * up
    Hp, Wp = Hu + 2 * pad, Wu + 2 * pad
    H_out = (Hp - KH) // stride + 1
    W_out = (Wp - KW) // stride + 1

    # Fused nearest-upsample + ReflectionPad2d via static index maps (stays NCHW;
    # replaces the old repeat + repeat + pad + transpose chain of HBM passes).
    rmap = jnp.asarray([_reflect_upsample_index(i, pad, Hu, up) for i in range(Hp)],
                       dtype=jnp.int32)
    cmap = jnp.asarray([_reflect_upsample_index(i, pad, Wu, up) for i in range(Wp)],
                       dtype=jnp.int32)
    xp = jnp.take(x_nchw, rmap, axis=2)
    xp = jnp.take(xp, cmap, axis=3)                           # (N, Cin, Hp, Wp)

    # Weights/bias flattened for SMEM scalar access (row-major over (Cout,Cin,KH,KW)).
    w_flat = weight.astype(jnp.float32).reshape(-1)
    b_flat = bias.astype(jnp.float32).reshape(-1)

    kernel = functools.partial(_conv_kernel, Cin=Cin, Cout=Cout, KH=KH, KW=KW,
                               H_out=H_out, W_out=W_out, stride=stride)

    flops = 2 * N * Cout * Cin * KH * KW * H_out * W_out
    bytes_accessed = 4 * (xp.size + w_flat.size + b_flat.size
                          + N * Cout * H_out * W_out)

    # TODO(synk): for large images, row-tile the grid with a halo so input blocks
    # fit v7x's 64 MiB VMEM; whole-image blocks are optimal at these test shapes.
    out = pl.pallas_call(
        kernel,
        out_shape=jax.ShapeDtypeStruct((N, Cout, H_out, W_out), x_nchw.dtype),
        grid=(N,),
        in_specs=[
            pl.BlockSpec((1, Cin, Hp, Wp), lambda n: (n, 0, 0, 0)),
            pl.BlockSpec(memory_space=pltpu.MemorySpace.SMEM),   # weights (scalars)
            pl.BlockSpec(memory_space=pltpu.MemorySpace.SMEM),   # bias (scalars)
        ],
        out_specs=pl.BlockSpec((1, Cout, H_out, W_out), lambda n: (n, 0, 0, 0)),
        compiler_params=pltpu.CompilerParams(dimension_semantics=("parallel",)),
        cost_estimate=pl.CostEstimate(flops=flops, transcendentals=0,
                                      bytes_accessed=bytes_accessed),
    )(xp, w_flat, b_flat)
    return out


if __name__ == "__main__":
    # Module config: UpsampleConvLayer(in_channels=4, out_channels=8,
    #                                  kernel_size=3, stride=1, upsample=2)
    in_channels, out_channels = 4, 8
    kernel_size, stride, upsample = 3, 1, 2

    key = jax.random.PRNGKey(0)
    kx, kw, kb = jax.random.split(key, 3)

    x = jax.random.normal(kx, (2, in_channels, 16, 16), dtype=jnp.float32)
    fan_in = in_channels * kernel_size * kernel_size
    bound = 1.0 / (fan_in ** 0.5)
    weight = jax.random.uniform(kw, (out_channels, in_channels, kernel_size, kernel_size),
                                minval=-bound, maxval=bound, dtype=jnp.float32)
    bias = jax.random.uniform(kb, (out_channels,), minval=-bound, maxval=bound,
                              dtype=jnp.float32)

    out = upsample_conv_layer(x, weight, bias,
                              kernel_size=kernel_size, stride=stride, upsample=upsample)
    out = jax.block_until_ready(out)

    # Reference check: nearest upsample + reflection pad + conv via XLA.
    x_up = jnp.repeat(jnp.repeat(x, upsample, axis=2), upsample, axis=3)
    x_p = jnp.pad(x_up, ((0, 0), (0, 0), (1, 1), (1, 1)), mode="reflect")
    ref = jax.lax.conv_general_dilated(
        x_p, weight, window_strides=(stride, stride), padding="VALID",
        dimension_numbers=("NCHW", "OIHW", "NCHW")) + bias.reshape(1, -1, 1, 1)
    assert out.shape == ref.shape == (2, out_channels, 32, 32)
    assert jnp.max(jnp.abs(out - ref)) < 1e-4

    print("KERNEL_OK")
</pallas_src>

<mosaic_0001>
module attributes {stable_mosaic.version = 11 : i64} {
  func.func @_conv_kernel(%arg0: i32, %arg1: memref<1x4x34x34xf32, #tpu.memory_space<vmem>>, %arg2: memref<288xf32, #tpu.memory_space<smem>>, %arg3: memref<8xf32, #tpu.memory_space<smem>>, %arg4: memref<1x8x32x32xf32, #tpu.memory_space<vmem>>) attributes {dimension_semantics = [#tpu.dimension_semantics<parallel>], iteration_bounds = array<i64: 2>, scalar_prefetch = 0 : i64, scratch_operands = 0 : i64, tpu.core_type = #tpu.core_type<tc>, window_params = [{transform_indices = @transform_0, window_bounds = array<i64: 1, 4, 34, 34>}, {transform_indices = @transform_1, window_bounds = array<i64: 288>}, {transform_indices = @transform_2, window_bounds = array<i64: 8>}, {transform_indices = @transform_3, window_bounds = array<i64: 1, 8, 32, 32>}]} {
    %cst = arith.constant 0.000000e+00 : f32
    %0 = vector.broadcast %cst : f32 to vector<32x32xf32>
    %cst_0 = arith.constant 0.000000e+00 : f32
    %1 = vector.broadcast %cst_0 : f32 to vector<32x32xf32>
    %cst_1 = arith.constant 0.000000e+00 : f32
    %2 = vector.broadcast %cst_1 : f32 to vector<32x32xf32>
    %cst_2 = arith.constant 0.000000e+00 : f32
    %3 = vector.broadcast %cst_2 : f32 to vector<32x32xf32>
    %cst_3 = arith.constant 0.000000e+00 : f32
    %4 = vector.broadcast %cst_3 : f32 to vector<32x32xf32>
    %cst_4 = arith.constant 0.000000e+00 : f32
    %5 = vector.broadcast %cst_4 : f32 to vector<32x32xf32>
    %cst_5 = arith.constant 0.000000e+00 : f32
    %6 = vector.broadcast %cst_5 : f32 to vector<32x32xf32>
    %cst_6 = arith.constant 0.000000e+00 : f32
    %7 = vector.broadcast %cst_6 : f32 to vector<32x32xf32>
    %c0 = arith.constant 0 : index
    %c0_7 = arith.constant 0 : index
    %c0_8 = arith.constant 0 : index
    %c0_9 = arith.constant 0 : index
    %8 = vector.load %arg1[%c0, %c0_7, %c0_8, %c0_9] : memref<1x4x34x34xf32, #tpu.memory_space<vmem>>, vector<1x1x34x34xf32>
    %9 = vector.shape_cast %8 : vector<1x1x34x34xf32> to vector<34x34xf32>
    %10 = vector.extract_strided_slice %9 {offsets = [0, 0], sizes = [32, 32], strides = [1, 1]} : vector<34x34xf32> to vector<32x32xf32>
    %c0_10 = arith.constant 0 : index
    %11 = memref.load %arg2[%c0_10] : memref<288xf32, #tpu.memory_space<smem>>
    %12 = vector.broadcast %11 : f32 to vector<32x32xf32>
    %13 = arith.mulf %12, %10 : vector<32x32xf32>
    %14 = arith.addf %0, %13 : vector<32x32xf32>
    %c36 = arith.constant 36 : index
    %15 = memref.load %arg2[%c36] : memref<288xf32, #tpu.memory_space<smem>>
    %16 = vector.broadcast %15 : f32 to vector<32x32xf32>
    %17 = arith.mulf %16, %10 : vector<32x32xf32>
    %18 = arith.addf %1, %17 : vector<32x32xf32>
    %c72 = arith.constant 72 : index
    %19 = memref.load %arg2[%c72] : memref<288xf32, #tpu.memory_space<smem>>
    %20 = vector.broadcast %19 : f32 to vector<32x32xf32>
    %21 = arith.mulf %20, %10 : vector<32x32xf32>
    %22 = arith.addf %2, %21 : vector<32x32xf32>
    %c108 = arith.constant 108 : index
    %23 = memref.load %arg2[%c108] : memref<288xf32, #tpu.memory_space<smem>>
    %24 = vector.broadcast %23 : f32 to vector<32x32xf32>
    %25 = arith.mulf %24, %10 : vector<32x32xf32>
    %26 = arith.addf %3, %25 : vector<32x32xf32>
    %c144 = arith.constant 144 : index
    %27 = memref.load %arg2[%c144] : memref<288xf32, #tpu.memory_space<smem>>
    %28 = vector.broadcast %27 : f32 to vector<32x32xf32>
    %29 = arith.mulf %28, %10 : vector<32x32xf32>
    %30 = arith.addf %4, %29 : vector<32x32xf32>
    %c180 = arith.constant 180 : index
    %31 = memref.load %arg2[%c180] : memref<288xf32, #tpu.memory_space<smem>>
    %32 = vector.broadcast %31 : f32 to vector<32x32xf32>
    %33 = arith.mulf %32, %10 : vector<32x32xf32>
    %34 = arith.addf %5, %33 : vector<32x32xf32>
    %c216 = arith.constant 216 : index
    %35 = memref.load %arg2[%c216] : memref<288xf32, #tpu.memory_space<smem>>
    %36 = vector.broadcast %35 : f32 to vector<32x32xf32>
    %37 = arith.mulf %36, %10 : vector<32x32xf32>
    %38 = arith.addf %6, %37 : vector<32x32xf32>
    %c252 = arith.constant 252 : index
    %39 = memref.load %arg2[%c252] : memref<288xf32, #tpu.memory_space<smem>>
    %40 = vector.broadcast %39 : f32 to vector<32x32xf32>
    %41 = arith.mulf %40, %10 : vector<32x32xf32>
    %42 = arith.addf %7, %41 : vector<32x32xf32>
    %43 = vector.extract_strided_slice %9 {offsets = [0, 1], sizes = [32, 32], strides = [1, 1]} : vector<34x34xf32> to vector<32x32xf32>
    %c1 = arith.constant 1 : index
    %44 = memref.load %arg2[%c1] : memref<288xf32, #tpu.memory_space<smem>>
    %45 = vector.broadcast %44 : f32 to vector<32x32xf32>
    %46 = arith.mulf %45, %43 : vector<32x32xf32>
    %47 = arith.addf %14, %46 : vector<32x32xf32>
    %c37 = arith.constant 37 : index
    %48 = memref.load %arg2[%c37] : memref<288xf32, #tpu.memory_space<smem>>
    %49 = vector.broadcast %48 : f32 to vector<32x32xf32>
    %50 = arith.mulf %49, %43 : vector<32x32xf32>
    %51 = arith.addf %18, %50 : vector<32x32xf32>
    %c73 = arith.constant 73 : index
    %52 = memref.load %arg2[%c73] : memref<288xf32, #tpu.memory_space<smem>>
    %53 = vector.broadcast %52 : f32 to vector<32x32xf32>
    %54 = arith.mulf %53, %43 : vector<32x32xf32>
    %55 = arith.addf %22, %54 : vector<32x32xf32>
    %c109 = arith.constant 109 : index
    %56 = memref.load %arg2[%c109] : memref<288xf32, #tpu.memory_space<smem>>
    %57 = vector.broadcast %56 : f32 to vector<32x32xf32>
    %58 = arith.mulf %57, %43 : vector<32x32xf32>
    %59 = arith.addf %26, %58 : vector<32x32xf32>
    %c145 = arith.constant 145 : index
    %60 = memref.load %arg2[%c145] : memref<288xf32, #tpu.memory_space<smem>>
    %61 = vector.broadcast %60 : f32 to vector<32x32xf32>
    %62 = arith.mulf %61, %43 : vector<32x32xf32>
    %63 = arith.addf %30, %62 : vector<32x32xf32>
    %c181 = arith.constant 181 : index
    %64 = memref.load %arg2[%c181] : memref<288xf32, #tpu.memory_space<smem>>
    %65 = vector.broadcast %64 : f32 to vector<32x32xf32>
    %66 = arith.mulf %65, %43 : vector<32x32xf32>
    %67 = arith.addf %34, %66 : vector<32x32xf32>
    %c217 = arith.constant 217 : index
    %68 = memref.load %arg2[%c217] : memref<288xf32, #tpu.memory_space<smem>>
    %69 = vector.broadcast %68 : f32 to vector<32x32xf32>
    %70 = arith.mulf %69, %43 : vector<32x32xf32>
    %71 = arith.addf %38, %70 : vector<32x32xf32>
    %c253 = arith.constant 253 : index
    %72 = memref.load %arg2[%c253] : memref<288xf32, #tpu.memory_space<smem>>
    %73 = vector.broadcast %72 : f32 to vector<32x32xf32>
    %74 = arith.mulf %73, %43 : vector<32x32xf32>
    %75 = arith.addf %42, %74 : vector<32x32xf32>
    %76 = vector.extract_strided_slice %9 {offsets = [0, 2], sizes = [32, 32], strides = [1, 1]} : vector<34x34xf32> to vector<32x32xf32>
    %c2 = arith.constant 2 : index
    %77 = memref.load %arg2[%c2] : memref<288xf32, #tpu.memory_space<smem>>
    %78 = vector.broadcast %77 : f32 to vector<32x32xf32>
    %79 = arith.mulf %78, %76 : vector<32x32xf32>
    %80 = arith.addf %47, %79 : vector<32x32xf32>
    %c38 = arith.constant 38 : index
    %81 = memref.load %arg2[%c38] : memref<288xf32, #tpu.memory_space<smem>>
    %82 = vector.broadcast %81 : f32 to vector<32x32xf32>
    %83 = arith.mulf %82, %76 : vector<32x32xf32>
    %84 = arith.addf %51, %83 : vector<32x32xf32>
    %c74 = arith.constant 74 : index
    %85 = memref.load %arg2[%c74] : memref<288xf32, #tpu.memory_space<smem>>
    %86 = vector.broadcast %85 : f32 to vector<32x32xf32>
    %87 = arith.mulf %86, %76 : vector<32x32xf32>
    %88 = arith.addf %55, %87 : vector<32x32xf32>
    %c110 = arith.constant 110 : index
    %89 = memref.load %arg2[%c110] : memref<288xf32, #tpu.memory_space<smem>>
    %90 = vector.broadcast %89 : f32 to vector<32x32xf32>
    %91 = arith.mulf %90, %76 : vector<32x32xf32>
    %92 = arith.addf %59, %91 : vector<32x32xf32>
    %c146 = arith.constant 146 : index
    %93 = memref.load %arg2[%c146] : memref<288xf32, #tpu.memory_space<smem>>
    %94 = vector.broadcast %93 : f32 to vector<32x32xf32>
    %95 = arith.mulf %94, %76 : vector<32x32xf32>
    %96 = arith.addf %63, %95 : vector<32x32xf32>
    %c182 = arith.constant 182 : index
    %97 = memref.load %arg2[%c182] : memref<288xf32, #tpu.memory_space<smem>>
    %98 = vector.broadcast %97 : f32 to vector<32x32xf32>
    %99 = arith.mulf %98, %76 : vector<32x32xf32>
    %100 = arith.addf %67, %99 : vector<32x32xf32>
    %c218 = arith.constant 218 : index
    %101 = memref.load %arg2[%c218] : memref<288xf32, #tpu.memory_space<smem>>
    %102 = vector.broadcast %101 : f32 to vector<32x32xf32>
    %103 = arith.mulf %102, %76 : vector<32x32xf32>
    %104 = arith.addf %71, %103 : vector<32x32xf32>
    %c254 = arith.constant 254 : index
    %105 = memref.load %arg2[%c254] : memref<288xf32, #tpu.memory_space<smem>>
    %106 = vector.broadcast %105 : f32 to vector<32x32xf32>
    %107 = arith.mulf %106, %76 : vector<32x32xf32>
    %108 = arith.addf %75, %107 : vector<32x32xf32>
    %109 = vector.extract_strided_slice %9 {offsets = [1, 0], sizes = [32, 32], strides = [1, 1]} : vector<34x34xf32> to vector<32x32xf32>
    %c3 = arith.constant 3 : index
    %110 = memref.load %arg2[%c3] : memref<288xf32, #tpu.memory_space<smem>>
    %111 = vector.broadcast %110 : f32 to vector<32x32xf32>
    %112 = arith.mulf %111, %109 : vector<32x32xf32>
    %113 = arith.addf %80, %112 : vector<32x32xf32>
    %c39 = arith.constant 39 : index
    %114 = memref.load %arg2[%c39] : memref<288xf32, #tpu.memory_space<smem>>
    %115 = vector.broadcast %114 : f32 to vector<32x32xf32>
    %116 = arith.mulf %115, %109 : vector<32x32xf32>
    %117 = arith.addf %84, %116 : vector<32x32xf32>
    %c75 = arith.constant 75 : index
    %118 = memref.load %arg2[%c75] : memref<288xf32, #tpu.memory_space<smem>>
    %119 = vector.broadcast %118 : f32 to vector<32x32xf32>
    %120 = arith.mulf %119, %109 : vector<32x32xf32>
    %121 = arith.addf %88, %120 : vector<32x32xf32>
    %c111 = arith.constant 111 : index
    %122 = memref.load %arg2[%c111] : memref<288xf32, #tpu.memory_space<smem>>
    %123 = vector.broadcast %122 : f32 to vector<32x32xf32>
    %124 = arith.mulf %123, %109 : vector<32x32xf32>
    %125 = arith.addf %92, %124 : vector<32x32xf32>
    %c147 = arith.constant 147 : index
    %126 = memref.load %arg2[%c147] : memref<288xf32, #tpu.memory_space<smem>>
    %127 = vector.broadcast %126 : f32 to vector<32x32xf32>
    %128 = arith.mulf %127, %109 : vector<32x32xf32>
    %129 = arith.addf %96, %128 : vector<32x32xf32>
    %c183 = arith.constant 183 : index
    %130 = memref.load %arg2[%c183] : memref<288xf32, #tpu.memory_space<smem>>
    %131 = vector.broadcast %130 : f32 to vector<32x32xf32>
    %132 = arith.mulf %131, %109 : vector<32x32xf32>
    %133 = arith.addf %100, %132 : vector<32x32xf32>
    %c219 = arith.constant 219 : index
    %134 = memref.load %arg2[%c219] : memref<288xf32, #tpu.memory_space<smem>>
    %135 = vector.broadcast %134 : f32 to vector<32x32xf32>
    %136 = arith.mulf %135, %109 : vector<32x32xf32>
    %137 = arith.addf %104, %136 : vector<32x32xf32>
    %c255 = arith.constant 255 : index
    %138 = memref.load %arg2[%c255] : memref<288xf32, #tpu.memory_space<smem>>
    %139 = vector.broadcast %138 : f32 to vector<32x32xf32>
    %140 = arith.mulf %139, %109 : vector<32x32xf32>
    %141 = arith.addf %108, %140 : vector<32x32xf32>
    %142 = vector.extract_strided_slice %9 {offsets = [1, 1], sizes = [32, 32], strides = [1, 1]} : vector<34x34xf32> to vector<32x32xf32>
    %c4 = arith.constant 4 : index
    %143 = memref.load %arg2[%c4] : memref<288xf32, #tpu.memory_space<smem>>
    %144 = vector.broadcast %143 : f32 to vector<32x32xf32>
    %145 = arith.mulf %144, %142 : vector<32x32xf32>
    %146 = arith.addf %113, %145 : vector<32x32xf32>
    %c40 = arith.constant 40 : index
    %147 = memref.load %arg2[%c40] : memref<288xf32, #tpu.memory_space<smem>>
    %148 = vector.broadcast %147 : f32 to vector<32x32xf32>
    %149 = arith.mulf %148, %142 : vector<32x32xf32>
    %150 = arith.addf %117, %149 : vector<32x32xf32>
    %c76 = arith.constant 76 : index
    %151 = memref.load %arg2[%c76] : memref<288xf32, #tpu.memory_space<smem>>
    %152 = vector.broadcast %151 : f32 to vector<32x32xf32>
    %153 = arith.mulf %152, %142 : vector<32x32xf32>
    %154 = arith.addf %121, %153 : vector<32x32xf32>
    %c112 = arith.constant 112 : index
    %155 = memref.load %arg2[%c112] : memref<288xf32, #tpu.memory_space<smem>>
    %156 = vector.broadcast %155 : f32 to vector<32x32xf32>
    %157 = arith.mulf %156, %142 : vector<32x32xf32>
    %158 = arith.addf %125, %157 : vector<32x32xf32>
    %c148 = arith.constant 148 : index
    %159 = memref.load %arg2[%c148] : memref<288xf32, #tpu.memory_space<smem>>
    %160 = vector.broadcast %159 : f32 to vector<32x32xf32>
    %161 = arith.mulf %160, %142 : vector<32x32xf32>
    %162 = arith.addf %129, %161 : vector<32x32xf32>
    %c184 = arith.constant 184 : index
    %163 = memref.load %arg2[%c184] : memref<288xf32, #tpu.memory_space<smem>>
    %164 = vector.broadcast %163 : f32 to vector<32x32xf32>
    %165 = arith.mulf %164, %142 : vector<32x32xf32>
    %166 = arith.addf %133, %165 : vector<32x32xf32>
    %c220 = arith.constant 220 : index
    %167 = memref.load %arg2[%c220] : memref<288xf32, #tpu.memory_space<smem>>
    %168 = vector.broadcast %167 : f32 to vector<32x32xf32>
    %169 = arith.mulf %168, %142 : vector<32x32xf32>
    %170 = arith.addf %137, %169 : vector<32x32xf32>
    %c256 = arith.constant 256 : index
    %171 = memref.load %arg2[%c256] : memref<288xf32, #tpu.memory_space<smem>>
    %172 = vector.broadcast %171 : f32 to vector<32x32xf32>
    %173 = arith.mulf %172, %142 : vector<32x32xf32>
    %174 = arith.addf %141, %173 : vector<32x32xf32>
    %175 = vector.extract_strided_slice %9 {offsets = [1, 2], sizes = [32, 32], strides = [1, 1]} : vector<34x34xf32> to vector<32x32xf32>
    %c5 = arith.constant 5 : index
    %176 = memref.load %arg2[%c5] : memref<288xf32, #tpu.memory_space<smem>>
    %177 = vector.broadcast %176 : f32 to vector<32x32xf32>
    %178 = arith.mulf %177, %175 : vector<32x32xf32>
    %179 = arith.addf %146, %178 : vector<32x32xf32>
    %c41 = arith.constant 41 : index
    %180 = memref.load %arg2[%c41] : memref<288xf32, #tpu.memory_space<smem>>
    %181 = vector.broadcast %180 : f32 to vector<32x32xf32>
    %182 = arith.mulf %181, %175 : vector<32x32xf32>
    %183 = arith.addf %150, %182 : vector<32x32xf32>
    %c77 = arith.constant 77 : index
    %184 = memref.load %arg2[%c77] : memref<288xf32, #tpu.memory_space<smem>>
    %185 = vector.broadcast %184 : f32 to vector<32x32xf32>
    %186 = arith.mulf %185, %175 : vector<32x32xf32>
    %187 = arith.addf %154, %186 : vector<32x32xf32>
    %c113 = arith.constant 113 : index
    %188 = memref.load %arg2[%c113] : memref<288xf32, #tpu.memory_space<smem>>
    %189 = vector.broadcast %188 : f32 to vector<32x32xf32>
    %190 = arith.mulf %189, %175 : vector<32x32xf32>
    %191 = arith.addf %158, %190 : vector<32x32xf32>
    %c149 = arith.constant 149 : index
    %192 = memref.load %arg2[%c149] : memref<288xf32, #tpu.memory_space<smem>>
    %193 = vector.broadcast %192 : f32 to vector<32x32xf32>
    %194 = arith.mulf %193, %175 : vector<32x32xf32>
    %195 = arith.addf %162, %194 : vector<32x32xf32>
    %c185 = arith.constant 185 : index
    %196 = memref.load %arg2[%c185] : memref<288xf32, #tpu.memory_space<smem>>
    %197 = vector.broadcast %196 : f32 to vector<32x32xf32>
    %198 = arith.mulf %197, %175 : vector<32x32xf32>
    %199 = arith.addf %166, %198 : vector<32x32xf32>
    %c221 = arith.constant 221 : index
    %200 = memref.load %arg2[%c221] : memref<288xf32, #tpu.memory_space<smem>>
    %201 = vector.broadcast %200 : f32 to vector<32x32xf32>
    %202 = arith.mulf %201, %175 : vector<32x32xf32>
    %203 = arith.addf %170, %202 : vector<32x32xf32>
    %c257 = arith.constant 257 : index
    %204 = memref.load %arg2[%c257] : memref<288xf32, #tpu.memory_space<smem>>
    %205 = vector.broadcast %204 : f32 to vector<32x32xf32>
    %206 = arith.mulf %205, %175 : vector<32x32xf32>
    %207 = arith.addf %174, %206 : vector<32x32xf32>
    %208 = vector.extract_strided_slice %9 {offsets = [2, 0], sizes = [32, 32], strides = [1, 1]} : vector<34x34xf32> to vector<32x32xf32>
    %c6 = arith.constant 6 : index
    %209 = memref.load %arg2[%c6] : memref<288xf32, #tpu.memory_space<smem>>
    %210 = vector.broadcast %209 : f32 to vector<32x32xf32>
    %211 = arith.mulf %210, %208 : vector<32x32xf32>
    %212 = arith.addf %179, %211 : vector<32x32xf32>
    %c42 = arith.constant 42 : index
    %213 = memref.load %arg2[%c42] : memref<288xf32, #tpu.memory_space<smem>>
    %214 = vector.broadcast %213 : f32 to vector<32x32xf32>
    %215 = arith.mulf %214, %208 : vector<32x32xf32>
    %216 = arith.addf %183, %215 : vector<32x32xf32>
    %c78 = arith.constant 78 : index
    %217 = memref.load %arg2[%c78] : memref<288xf32, #tpu.memory_space<smem>>
    %218 = vector.broadcast %217 : f32 to vector<32x32xf32>
    %219 = arith.mulf %218, %208 : vector<32x32xf32>
    %220 = arith.addf %187, %219 : vector<32x32xf32>
    %c114 = arith.constant 114 : index
    %221 = memref.load %arg2[%c114] : memref<288xf32, #tpu.memory_space<smem>>
    %222 = vector.broadcast %221 : f32 to vector<32x32xf32>
    %223 = arith.mulf %222, %208 : vector<32x32xf32>
    %224 = arith.addf %191, %223 : vector<32x32xf32>
    %c150 = arith.constant 150 : index
    %225 = memref.load %arg2[%c150] : memref<288xf32, #tpu.memory_space<smem>>
    %226 = vector.broadcast %225 : f32 to vector<32x32xf32>
    %227 = arith.mulf %226, %208 : vector<32x32xf32>
    %228 = arith.addf %195, %227 : vector<32x32xf32>
    %c186 = arith.constant 186 : index
    %229 = memref.load %arg2[%c186] : memref<288xf32, #tpu.memory_space<smem>>
    %230 = vector.broadcast %229 : f32 to vector<32x32xf32>
    %231 = arith.mulf %230, %208 : vector<32x32xf32>
    %232 = arith.addf %199, %231 : vector<32x32xf32>
    %c222 = arith.constant 222 : index
    %233 = memref.load %arg2[%c222] : memref<288xf32, #tpu.memory_space<smem>>
    %234 = vector.broadcast %233 : f32 to vector<32x32xf32>
    %235 = arith.mulf %234, %208 : vector<32x32xf32>
    %236 = arith.addf %203, %235 : vector<32x32xf32>
    %c258 = arith.constant 258 : index
    %237 = memref.load %arg2[%c258] : memref<288xf32, #tpu.memory_space<smem>>
    %238 = vector.broadcast %237 : f32 to vector<32x32xf32>
    %239 = arith.mulf %238, %208 : vector<32x32xf32>
    %240 = arith.addf %207, %239 : vector<32x32xf32>
    %241 = vector.extract_strided_slice %9 {offsets = [2, 1], sizes = [32, 32], strides = [1, 1]} : vector<34x34xf32> to vector<32x32xf32>
    %c7 = arith.constant 7 : index
    %242 = memref.load %arg2[%c7] : memref<288xf32, #tpu.memory_space<smem>>
    %243 = vector.broadcast %242 : f32 to vector<32x32xf32>
    %244 = arith.mulf %243, %241 : vector<32x32xf32>
    %245 = arith.addf %212, %244 : vector<32x32xf32>
    %c43 = arith.constant 43 : index
    %246 = memref.load %arg2[%c43] : memref<288xf32, #tpu.memory_space<smem>>
    %247 = vector.broadcast %246 : f32 to vector<32x32xf32>
    %248 = arith.mulf %247, %241 : vector<32x32xf32>
    %249 = arith.addf %216, %248 : vector<32x32xf32>
    %c79 = arith.constant 79 : index
    %250 = memref.load %arg2[%c79] : memref<288xf32, #tpu.memory_space<smem>>
    %251 = vector.broadcast %250 : f32 to vector<32x32xf32>
    %252 = arith.mulf %251, %241 : vector<32x32xf32>
    %253 = arith.addf %220, %252 : vector<32x32xf32>
    %c115 = arith.constant 115 : index
    %254 = memref.load %arg2[%c115] : memref<288xf32, #tpu.memory_space<smem>>
    %255 = vector.broadcast %254 : f32 to vector<32x32xf32>
    %256 = arith.mulf %255, %241 : vector<32x32xf32>
    %257 = arith.addf %224, %256 : vector<32x32xf32>
    %c151 = arith.constant 151 : index
    %258 = memref.load %arg2[%c151] : memref<288xf32, #tpu.memory_space<smem>>
    %259 = vector.broadcast %258 : f32 to vector<32x32xf32>
    %260 = arith.mulf %259, %241 : vector<32x32xf32>
    %261 = arith.addf %228, %260 : vector<32x32xf32>
    %c187 = arith.constant 187 : index
    %262 = memref.load %arg2[%c187] : memref<288xf32, #tpu.memory_space<smem>>
    %263 = vector.broadcast %262 : f32 to vector<32x32xf32>
    %264 = arith.mulf %263, %241 : vector<32x32xf32>
    %265 = arith.addf %232, %264 : vector<32x32xf32>
    %c223 = arith.constant 223 : index
    %266 = memref.load %arg2[%c223] : memref<288xf32, #tpu.memory_space<smem>>
    %267 = vector.broadcast %266 : f32 to vector<32x32xf32>
    %268 = arith.mulf %267, %241 : vector<32x32xf32>
    %269 = arith.addf %236, %268 : vector<32x32xf32>
    %c259 = arith.constant 259 : index
    %270 = memref.load %arg2[%c259] : memref<288xf32, #tpu.memory_space<smem>>
    %271 = vector.broadcast %270 : f32 to vector<32x32xf32>
    %272 = arith.mulf %271, %241 : vector<32x32xf32>
    %273 = arith.addf %240, %272 : vector<32x32xf32>
    %274 = vector.extract_strided_slice %9 {offsets = [2, 2], sizes = [32, 32], strides = [1, 1]} : vector<34x34xf32> to vector<32x32xf32>
    %c8 = arith.constant 8 : index
    %275 = memref.load %arg2[%c8] : memref<288xf32, #tpu.memory_space<smem>>
    %276 = vector.broadcast %275 : f32 to vector<32x32xf32>
    %277 = arith.mulf %276, %274 : vector<32x32xf32>
    %278 = arith.addf %245, %277 : vector<32x32xf32>
    %c44 = arith.constant 44 : index
    %279 = memref.load %arg2[%c44] : memref<288xf32, #tpu.memory_space<smem>>
    %280 = vector.broadcast %279 : f32 to vector<32x32xf32>
    %281 = arith.mulf %280, %274 : vector<32x32xf32>
    %282 = arith.addf %249, %281 : vector<32x32xf32>
    %c80 = arith.constant 80 : index
    %283 = memref.load %arg2[%c80] : memref<288xf32, #tpu.memory_space<smem>>
    %284 = vector.broadcast %283 : f32 to vector<32x32xf32>
    %285 = arith.mulf %284, %274 : vector<32x32xf32>
    %286 = arith.addf %253, %285 : vector<32x32xf32>
    %c116 = arith.constant 116 : index
    %287 = memref.load %arg2[%c116] : memref<288xf32, #tpu.memory_space<smem>>
    %288 = vector.broadcast %287 : f32 to vector<32x32xf32>
    %289 = arith.mulf %288, %274 : vector<32x32xf32>
    %290 = arith.addf %257, %289 : vector<32x32xf32>
    %c152 = arith.constant 152 : index
    %291 = memref.load %arg2[%c152] : memref<288xf32, #tpu.memory_space<smem>>
    %292 = vector.broadcast %291 : f32 to vector<32x32xf32>
    %293 = arith.mulf %292, %274 : vector<32x32xf32>
    %294 = arith.addf %261, %293 : vector<32x32xf32>
    %c188 = arith.constant 188 : index
    %295 = memref.load %arg2[%c188] : memref<288xf32, #tpu.memory_space<smem>>
    %296 = vector.broadcast %295 : f32 to vector<32x32xf32>
    %297 = arith.mulf %296, %274 : vector<32x32xf32>
    %298 = arith.addf %265, %297 : vector<32x32xf32>
    %c224 = arith.constant 224 : index
    %299 = memref.load %arg2[%c224] : memref<288xf32, #tpu.memory_space<smem>>
    %300 = vector.broadcast %299 : f32 to vector<32x32xf32>
    %301 = arith.mulf %300, %274 : vector<32x32xf32>
    %302 = arith.addf %269, %301 : vector<32x32xf32>
    %c260 = arith.constant 260 : index
    %303 = memref.load %arg2[%c260] : memref<288xf32, #tpu.memory_space<smem>>
    %304 = vector.broadcast %303 : f32 to vector<32x32xf32>
    %305 = arith.mulf %304, %274 : vector<32x32xf32>
    %306 = arith.addf %273, %305 : vector<32x32xf32>
    %c0_11 = arith.constant 0 : index
    %c1_12 = arith.constant 1 : index
    %c0_13 = arith.constant 0 : index
    %c0_14 = arith.constant 0 : index
    %307 = vector.load %arg1[%c0_11, %c1_12, %c0_13, %c0_14] : memref<1x4x34x34xf32, #tpu.memory_space<vmem>>, vector<1x1x34x34xf32>
    %308 = vector.shape_cast %307 : vector<1x1x34x34xf32> to vector<34x34xf32>
    %309 = vector.extract_strided_slice %308 {offsets = [0, 0], sizes = [32, 32], strides = [1, 1]} : vector<34x34xf32> to vector<32x32xf32>
    %c9 = arith.constant 9 : index
    %310 = memref.load %arg2[%c9] : memref<288xf32, #tpu.memory_space<smem>>
    %311 = vector.broadcast %310 : f32 to vector<32x32xf32>
    %312 = arith.mulf %311, %309 : vector<32x32xf32>
    %313 = arith.addf %278, %312 : vector<32x32xf32>
    %c45 = arith.constant 45 : index
    %314 = memref.load %arg2[%c45] : memref<288xf32, #tpu.memory_space<smem>>
    %315 = vector.broadcast %314 : f32 to vector<32x32xf32>
    %316 = arith.mulf %315, %309 : vector<32x32xf32>
    %317 = arith.addf %282, %316 : vector<32x32xf32>
    %c81 = arith.constant 81 : index
    %318 = memref.load %arg2[%c81] : memref<288xf32, #tpu.memory_space<smem>>
    %319 = vector.broadcast %318 : f32 to vector<32x32xf32>
    %320 = arith.mulf %319, %309 : vector<32x32xf32>
    %321 = arith.addf %286, %320 : vector<32x32xf32>
    %c117 = arith.constant 117 : index
    %322 = memref.load %arg2[%c117] : memref<288xf32, #tpu.memory_space<smem>>
    %323 = vector.broadcast %322 : f32 to vector<32x32xf32>
    %324 = arith.mulf %323, %309 : vector<32x32xf32>
    %325 = arith.addf %290, %324 : vector<32x32xf32>
    %c153 = arith.constant 153 : index
    %326 = memref.load %arg2[%c153] : memref<288xf32, #tpu.memory_space<smem>>
    %327 = vector.broadcast %326 : f32 to vector<32x32xf32>
    %328 = arith.mulf %327, %309 : vector<32x32xf32>
    %329 = arith.addf %294, %328 : vector<32x32xf32>
    %c189 = arith.constant 189 : index
    %330 = memref.load %arg2[%c189] : memref<288xf32, #tpu.memory_space<smem>>
    %331 = vector.broadcast %330 : f32 to vector<32x32xf32>
    %332 = arith.mulf %331, %309 : vector<32x32xf32>
    %333 = arith.addf %298, %332 : vector<32x32xf32>
    %c225 = arith.constant 225 : index
    %334 = memref.load %arg2[%c225] : memref<288xf32, #tpu.memory_space<smem>>
    %335 = vector.broadcast %334 : f32 to vector<32x32xf32>
    %336 = arith.mulf %335, %309 : vector<32x32xf32>
    %337 = arith.addf %302, %336 : vector<32x32xf32>
    %c261 = arith.constant 261 : index
    %338 = memref.load %arg2[%c261] : memref<288xf32, #tpu.memory_space<smem>>
    %339 = vector.broadcast %338 : f32 to vector<32x32xf32>
    %340 = arith.mulf %339, %309 : vector<32x32xf32>
    %341 = arith.addf %306, %340 : vector<32x32xf32>
    %342 = vector.extract_strided_slice %308 {offsets = [0, 1], sizes = [32, 32], strides = [1, 1]} : vector<34x34xf32> to vector<32x32xf32>
    %c10 = arith.constant 10 : index
    %343 = memref.load %arg2[%c10] : memref<288xf32, #tpu.memory_space<smem>>
    %344 = vector.broadcast %343 : f32 to vector<32x32xf32>
    %345 = arith.mulf %344, %342 : vector<32x32xf32>
    %346 = arith.addf %313, %345 : vector<32x32xf32>
    %c46 = arith.constant 46 : index
    %347 = memref.load %arg2[%c46] : memref<288xf32, #tpu.memory_space<smem>>
    %348 = vector.broadcast %347 : f32 to vector<32x32xf32>
    %349 = arith.mulf %348, %342 : vector<32x32xf32>
    %350 = arith.addf %317, %349 : vector<32x32xf32>
    %c82 = arith.constant 82 : index
    %351 = memref.load %arg2[%c82] : memref<288xf32, #tpu.memory_space<smem>>
    %352 = vector.broadcast %351 : f32 to vector<32x32xf32>
    %353 = arith.mulf %352, %342 : vector<32x32xf32>
    %354 = arith.addf %321, %353 : vector<32x32xf32>
    %c118 = arith.constant 118 : index
    %355 = memref.load %arg2[%c118] : memref<288xf32, #tpu.memory_space<smem>>
    %356 = vector.broadcast %355 : f32 to vector<32x32xf32>
    %357 = arith.mulf %356, %342 : vector<32x32xf32>
    %358 = arith.addf %325, %357 : vector<32x32xf32>
    %c154 = arith.constant 154 : index
    %359 = memref.load %arg2[%c154] : memref<288xf32, #tpu.memory_space<smem>>
    %360 = vector.broadcast %359 : f32 to vector<32x32xf32>
    %361 = arith.mulf %360, %342 : vector<32x32xf32>
    %362 = arith.addf %329, %361 : vector<32x32xf32>
    %c190 = arith.constant 190 : index
    %363 = memref.load %arg2[%c190] : memref<288xf32, #tpu.memory_space<smem>>
    %364 = vector.broadcast %363 : f32 to vector<32x32xf32>
    %365 = arith.mulf %364, %342 : vector<32x32xf32>
    %366 = arith.addf %333, %365 : vector<32x32xf32>
    %c226 = arith.constant 226 : index
    %367 = memref.load %arg2[%c226] : memref<288xf32, #tpu.memory_space<smem>>
    %368 = vector.broadcast %367 : f32 to vector<32x32xf32>
    %369 = arith.mulf %368, %342 : vector<32x32xf32>
    %370 = arith.addf %337, %369 : vector<32x32xf32>
    %c262 = arith.constant 262 : index
    %371 = memref.load %arg2[%c262] : memref<288xf32, #tpu.memory_space<smem>>
    %372 = vector.broadcast %371 : f32 to vector<32x32xf32>
    %373 = arith.mulf %372, %342 : vector<32x32xf32>
    %374 = arith.addf %341, %373 : vector<32x32xf32>
    %375 = vector.extract_strided_slice %308 {offsets = [0, 2], sizes = [32, 32], strides = [1, 1]} : vector<34x34xf32> to vector<32x32xf32>
    %c11 = arith.constant 11 : index
    %376 = memref.load %arg2[%c11] : memref<288xf32, #tpu.memory_space<smem>>
    %377 = vector.broadcast %376 : f32 to vector<32x32xf32>
    %378 = arith.mulf %377, %375 : vector<32x32xf32>
    %379 = arith.addf %346, %378 : vector<32x32xf32>
    %c47 = arith.constant 47 : index
    %380 = memref.load %arg2[%c47] : memref<288xf32, #tpu.memory_space<smem>>
    %381 = vector.broadcast %380 : f32 to vector<32x32xf32>
    %382 = arith.mulf %381, %375 : vector<32x32xf32>
    %383 = arith.addf %350, %382 : vector<32x32xf32>
    %c83 = arith.constant 83 : index
    %384 = memref.load %arg2[%c83] : memref<288xf32, #tpu.memory_space<smem>>
    %385 = vector.broadcast %384 : f32 to vector<32x32xf32>
    %386 = arith.mulf %385, %375 : vector<32x32xf32>
    %387 = arith.addf %354, %386 : vector<32x32xf32>
    %c119 = arith.constant 119 : index
    %388 = memref.load %arg2[%c119] : memref<288xf32, #tpu.memory_space<smem>>
    %389 = vector.broadcast %388 : f32 to vector<32x32xf32>
    %390 = arith.mulf %389, %375 : vector<32x32xf32>
    %391 = arith.addf %358, %390 : vector<32x32xf32>
    %c155 = arith.constant 155 : index
    %392 = memref.load %arg2[%c155] : memref<288xf32, #tpu.memory_space<smem>>
    %393 = vector.broadcast %392 : f32 to vector<32x32xf32>
    %394 = arith.mulf %393, %375 : vector<32x32xf32>
    %395 = arith.addf %362, %394 : vector<32x32xf32>
    %c191 = arith.constant 191 : index
    %396 = memref.load %arg2[%c191] : memref<288xf32, #tpu.memory_space<smem>>
    %397 = vector.broadcast %396 : f32 to vector<32x32xf32>
    %398 = arith.mulf %397, %375 : vector<32x32xf32>
    %399 = arith.addf %366, %398 : vector<32x32xf32>
    %c227 = arith.constant 227 : index
    %400 = memref.load %arg2[%c227] : memref<288xf32, #tpu.memory_space<smem>>
    %401 = vector.broadcast %400 : f32 to vector<32x32xf32>
    %402 = arith.mulf %401, %375 : vector<32x32xf32>
    %403 = arith.addf %370, %402 : vector<32x32xf32>
    %c263 = arith.constant 263 : index
    %404 = memref.load %arg2[%c263] : memref<288xf32, #tpu.memory_space<smem>>
    %405 = vector.broadcast %404 : f32 to vector<32x32xf32>
    %406 = arith.mulf %405, %375 : vector<32x32xf32>
    %407 = arith.addf %374, %406 : vector<32x32xf32>
    %408 = vector.extract_strided_slice %308 {offsets = [1, 0], sizes = [32, 32], strides = [1, 1]} : vector<34x34xf32> to vector<32x32xf32>
    %c12 = arith.constant 12 : index
    %409 = memref.load %arg2[%c12] : memref<288xf32, #tpu.memory_space<smem>>
    %410 = vector.broadcast %409 : f32 to vector<32x32xf32>
    %411 = arith.mulf %410, %408 : vector<32x32xf32>
    %412 = arith.addf %379, %411 : vector<32x32xf32>
    %c48 = arith.constant 48 : index
    %413 = memref.load %arg2[%c48] : memref<288xf32, #tpu.memory_space<smem>>
    %414 = vector.broadcast %413 : f32 to vector<32x32xf32>
    %415 = arith.mulf %414, %408 : vector<32x32xf32>
    %416 = arith.addf %383, %415 : vector<32x32xf32>
    %c84 = arith.constant 84 : index
    %417 = memref.load %arg2[%c84] : memref<288xf32, #tpu.memory_space<smem>>
    %418 = vector.broadcast %417 : f32 to vector<32x32xf32>
    %419 = arith.mulf %418, %408 : vector<32x32xf32>
    %420 = arith.addf %387, %419 : vector<32x32xf32>
    %c120 = arith.constant 120 : index
    %421 = memref.load %arg2[%c120] : memref<288xf32, #tpu.memory_space<smem>>
    %422 = vector.broadcast %421 : f32 to vector<32x32xf32>
    %423 = arith.mulf %422, %408 : vector<32x32xf32>
    %424 = arith.addf %391, %423 : vector<32x32xf32>
    %c156 = arith.constant 156 : index
    %425 = memref.load %arg2[%c156] : memref<288xf32, #tpu.memory_space<smem>>
    %426 = vector.broadcast %425 : f32 to vector<32x32xf32>
    %427 = arith.mulf %426, %408 : vector<32x32xf32>
    %428 = arith.addf %395, %427 : vector<32x32xf32>
    %c192 = arith.constant 192 : index
    %429 = memref.load %arg2[%c192] : memref<288xf32, #tpu.memory_space<smem>>
    %430 = vector.broadcast %429 : f32 to vector<32x32xf32>
    %431 = arith.mulf %430, %408 : vector<32x32xf32>
    %432 = arith.addf %399, %431 : vector<32x32xf32>
    %c228 = arith.constant 228 : index
    %433 = memref.load %arg2[%c228] : memref<288xf32, #tpu.memory_space<smem>>
    %434 = vector.broadcast %433 : f32 to vector<32x32xf32>
    %435 = arith.mulf %434, %408 : vector<32x32xf32>
    %436 = arith.addf %403, %435 : vector<32x32xf32>
    %c264 = arith.constant 264 : index
    %437 = memref.load %arg2[%c264] : memref<288xf32, #tpu.memory_space<smem>>
    %438 = vector.broadcast %437 : f32 to vector<32x32xf32>
    %439 = arith.mulf %438, %408 : vector<32x32xf32>
    %440 = arith.addf %407, %439 : vector<32x32xf32>
    %441 = vector.extract_strided_slice %308 {offsets = [1, 1], sizes = [32, 32], strides = [1, 1]} : vector<34x34xf32> to vector<32x32xf32>
    %c13 = arith.constant 13 : index
    %442 = memref.load %arg2[%c13] : memref<288xf32, #tpu.memory_space<smem>>
    %443 = vector.broadcast %442 : f32 to vector<32x32xf32>
    %444 = arith.mulf %443, %441 : vector<32x32xf32>
    %445 = arith.addf %412, %444 : vector<32x32xf32>
    %c49 = arith.constant 49 : index
    %446 = memref.load %arg2[%c49] : memref<288xf32, #tpu.memory_space<smem>>
    %447 = vector.broadcast %446 : f32 to vector<32x32xf32>
    %448 = arith.mulf %447, %441 : vector<32x32xf32>
    %449 = arith.addf %416, %448 : vector<32x32xf32>
    %c85 = arith.constant 85 : index
    %450 = memref.load %arg2[%c85] : memref<288xf32, #tpu.memory_space<smem>>
    %451 = vector.broadcast %450 : f32 to vector<32x32xf32>
    %452 = arith.mulf %451, %441 : vector<32x32xf32>
    %453 = arith.addf %420, %452 : vector<32x32xf32>
    %c121 = arith.constant 121 : index
    %454 = memref.load %arg2[%c121] : memref<288xf32, #tpu.memory_space<smem>>
    %455 = vector.broadcast %454 : f32 to vector<32x32xf32>
    %456 = arith.mulf %455, %441 : vector<32x32xf32>
    %457 = arith.addf %424, %456 : vector<32x32xf32>
    %c157 = arith.constant 157 : index
    %458 = memref.load %arg2[%c157] : memref<288xf32, #tpu.memory_space<smem>>
    %459 = vector.broadcast %458 : f32 to vector<32x32xf32>
    %460 = arith.mulf %459, %441 : vector<32x32xf32>
    %461 = arith.addf %428, %460 : vector<32x32xf32>
    %c193 = arith.constant 193 : index
    %462 = memref.load %arg2[%c193] : memref<288xf32, #tpu.memory_space<smem>>
    %463 = vector.broadcast %462 : f32 to vector<32x32xf32>
    %464 = arith.mulf %463, %441 : vector<32x32xf32>
    %465 = arith.addf %432, %464 : vector<32x32xf32>
    %c229 = arith.constant 229 : index
    %466 = memref.load %arg2[%c229] : memref<288xf32, #tpu.memory_space<smem>>
    %467 = vector.broadcast %466 : f32 to vector<32x32xf32>
    %468 = arith.mulf %467, %441 : vector<32x32xf32>
    %469 = arith.addf %436, %468 : vector<32x32xf32>
    %c265 = arith.constant 265 : index
    %470 = memref.load %arg2[%c265] : memref<288xf32, #tpu.memory_space<smem>>
    %471 = vector.broadcast %470 : f32 to vector<32x32xf32>
    %472 = arith.mulf %471, %441 : vector<32x32xf32>
    %473 = arith.addf %440, %472 : vector<32x32xf32>
    %474 = vector.extract_strided_slice %308 {offsets = [1, 2], sizes = [32, 32], strides = [1, 1]} : vector<34x34xf32> to vector<32x32xf32>
    %c14 = arith.constant 14 : index
    %475 = memref.load %arg2[%c14] : memref<288xf32, #tpu.memory_space<smem>>
    %476 = vector.broadcast %475 : f32 to vector<32x32xf32>
    %477 = arith.mulf %476, %474 : vector<32x32xf32>
    %478 = arith.addf %445, %477 : vector<32x32xf32>
    %c50 = arith.constant 50 : index
    %479 = memref.load %arg2[%c50] : memref<288xf32, #tpu.memory_space<smem>>
    %480 = vector.broadcast %479 : f32 to vector<32x32xf32>
    %481 = arith.mulf %480, %474 : vector<32x32xf32>
    %482 = arith.addf %449, %481 : vector<32x32xf32>
    %c86 = arith.constant 86 : index
    %483 = memref.load %arg2[%c86] : memref<288xf32, #tpu.memory_space<smem>>
    %484 = vector.broadcast %483 : f32 to vector<32x32xf32>
    %485 = arith.mulf %484, %474 : vector<32x32xf32>
    %486 = arith.addf %453, %485 : vector<32x32xf32>
    %c122 = arith.constant 122 : index
    %487 = memref.load %arg2[%c122] : memref<288xf32, #tpu.memory_space<smem>>
    %488 = vector.broadcast %487 : f32 to vector<32x32xf32>
    %489 = arith.mulf %488, %474 : vector<32x32xf32>
    %490 = arith.addf %457, %489 : vector<32x32xf32>
    %c158 = arith.constant 158 : index
    %491 = memref.load %arg2[%c158] : memref<288xf32, #tpu.memory_space<smem>>
    %492 = vector.broadcast %491 : f32 to vector<32x32xf32>
    %493 = arith.mulf %492, %474 : vector<32x32xf32>
    %494 = arith.addf %461, %493 : vector<32x32xf32>
    %c194 = arith.constant 194 : index
    %495 = memref.load %arg2[%c194] : memref<288xf32, #tpu.memory_space<smem>>
    %496 = vector.broadcast %495 : f32 to vector<32x32xf32>
    %497 = arith.mulf %496, %474 : vector<32x32xf32>
    %498 = arith.addf %465, %497 : vector<32x32xf32>
    %c230 = arith.constant 230 : index
    %499 = memref.load %arg2[%c230] : memref<288xf32, #tpu.memory_space<smem>>
    %500 = vector.broadcast %499 : f32 to vector<32x32xf32>
    %501 = arith.mulf %500, %474 : vector<32x32xf32>
    %502 = arith.addf %469, %501 : vector<32x32xf32>
    %c266 = arith.constant 266 : index
    %503 = memref.load %arg2[%c266] : memref<288xf32, #tpu.memory_space<smem>>
    %504 = vector.broadcast %503 : f32 to vector<32x32xf32>
    %505 = arith.mulf %504, %474 : vector<32x32xf32>
    %506 = arith.addf %473, %505 : vector<32x32xf32>
    %507 = vector.extract_strided_slice %308 {offsets = [2, 0], sizes = [32, 32], strides = [1, 1]} : vector<34x34xf32> to vector<32x32xf32>
    %c15 = arith.constant 15 : index
    %508 = memref.load %arg2[%c15] : memref<288xf32, #tpu.memory_space<smem>>
    %509 = vector.broadcast %508 : f32 to vector<32x32xf32>
    %510 = arith.mulf %509, %507 : vector<32x32xf32>
    %511 = arith.addf %478, %510 : vector<32x32xf32>
    %c51 = arith.constant 51 : index
    %512 = memref.load %arg2[%c51] : memref<288xf32, #tpu.memory_space<smem>>
    %513 = vector.broadcast %512 : f32 to vector<32x32xf32>
    %514 = arith.mulf %513, %507 : vector<32x32xf32>
    %515 = arith.addf %482, %514 : vector<32x32xf32>
    %c87 = arith.constant 87 : index
    %516 = memref.load %arg2[%c87] : memref<288xf32, #tpu.memory_space<smem>>
    %517 = vector.broadcast %516 : f32 to vector<32x32xf32>
    %518 = arith.mulf %517, %507 : vector<32x32xf32>
    %519 = arith.addf %486, %518 : vector<32x32xf32>
    %c123 = arith.constant 123 : index
    %520 = memref.load %arg2[%c123] : memref<288xf32, #tpu.memory_space<smem>>
    %521 = vector.broadcast %520 : f32 to vector<32x32xf32>
    %522 = arith.mulf %521, %507 : vector<32x32xf32>
    %523 = arith.addf %490, %522 : vector<32x32xf32>
    %c159 = arith.constant 159 : index
    %524 = memref.load %arg2[%c159] : memref<288xf32, #tpu.memory_space<smem>>
    %525 = vector.broadcast %524 : f32 to vector<32x32xf32>
    %526 = arith.mulf %525, %507 : vector<32x32xf32>
    %527 = arith.addf %494, %526 : vector<32x32xf32>
    %c195 = arith.constant 195 : index
    %528 = memref.load %arg2[%c195] : memref<288xf32, #tpu.memory_space<smem>>
    %529 = vector.broadcast %528 : f32 to vector<32x32xf32>
    %530 = arith.mulf %529, %507 : vector<32x32xf32>
    %531 = arith.addf %498, %530 : vector<32x32xf32>
    %c231 = arith.constant 231 : index
    %532 = memref.load %arg2[%c231] : memref<288xf32, #tpu.memory_space<smem>>
    %533 = vector.broadcast %532 : f32 to vector<32x32xf32>
    %534 = arith.mulf %533, %507 : vector<32x32xf32>
    %535 = arith.addf %502, %534 : vector<32x32xf32>
    %c267 = arith.constant 267 : index
    %536 = memref.load %arg2[%c267] : memref<288xf32, #tpu.memory_space<smem>>
    %537 = vector.broadcast %536 : f32 to vector<32x32xf32>
    %538 = arith.mulf %537, %507 : vector<32x32xf32>
    %539 = arith.addf %506, %538 : vector<32x32xf32>
    %540 = vector.extract_strided_slice %308 {offsets = [2, 1], sizes = [32, 32], strides = [1, 1]} : vector<34x34xf32> to vector<32x32xf32>
    %c16 = arith.constant 16 : index
    %541 = memref.load %arg2[%c16] : memref<288xf32, #tpu.memory_space<smem>>
    %542 = vector.broadcast %541 : f32 to vector<32x32xf32>
    %543 = arith.mulf %542, %540 : vector<32x32xf32>
    %544 = arith.addf %511, %543 : vector<32x32xf32>
    %c52 = arith.constant 52 : index
    %545 = memref.load %arg2[%c52] : memref<288xf32, #tpu.memory_space<smem>>
    %546 = vector.broadcast %545 : f32 to vector<32x32xf32>
    %547 = arith.mulf %546, %540 : vector<32x32xf32>
    %548 = arith.addf %515, %547 : vector<32x32xf32>
    %c88 = arith.constant 88 : index
    %549 = memref.load %arg2[%c88] : memref<288xf32, #tpu.memory_space<smem>>
    %550 = vector.broadcast %549 : f32 to vector<32x32xf32>
    %551 = arith.mulf %550, %540 : vector<32x32xf32>
    %552 = arith.addf %519, %551 : vector<32x32xf32>
    %c124 = arith.constant 124 : index
    %553 = memref.load %arg2[%c124] : memref<288xf32, #tpu.memory_space<smem>>
    %554 = vector.broadcast %553 : f32 to vector<32x32xf32>
    %555 = arith.mulf %554, %540 : vector<32x32xf32>
    %556 = arith.addf %523, %555 : vector<32x32xf32>
    %c160 = arith.constant 160 : index
    %557 = memref.load %arg2[%c160] : memref<288xf32, #tpu.memory_space<smem>>
    %558 = vector.broadcast %557 : f32 to vector<32x32xf32>
    %559 = arith.mulf %558, %540 : vector<32x32xf32>
    %560 = arith.addf %527, %559 : vector<32x32xf32>
    %c196 = arith.constant 196 : index
    %561 = memref.load %arg2[%c196] : memref<288xf32, #tpu.memory_space<smem>>
    %562 = vector.broadcast %561 : f32 to vector<32x32xf32>
    %563 = arith.mulf %562, %540 : vector<32x32xf32>
    %564 = arith.addf %531, %563 : vector<32x32xf32>
    %c232 = arith.constant 232 : index
    %565 = memref.load %arg2[%c232] : memref<288xf32, #tpu.memory_space<smem>>
    %566 = vector.broadcast %565 : f32 to vector<32x32xf32>
    %567 = arith.mulf %566, %540 : vector<32x32xf32>
    %568 = arith.addf %535, %567 : vector<32x32xf32>
    %c268 = arith.constant 268 : index
    %569 = memref.load %arg2[%c268] : memref<288xf32, #tpu.memory_space<smem>>
    %570 = vector.broadcast %569 : f32 to vector<32x32xf32>
    %571 = arith.mulf %570, %540 : vector<32x32xf32>
    %572 = arith.addf %539, %571 : vector<32x32xf32>
    %573 = vector.extract_strided_slice %308 {offsets = [2, 2], sizes = [32, 32], strides = [1, 1]} : vector<34x34xf32> to vector<32x32xf32>
    %c17 = arith.constant 17 : index
    %574 = memref.load %arg2[%c17] : memref<288xf32, #tpu.memory_space<smem>>
    %575 = vector.broadcast %574 : f32 to vector<32x32xf32>
    %576 = arith.mulf %575, %573 : vector<32x32xf32>
    %577 = arith.addf %544, %576 : vector<32x32xf32>
    %c53 = arith.constant 53 : index
    %578 = memref.load %arg2[%c53] : memref<288xf32, #tpu.memory_space<smem>>
    %579 = vector.broadcast %578 : f32 to vector<32x32xf32>
    %580 = arith.mulf %579, %573 : vector<32x32xf32>
    %581 = arith.addf %548, %580 : vector<32x32xf32>
    %c89 = arith.constant 89 : index
    %582 = memref.load %arg2[%c89] : memref<288xf32, #tpu.memory_space<smem>>
    %583 = vector.broadcast %582 : f32 to vector<32x32xf32>
    %584 = arith.mulf %583, %573 : vector<32x32xf32>
    %585 = arith.addf %552, %584 : vector<32x32xf32>
    %c125 = arith.constant 125 : index
    %586 = memref.load %arg2[%c125] : memref<288xf32, #tpu.memory_space<smem>>
    %587 = vector.broadcast %586 : f32 to vector<32x32xf32>
    %588 = arith.mulf %587, %573 : vector<32x32xf32>
    %589 = arith.addf %556, %588 : vector<32x32xf32>
    %c161 = arith.constant 161 : index
    %590 = memref.load %arg2[%c161] : memref<288xf32, #tpu.memory_space<smem>>
    %591 = vector.broadcast %590 : f32 to vector<32x32xf32>
    %592 = arith.mulf %591, %573 : vector<32x32xf32>
    %593 = arith.addf %560, %592 : vector<32x32xf32>
    %c197 = arith.constant 197 : index
    %594 = memref.load %arg2[%c197] : memref<288xf32, #tpu.memory_space<smem>>
    %595 = vector.broadcast %594 : f32 to vector<32x32xf32>
    %596 = arith.mulf %595, %573 : vector<32x32xf32>
    %597 = arith.addf %564, %596 : vector<32x32xf32>
    %c233 = arith.constant 233 : index
    %598 = memref.load %arg2[%c233] : memref<288xf32, #tpu.memory_space<smem>>
    %599 = vector.broadcast %598 : f32 to vector<32x32xf32>
    %600 = arith.mulf %599, %573 : vector<32x32xf32>
    %601 = arith.addf %568, %600 : vector<32x32xf32>
    %c269 = arith.constant 269 : index
    %602 = memref.load %arg2[%c269] : memref<288xf32, #tpu.memory_space<smem>>
    %603 = vector.broadcast %602 : f32 to vector<32x32xf32>
    %604 = arith.mulf %603, %573 : vector<32x32xf32>
    %605 = arith.addf %572, %604 : vector<32x32xf32>
    %c0_15 = arith.constant 0 : index
    %c2_16 = arith.constant 2 : index
    %c0_17 = arith.constant 0 : index
    %c0_18 = arith.constant 0 : index
    %606 = vector.load %arg1[%c0_15, %c2_16, %c0_17, %c0_18] : memref<1x4x34x34xf32, #tpu.memory_space<vmem>>, vector<1x1x34x34xf32>
    %607 = vector.shape_cast %606 : vector<1x1x34x34xf32> to vector<34x34xf32>
    %608 = vector.extract_strided_slice %607 {offsets = [0, 0], sizes = [32, 32], strides = [1, 1]} : vector<34x34xf32> to vector<32x32xf32>
    %c18 = arith.constant 18 : index
    %609 = memref.load %arg2[%c18] : memref<288xf32, #tpu.memory_space<smem>>
    %610 = vector.broadcast %609 : f32 to vector<32x32xf32>
    %611 = arith.mulf %610, %608 : vector<32x32xf32>
    %612 = arith.addf %577, %611 : vector<32x32xf32>
    %c54 = arith.constant 54 : index
    %613 = memref.load %arg2[%c54] : memref<288xf32, #tpu.memory_space<smem>>
    %614 = vector.broadcast %613 : f32 to vector<32x32xf32>
    %615 = arith.mulf %614, %608 : vector<32x32xf32>
    %616 = arith.addf %581, %615 : vector<32x32xf32>
    %c90 = arith.constant 90 : index
    %617 = memref.load %arg2[%c90] : memref<288xf32, #tpu.memory_space<smem>>
    %618 = vector.broadcast %617 : f32 to vector<32x32xf32>
    %619 = arith.mulf %618, %608 : vector<32x32xf32>
    %620 = arith.addf %585, %619 : vector<32x32xf32>
    %c126 = arith.constant 126 : index
    %621 = memref.load %arg2[%c126] : memref<288xf32, #tpu.memory_space<smem>>
    %622 = vector.broadcast %621 : f32 to vector<32x32xf32>
    %623 = arith.mulf %622, %608 : vector<32x32xf32>
    %624 = arith.addf %589, %623 : vector<32x32xf32>
    %c162 = arith.constant 162 : index
    %625 = memref.load %arg2[%c162] : memref<288xf32, #tpu.memory_space<smem>>
    %626 = vector.broadcast %625 : f32 to vector<32x32xf32>
    %627 = arith.mulf %626, %608 : vector<32x32xf32>
    %628 = arith.addf %593, %627 : vector<32x32xf32>
    %c198 = arith.constant 198 : index
    %629 = memref.load %arg2[%c198] : memref<288xf32, #tpu.memory_space<smem>>
    %630 = vector.broadcast %629 : f32 to vector<32x32xf32>
    %631 = arith.mulf %630, %608 : vector<32x32xf32>
    %632 = arith.addf %597, %631 : vector<32x32xf32>
    %c234 = arith.constant 234 : index
    %633 = memref.load %arg2[%c234] : memref<288xf32, #tpu.memory_space<smem>>
    %634 = vector.broadcast %633 : f32 to vector<32x32xf32>
    %635 = arith.mulf %634, %608 : vector<32x32xf32>
    %636 = arith.addf %601, %635 : vector<32x32xf32>
    %c270 = arith.constant 270 : index
    %637 = memref.load %arg2[%c270] : memref<288xf32, #tpu.memory_space<smem>>
    %638 = vector.broadcast %637 : f32 to vector<32x32xf32>
    %639 = arith.mulf %638, %608 : vector<32x32xf32>
    %640 = arith.addf %605, %639 : vector<32x32xf32>
    %641 = vector.extract_strided_slice %607 {offsets = [0, 1], sizes = [32, 32], strides = [1, 1]} : vector<34x34xf32> to vector<32x32xf32>
    %c19 = arith.constant 19 : index
    %642 = memref.load %arg2[%c19] : memref<288xf32, #tpu.memory_space<smem>>
    %643 = vector.broadcast %642 : f32 to vector<32x32xf32>
    %644 = arith.mulf %643, %641 : vector<32x32xf32>
    %645 = arith.addf %612, %644 : vector<32x32xf32>
    %c55 = arith.constant 55 : index
    %646 = memref.load %arg2[%c55] : memref<288xf32, #tpu.memory_space<smem>>
    %647 = vector.broadcast %646 : f32 to vector<32x32xf32>
    %648 = arith.mulf %647, %641 : vector<32x32xf32>
    %649 = arith.addf %616, %648 : vector<32x32xf32>
    %c91 = arith.constant 91 : index
    %650 = memref.load %arg2[%c91] : memref<288xf32, #tpu.memory_space<smem>>
    %651 = vector.broadcast %650 : f32 to vector<32x32xf32>
    %652 = arith.mulf %651, %641 : vector<32x32xf32>
    %653 = arith.addf %620, %652 : vector<32x32xf32>
    %c127 = arith.constant 127 : index
    %654 = memref.load %arg2[%c127] : memref<288xf32, #tpu.memory_space<smem>>
    %655 = vector.broadcast %654 : f32 to vector<32x32xf32>
    %656 = arith.mulf %655, %641 : vector<32x32xf32>
    %657 = arith.addf %624, %656 : vector<32x32xf32>
    %c163 = arith.constant 163 : index
    %658 = memref.load %arg2[%c163] : memref<288xf32, #tpu.memory_space<smem>>
    %659 = vector.broadcast %658 : f32 to vector<32x32xf32>
    %660 = arith.mulf %659, %641 : vector<32x32xf32>
    %661 = arith.addf %628, %660 : vector<32x32xf32>
    %c199 = arith.constant 199 : index
    %662 = memref.load %arg2[%c199] : memref<288xf32, #tpu.memory_space<smem>>
    %663 = vector.broadcast %662 : f32 to vector<32x32xf32>
    %664 = arith.mulf %663, %641 : vector<32x32xf32>
    %665 = arith.addf %632, %664 : vector<32x32xf32>
    %c235 = arith.constant 235 : index
    %666 = memref.load %arg2[%c235] : memref<288xf32, #tpu.memory_space<smem>>
    %667 = vector.broadcast %666 : f32 to vector<32x32xf32>
    %668 = arith.mulf %667, %641 : vector<32x32xf32>
    %669 = arith.addf %636, %668 : vector<32x32xf32>
    %c271 = arith.constant 271 : index
    %670 = memref.load %arg2[%c271] : memref<288xf32, #tpu.memory_space<smem>>
    %671 = vector.broadcast %670 : f32 to vector<32x32xf32>
    %672 = arith.mulf %671, %641 : vector<32x32xf32>
    %673 = arith.addf %640, %672 : vector<32x32xf32>
    %674 = vector.extract_strided_slice %607 {offsets = [0, 2], sizes = [32, 32], strides = [1, 1]} : vector<34x34xf32> to vector<32x32xf32>
    %c20 = arith.constant 20 : index
    %675 = memref.load %arg2[%c20] : memref<288xf32, #tpu.memory_space<smem>>
    %676 = vector.broadcast %675 : f32 to vector<32x32xf32>
    %677 = arith.mulf %676, %674 : vector<32x32xf32>
    %678 = arith.addf %645, %677 : vector<32x32xf32>
    %c56 = arith.constant 56 : index
    %679 = memref.load %arg2[%c56] : memref<288xf32, #tpu.memory_space<smem>>
    %680 = vector.broadcast %679 : f32 to vector<32x32xf32>
    %681 = arith.mulf %680, %674 : vector<32x32xf32>
    %682 = arith.addf %649, %681 : vector<32x32xf32>
    %c92 = arith.constant 92 : index
    %683 = memref.load %arg2[%c92] : memref<288xf32, #tpu.memory_space<smem>>
    %684 = vector.broadcast %683 : f32 to vector<32x32xf32>
    %685 = arith.mulf %684, %674 : vector<32x32xf32>
    %686 = arith.addf %653, %685 : vector<32x32xf32>
    %c128 = arith.constant 128 : index
    %687 = memref.load %arg2[%c128] : memref<288xf32, #tpu.memory_space<smem>>
    %688 = vector.broadcast %687 : f32 to vector<32x32xf32>
    %689 = arith.mulf %688, %674 : vector<32x32xf32>
    %690 = arith.addf %657, %689 : vector<32x32xf32>
    %c164 = arith.constant 164 : index
    %691 = memref.load %arg2[%c164] : memref<288xf32, #tpu.memory_space<smem>>
    %692 = vector.broadcast %691 : f32 to vector<32x32xf32>
    %693 = arith.mulf %692, %674 : vector<32x32xf32>
    %694 = arith.addf %661, %693 : vector<32x32xf32>
    %c200 = arith.constant 200 : index
    %695 = memref.load %arg2[%c200] : memref<288xf32, #tpu.memory_space<smem>>
    %696 = vector.broadcast %695 : f32 to vector<32x32xf32>
    %697 = arith.mulf %696, %674 : vector<32x32xf32>
    %698 = arith.addf %665, %697 : vector<32x32xf32>
    %c236 = arith.constant 236 : index
    %699 = memref.load %arg2[%c236] : memref<288xf32, #tpu.memory_space<smem>>
    %700 = vector.broadcast %699 : f32 to vector<32x32xf32>
    %701 = arith.mulf %700, %674 : vector<32x32xf32>
    %702 = arith.addf %669, %701 : vector<32x32xf32>
    %c272 = arith.constant 272 : index
    %703 = memref.load %arg2[%c272] : memref<288xf32, #tpu.memory_space<smem>>
    %704 = vector.broadcast %703 : f32 to vector<32x32xf32>
    %705 = arith.mulf %704, %674 : vector<32x32xf32>
    %706 = arith.addf %673, %705 : vector<32x32xf32>
    %707 = vector.extract_strided_slice %607 {offsets = [1, 0], sizes = [32, 32], strides = [1, 1]} : vector<34x34xf32> to vector<32x32xf32>
    %c21 = arith.constant 21 : index
    %708 = memref.load %arg2[%c21] : memref<288xf32, #tpu.memory_space<smem>>
    %709 = vector.broadcast %708 : f32 to vector<32x32xf32>
    %710 = arith.mulf %709, %707 : vector<32x32xf32>
    %711 = arith.addf %678, %710 : vector<32x32xf32>
    %c57 = arith.constant 57 : index
    %712 = memref.load %arg2[%c57] : memref<288xf32, #tpu.memory_space<smem>>
    %713 = vector.broadcast %712 : f32 to vector<32x32xf32>
    %714 = arith.mulf %713, %707 : vector<32x32xf32>
    %715 = arith.addf %682, %714 : vector<32x32xf32>
    %c93 = arith.constant 93 : index
    %716 = memref.load %arg2[%c93] : memref<288xf32, #tpu.memory_space<smem>>
    %717 = vector.broadcast %716 : f32 to vector<32x32xf32>
    %718 = arith.mulf %717, %707 : vector<32x32xf32>
    %719 = arith.addf %686, %718 : vector<32x32xf32>
    %c129 = arith.constant 129 : index
    %720 = memref.load %arg2[%c129] : memref<288xf32, #tpu.memory_space<smem>>
    %721 = vector.broadcast %720 : f32 to vector<32x32xf32>
    %722 = arith.mulf %721, %707 : vector<32x32xf32>
    %723 = arith.addf %690, %722 : vector<32x32xf32>
    %c165 = arith.constant 165 : index
    %724 = memref.load %arg2[%c165] : memref<288xf32, #tpu.memory_space<smem>>
    %725 = vector.broadcast %724 : f32 to vector<32x32xf32>
    %726 = arith.mulf %725, %707 : vector<32x32xf32>
    %727 = arith.addf %694, %726 : vector<32x32xf32>
    %c201 = arith.constant 201 : index
    %728 = memref.load %arg2[%c201] : memref<288xf32, #tpu.memory_space<smem>>
    %729 = vector.broadcast %728 : f32 to vector<32x32xf32>
    %730 = arith.mulf %729, %707 : vector<32x32xf32>
    %731 = arith.addf %698, %730 : vector<32x32xf32>
    %c237 = arith.constant 237 : index
    %732 = memref.load %arg2[%c237] : memref<288xf32, #tpu.memory_space<smem>>
    %733 = vector.broadcast %732 : f32 to vector<32x32xf32>
    %734 = arith.mulf %733, %707 : vector<32x32xf32>
    %735 = arith.addf %702, %734 : vector<32x32xf32>
    %c273 = arith.constant 273 : index
    %736 = memref.load %arg2[%c273] : memref<288xf32, #tpu.memory_space<smem>>
    %737 = vector.broadcast %736 : f32 to vector<32x32xf32>
    %738 = arith.mulf %737, %707 : vector<32x32xf32>
    %739 = arith.addf %706, %738 : vector<32x32xf32>
    %740 = vector.extract_strided_slice %607 {offsets = [1, 1], sizes = [32, 32], strides = [1, 1]} : vector<34x34xf32> to vector<32x32xf32>
    %c22 = arith.constant 22 : index
    %741 = memref.load %arg2[%c22] : memref<288xf32, #tpu.memory_space<smem>>
    %742 = vector.broadcast %741 : f32 to vector<32x32xf32>
    %743 = arith.mulf %742, %740 : vector<32x32xf32>
    %744 = arith.addf %711, %743 : vector<32x32xf32>
    %c58 = arith.constant 58 : index
    %745 = memref.load %arg2[%c58] : memref<288xf32, #tpu.memory_space<smem>>
    %746 = vector.broadcast %745 : f32 to vector<32x32xf32>
    %747 = arith.mulf %746, %740 : vector<32x32xf32>
    %748 = arith.addf %715, %747 : vector<32x32xf32>
    %c94 = arith.constant 94 : index
    %749 = memref.load %arg2[%c94] : memref<288xf32, #tpu.memory_space<smem>>
    %750 = vector.broadcast %749 : f32 to vector<32x32xf32>
    %751 = arith.mulf %750, %740 : vector<32x32xf32>
    %752 = arith.addf %719, %751 : vector<32x32xf32>
    %c130 = arith.constant 130 : index
    %753 = memref.load %arg2[%c130] : memref<288xf32, #tpu.memory_space<smem>>
    %754 = vector.broadcast %753 : f32 to vector<32x32xf32>
    %755 = arith.mulf %754, %740 : vector<32x32xf32>
    %756 = arith.addf %723, %755 : vector<32x32xf32>
    %c166 = arith.constant 166 : index
    %757 = memref.load %arg2[%c166] : memref<288xf32, #tpu.memory_space<smem>>
    %758 = vector.broadcast %757 : f32 to vector<32x32xf32>
    %759 = arith.mulf %758, %740 : vector<32x32xf32>
    %760 = arith.addf %727, %759 : vector<32x32xf32>
    %c202 = arith.constant 202 : index
    %761 = memref.load %arg2[%c202] : memref<288xf32, #tpu.memory_space<smem>>
    %762 = vector.broadcast %761 : f32 to vector<32x32xf32>
    %763 = arith.mulf %762, %740 : vector<32x32xf32>
    %764 = arith.addf %731, %763 : vector<32x32xf32>
    %c238 = arith.constant 238 : index
    %765 = memref.load %arg2[%c238] : memref<288xf32, #tpu.memory_space<smem>>
    %766 = vector.broadcast %765 : f32 to vector<32x32xf32>
    %767 = arith.mulf %766, %740 : vector<32x32xf32>
    %768 = arith.addf %735, %767 : vector<32x32xf32>
    %c274 = arith.constant 274 : index
    %769 = memref.load %arg2[%c274] : memref<288xf32, #tpu.memory_space<smem>>
    %770 = vector.broadcast %769 : f32 to vector<32x32xf32>
    %771 = arith.mulf %770, %740 : vector<32x32xf32>
    %772 = arith.addf %739, %771 : vector<32x32xf32>
    %773 = vector.extract_strided_slice %607 {offsets = [1, 2], sizes = [32, 32], strides = [1, 1]} : vector<34x34xf32> to vector<32x32xf32>
    %c23 = arith.constant 23 : index
    %774 = memref.load %arg2[%c23] : memref<288xf32, #tpu.memory_space<smem>>
    %775 = vector.broadcast %774 : f32 to vector<32x32xf32>
    %776 = arith.mulf %775, %773 : vector<32x32xf32>
    %777 = arith.addf %744, %776 : vector<32x32xf32>
    %c59 = arith.constant 59 : index
    %778 = memref.load %arg2[%c59] : memref<288xf32, #tpu.memory_space<smem>>
    %779 = vector.broadcast %778 : f32 to vector<32x32xf32>
    %780 = arith.mulf %779, %773 : vector<32x32xf32>
    %781 = arith.addf %748, %780 : vector<32x32xf32>
    %c95 = arith.constant 95 : index
    %782 = memref.load %arg2[%c95] : memref<288xf32, #tpu.memory_space<smem>>
    %783 = vector.broadcast %782 : f32 to vector<32x32xf32>
    %784 = arith.mulf %783, %773 : vector<32x32xf32>
    %785 = arith.addf %752, %784 : vector<32x32xf32>
    %c131 = arith.constant 131 : index
    %786 = memref.load %arg2[%c131] : memref<288xf32, #tpu.memory_space<smem>>
    %787 = vector.broadcast %786 : f32 to vector<32x32xf32>
    %788 = arith.mulf %787, %773 : vector<32x32xf32>
    %789 = arith.addf %756, %788 : vector<32x32xf32>
    %c167 = arith.constant 167 : index
    %790 = memref.load %arg2[%c167] : memref<288xf32, #tpu.memory_space<smem>>
    %791 = vector.broadcast %790 : f32 to vector<32x32xf32>
    %792 = arith.mulf %791, %773 : vector<32x32xf32>
    %793 = arith.addf %760, %792 : vector<32x32xf32>
    %c203 = arith.constant 203 : index
    %794 = memref.load %arg2[%c203] : memref<288xf32, #tpu.memory_space<smem>>
    %795 = vector.broadcast %794 : f32 to vector<32x32xf32>
    %796 = arith.mulf %795, %773 : vector<32x32xf32>
    %797 = arith.addf %764, %796 : vector<32x32xf32>
    %c239 = arith.constant 239 : index
    %798 = memref.load %arg2[%c239] : memref<288xf32, #tpu.memory_space<smem>>
    %799 = vector.broadcast %798 : f32 to vector<32x32xf32>
    %800 = arith.mulf %799, %773 : vector<32x32xf32>
    %801 = arith.addf %768, %800 : vector<32x32xf32>
    %c275 = arith.constant 275 : index
    %802 = memref.load %arg2[%c275] : memref<288xf32, #tpu.memory_space<smem>>
    %803 = vector.broadcast %802 : f32 to vector<32x32xf32>
    %804 = arith.mulf %803, %773 : vector<32x32xf32>
    %805 = arith.addf %772, %804 : vector<32x32xf32>
    %806 = vector.extract_strided_slice %607 {offsets = [2, 0], sizes = [32, 32], strides = [1, 1]} : vector<34x34xf32> to vector<32x32xf32>
    %c24 = arith.constant 24 : index
    %807 = memref.load %arg2[%c24] : memref<288xf32, #tpu.memory_space<smem>>
    %808 = vector.broadcast %807 : f32 to vector<32x32xf32>
    %809 = arith.mulf %808, %806 : vector<32x32xf32>
    %810 = arith.addf %777, %809 : vector<32x32xf32>
    %c60 = arith.constant 60 : index
    %811 = memref.load %arg2[%c60] : memref<288xf32, #tpu.memory_space<smem>>
    %812 = vector.broadcast %811 : f32 to vector<32x32xf32>
    %813 = arith.mulf %812, %806 : vector<32x32xf32>
    %814 = arith.addf %781, %813 : vector<32x32xf32>
    %c96 = arith.constant 96 : index
    %815 = memref.load %arg2[%c96] : memref<288xf32, #tpu.memory_space<smem>>
    %816 = vector.broadcast %815 : f32 to vector<32x32xf32>
    %817 = arith.mulf %816, %806 : vector<32x32xf32>
    %818 = arith.addf %785, %817 : vector<32x32xf32>
    %c132 = arith.constant 132 : index
    %819 = memref.load %arg2[%c132] : memref<288xf32, #tpu.memory_space<smem>>
    %820 = vector.broadcast %819 : f32 to vector<32x32xf32>
    %821 = arith.mulf %820, %806 : vector<32x32xf32>
    %822 = arith.addf %789, %821 : vector<32x32xf32>
    %c168 = arith.constant 168 : index
    %823 = memref.load %arg2[%c168] : memref<288xf32, #tpu.memory_space<smem>>
    %824 = vector.broadcast %823 : f32 to vector<32x32xf32>
    %825 = arith.mulf %824, %806 : vector<32x32xf32>
    %826 = arith.addf %793, %825 : vector<32x32xf32>
    %c204 = arith.constant 204 : index
    %827 = memref.load %arg2[%c204] : memref<288xf32, #tpu.memory_space<smem>>
    %828 = vector.broadcast %827 : f32 to vector<32x32xf32>
    %829 = arith.mulf %828, %806 : vector<32x32xf32>
    %830 = arith.addf %797, %829 : vector<32x32xf32>
    %c240 = arith.constant 240 : index
    %831 = memref.load %arg2[%c240] : memref<288xf32, #tpu.memory_space<smem>>
    %832 = vector.broadcast %831 : f32 to vector<32x32xf32>
    %833 = arith.mulf %832, %806 : vector<32x32xf32>
    %834 = arith.addf %801, %833 : vector<32x32xf32>
    %c276 = arith.constant 276 : index
    %835 = memref.load %arg2[%c276] : memref<288xf32, #tpu.memory_space<smem>>
    %836 = vector.broadcast %835 : f32 to vector<32x32xf32>
    %837 = arith.mulf %836, %806 : vector<32x32xf32>
    %838 = arith.addf %805, %837 : vector<32x32xf32>
    %839 = vector.extract_strided_slice %607 {offsets = [2, 1], sizes = [32, 32], strides = [1, 1]} : vector<34x34xf32> to vector<32x32xf32>
    %c25 = arith.constant 25 : index
    %840 = memref.load %arg2[%c25] : memref<288xf32, #tpu.memory_space<smem>>
    %841 = vector.broadcast %840 : f32 to vector<32x32xf32>
    %842 = arith.mulf %841, %839 : vector<32x32xf32>
    %843 = arith.addf %810, %842 : vector<32x32xf32>
    %c61 = arith.constant 61 : index
    %844 = memref.load %arg2[%c61] : memref<288xf32, #tpu.memory_space<smem>>
    %845 = vector.broadcast %844 : f32 to vector<32x32xf32>
    %846 = arith.mulf %845, %839 : vector<32x32xf32>
    %847 = arith.addf %814, %846 : vector<32x32xf32>
    %c97 = arith.constant 97 : index
    %848 = memref.load %arg2[%c97] : memref<288xf32, #tpu.memory_space<smem>>
    %849 = vector.broadcast %848 : f32 to vector<32x32xf32>
    %850 = arith.mulf %849, %839 : vector<32x32xf32>
    %851 = arith.addf %818, %850 : vector<32x32xf32>
    %c133 = arith.constant 133 : index
    %852 = memref.load %arg2[%c133] : memref<288xf32, #tpu.memory_space<smem>>
    %853 = vector.broadcast %852 : f32 to vector<32x32xf32>
    %854 = arith.mulf %853, %839 : vector<32x32xf32>
    %855 = arith.addf %822, %854 : vector<32x32xf32>
    %c169 = arith.constant 169 : index
    %856 = memref.load %arg2[%c169] : memref<288xf32, #tpu.memory_space<smem>>
    %857 = vector.broadcast %856 : f32 to vector<32x32xf32>
    %858 = arith.mulf %857, %839 : vector<32x32xf32>
    %859 = arith.addf %826, %858 : vector<32x32xf32>
    %c205 = arith.constant 205 : index
    %860 = memref.load %arg2[%c205] : memref<288xf32, #tpu.memory_space<smem>>
    %861 = vector.broadcast %860 : f32 to vector<32x32xf32>
    %862 = arith.mulf %861, %839 : vector<32x32xf32>
    %863 = arith.addf %830, %862 : vector<32x32xf32>
    %c241 = arith.constant 241 : index
    %864 = memref.load %arg2[%c241] : memref<288xf32, #tpu.memory_space<smem>>
    %865 = vector.broadcast %864 : f32 to vector<32x32xf32>
    %866 = arith.mulf %865, %839 : vector<32x32xf32>
    %867 = arith.addf %834, %866 : vector<32x32xf32>
    %c277 = arith.constant 277 : index
    %868 = memref.load %arg2[%c277] : memref<288xf32, #tpu.memory_space<smem>>
    %869 = vector.broadcast %868 : f32 to vector<32x32xf32>
    %870 = arith.mulf %869, %839 : vector<32x32xf32>
    %871 = arith.addf %838, %870 : vector<32x32xf32>
    %872 = vector.extract_strided_slice %607 {offsets = [2, 2], sizes = [32, 32], strides = [1, 1]} : vector<34x34xf32> to vector<32x32xf32>
    %c26 = arith.constant 26 : index
    %873 = memref.load %arg2[%c26] : memref<288xf32, #tpu.memory_space<smem>>
    %874 = vector.broadcast %873 : f32 to vector<32x32xf32>
    %875 = arith.mulf %874, %872 : vector<32x32xf32>
    %876 = arith.addf %843, %875 : vector<32x32xf32>
    %c62 = arith.constant 62 : index
    %877 = memref.load %arg2[%c62] : memref<288xf32, #tpu.memory_space<smem>>
    %878 = vector.broadcast %877 : f32 to vector<32x32xf32>
    %879 = arith.mulf %878, %872 : vector<32x32xf32>
    %880 = arith.addf %847, %879 : vector<32x32xf32>
    %c98 = arith.constant 98 : index
    %881 = memref.load %arg2[%c98] : memref<288xf32, #tpu.memory_space<smem>>
    %882 = vector.broadcast %881 : f32 to vector<32x32xf32>
    %883 = arith.mulf %882, %872 : vector<32x32xf32>
    %884 = arith.addf %851, %883 : vector<32x32xf32>
    %c134 = arith.constant 134 : index
    %885 = memref.load %arg2[%c134] : memref<288xf32, #tpu.memory_space<smem>>
    %886 = vector.broadcast %885 : f32 to vector<32x32xf32>
    %887 = arith.mulf %886, %872 : vector<32x32xf32>
    %888 = arith.addf %855, %887 : vector<32x32xf32>
    %c170 = arith.constant 170 : index
    %889 = memref.load %arg2[%c170] : memref<288xf32, #tpu.memory_space<smem>>
    %890 = vector.broadcast %889 : f32 to vector<32x32xf32>
    %891 = arith.mulf %890, %872 : vector<32x32xf32>
    %892 = arith.addf %859, %891 : vector<32x32xf32>
    %c206 = arith.constant 206 : index
    %893 = memref.load %arg2[%c206] : memref<288xf32, #tpu.memory_space<smem>>
    %894 = vector.broadcast %893 : f32 to vector<32x32xf32>
    %895 = arith.mulf %894, %872 : vector<32x32xf32>
    %896 = arith.addf %863, %895 : vector<32x32xf32>
    %c242 = arith.constant 242 : index
    %897 = memref.load %arg2[%c242] : memref<288xf32, #tpu.memory_space<smem>>
    %898 = vector.broadcast %897 : f32 to vector<32x32xf32>
    %899 = arith.mulf %898, %872 : vector<32x32xf32>
    %900 = arith.addf %867, %899 : vector<32x32xf32>
    %c278 = arith.constant 278 : index
    %901 = memref.load %arg2[%c278] : memref<288xf32, #tpu.memory_space<smem>>
    %902 = vector.broadcast %901 : f32 to vector<32x32xf32>
    %903 = arith.mulf %902, %872 : vector<32x32xf32>
    %904 = arith.addf %871, %903 : vector<32x32xf32>
    %c0_19 = arith.constant 0 : index
    %c3_20 = arith.constant 3 : index
    %c0_21 = arith.constant 0 : index
    %c0_22 = arith.constant 0 : index
    %905 = vector.load %arg1[%c0_19, %c3_20, %c0_21, %c0_22] : memref<1x4x34x34xf32, #tpu.memory_space<vmem>>, vector<1x1x34x34xf32>
    %906 = vector.shape_cast %905 : vector<1x1x34x34xf32> to vector<34x34xf32>
    %907 = vector.extract_strided_slice %906 {offsets = [0, 0], sizes = [32, 32], strides = [1, 1]} : vector<34x34xf32> to vector<32x32xf32>
    %c27 = arith.constant 27 : index
    %908 = memref.load %arg2[%c27] : memref<288xf32, #tpu.memory_space<smem>>
    %909 = vector.broadcast %908 : f32 to vector<32x32xf32>
    %910 = arith.mulf %909, %907 : vector<32x32xf32>
    %911 = arith.addf %876, %910 : vector<32x32xf32>
    %c63 = arith.constant 63 : index
    %912 = memref.load %arg2[%c63] : memref<288xf32, #tpu.memory_space<smem>>
    %913 = vector.broadcast %912 : f32 to vector<32x32xf32>
    %914 = arith.mulf %913, %907 : vector<32x32xf32>
    %915 = arith.addf %880, %914 : vector<32x32xf32>
    %c99 = arith.constant 99 : index
    %916 = memref.load %arg2[%c99] : memref<288xf32, #tpu.memory_space<smem>>
    %917 = vector.broadcast %916 : f32 to vector<32x32xf32>
    %918 = arith.mulf %917, %907 : vector<32x32xf32>
    %919 = arith.addf %884, %918 : vector<32x32xf32>
    %c135 = arith.constant 135 : index
    %920 = memref.load %arg2[%c135] : memref<288xf32, #tpu.memory_space<smem>>
    %921 = vector.broadcast %920 : f32 to vector<32x32xf32>
    %922 = arith.mulf %921, %907 : vector<32x32xf32>
    %923 = arith.addf %888, %922 : vector<32x32xf32>
    %c171 = arith.constant 171 : index
    %924 = memref.load %arg2[%c171] : memref<288xf32, #tpu.memory_space<smem>>
    %925 = vector.broadcast %924 : f32 to vector<32x32xf32>
    %926 = arith.mulf %925, %907 : vector<32x32xf32>
    %927 = arith.addf %892, %926 : vector<32x32xf32>
    %c207 = arith.constant 207 : index
    %928 = memref.load %arg2[%c207] : memref<288xf32, #tpu.memory_space<smem>>
    %929 = vector.broadcast %928 : f32 to vector<32x32xf32>
    %930 = arith.mulf %929, %907 : vector<32x32xf32>
    %931 = arith.addf %896, %930 : vector<32x32xf32>
    %c243 = arith.constant 243 : index
    %932 = memref.load %arg2[%c243] : memref<288xf32, #tpu.memory_space<smem>>
    %933 = vector.broadcast %932 : f32 to vector<32x32xf32>
    %934 = arith.mulf %933, %907 : vector<32x32xf32>
    %935 = arith.addf %900, %934 : vector<32x32xf32>
    %c279 = arith.constant 279 : index
    %936 = memref.load %arg2[%c279] : memref<288xf32, #tpu.memory_space<smem>>
    %937 = vector.broadcast %936 : f32 to vector<32x32xf32>
    %938 = arith.mulf %937, %907 : vector<32x32xf32>
    %939 = arith.addf %904, %938 : vector<32x32xf32>
    %940 = vector.extract_strided_slice %906 {offsets = [0, 1], sizes = [32, 32], strides = [1, 1]} : vector<34x34xf32> to vector<32x32xf32>
    %c28 = arith.constant 28 : index
    %941 = memref.load %arg2[%c28] : memref<288xf32, #tpu.memory_space<smem>>
    %942 = vector.broadcast %941 : f32 to vector<32x32xf32>
    %943 = arith.mulf %942, %940 : vector<32x32xf32>
    %944 = arith.addf %911, %943 : vector<32x32xf32>
    %c64 = arith.constant 64 : index
    %945 = memref.load %arg2[%c64] : memref<288xf32, #tpu.memory_space<smem>>
    %946 = vector.broadcast %945 : f32 to vector<32x32xf32>
    %947 = arith.mulf %946, %940 : vector<32x32xf32>
    %948 = arith.addf %915, %947 : vector<32x32xf32>
    %c100 = arith.constant 100 : index
    %949 = memref.load %arg2[%c100] : memref<288xf32, #tpu.memory_space<smem>>
    %950 = vector.broadcast %949 : f32 to vector<32x32xf32>
    %951 = arith.mulf %950, %940 : vector<32x32xf32>
    %952 = arith.addf %919, %951 : vector<32x32xf32>
    %c136 = arith.constant 136 : index
    %953 = memref.load %arg2[%c136] : memref<288xf32, #tpu.memory_space<smem>>
    %954 = vector.broadcast %953 : f32 to vector<32x32xf32>
    %955 = arith.mulf %954, %940 : vector<32x32xf32>
    %956 = arith.addf %923, %955 : vector<32x32xf32>
    %c172 = arith.constant 172 : index
    %957 = memref.load %arg2[%c172] : memref<288xf32, #tpu.memory_space<smem>>
    %958 = vector.broadcast %957 : f32 to vector<32x32xf32>
    %959 = arith.mulf %958, %940 : vector<32x32xf32>
    %960 = arith.addf %927, %959 : vector<32x32xf32>
    %c208 = arith.constant 208 : index
    %961 = memref.load %arg2[%c208] : memref<288xf32, #tpu.memory_space<smem>>
    %962 = vector.broadcast %961 : f32 to vector<32x32xf32>
    %963 = arith.mulf %962, %940 : vector<32x32xf32>
    %964 = arith.addf %931, %963 : vector<32x32xf32>
    %c244 = arith.constant 244 : index
    %965 = memref.load %arg2[%c244] : memref<288xf32, #tpu.memory_space<smem>>
    %966 = vector.broadcast %965 : f32 to vector<32x32xf32>
    %967 = arith.mulf %966, %940 : vector<32x32xf32>
    %968 = arith.addf %935, %967 : vector<32x32xf32>
    %c280 = arith.constant 280 : index
    %969 = memref.load %arg2[%c280] : memref<288xf32, #tpu.memory_space<smem>>
    %970 = vector.broadcast %969 : f32 to vector<32x32xf32>
    %971 = arith.mulf %970, %940 : vector<32x32xf32>
    %972 = arith.addf %939, %971 : vector<32x32xf32>
    %973 = vector.extract_strided_slice %906 {offsets = [0, 2], sizes = [32, 32], strides = [1, 1]} : vector<34x34xf32> to vector<32x32xf32>
    %c29 = arith.constant 29 : index
    %974 = memref.load %arg2[%c29] : memref<288xf32, #tpu.memory_space<smem>>
    %975 = vector.broadcast %974 : f32 to vector<32x32xf32>
    %976 = arith.mulf %975, %973 : vector<32x32xf32>
    %977 = arith.addf %944, %976 : vector<32x32xf32>
    %c65 = arith.constant 65 : index
    %978 = memref.load %arg2[%c65] : memref<288xf32, #tpu.memory_space<smem>>
    %979 = vector.broadcast %978 : f32 to vector<32x32xf32>
    %980 = arith.mulf %979, %973 : vector<32x32xf32>
    %981 = arith.addf %948, %980 : vector<32x32xf32>
    %c101 = arith.constant 101 : index
    %982 = memref.load %arg2[%c101] : memref<288xf32, #tpu.memory_space<smem>>
    %983 = vector.broadcast %982 : f32 to vector<32x32xf32>
    %984 = arith.mulf %983, %973 : vector<32x32xf32>
    %985 = arith.addf %952, %984 : vector<32x32xf32>
    %c137 = arith.constant 137 : index
    %986 = memref.load %arg2[%c137] : memref<288xf32, #tpu.memory_space<smem>>
    %987 = vector.broadcast %986 : f32 to vector<32x32xf32>
    %988 = arith.mulf %987, %973 : vector<32x32xf32>
    %989 = arith.addf %956, %988 : vector<32x32xf32>
    %c173 = arith.constant 173 : index
    %990 = memref.load %arg2[%c173] : memref<288xf32, #tpu.memory_space<smem>>
    %991 = vector.broadcast %990 : f32 to vector<32x32xf32>
    %992 = arith.mulf %991, %973 : vector<32x32xf32>
    %993 = arith.addf %960, %992 : vector<32x32xf32>
    %c209 = arith.constant 209 : index
    %994 = memref.load %arg2[%c209] : memref<288xf32, #tpu.memory_space<smem>>
    %995 = vector.broadcast %994 : f32 to vector<32x32xf32>
    %996 = arith.mulf %995, %973 : vector<32x32xf32>
    %997 = arith.addf %964, %996 : vector<32x32xf32>
    %c245 = arith.constant 245 : index
    %998 = memref.load %arg2[%c245] : memref<288xf32, #tpu.memory_space<smem>>
    %999 = vector.broadcast %998 : f32 to vector<32x32xf32>
    %1000 = arith.mulf %999, %973 : vector<32x32xf32>
    %1001 = arith.addf %968, %1000 : vector<32x32xf32>
    %c281 = arith.constant 281 : index
    %1002 = memref.load %arg2[%c281] : memref<288xf32, #tpu.memory_space<smem>>
    %1003 = vector.broadcast %1002 : f32 to vector<32x32xf32>
    %1004 = arith.mulf %1003, %973 : vector<32x32xf32>
    %1005 = arith.addf %972, %1004 : vector<32x32xf32>
    %1006 = vector.extract_strided_slice %906 {offsets = [1, 0], sizes = [32, 32], strides = [1, 1]} : vector<34x34xf32> to vector<32x32xf32>
    %c30 = arith.constant 30 : index
    %1007 = memref.load %arg2[%c30] : memref<288xf32, #tpu.memory_space<smem>>
    %1008 = vector.broadcast %1007 : f32 to vector<32x32xf32>
    %1009 = arith.mulf %1008, %1006 : vector<32x32xf32>
    %1010 = arith.addf %977, %1009 : vector<32x32xf32>
    %c66 = arith.constant 66 : index
    %1011 = memref.load %arg2[%c66] : memref<288xf32, #tpu.memory_space<smem>>
    %1012 = vector.broadcast %1011 : f32 to vector<32x32xf32>
    %1013 = arith.mulf %1012, %1006 : vector<32x32xf32>
    %1014 = arith.addf %981, %1013 : vector<32x32xf32>
    %c102 = arith.constant 102 : index
    %1015 = memref.load %arg2[%c102] : memref<288xf32, #tpu.memory_space<smem>>
    %1016 = vector.broadcast %1015 : f32 to vector<32x32xf32>
    %1017 = arith.mulf %1016, %1006 : vector<32x32xf32>
    %1018 = arith.addf %985, %1017 : vector<32x32xf32>
    %c138 = arith.constant 138 : index
    %1019 = memref.load %arg2[%c138] : memref<288xf32, #tpu.memory_space<smem>>
    %1020 = vector.broadcast %1019 : f32 to vector<32x32xf32>
    %1021 = arith.mulf %1020, %1006 : vector<32x32xf32>
    %1022 = arith.addf %989, %1021 : vector<32x32xf32>
    %c174 = arith.constant 174 : index
    %1023 = memref.load %arg2[%c174] : memref<288xf32, #tpu.memory_space<smem>>
    %1024 = vector.broadcast %1023 : f32 to vector<32x32xf32>
    %1025 = arith.mulf %1024, %1006 : vector<32x32xf32>
    %1026 = arith.addf %993, %1025 : vector<32x32xf32>
    %c210 = arith.constant 210 : index
    %1027 = memref.load %arg2[%c210] : memref<288xf32, #tpu.memory_space<smem>>
    %1028 = vector.broadcast %1027 : f32 to vector<32x32xf32>
    %1029 = arith.mulf %1028, %1006 : vector<32x32xf32>
    %1030 = arith.addf %997, %1029 : vector<32x32xf32>
    %c246 = arith.constant 246 : index
    %1031 = memref.load %arg2[%c246] : memref<288xf32, #tpu.memory_space<smem>>
    %1032 = vector.broadcast %1031 : f32 to vector<32x32xf32>
    %1033 = arith.mulf %1032, %1006 : vector<32x32xf32>
    %1034 = arith.addf %1001, %1033 : vector<32x32xf32>
    %c282 = arith.constant 282 : index
    %1035 = memref.load %arg2[%c282] : memref<288xf32, #tpu.memory_space<smem>>
    %1036 = vector.broadcast %1035 : f32 to vector<32x32xf32>
    %1037 = arith.mulf %1036, %1006 : vector<32x32xf32>
    %1038 = arith.addf %1005, %1037 : vector<32x32xf32>
    %1039 = vector.extract_strided_slice %906 {offsets = [1, 1], sizes = [32, 32], strides = [1, 1]} : vector<34x34xf32> to vector<32x32xf32>
    %c31 = arith.constant 31 : index
    %1040 = memref.load %arg2[%c31] : memref<288xf32, #tpu.memory_space<smem>>
    %1041 = vector.broadcast %1040 : f32 to vector<32x32xf32>
    %1042 = arith.mulf %1041, %1039 : vector<32x32xf32>
    %1043 = arith.addf %1010, %1042 : vector<32x32xf32>
    %c67 = arith.constant 67 : index
    %1044 = memref.load %arg2[%c67] : memref<288xf32, #tpu.memory_space<smem>>
    %1045 = vector.broadcast %1044 : f32 to vector<32x32xf32>
    %1046 = arith.mulf %1045, %1039 : vector<32x32xf32>
    %1047 = arith.addf %1014, %1046 : vector<32x32xf32>
    %c103 = arith.constant 103 : index
    %1048 = memref.load %arg2[%c103] : memref<288xf32, #tpu.memory_space<smem>>
    %1049 = vector.broadcast %1048 : f32 to vector<32x32xf32>
    %1050 = arith.mulf %1049, %1039 : vector<32x32xf32>
    %1051 = arith.addf %1018, %1050 : vector<32x32xf32>
    %c139 = arith.constant 139 : index
    %1052 = memref.load %arg2[%c139] : memref<288xf32, #tpu.memory_space<smem>>
    %1053 = vector.broadcast %1052 : f32 to vector<32x32xf32>
    %1054 = arith.mulf %1053, %1039 : vector<32x32xf32>
    %1055 = arith.addf %1022, %1054 : vector<32x32xf32>
    %c175 = arith.constant 175 : index
    %1056 = memref.load %arg2[%c175] : memref<288xf32, #tpu.memory_space<smem>>
    %1057 = vector.broadcast %1056 : f32 to vector<32x32xf32>
    %1058 = arith.mulf %1057, %1039 : vector<32x32xf32>
    %1059 = arith.addf %1026, %1058 : vector<32x32xf32>
    %c211 = arith.constant 211 : index
    %1060 = memref.load %arg2[%c211] : memref<288xf32, #tpu.memory_space<smem>>
    %1061 = vector.broadcast %1060 : f32 to vector<32x32xf32>
    %1062 = arith.mulf %1061, %1039 : vector<32x32xf32>
    %1063 = arith.addf %1030, %1062 : vector<32x32xf32>
    %c247 = arith.constant 247 : index
    %1064 = memref.load %arg2[%c247] : memref<288xf32, #tpu.memory_space<smem>>
    %1065 = vector.broadcast %1064 : f32 to vector<32x32xf32>
    %1066 = arith.mulf %1065, %1039 : vector<32x32xf32>
    %1067 = arith.addf %1034, %1066 : vector<32x32xf32>
    %c283 = arith.constant 283 : index
    %1068 = memref.load %arg2[%c283] : memref<288xf32, #tpu.memory_space<smem>>
    %1069 = vector.broadcast %1068 : f32 to vector<32x32xf32>
    %1070 = arith.mulf %1069, %1039 : vector<32x32xf32>
    %1071 = arith.addf %1038, %1070 : vector<32x32xf32>
    %1072 = vector.extract_strided_slice %906 {offsets = [1, 2], sizes = [32, 32], strides = [1, 1]} : vector<34x34xf32> to vector<32x32xf32>
    %c32 = arith.constant 32 : index
    %1073 = memref.load %arg2[%c32] : memref<288xf32, #tpu.memory_space<smem>>
    %1074 = vector.broadcast %1073 : f32 to vector<32x32xf32>
    %1075 = arith.mulf %1074, %1072 : vector<32x32xf32>
    %1076 = arith.addf %1043, %1075 : vector<32x32xf32>
    %c68 = arith.constant 68 : index
    %1077 = memref.load %arg2[%c68] : memref<288xf32, #tpu.memory_space<smem>>
    %1078 = vector.broadcast %1077 : f32 to vector<32x32xf32>
    %1079 = arith.mulf %1078, %1072 : vector<32x32xf32>
    %1080 = arith.addf %1047, %1079 : vector<32x32xf32>
    %c104 = arith.constant 104 : index
    %1081 = memref.load %arg2[%c104] : memref<288xf32, #tpu.memory_space<smem>>
    %1082 = vector.broadcast %1081 : f32 to vector<32x32xf32>
    %1083 = arith.mulf %1082, %1072 : vector<32x32xf32>
    %1084 = arith.addf %1051, %1083 : vector<32x32xf32>
    %c140 = arith.constant 140 : index
    %1085 = memref.load %arg2[%c140] : memref<288xf32, #tpu.memory_space<smem>>
    %1086 = vector.broadcast %1085 : f32 to vector<32x32xf32>
    %1087 = arith.mulf %1086, %1072 : vector<32x32xf32>
    %1088 = arith.addf %1055, %1087 : vector<32x32xf32>
    %c176 = arith.constant 176 : index
    %1089 = memref.load %arg2[%c176] : memref<288xf32, #tpu.memory_space<smem>>
    %1090 = vector.broadcast %1089 : f32 to vector<32x32xf32>
    %1091 = arith.mulf %1090, %1072 : vector<32x32xf32>
    %1092 = arith.addf %1059, %1091 : vector<32x32xf32>
    %c212 = arith.constant 212 : index
    %1093 = memref.load %arg2[%c212] : memref<288xf32, #tpu.memory_space<smem>>
    %1094 = vector.broadcast %1093 : f32 to vector<32x32xf32>
    %1095 = arith.mulf %1094, %1072 : vector<32x32xf32>
    %1096 = arith.addf %1063, %1095 : vector<32x32xf32>
    %c248 = arith.constant 248 : index
    %1097 = memref.load %arg2[%c248] : memref<288xf32, #tpu.memory_space<smem>>
    %1098 = vector.broadcast %1097 : f32 to vector<32x32xf32>
    %1099 = arith.mulf %1098, %1072 : vector<32x32xf32>
    %1100 = arith.addf %1067, %1099 : vector<32x32xf32>
    %c284 = arith.constant 284 : index
    %1101 = memref.load %arg2[%c284] : memref<288xf32, #tpu.memory_space<smem>>
    %1102 = vector.broadcast %1101 : f32 to vector<32x32xf32>
    %1103 = arith.mulf %1102, %1072 : vector<32x32xf32>
    %1104 = arith.addf %1071, %1103 : vector<32x32xf32>
    %1105 = vector.extract_strided_slice %906 {offsets = [2, 0], sizes = [32, 32], strides = [1, 1]} : vector<34x34xf32> to vector<32x32xf32>
    %c33 = arith.constant 33 : index
    %1106 = memref.load %arg2[%c33] : memref<288xf32, #tpu.memory_space<smem>>
    %1107 = vector.broadcast %1106 : f32 to vector<32x32xf32>
    %1108 = arith.mulf %1107, %1105 : vector<32x32xf32>
    %1109 = arith.addf %1076, %1108 : vector<32x32xf32>
    %c69 = arith.constant 69 : index
    %1110 = memref.load %arg2[%c69] : memref<288xf32, #tpu.memory_space<smem>>
    %1111 = vector.broadcast %1110 : f32 to vector<32x32xf32>
    %1112 = arith.mulf %1111, %1105 : vector<32x32xf32>
    %1113 = arith.addf %1080, %1112 : vector<32x32xf32>
    %c105 = arith.constant 105 : index
    %1114 = memref.load %arg2[%c105] : memref<288xf32, #tpu.memory_space<smem>>
    %1115 = vector.broadcast %1114 : f32 to vector<32x32xf32>
    %1116 = arith.mulf %1115, %1105 : vector<32x32xf32>
    %1117 = arith.addf %1084, %1116 : vector<32x32xf32>
    %c141 = arith.constant 141 : index
    %1118 = memref.load %arg2[%c141] : memref<288xf32, #tpu.memory_space<smem>>
    %1119 = vector.broadcast %1118 : f32 to vector<32x32xf32>
    %1120 = arith.mulf %1119, %1105 : vector<32x32xf32>
    %1121 = arith.addf %1088, %1120 : vector<32x32xf32>
    %c177 = arith.constant 177 : index
    %1122 = memref.load %arg2[%c177] : memref<288xf32, #tpu.memory_space<smem>>
    %1123 = vector.broadcast %1122 : f32 to vector<32x32xf32>
    %1124 = arith.mulf %1123, %1105 : vector<32x32xf32>
    %1125 = arith.addf %1092, %1124 : vector<32x32xf32>
    %c213 = arith.constant 213 : index
    %1126 = memref.load %arg2[%c213] : memref<288xf32, #tpu.memory_space<smem>>
    %1127 = vector.broadcast %1126 : f32 to vector<32x32xf32>
    %1128 = arith.mulf %1127, %1105 : vector<32x32xf32>
    %1129 = arith.addf %1096, %1128 : vector<32x32xf32>
    %c249 = arith.constant 249 : index
    %1130 = memref.load %arg2[%c249] : memref<288xf32, #tpu.memory_space<smem>>
    %1131 = vector.broadcast %1130 : f32 to vector<32x32xf32>
    %1132 = arith.mulf %1131, %1105 : vector<32x32xf32>
    %1133 = arith.addf %1100, %1132 : vector<32x32xf32>
    %c285 = arith.constant 285 : index
    %1134 = memref.load %arg2[%c285] : memref<288xf32, #tpu.memory_space<smem>>
    %1135 = vector.broadcast %1134 : f32 to vector<32x32xf32>
    %1136 = arith.mulf %1135, %1105 : vector<32x32xf32>
    %1137 = arith.addf %1104, %1136 : vector<32x32xf32>
    %1138 = vector.extract_strided_slice %906 {offsets = [2, 1], sizes = [32, 32], strides = [1, 1]} : vector<34x34xf32> to vector<32x32xf32>
    %c34 = arith.constant 34 : index
    %1139 = memref.load %arg2[%c34] : memref<288xf32, #tpu.memory_space<smem>>
    %1140 = vector.broadcast %1139 : f32 to vector<32x32xf32>
    %1141 = arith.mulf %1140, %1138 : vector<32x32xf32>
    %1142 = arith.addf %1109, %1141 : vector<32x32xf32>
    %c70 = arith.constant 70 : index
    %1143 = memref.load %arg2[%c70] : memref<288xf32, #tpu.memory_space<smem>>
    %1144 = vector.broadcast %1143 : f32 to vector<32x32xf32>
    %1145 = arith.mulf %1144, %1138 : vector<32x32xf32>
    %1146 = arith.addf %1113, %1145 : vector<32x32xf32>
    %c106 = arith.constant 106 : index
    %1147 = memref.load %arg2[%c106] : memref<288xf32, #tpu.memory_space<smem>>
    %1148 = vector.broadcast %1147 : f32 to vector<32x32xf32>
    %1149 = arith.mulf %1148, %1138 : vector<32x32xf32>
    %1150 = arith.addf %1117, %1149 : vector<32x32xf32>
    %c142 = arith.constant 142 : index
    %1151 = memref.load %arg2[%c142] : memref<288xf32, #tpu.memory_space<smem>>
    %1152 = vector.broadcast %1151 : f32 to vector<32x32xf32>
    %1153 = arith.mulf %1152, %1138 : vector<32x32xf32>
    %1154 = arith.addf %1121, %1153 : vector<32x32xf32>
    %c178 = arith.constant 178 : index
    %1155 = memref.load %arg2[%c178] : memref<288xf32, #tpu.memory_space<smem>>
    %1156 = vector.broadcast %1155 : f32 to vector<32x32xf32>
    %1157 = arith.mulf %1156, %1138 : vector<32x32xf32>
    %1158 = arith.addf %1125, %1157 : vector<32x32xf32>
    %c214 = arith.constant 214 : index
    %1159 = memref.load %arg2[%c214] : memref<288xf32, #tpu.memory_space<smem>>
    %1160 = vector.broadcast %1159 : f32 to vector<32x32xf32>
    %1161 = arith.mulf %1160, %1138 : vector<32x32xf32>
    %1162 = arith.addf %1129, %1161 : vector<32x32xf32>
    %c250 = arith.constant 250 : index
    %1163 = memref.load %arg2[%c250] : memref<288xf32, #tpu.memory_space<smem>>
    %1164 = vector.broadcast %1163 : f32 to vector<32x32xf32>
    %1165 = arith.mulf %1164, %1138 : vector<32x32xf32>
    %1166 = arith.addf %1133, %1165 : vector<32x32xf32>
    %c286 = arith.constant 286 : index
    %1167 = memref.load %arg2[%c286] : memref<288xf32, #tpu.memory_space<smem>>
    %1168 = vector.broadcast %1167 : f32 to vector<32x32xf32>
    %1169 = arith.mulf %1168, %1138 : vector<32x32xf32>
    %1170 = arith.addf %1137, %1169 : vector<32x32xf32>
    %1171 = vector.extract_strided_slice %906 {offsets = [2, 2], sizes = [32, 32], strides = [1, 1]} : vector<34x34xf32> to vector<32x32xf32>
    %c35 = arith.constant 35 : index
    %1172 = memref.load %arg2[%c35] : memref<288xf32, #tpu.memory_space<smem>>
    %1173 = vector.broadcast %1172 : f32 to vector<32x32xf32>
    %1174 = arith.mulf %1173, %1171 : vector<32x32xf32>
    %1175 = arith.addf %1142, %1174 : vector<32x32xf32>
    %c71 = arith.constant 71 : index
    %1176 = memref.load %arg2[%c71] : memref<288xf32, #tpu.memory_space<smem>>
    %1177 = vector.broadcast %1176 : f32 to vector<32x32xf32>
    %1178 = arith.mulf %1177, %1171 : vector<32x32xf32>
    %1179 = arith.addf %1146, %1178 : vector<32x32xf32>
    %c107 = arith.constant 107 : index
    %1180 = memref.load %arg2[%c107] : memref<288xf32, #tpu.memory_space<smem>>
    %1181 = vector.broadcast %1180 : f32 to vector<32x32xf32>
    %1182 = arith.mulf %1181, %1171 : vector<32x32xf32>
    %1183 = arith.addf %1150, %1182 : vector<32x32xf32>
    %c143 = arith.constant 143 : index
    %1184 = memref.load %arg2[%c143] : memref<288xf32, #tpu.memory_space<smem>>
    %1185 = vector.broadcast %1184 : f32 to vector<32x32xf32>
    %1186 = arith.mulf %1185, %1171 : vector<32x32xf32>
    %1187 = arith.addf %1154, %1186 : vector<32x32xf32>
    %c179 = arith.constant 179 : index
    %1188 = memref.load %arg2[%c179] : memref<288xf32, #tpu.memory_space<smem>>
    %1189 = vector.broadcast %1188 : f32 to vector<32x32xf32>
    %1190 = arith.mulf %1189, %1171 : vector<32x32xf32>
    %1191 = arith.addf %1158, %1190 : vector<32x32xf32>
    %c215 = arith.constant 215 : index
    %1192 = memref.load %arg2[%c215] : memref<288xf32, #tpu.memory_space<smem>>
    %1193 = vector.broadcast %1192 : f32 to vector<32x32xf32>
    %1194 = arith.mulf %1193, %1171 : vector<32x32xf32>
    %1195 = arith.addf %1162, %1194 : vector<32x32xf32>
    %c251 = arith.constant 251 : index
    %1196 = memref.load %arg2[%c251] : memref<288xf32, #tpu.memory_space<smem>>
    %1197 = vector.broadcast %1196 : f32 to vector<32x32xf32>
    %1198 = arith.mulf %1197, %1171 : vector<32x32xf32>
    %1199 = arith.addf %1166, %1198 : vector<32x32xf32>
    %c287 = arith.constant 287 : index
    %1200 = memref.load %arg2[%c287] : memref<288xf32, #tpu.memory_space<smem>>
    %1201 = vector.broadcast %1200 : f32 to vector<32x32xf32>
    %1202 = arith.mulf %1201, %1171 : vector<32x32xf32>
    %1203 = arith.addf %1170, %1202 : vector<32x32xf32>
    %c0_23 = arith.constant 0 : index
    %1204 = memref.load %arg3[%c0_23] : memref<8xf32, #tpu.memory_space<smem>>
    %1205 = vector.broadcast %1204 : f32 to vector<32x32xf32>
    %1206 = arith.addf %1175, %1205 : vector<32x32xf32>
    %c0_24 = arith.constant 0 : index
    %c0_25 = arith.constant 0 : index
    %c0_26 = arith.constant 0 : index
    %c0_27 = arith.constant 0 : index
    %1207 = vector.load %arg4[%c0_24, %c0_25, %c0_26, %c0_27] : memref<1x8x32x32xf32, #tpu.memory_space<vmem>>, vector<1x1x32x32xf32>
    %1208 = vector.shape_cast %1207 : vector<1x1x32x32xf32> to vector<32x32xf32>
    %1209 = vector.shape_cast %1206 : vector<32x32xf32> to vector<1x1x32x32xf32>
    tpu.vector_store %arg4[%c0_24, %c0_25, %c0_26, %c0_27], %1209 {strides = array<i32>} : memref<1x8x32x32xf32, #tpu.memory_space<vmem>>, vector<1x1x32x32xf32>,
    %c1_28 = arith.constant 1 : index
    %1210 = memref.load %arg3[%c1_28] : memref<8xf32, #tpu.memory_space<smem>>
    %1211 = vector.broadcast %1210 : f32 to vector<32x32xf32>
    %1212 = arith.addf %1179, %1211 : vector<32x32xf32>
    %c0_29 = arith.constant 0 : index
    %c1_30 = arith.constant 1 : index
    %c0_31 = arith.constant 0 : index
    %c0_32 = arith.constant 0 : index
    %1213 = vector.load %arg4[%c0_29, %c1_30, %c0_31, %c0_32] : memref<1x8x32x32xf32, #tpu.memory_space<vmem>>, vector<1x1x32x32xf32>
    %1214 = vector.shape_cast %1213 : vector<1x1x32x32xf32> to vector<32x32xf32>
    %1215 = vector.shape_cast %1212 : vector<32x32xf32> to vector<1x1x32x32xf32>
    tpu.vector_store %arg4[%c0_29, %c1_30, %c0_31, %c0_32], %1215 {strides = array<i32>} : memref<1x8x32x32xf32, #tpu.memory_space<vmem>>, vector<1x1x32x32xf32>,
    %c2_33 = arith.constant 2 : index
    %1216 = memref.load %arg3[%c2_33] : memref<8xf32, #tpu.memory_space<smem>>
    %1217 = vector.broadcast %1216 : f32 to vector<32x32xf32>
    %1218 = arith.addf %1183, %1217 : vector<32x32xf32>
    %c0_34 = arith.constant 0 : index
    %c2_35 = arith.constant 2 : index
    %c0_36 = arith.constant 0 : index
    %c0_37 = arith.constant 0 : index
    %1219 = vector.load %arg4[%c0_34, %c2_35, %c0_36, %c0_37] : memref<1x8x32x32xf32, #tpu.memory_space<vmem>>, vector<1x1x32x32xf32>
    %1220 = vector.shape_cast %1219 : vector<1x1x32x32xf32> to vector<32x32xf32>
    %1221 = vector.shape_cast %1218 : vector<32x32xf32> to vector<1x1x32x32xf32>
    tpu.vector_store %arg4[%c0_34, %c2_35, %c0_36, %c0_37], %1221 {strides = array<i32>} : memref<1x8x32x32xf32, #tpu.memory_space<vmem>>, vector<1x1x32x32xf32>,
    %c3_38 = arith.constant 3 : index
    %1222 = memref.load %arg3[%c3_38] : memref<8xf32, #tpu.memory_space<smem>>
    %1223 = vector.broadcast %1222 : f32 to vector<32x32xf32>
    %1224 = arith.addf %1187, %1223 : vector<32x32xf32>
    %c0_39 = arith.constant 0 : index
    %c3_40 = arith.constant 3 : index
    %c0_41 = arith.constant 0 : index
    %c0_42 = arith.constant 0 : index
    %1225 = vector.load %arg4[%c0_39, %c3_40, %c0_41, %c0_42] : memref<1x8x32x32xf32, #tpu.memory_space<vmem>>, vector<1x1x32x32xf32>
    %1226 = vector.shape_cast %1225 : vector<1x1x32x32xf32> to vector<32x32xf32>
    %1227 = vector.shape_cast %1224 : vector<32x32xf32> to vector<1x1x32x32xf32>
    tpu.vector_store %arg4[%c0_39, %c3_40, %c0_41, %c0_42], %1227 {strides = array<i32>} : memref<1x8x32x32xf32, #tpu.memory_space<vmem>>, vector<1x1x32x32xf32>,
    %c4_43 = arith.constant 4 : index
    %1228 = memref.load %arg3[%c4_43] : memref<8xf32, #tpu.memory_space<smem>>
    %1229 = vector.broadcast %1228 : f32 to vector<32x32xf32>
    %1230 = arith.addf %1191, %1229 : vector<32x32xf32>
    %c0_44 = arith.constant 0 : index
    %c4_45 = arith.constant 4 : index
    %c0_46 = arith.constant 0 : index
    %c0_47 = arith.constant 0 : index
    %1231 = vector.load %arg4[%c0_44, %c4_45, %c0_46, %c0_47] : memref<1x8x32x32xf32, #tpu.memory_space<vmem>>, vector<1x1x32x32xf32>
    %1232 = vector.shape_cast %1231 : vector<1x1x32x32xf32> to vector<32x32xf32>
    %1233 = vector.shape_cast %1230 : vector<32x32xf32> to vector<1x1x32x32xf32>
    tpu.vector_store %arg4[%c0_44, %c4_45, %c0_46, %c0_47], %1233 {strides = array<i32>} : memref<1x8x32x32xf32, #tpu.memory_space<vmem>>, vector<1x1x32x32xf32>,
    %c5_48 = arith.constant 5 : index
    %1234 = memref.load %arg3[%c5_48] : memref<8xf32, #tpu.memory_space<smem>>
    %1235 = vector.broadcast %1234 : f32 to vector<32x32xf32>
    %1236 = arith.addf %1195, %1235 : vector<32x32xf32>
    %c0_49 = arith.constant 0 : index
    %c5_50 = arith.constant 5 : index
    %c0_51 = arith.constant 0 : index
    %c0_52 = arith.constant 0 : index
    %1237 = vector.load %arg4[%c0_49, %c5_50, %c0_51, %c0_52] : memref<1x8x32x32xf32, #tpu.memory_space<vmem>>, vector<1x1x32x32xf32>
    %1238 = vector.shape_cast %1237 : vector<1x1x32x32xf32> to vector<32x32xf32>
    %1239 = vector.shape_cast %1236 : vector<32x32xf32> to vector<1x1x32x32xf32>
    tpu.vector_store %arg4[%c0_49, %c5_50, %c0_51, %c0_52], %1239 {strides = array<i32>} : memref<1x8x32x32xf32, #tpu.memory_space<vmem>>, vector<1x1x32x32xf32>,
    %c6_53 = arith.constant 6 : index
    %1240 = memref.load %arg3[%c6_53] : memref<8xf32, #tpu.memory_space<smem>>
    %1241 = vector.broadcast %1240 : f32 to vector<32x32xf32>
    %1242 = arith.addf %1199, %1241 : vector<32x32xf32>
    %c0_54 = arith.constant 0 : index
    %c6_55 = arith.constant 6 : index
    %c0_56 = arith.constant 0 : index
    %c0_57 = arith.constant 0 : index
    %1243 = vector.load %arg4[%c0_54, %c6_55, %c0_56, %c0_57] : memref<1x8x32x32xf32, #tpu.memory_space<vmem>>, vector<1x1x32x32xf32>
    %1244 = vector.shape_cast %1243 : vector<1x1x32x32xf32> to vector<32x32xf32>
    %1245 = vector.shape_cast %1242 : vector<32x32xf32> to vector<1x1x32x32xf32>
    tpu.vector_store %arg4[%c0_54, %c6_55, %c0_56, %c0_57], %1245 {strides = array<i32>} : memref<1x8x32x32xf32, #tpu.memory_space<vmem>>, vector<1x1x32x32xf32>,
    %c7_58 = arith.constant 7 : index
    %1246 = memref.load %arg3[%c7_58] : memref<8xf32, #tpu.memory_space<smem>>
    %1247 = vector.broadcast %1246 : f32 to vector<32x32xf32>
    %1248 = arith.addf %1203, %1247 : vector<32x32xf32>
    %c0_59 = arith.constant 0 : index
    %c7_60 = arith.constant 7 : index
    %c0_61 = arith.constant 0 : index
    %c0_62 = arith.constant 0 : index
    %1249 = vector.load %arg4[%c0_59, %c7_60, %c0_61, %c0_62] : memref<1x8x32x32xf32, #tpu.memory_space<vmem>>, vector<1x1x32x32xf32>
    %1250 = vector.shape_cast %1249 : vector<1x1x32x32xf32> to vector<32x32xf32>
    %1251 = vector.shape_cast %1248 : vector<32x32xf32> to vector<1x1x32x32xf32>
    tpu.vector_store %arg4[%c0_59, %c7_60, %c0_61, %c0_62], %1251 {strides = array<i32>} : memref<1x8x32x32xf32, #tpu.memory_space<vmem>>, vector<1x1x32x32xf32>,
    return
  }
  func.func @transform_0(%arg0: i32) -> (i32, i32, i32, i32) {
    %c0_i32 = arith.constant 0 : i32
    %c0_i32_0 = arith.constant 0 : i32
    %c0_i32_1 = arith.constant 0 : i32
    %c0_i32_2 = arith.constant 0 : i32
    return %arg0, %c0_i32, %c0_i32_0, %c0_i32_1 : i32, i32, i32, i32
  }
  func.func @transform_1(%arg0: i32) -> i32 {
    %c0_i32 = arith.constant 0 : i32
    %c0_i32_0 = arith.constant 0 : i32
    return %c0_i32 : i32
  }
  func.func @transform_2(%arg0: i32) -> i32 {
    %c0_i32 = arith.constant 0 : i32
    %c0_i32_0 = arith.constant 0 : i32
    return %c0_i32 : i32
  }
  func.func @transform_3(%arg0: i32) -> (i32, i32, i32, i32) {
    %c0_i32 = arith.constant 0 : i32
    %c0_i32_0 = arith.constant 0 : i32
    %c0_i32_1 = arith.constant 0 : i32
    %c0_i32_2 = arith.constant 0 : i32
    return %arg0, %c0_i32, %c0_i32_0, %c0_i32_1 : i32, i32, i32, i32
  }
}

</mosaic_0001>

<llo_original>
// kernel: tpu_custom_call.1
$region0: #{tpu_custom_call.1}
  #allocation0 [shape = 'u32[]', space=smem, size = 0x4, offset = 0x4, fixed_abs, tag = 'smem constant byte address 0x4 - core index']
  #allocation1 [shape = 'u32[144,128]{1,0:T(1,128)}', space=vmem, size = 0x12000, scoped, tag = 'internal scratch']
  %s0 = inlined_call_operand.vmem [shape: f32[2,4,34,34], index: 0, kind: input, shape index: {}]
  %s1 = inlined_call_operand.vmem [shape: f32[288], index: 1, kind: input, shape index: {}]
  %s2 = inlined_call_operand.vmem [shape: f32[8], index: 2, kind: input, shape index: {}]
  %s3 = inlined_call_operand.hbm [shape: f32[2,8,32,32], index: 3, kind: output, shape index: {}]
  %s4 = sld [smem:[#allocation0]]
  $region53: #{tpu_custom_call.1} parent=0
    _
  %s6 = ssub.s32 1, %s4
  %s7 = scalar_select 0, %s6, %s4
  $region1: #{tpu_custom_call.1} parent=0
    #allocation2 [shape = 'u8[1536]{0}', space=smem, size = 0x600, scoped, tag = 'input window, operand 1, single buffered']
    #allocation3 [shape = 's32[2]{0}', space=sflag, size = 0x8, scoped, tag = 'scoped memory for tpu_custom_call.1']
    #allocation4 [shape = 's32[2]{0}', space=sflag, size = 0x8, scoped, tag = 'scoped memory for tpu_custom_call.1']
    #allocation5 [shape = 'u8[512]{0}', space=smem, size = 0x200, scoped, tag = 'input window, operand 2, single buffered']
    #allocation6 [shape = 's32[1]{0}', space=sflag, size = 0x4, scoped, tag = 'scoped memory for tpu_custom_call.1']
    #allocation7 [shape = 'u8[262144]{0}', space=vmem, size = 0x40000, scoped, tag = 'output window, operand 0']
    %8 = vsyncpa [#allocation4], 0
    %9 = vsyncpa [#allocation6], 0
    %10 = vsyncpa [#allocation3], 0
    %s11 = scalar_lea.sflag [#allocation3], 1
    %12 = vsyncpa %s11, 0
    loop: start=0, step=1, limit=4
    $region2: #{tpu_custom_call.1} parent=1 // loop_pre_header
      _
    $region3: #{tpu_custom_call.1} parent=1 // loop_header
      %s14 = sphi 0, %s18
      %p15 = scmp.ge.s32.totalorder %s14, 4
      %s24 = sphi 0, %s26
      %s27 = sphi 0, %s24
      %s28 = sphi 0, %s27
      %s44 = sphi 0, %s28
      %s48 = sphi 0, %s48
      %s50 = sphi 0, %s48
      %s51 = sphi 0, %s50
      %s65 = sphi 0, %s51
      %s69 = sphi 0, %s69
      %s71 = sphi 0, %s69
      %s72 = sphi 0, %s71
      %s86 = sphi 0, %s72
      %s92 = sphi 0, %s94
      %s95 = sphi 0, %s92
      %s96 = sphi 0, %s95
      %s112 = sphi 0, %s96
    $region4: #{tpu_custom_call.1} parent=1 // loop_header_branch
      %17 = sbr.rel (%p15) target = $region8
    $region5: #{tpu_custom_call.1} parent=1 // loop_body
      %s19 = ssub.s32 %s14, 1
      %s20 = ssub.s32 %s14, 2
      %s21 = sadd.s32 %s14, 1
      %s22 = ssub.s32 %s14, %s21
      %p23 = scmp.eq.s32.totalorder %s22, 0
      %s25 = sadd.s32 %s24, 1
      %s26 = scalar_select %p23, %s24, %s25
      %p29 = pneg %p23
      %p30 = scmp.eq.s32.totalorder %s14, 1
      %p31 = por %p29, %p30
      %p32 = scmp.ne.s32.totalorder %s24, %s27
      %p33 = scmp.eq.s32.totalorder %s14, 0
      %p34 = por %p32, %p33
      %p35 = scmp.ne.s32.totalorder %s24, %s27
      %p36 = scmp.eq.s32.totalorder %s19, 1
      %p37 = por %p35, %p36
      %p38 = scmp.ne.s32.totalorder %s27, %s28
      %p39 = scmp.eq.s32.totalorder %s19, 0
      %p40 = por %p38, %p39
      %p41 = scmp.ne.s32.totalorder %s27, %s28
      %p42 = scmp.eq.s32.totalorder %s20, 1
      %p43 = por %p41, %p42
      %p45 = scmp.ne.s32.totalorder %s28, %s44
      %p46 = scmp.eq.s32.totalorder %s20, 0
      %p47 = por %p45, %p46
      %s49 = sadd.s32 %s48, 1
      %p52 = scmp.eq.s32.totalorder %s14, 1
      %p53 = scmp.ne.s32.totalorder %s48, %s50
      %p54 = scmp.eq.s32.totalorder %s14, 0
      %p55 = por %p53, %p54
      %p56 = scmp.ne.s32.totalorder %s48, %s50
      %p57 = scmp.eq.s32.totalorder %s19, 1
      %p58 = por %p56, %p57
      %p59 = scmp.ne.s32.totalorder %s50, %s51
      %p60 = scmp.eq.s32.totalorder %s19, 0
      %p61 = por %p59, %p60
      %p62 = scmp.ne.s32.totalorder %s50, %s51
      %p63 = scmp.eq.s32.totalorder %s20, 1
      %p64 = por %p62, %p63
      %p66 = scmp.ne.s32.totalorder %s51, %s65
      %p67 = scmp.eq.s32.totalorder %s20, 0
      %p68 = por %p66, %p67
      %s70 = sadd.s32 %s69, 1
      %p73 = scmp.eq.s32.totalorder %s14, 1
      %p74 = scmp.ne.s32.totalorder %s69, %s71
      %p75 = scmp.eq.s32.totalorder %s14, 0
      %p76 = por %p74, %p75
      %p77 = scmp.ne.s32.totalorder %s69, %s71
      %p78 = scmp.eq.s32.totalorder %s19, 1
      %p79 = por %p77, %p78
      %p80 = scmp.ne.s32.totalorder %s71, %s72
      %p81 = scmp.eq.s32.totalorder %s19, 0
      %p82 = por %p80, %p81
      %p83 = scmp.ne.s32.totalorder %s71, %s72
      %p84 = scmp.eq.s32.totalorder %s20, 1
      %p85 = por %p83, %p84
      %p87 = scmp.ne.s32.totalorder %s72, %s86
      %p88 = scmp.eq.s32.totalorder %s20, 0
      %p89 = por %p87, %p88
      %s90 = ssub.s32 %s14, %s21
      %p91 = scmp.eq.s32.totalorder %s90, 0
      %s93 = sadd.s32 %s92, 1
      %s94 = scalar_select %p91, %s92, %s93
      %p97 = pneg %p91
      %p98 = scmp.eq.s32.totalorder %s14, 1
      %p99 = por %p97, %p98
      %p100 = scmp.ne.s32.totalorder %s92, %s95
      %p101 = scmp.eq.s32.totalorder %s14, 0
      %p102 = por %p100, %p101
      %p103 = scmp.ne.s32.totalorder %s92, %s95
      %p104 = scmp.eq.s32.totalorder %s19, 1
      %p105 = por %p103, %p104
      %p106 = scmp.ne.s32.totalorder %s95, %s96
      %p107 = scmp.eq.s32.totalorder %s19, 0
      %p108 = por %p106, %p107
      %p109 = scmp.ne.s32.totalorder %s95, %s96
      %p110 = scmp.eq.s32.totalorder %s20, 1
      %p111 = por %p109, %p110
      %p113 = scmp.ne.s32.totalorder %s96, %s112
      %p114 = scmp.eq.s32.totalorder %s20, 0
      %p115 = por %p113, %p114
      %p116 = scmp.le.s32.totalorder 1, %s14
      %p117 = scmp.lt.s32.totalorder %s14, 3
      %p118 = pnand %p116, %p117
      %p119 = pneg %p118
      // Predicated region
      $region9: #{tpu_custom_call.1} parent=5 // pred_check
        _
      $region10: #{tpu_custom_call.1} parent=5 // pred_check_branch
        %121 = sbr.rel (%p118) target = $region12
      $region11: #{tpu_custom_call.1} parent=5 // pred_region
        %s122 = ssub.s32 %s14, 1
        // Predicated region
        $region13: #{tpu_custom_call.1} parent=11 // pred_check
          %p123 = pneg %p61
        $region14: #{tpu_custom_call.1} parent=11 // pred_check_branch
          %125 = sbr.rel (%p123) target = $region16
        $region15: #{tpu_custom_call.1} parent=11 // pred_region
          %s127 = ssub.s32 48, 48
          %128 = vsyncadd [#allocation4], %s127
          %s130 = sshll.u32 %s1, 4
          %s131 = int_to_ptr.vmem [resolvable:$true] %s130
          %133 = dma.vmem_to_smem %s131, 48, [#allocation2], [#allocation4]
        $region16: #{tpu_custom_call.1} parent=11 // pred_fallthru
          _
        // Predicated region
        $region17: #{tpu_custom_call.1} parent=11 // pred_check
          %p134 = pneg %p82
        $region18: #{tpu_custom_call.1} parent=11 // pred_check_branch
          %136 = sbr.rel (%p134) target = $region20
        $region19: #{tpu_custom_call.1} parent=11 // pred_region
          %s138 = ssub.s32 16, 16
          %139 = vsyncadd [#allocation6], %s138
          %s141 = sshll.u32 %s2, 4
          %s142 = int_to_ptr.vmem [resolvable:$true] %s141
          %144 = dma.vmem_to_smem %s142, 16, [#allocation5], [#allocation6]
        $region20: #{tpu_custom_call.1} parent=11 // pred_fallthru
          _
      $region12: #{tpu_custom_call.1} parent=5 // pred_fallthru
        _
      %p145 = scmp.lt.s32.totalorder %s14, 2
      // Predicated region
      $region21: #{tpu_custom_call.1} parent=5 // pred_check
        %p146 = pneg %p145
      $region22: #{tpu_custom_call.1} parent=5 // pred_check_branch
        %148 = sbr.rel (%p146) target = $region24
      $region23: #{tpu_custom_call.1} parent=5 // pred_region
        // Predicated region
        $region25: #{tpu_custom_call.1} parent=23 // pred_check
          %p149 = pneg %p34
        $region26: #{tpu_custom_call.1} parent=23 // pred_check_branch
          %151 = sbr.rel (%p149) target = $region28
        $region27: #{tpu_custom_call.1} parent=23 // pred_region
          %p152 = scmp.lt.s32.totalorder %s14, 1
          %s153 = scalar_select %p152, %s14, 1
          %s154 = smul.addr %s153, 20
          %s155 = smul.addr %s154, 8
          %s156 = scalar_lea.vmem %s0, %s155
        $region28: #{tpu_custom_call.1} parent=23 // pred_fallthru
          _
      $region24: #{tpu_custom_call.1} parent=5 // pred_fallthru
        _
      %p157 = scmp.le.s32.totalorder 1, %s14
      %p158 = scmp.lt.s32.totalorder %s14, 3
      %p159 = pnand %p157, %p158
      %p160 = pneg %p159
      // Predicated region
      $region29: #{tpu_custom_call.1} parent=5 // pred_check
        _
      $region30: #{tpu_custom_call.1} parent=5 // pred_check_branch
        %162 = sbr.rel (%p159) target = $region32
      $region31: #{tpu_custom_call.1} parent=5 // pred_region
        %s163 = ssub.s32 %s14, 1
        // Predicated region
        $region33: #{tpu_custom_call.1} parent=31 // pred_check
          %p164 = pneg %p61
        $region34: #{tpu_custom_call.1} parent=31 // pred_check_branch
          %166 = sbr.rel (%p164) target = $region36
        $region35: #{tpu_custom_call.1} parent=31 // pred_region
          %167 = dma.done [#allocation4], 48
        $region36: #{tpu_custom_call.1} parent=31 // pred_fallthru
          _
        // Predicated region
        $region37: #{tpu_custom_call.1} parent=31 // pred_check
          %p168 = pneg %p82
        $region38: #{tpu_custom_call.1} parent=31 // pred_check_branch
          %170 = sbr.rel (%p168) target = $region40
        $region39: #{tpu_custom_call.1} parent=31 // pred_region
          %171 = dma.done [#allocation6], 16
        $region40: #{tpu_custom_call.1} parent=31 // pred_fallthru
          _
        %172 = sfence
        %p173 = scmp.lt.s32.totalorder %s19, 1
        %s174 = scalar_select %p173, %s19, 1
        %s175 = smul.addr %s174, 20
        %s176 = smul.addr %s175, 8
        %s177 = scalar_lea.vmem %s0, %s176
        %p178 = pneg %p40
        %p179 = pneg %p37
        %p180 = pneg %p61
        %p181 = pneg %p58
        %p182 = pneg %p82
        %p183 = pneg %p79
        %p184 = pneg %p108
        %p185 = pneg %p105
        %s186 = sand.u32 %s95, 1
        %s187 = scalar_lea.sflag [#allocation3], %s186
        %s188 = sand.u32 %s95, 1
        %s189 = smul.addr %s188, 256
        %s190 = scalar_lea.vmem [#allocation7], %s189
        %p191 = scmp.lt.s32.totalorder %s19, 1
        %s192 = scalar_select %p191, %s19, 1
        %s193 = smul.addr %s192, 20
        %s194 = smul.addr %s193, 8
        %s195 = scalar_lea.vmem %s0, %s194
        %v196 = vld [vmem:[%s195] sm:$0xff]
        %v197 = vld [vmem:[%s195 + $0x8] sm:$0xff]
        %v198 = vld [vmem:[%s195 + $0x10] sm:$0xff]
        %v199 = vld [vmem:[%s195 + $0x18] sm:$0xff]
        %v200 = vld [vmem:[%s195 + $0x20] sm:$0x3]
        %s201 = sld [smem:[#allocation2]]
        %v202 = vstv %s201
        %v203 = vmul.f32 %v202, %v196
        %v204 = vmul.f32 %v202, %v197
        %v205 = vmul.f32 %v202, %v198
        %v206 = vmul.f32 %v202, %v199
        %v207 = vadd.f32 %v203, 0.0
        %v208 = vadd.f32 %v204, 0.0
        %v209 = vadd.f32 %v205, 0.0
        %v210 = vadd.f32 %v206, 0.0
        %s211 = sld [smem:[#allocation2 + $0x24]]
        %v212 = vstv %s211
        %v213 = vmul.f32 %v212, %v196
        %v214 = vmul.f32 %v212, %v197
        %v215 = vmul.f32 %v212, %v198
        %v216 = vmul.f32 %v212, %v199
        %v217 = vadd.f32 %v213, 0.0
        %v218 = vadd.f32 %v214, 0.0
        %v219 = vadd.f32 %v215, 0.0
        %v220 = vadd.f32 %v216, 0.0
        %s221 = sld [smem:[#allocation2 + $0x48]]
        %v222 = vstv %s221
        %v223 = vmul.f32 %v222, %v196
        %v224 = vmul.f32 %v222, %v197
        %v225 = vmul.f32 %v222, %v198
        %v226 = vmul.f32 %v222, %v199
        %v227 = vadd.f32 %v223, 0.0
        %v228 = vadd.f32 %v224, 0.0
        %v229 = vadd.f32 %v225, 0.0
        %v230 = vadd.f32 %v226, 0.0
        %s231 = sld [smem:[#allocation2 + $0x6c]]
        %v232 = vstv %s231
        %v233 = vmul.f32 %v232, %v196
        %v234 = vmul.f32 %v232, %v197
        %v235 = vmul.f32 %v232, %v198
        %v236 = vmul.f32 %v232, %v199
        %v237 = vadd.f32 %v233, 0.0
        %v238 = vadd.f32 %v234, 0.0
        %v239 = vadd.f32 %v235, 0.0
        %v240 = vadd.f32 %v236, 0.0
        %s241 = sld [smem:[#allocation2 + $0x90]]
        %v242 = vstv %s241
        %v243 = vmul.f32 %v242, %v196
        %v244 = vmul.f32 %v242, %v197
        %v245 = vmul.f32 %v242, %v198
        %v246 = vmul.f32 %v242, %v199
        %v247 = vadd.f32 %v243, 0.0
        %v248 = vadd.f32 %v244, 0.0
        %v249 = vadd.f32 %v245, 0.0
        %v250 = vadd.f32 %v246, 0.0
        %s251 = sld [smem:[#allocation2 + $0xb4]]
        %v252 = vstv %s251
        %v253 = vmul.f32 %v252, %v196
        %v254 = vmul.f32 %v252, %v197
        %v255 = vmul.f32 %v252, %v198
        %v256 = vmul.f32 %v252, %v199
        %v257 = vadd.f32 %v253, 0.0
        %v258 = vadd.f32 %v254, 0.0
        %v259 = vadd.f32 %v255, 0.0
        %v260 = vadd.f32 %v256, 0.0
        %s261 = sld [smem:[#allocation2 + $0xd8]]
        %v262 = vstv %s261
        %v263 = vmul.f32 %v262, %v196
        %v264 = vmul.f32 %v262, %v197
        %v265 = vmul.f32 %v262, %v198
        %v266 = vmul.f32 %v262, %v199
        %v267 = vadd.f32 %v263, 0.0
        %v268 = vadd.f32 %v264, 0.0
        %v269 = vadd.f32 %v265, 0.0
        %v270 = vadd.f32 %v266, 0.0
        %s271 = sld [smem:[#allocation2 + $0xfc]]
        %v272 = vstv %s271
        %v273 = vmul.f32 %v272, %v196
        %v274 = vmul.f32 %v272, %v197
        %v275 = vmul.f32 %v272, %v198
        %v276 = vmul.f32 %v272, %v199
        %v277 = vadd.f32 %v273, 0.0
        %v278 = vadd.f32 %v274, 0.0
        %v279 = vadd.f32 %v275, 0.0
        %v280 = vadd.f32 %v276, 0.0
        %s281 = sld [smem:[#allocation2 + $0x1]]
        %v282 = vstv %s281
        %v283 = vmul.f32 %v282, %v196
        %v284 = vmul.f32 %v282, %v197
        %v285 = vmul.f32 %v282, %v198
        %v286 = vmul.f32 %v282, %v199
        %291 = vrot.lane.b32.xlu0 %v283, 127
        %v292 = vpop.permute.xlu0 %291
        %293 = vrot.lane.b32.xlu0 %v284, 127
        %v294 = vpop.permute.xlu0 %293
        %295 = vrot.lane.b32.xlu0 %v285, 127
        %v296 = vpop.permute.xlu0 %295
        %297 = vrot.lane.b32.xlu0 %v286, 127
        %v298 = vpop.permute.xlu0 %297
        %v303 = vadd.f32 %v207, %v292
        %v304 = vadd.f32 %v208, %v294
        %v305 = vadd.f32 %v209, %v296
        %v306 = vadd.f32 %v210, %v298
        %s307 = sld [smem:[#allocation2 + $0x25]]
        %v308 = vstv %s307
        %v309 = vmul.f32 %v308, %v196
        %v310 = vmul.f32 %v308, %v197
        %v311 = vmul.f32 %v308, %v198
        %v312 = vmul.f32 %v308, %v199
        %317 = vrot.lane.b32.xlu0 %v309, 127
        %v318 = vpop.permute.xlu0 %317
        %319 = vrot.lane.b32.xlu0 %v310, 127
        %v320 = vpop.permute.xlu0 %319
        %321 = vrot.lane.b32.xlu0 %v311, 127
        %v322 = vpop.permute.xlu0 %321
        %323 = vrot.lane.b32.xlu0 %v312, 127
        %v324 = vpop.permute.xlu0 %323
        %v329 = vadd.f32 %v217, %v318
        %v330 = vadd.f32 %v218, %v320
        %v331 = vadd.f32 %v219, %v322
        %v332 = vadd.f32 %v220, %v324
        %s333 = sld [smem:[#allocation2 + $0x49]]
        %v334 = vstv %s333
        %v335 = vmul.f32 %v334, %v196
        %v336 = vmul.f32 %v334, %v197
        %v337 = vmul.f32 %v334, %v198
        %v338 = vmul.f32 %v334, %v199
        %343 = vrot.lane.b32.xlu0 %v335, 127
        %v344 = vpop.permute.xlu0 %343
        %345 = vrot.lane.b32.xlu0 %v336, 127
        %v346 = vpop.permute.xlu0 %345
        %347 = vrot.lane.b32.xlu0 %v337, 127
        %v348 = vpop.permute.xlu0 %347
        %349 = vrot.lane.b32.xlu0 %v338, 127
        %v350 = vpop.permute.xlu0 %349
        %v355 = vadd.f32 %v227, %v344
        %v356 = vadd.f32 %v228, %v346
        %v357 = vadd.f32 %v229, %v348
        %v358 = vadd.f32 %v230, %v350
        %s359 = sld [smem:[#allocation2 + $0x6d]]
        %v360 = vstv %s359
        %v361 = vmul.f32 %v360, %v196
        %v362 = vmul.f32 %v360, %v197
        %v363 = vmul.f32 %v360, %v198
        %v364 = vmul.f32 %v360, %v199
        %369 = vrot.lane.b32.xlu0 %v361, 127
        %v370 = vpop.permute.xlu0 %369
        %371 = vrot.lane.b32.xlu0 %v362, 127
        %v372 = vpop.permute.xlu0 %371
        %373 = vrot.lane.b32.xlu0 %v363, 127
        %v374 = vpop.permute.xlu0 %373
        %375 = vrot.lane.b32.xlu0 %v364, 127
        %v376 = vpop.permute.xlu0 %375
        %v381 = vadd.f32 %v237, %v370
        %v382 = vadd.f32 %v238, %v372
        %v383 = vadd.f32 %v239, %v374
        %v384 = vadd.f32 %v240, %v376
        %s385 = sld [smem:[#allocation2 + $0x91]]
        %v386 = vstv %s385
        %v387 = vmul.f32 %v386, %v196
        %v388 = vmul.f32 %v386, %v197
        %v389 = vmul.f32 %v386, %v198
        %v390 = vmul.f32 %v386, %v199
        %395 = vrot.lane.b32.xlu0 %v387, 127
        %v396 = vpop.permute.xlu0 %395
        %397 = vrot.lane.b32.xlu0 %v388, 127
        %v398 = vpop.permute.xlu0 %397
        %399 = vrot.lane.b32.xlu0 %v389, 127
        %v400 = vpop.permute.xlu0 %399
        %401 = vrot.lane.b32.xlu0 %v390, 127
        %v402 = vpop.permute.xlu0 %401
        %v407 = vadd.f32 %v247, %v396
        %v408 = vadd.f32 %v248, %v398
        %v409 = vadd.f32 %v249, %v400
        %v410 = vadd.f32 %v250, %v402
        %s411 = sld [smem:[#allocation2 + $0xb5]]
        %v412 = vstv %s411
        %v413 = vmul.f32 %v412, %v196
        %v414 = vmul.f32 %v412, %v197
        %v415 = vmul.f32 %v412, %v198
        %v416 = vmul.f32 %v412, %v199
        %421 = vrot.lane.b32.xlu0 %v413, 127
        %v422 = vpop.permute.xlu0 %421
        %423 = vrot.lane.b32.xlu0 %v414, 127
        %v424 = vpop.permute.xlu0 %423
        %425 = vrot.lane.b32.xlu0 %v415, 127
        %v426 = vpop.permute.xlu0 %425
        %427 = vrot.lane.b32.xlu0 %v416, 127
        %v428 = vpop.permute.xlu0 %427
        %v433 = vadd.f32 %v257, %v422
        %v434 = vadd.f32 %v258, %v424
        %v435 = vadd.f32 %v259, %v426
        %v436 = vadd.f32 %v260, %v428
        %s437 = sld [smem:[#allocation2 + $0xd9]]
        %v438 = vstv %s437
        %v439 = vmul.f32 %v438, %v196
        %v440 = vmul.f32 %v438, %v197
        %v441 = vmul.f32 %v438, %v198
        %v442 = vmul.f32 %v438, %v199
        %447 = vrot.lane.b32.xlu0 %v439, 127
        %v448 = vpop.permute.xlu0 %447
        %449 = vrot.lane.b32.xlu0 %v440, 127
        %v450 = vpop.permute.xlu0 %449
        %451 = vrot.lane.b32.xlu0 %v441, 127
        %v452 = vpop.permute.xlu0 %451
        %453 = vrot.lane.b32.xlu0 %v442, 127
        %v454 = vpop.permute.xlu0 %453
        %v459 = vadd.f32 %v267, %v448
        %v460 = vadd.f32 %v268, %v450
        %v461 = vadd.f32 %v269, %v452
        %v462 = vadd.f32 %v270, %v454
        %s463 = sld [smem:[#allocation2 + $0xfd]]
        %v464 = vstv %s463
        %v465 = vmul.f32 %v464, %v196
        %v466 = vmul.f32 %v464, %v197
        %v467 = vmul.f32 %v464, %v198
        %v468 = vmul.f32 %v464, %v199
        %473 = vrot.lane.b32.xlu0 %v465, 127
        %v474 = vpop.permute.xlu0 %473
        %475 = vrot.lane.b32.xlu0 %v466, 127
        %v476 = vpop.permute.xlu0 %475
        %477 = vrot.lane.b32.xlu0 %v467, 127
        %v478 = vpop.permute.xlu0 %477
        %479 = vrot.lane.b32.xlu0 %v468, 127
        %v480 = vpop.permute.xlu0 %479
        %v485 = vadd.f32 %v277, %v474
        %v486 = vadd.f32 %v278, %v476
        %v487 = vadd.f32 %v279, %v478
        %v488 = vadd.f32 %v280, %v480
        %s489 = sld [smem:[#allocation2 + $0x2]]
        %v490 = vstv %s489
        %v491 = vmul.f32 %v490, %v196
        %v492 = vmul.f32 %v490, %v197
        %v493 = vmul.f32 %v490, %v198
        %v494 = vmul.f32 %v490, %v199
        %499 = vrot.lane.b32.xlu0 %v491, 126
        %v500 = vpop.permute.xlu0 %499
        %501 = vrot.lane.b32.xlu0 %v492, 126
        %v502 = vpop.permute.xlu0 %501
        %503 = vrot.lane.b32.xlu0 %v493, 126
        %v504 = vpop.permute.xlu0 %503
        %505 = vrot.lane.b32.xlu0 %v494, 126
        %v506 = vpop.permute.xlu0 %505
        %v511 = vadd.f32 %v303, %v500
        %v512 = vadd.f32 %v304, %v502
        %v513 = vadd.f32 %v305, %v504
        %v514 = vadd.f32 %v306, %v506
        %s515 = sld [smem:[#allocation2 + $0x26]]
        %v516 = vstv %s515
        %v517 = vmul.f32 %v516, %v196
        %v518 = vmul.f32 %v516, %v197
        %v519 = vmul.f32 %v516, %v198
        %v520 = vmul.f32 %v516, %v199
        %525 = vrot.lane.b32.xlu0 %v517, 126
        %v526 = vpop.permute.xlu0 %525
        %527 = vrot.lane.b32.xlu0 %v518, 126
        %v528 = vpop.permute.xlu0 %527
        %529 = vrot.lane.b32.xlu0 %v519, 126
        %v530 = vpop.permute.xlu0 %529
        %531 = vrot.lane.b32.xlu0 %v520, 126
        %v532 = vpop.permute.xlu0 %531
        %v537 = vadd.f32 %v329, %v526
        %v538 = vadd.f32 %v330, %v528
        %v539 = vadd.f32 %v331, %v530
        %v540 = vadd.f32 %v332, %v532
        %s541 = sld [smem:[#allocation2 + $0x4a]]
        %v542 = vstv %s541
        %v543 = vmul.f32 %v542, %v196
        %v544 = vmul.f32 %v542, %v197
        %v545 = vmul.f32 %v542, %v198
        %v546 = vmul.f32 %v542, %v199
        %551 = vrot.lane.b32.xlu0 %v543, 126
        %v552 = vpop.permute.xlu0 %551
        %553 = vrot.lane.b32.xlu0 %v544, 126
        %v554 = vpop.permute.xlu0 %553
        %555 = vrot.lane.b32.xlu0 %v545, 126
        %v556 = vpop.permute.xlu0 %555
        %557 = vrot.lane.b32.xlu0 %v546, 126
        %v558 = vpop.permute.xlu0 %557
        %v563 = vadd.f32 %v355, %v552
        %v564 = vadd.f32 %v356, %v554
        %v565 = vadd.f32 %v357, %v556
        %v566 = vadd.f32 %v358, %v558
        %s567 = sld [smem:[#allocation2 + $0x6e]]
        %v568 = vstv %s567
        %v569 = vmul.f32 %v568, %v196
        %v570 = vmul.f32 %v568, %v197
        %v571 = vmul.f32 %v568, %v198
        %v572 = vmul.f32 %v568, %v199
        %577 = vrot.lane.b32.xlu0 %v569, 126
        %v578 = vpop.permute.xlu0 %577
        %579 = vrot.lane.b32.xlu0 %v570, 126
        %v580 = vpop.permute.xlu0 %579
        %581 = vrot.lane.b32.xlu0 %v571, 126
        %v582 = vpop.permute.xlu0 %581
        %583 = vrot.lane.b32.xlu0 %v572, 126
        %v584 = vpop.permute.xlu0 %583
        %v589 = vadd.f32 %v381, %v578
        %v590 = vadd.f32 %v382, %v580
        %v591 = vadd.f32 %v383, %v582
        %v592 = vadd.f32 %v384, %v584
        %s593 = sld [smem:[#allocation2 + $0x92]]
        %v594 = vstv %s593
        %v595 = vmul.f32 %v594, %v196
        %v596 = vmul.f32 %v594, %v197
        %v597 = vmul.f32 %v594, %v198
        %v598 = vmul.f32 %v594, %v199
        %603 = vrot.lane.b32.xlu0 %v595, 126
        %v604 = vpop.permute.xlu0 %603
        %605 = vrot.lane.b32.xlu0 %v596, 126
        %v606 = vpop.permute.xlu0 %605
        %607 = vrot.lane.b32.xlu0 %v597, 126
        %v608 = vpop.permute.xlu0 %607
        %609 = vrot.lane.b32.xlu0 %v598, 126
        %v610 = vpop.permute.xlu0 %609
        %v615 = vadd.f32 %v407, %v604
        %v616 = vadd.f32 %v408, %v606
        %v617 = vadd.f32 %v409, %v608
        %v618 = vadd.f32 %v410, %v610
        %s619 = sld [smem:[#allocation2 + $0xb6]]
        %v620 = vstv %s619
        %v621 = vmul.f32 %v620, %v196
        %v622 = vmul.f32 %v620, %v197
        %v623 = vmul.f32 %v620, %v198
        %v624 = vmul.f32 %v620, %v199
        %629 = vrot.lane.b32.xlu0 %v621, 126
        %v630 = vpop.permute.xlu0 %629
        %631 = vrot.lane.b32.xlu0 %v622, 126
        %v632 = vpop.permute.xlu0 %631
        %633 = vrot.lane.b32.xlu0 %v623, 126
        %v634 = vpop.permute.xlu0 %633
        %635 = vrot.lane.b32.xlu0 %v624, 126
        %v636 = vpop.permute.xlu0 %635
        %v641 = vadd.f32 %v433, %v630
        %v642 = vadd.f32 %v434, %v632
        %v643 = vadd.f32 %v435, %v634
        %v644 = vadd.f32 %v436, %v636
        %s645 = sld [smem:[#allocation2 + $0xda]]
        %v646 = vstv %s645
        %v647 = vmul.f32 %v646, %v196
        %v648 = vmul.f32 %v646, %v197
        %v649 = vmul.f32 %v646, %v198
        %v650 = vmul.f32 %v646, %v199
        %655 = vrot.lane.b32.xlu0 %v647, 126
        %v656 = vpop.permute.xlu0 %655
        %657 = vrot.lane.b32.xlu0 %v648, 126
        %v658 = vpop.permute.xlu0 %657
        %659 = vrot.lane.b32.xlu0 %v649, 126
        %v660 = vpop.permute.xlu0 %659
        %661 = vrot.lane.b32.xlu0 %v650, 126
        %v662 = vpop.permute.xlu0 %661
        %v667 = vadd.f32 %v459, %v656
        %v668 = vadd.f32 %v460, %v658
        %v669 = vadd.f32 %v461, %v660
        %v670 = vadd.f32 %v462, %v662
        %s671 = sld [smem:[#allocation2 + $0xfe]]
        %v672 = vstv %s671
        %v673 = vmul.f32 %v672, %v196
        %v674 = vmul.f32 %v672, %v197
        %v675 = vmul.f32 %v672, %v198
        %v676 = vmul.f32 %v672, %v199
        %681 = vrot.lane.b32.xlu0 %v673, 126
        %v682 = vpop.permute.xlu0 %681
        %683 = vrot.lane.b32.xlu0 %v674, 126
        %v684 = vpop.permute.xlu0 %683
        %685 = vrot.lane.b32.xlu0 %v675, 126
        %v686 = vpop.permute.xlu0 %685
        %687 = vrot.lane.b32.xlu0 %v676, 126
        %v688 = vpop.permute.xlu0 %687
        %v693 = vadd.f32 %v485, %v682
        %v694 = vadd.f32 %v486, %v684
        %v695 = vadd.f32 %v487, %v686
        %v696 = vadd.f32 %v488, %v688
        %s697 = sld [smem:[#allocation2 + $0x3]]
        %v698 = vstv %s697
        %v699 = vmul.f32 %v698, %v196
        %v700 = vmul.f32 %v698, %v197
        %v701 = vmul.f32 %v698, %v198
        %v702 = vmul.f32 %v698, %v199
        %v703 = vmul.f32 %v698, %v200
        %vm709 = vcmask 1046528
        %v710 = vrot.slane %v699, 1
        %v711 = vrot.slane %v700, 1
        %v712 = vsel %vm709, %v710, %v711
        %v713 = vrot.slane %v701, 1
        %v714 = vsel %vm709, %v711, %v713
        %v715 = vrot.slane %v702, 1
        %v716 = vsel %vm709, %v713, %v715
        %v717 = vrot.slane %v703, 1
        %v718 = vsel %vm709, %v715, %v717
        %v723 = vadd.f32 %v511, %v712
        %v724 = vadd.f32 %v512, %v714
        %v725 = vadd.f32 %v513, %v716
        %v726 = vadd.f32 %v514, %v718
        %s727 = sld [smem:[#allocation2 + $0x27]]
        %v728 = vstv %s727
        %v729 = vmul.f32 %v728, %v196
        %v730 = vmul.f32 %v728, %v197
        %v731 = vmul.f32 %v728, %v198
        %v732 = vmul.f32 %v728, %v199
        %v733 = vmul.f32 %v728, %v200
        %v739 = vrot.slane %v729, 1
        %v740 = vrot.slane %v730, 1
        %v741 = vsel %vm709, %v739, %v740
        %v742 = vrot.slane %v731, 1
        %v743 = vsel %vm709, %v740, %v742
        %v744 = vrot.slane %v732, 1
        %v745 = vsel %vm709, %v742, %v744
        %v746 = vrot.slane %v733, 1
        %v747 = vsel %vm709, %v744, %v746
        %v752 = vadd.f32 %v537, %v741
        %v753 = vadd.f32 %v538, %v743
        %v754 = vadd.f32 %v539, %v745
        %v755 = vadd.f32 %v540, %v747
        %s756 = sld [smem:[#allocation2 + $0x4b]]
        %v757 = vstv %s756
        %v758 = vmul.f32 %v757, %v196
        %v759 = vmul.f32 %v757, %v197
        %v760 = vmul.f32 %v757, %v198
        %v761 = vmul.f32 %v757, %v199
        %v762 = vmul.f32 %v757, %v200
        %v768 = vrot.slane %v758, 1
        %v769 = vrot.slane %v759, 1
        %v770 = vsel %vm709, %v768, %v769
        %v771 = vrot.slane %v760, 1
        %v772 = vsel %vm709, %v769, %v771
        %v773 = vrot.slane %v761, 1
        %v774 = vsel %vm709, %v771, %v773
        %v775 = vrot.slane %v762, 1
        %v776 = vsel %vm709, %v773, %v775
        %v781 = vadd.f32 %v563, %v770
        %v782 = vadd.f32 %v564, %v772
        %v783 = vadd.f32 %v565, %v774
        %v784 = vadd.f32 %v566, %v776
        %s785 = sld [smem:[#allocation2 + $0x6f]]
        %v786 = vstv %s785
        %v787 = vmul.f32 %v786, %v196
        %v788 = vmul.f32 %v786, %v197
        %v789 = vmul.f32 %v786, %v198
        %v790 = vmul.f32 %v786, %v199
        %v791 = vmul.f32 %v786, %v200
        %v797 = vrot.slane %v787, 1
        %v798 = vrot.slane %v788, 1
        %v799 = vsel %vm709, %v797, %v798
        %v800 = vrot.slane %v789, 1
        %v801 = vsel %vm709, %v798, %v800
        %v802 = vrot.slane %v790, 1
        %v803 = vsel %vm709, %v800, %v802
        %v804 = vrot.slane %v791, 1
        %v805 = vsel %vm709, %v802, %v804
        %v810 = vadd.f32 %v589, %v799
        %v811 = vadd.f32 %v590, %v801
        %v812 = vadd.f32 %v591, %v803
        %v813 = vadd.f32 %v592, %v805
        %s814 = sld [smem:[#allocation2 + $0x93]]
        %v815 = vstv %s814
        %v816 = vmul.f32 %v815, %v196
        %v817 = vmul.f32 %v815, %v197
        %v818 = vmul.f32 %v815, %v198
        %v819 = vmul.f32 %v815, %v199
        %v820 = vmul.f32 %v815, %v200
        %v826 = vrot.slane %v816, 1
        %v827 = vrot.slane %v817, 1
        %v828 = vsel %vm709, %v826, %v827
        %v829 = vrot.slane %v818, 1
        %v830 = vsel %vm709, %v827, %v829
        %v831 = vrot.slane %v819, 1
        %v832 = vsel %vm709, %v829, %v831
        %v833 = vrot.slane %v820, 1
        %v834 = vsel %vm709, %v831, %v833
        %v839 = vadd.f32 %v615, %v828
        %v840 = vadd.f32 %v616, %v830
        %v841 = vadd.f32 %v617, %v832
        %v842 = vadd.f32 %v618, %v834
        %s843 = sld [smem:[#allocation2 + $0xb7]]
        %v844 = vstv %s843
        %v845 = vmul.f32 %v844, %v196
        %v846 = vmul.f32 %v844, %v197
        %v847 = vmul.f32 %v844, %v198
        %v848 = vmul.f32 %v844, %v199
        %v849 = vmul.f32 %v844, %v200
        %v855 = vrot.slane %v845, 1
        %v856 = vrot.slane %v846, 1
        %v857 = vsel %vm709, %v855, %v856
        %v858 = vrot.slane %v847, 1
        %v859 = vsel %vm709, %v856, %v858
        %v860 = vrot.slane %v848, 1
        %v861 = vsel %vm709, %v858, %v860
        %v862 = vrot.slane %v849, 1
        %v863 = vsel %vm709, %v860, %v862
        %v868 = vadd.f32 %v641, %v857
        %v869 = vadd.f32 %v642, %v859
        %v870 = vadd.f32 %v643, %v861
        %v871 = vadd.f32 %v644, %v863
        %s872 = sld [smem:[#allocation2 + $0xdb]]
        %v873 = vstv %s872
        %v874 = vmul.f32 %v873, %v196
        %v875 = vmul.f32 %v873, %v197
        %v876 = vmul.f32 %v873, %v198
        %v877 = vmul.f32 %v873, %v199
        %v878 = vmul.f32 %v873, %v200
        %v884 = vrot.slane %v874, 1
        %v885 = vrot.slane %v875, 1
        %v886 = vsel %vm709, %v884, %v885
        %v887 = vrot.slane %v876, 1
        %v888 = vsel %vm709, %v885, %v887
        %v889 = vrot.slane %v877, 1
        %v890 = vsel %vm709, %v887, %v889
        %v891 = vrot.slane %v878, 1
        %v892 = vsel %vm709, %v889, %v891
        %v897 = vadd.f32 %v667, %v886
        %v898 = vadd.f32 %v668, %v888
        %v899 = vadd.f32 %v669, %v890
        %v900 = vadd.f32 %v670, %v892
        %s901 = sld [smem:[#allocation2 + $0xff]]
        %v902 = vstv %s901
        %v903 = vmul.f32 %v902, %v196
        %v904 = vmul.f32 %v902, %v197
        %v905 = vmul.f32 %v902, %v198
        %v906 = vmul.f32 %v902, %v199
        %v907 = vmul.f32 %v902, %v200
        %v913 = vrot.slane %v903, 1
        %v914 = vrot.slane %v904, 1
        %v915 = vsel %vm709, %v913, %v914
        %v916 = vrot.slane %v905, 1
        %v917 = vsel %vm709, %v914, %v916
        %v918 = vrot.slane %v906, 1
        %v919 = vsel %vm709, %v916, %v918
        %v920 = vrot.slane %v907, 1
        %v921 = vsel %vm709, %v918, %v920
        %v926 = vadd.f32 %v693, %v915
        %v927 = vadd.f32 %v694, %v917
        %v928 = vadd.f32 %v695, %v919
        %v929 = vadd.f32 %v696, %v921
        %s930 = sld [smem:[#allocation2 + $0x4]]
        %v931 = vstv %s930
        %v932 = vmul.f32 %v931, %v196
        %v933 = vmul.f32 %v931, %v197
        %v934 = vmul.f32 %v931, %v198
        %v935 = vmul.f32 %v931, %v199
        %v936 = vmul.f32 %v931, %v200
        %v942 = vrot.slane %v932, 1
        %v943 = vrot.slane %v933, 1
        %v944 = vsel %vm709, %v942, %v943
        %v945 = vrot.slane %v934, 1
        %v946 = vsel %vm709, %v943, %v945
        %v947 = vrot.slane %v935, 1
        %v948 = vsel %vm709, %v945, %v947
        %v949 = vrot.slane %v936, 1
        %v950 = vsel %vm709, %v947, %v949
        %951 = vrot.lane.b32.xlu0 %v944, 127
        %v952 = vpop.permute.xlu0 %951
        %953 = vrot.lane.b32.xlu0 %v946, 127
        %v954 = vpop.permute.xlu0 %953
        %955 = vrot.lane.b32.xlu0 %v948, 127
        %v956 = vpop.permute.xlu0 %955
        %957 = vrot.lane.b32.xlu0 %v950, 127
        %v958 = vpop.permute.xlu0 %957
        %v963 = vadd.f32 %v723, %v952
        %v964 = vadd.f32 %v724, %v954
        %v965 = vadd.f32 %v725, %v956
        %v966 = vadd.f32 %v726, %v958
        %s967 = sld [smem:[#allocation2 + $0x28]]
        %v968 = vstv %s967
        %v969 = vmul.f32 %v968, %v196
        %v970 = vmul.f32 %v968, %v197
        %v971 = vmul.f32 %v968, %v198
        %v972 = vmul.f32 %v968, %v199
        %v973 = vmul.f32 %v968, %v200
        %v979 = vrot.slane %v969, 1
        %v980 = vrot.slane %v970, 1
        %v981 = vsel %vm709, %v979, %v980
        %v982 = vrot.slane %v971, 1
        %v983 = vsel %vm709, %v980, %v982
        %v984 = vrot.slane %v972, 1
        %v985 = vsel %vm709, %v982, %v984
        %v986 = vrot.slane %v973, 1
        %v987 = vsel %vm709, %v984, %v986
        %988 = vrot.lane.b32.xlu0 %v981, 127
        %v989 = vpop.permute.xlu0 %988
        %990 = vrot.lane.b32.xlu0 %v983, 127
        %v991 = vpop.permute.xlu0 %990
        %992 = vrot.lane.b32.xlu0 %v985, 127
        %v993 = vpop.permute.xlu0 %992
        %994 = vrot.lane.b32.xlu0 %v987, 127
        %v995 = vpop.permute.xlu0 %994
        %v1000 = vadd.f32 %v752, %v989
        %v1001 = vadd.f32 %v753, %v991
        %v1002 = vadd.f32 %v754, %v993
        %v1003 = vadd.f32 %v755, %v995
        %s1004 = sld [smem:[#allocation2 + $0x4c]]
        %v1005 = vstv %s1004
        %v1006 = vmul.f32 %v1005, %v196
        %v1007 = vmul.f32 %v1005, %v197
        %v1008 = vmul.f32 %v1005, %v198
        %v1009 = vmul.f32 %v1005, %v199
        %v1010 = vmul.f32 %v1005, %v200
        %v1016 = vrot.slane %v1006, 1
        %v1017 = vrot.slane %v1007, 1
        %v1018 = vsel %vm709, %v1016, %v1017
        %v1019 = vrot.slane %v1008, 1
        %v1020 = vsel %vm709, %v1017, %v1019
        %v1021 = vrot.slane %v1009, 1
        %v1022 = vsel %vm709, %v1019, %v1021
        %v1023 = vrot.slane %v1010, 1
        %v1024 = vsel %vm709, %v1021, %v1023
        %1025 = vrot.lane.b32.xlu0 %v1018, 127
        %v1026 = vpop.permute.xlu0 %1025
        %1027 = vrot.lane.b32.xlu0 %v1020, 127
        %v1028 = vpop.permute.xlu0 %1027
        %1029 = vrot.lane.b32.xlu0 %v1022, 127
        %v1030 = vpop.permute.xlu0 %1029
        %1031 = vrot.lane.b32.xlu0 %v1024, 127
        %v1032 = vpop.permute.xlu0 %1031
        %v1037 = vadd.f32 %v781, %v1026
        %v1038 = vadd.f32 %v782, %v1028
        %v1039 = vadd.f32 %v783, %v1030
        %v1040 = vadd.f32 %v784, %v1032
        %s1041 = sld [smem:[#allocation2 + $0x70]]
        %v1042 = vstv %s1041
        %v1043 = vmul.f32 %v1042, %v196
        %v1044 = vmul.f32 %v1042, %v197
        %v1045 = vmul.f32 %v1042, %v198
        %v1046 = vmul.f32 %v1042, %v199
        %v1047 = vmul.f32 %v1042, %v200
        %v1053 = vrot.slane %v1043, 1
        %v1054 = vrot.slane %v1044, 1
        %v1055 = vsel %vm709, %v1053, %v1054
        %v1056 = vrot.slane %v1045, 1
        %v1057 = vsel %vm709, %v1054, %v1056
        %v1058 = vrot.slane %v1046, 1
        %v1059 = vsel %vm709, %v1056, %v1058
        %v1060 = vrot.slane %v1047, 1
        %v1061 = vsel %vm709, %v1058, %v1060
        %1062 = vrot.lane.b32.xlu0 %v1055, 127
        %v1063 = vpop.permute.xlu0 %1062
        %1064 = vrot.lane.b32.xlu0 %v1057, 127
        %v1065 = vpop.permute.xlu0 %1064
        %1066 = vrot.lane.b32.xlu0 %v1059, 127
        %v1067 = vpop.permute.xlu0 %1066
        %1068 = vrot.lane.b32.xlu0 %v1061, 127
        %v1069 = vpop.permute.xlu0 %1068
        %v1074 = vadd.f32 %v810, %v1063
        %v1075 = vadd.f32 %v811, %v1065
        %v1076 = vadd.f32 %v812, %v1067
        %v1077 = vadd.f32 %v813, %v1069
        %s1078 = sld [smem:[#allocation2 + $0x94]]
        %v1079 = vstv %s1078
        %v1080 = vmul.f32 %v1079, %v196
        %v1081 = vmul.f32 %v1079, %v197
        %v1082 = vmul.f32 %v1079, %v198
        %v1083 = vmul.f32 %v1079, %v199
        %v1084 = vmul.f32 %v1079, %v200
        %v1090 = vrot.slane %v1080, 1
        %v1091 = vrot.slane %v1081, 1
        %v1092 = vsel %vm709, %v1090, %v1091
        %v1093 = vrot.slane %v1082, 1
        %v1094 = vsel %vm709, %v1091, %v1093
        %v1095 = vrot.slane %v1083, 1
        %v1096 = vsel %vm709, %v1093, %v1095
        %v1097 = vrot.slane %v1084, 1
        %v1098 = vsel %vm709, %v1095, %v1097
        %1099 = vrot.lane.b32.xlu0 %v1092, 127
        %v1100 = vpop.permute.xlu0 %1099
        %1101 = vrot.lane.b32.xlu0 %v1094, 127
        %v1102 = vpop.permute.xlu0 %1101
        %1103 = vrot.lane.b32.xlu0 %v1096, 127
        %v1104 = vpop.permute.xlu0 %1103
        %1105 = vrot.lane.b32.xlu0 %v1098, 127
        %v1106 = vpop.permute.xlu0 %1105
        %v1111 = vadd.f32 %v839, %v1100
        %v1112 = vadd.f32 %v840, %v1102
        %v1113 = vadd.f32 %v841, %v1104
        %v1114 = vadd.f32 %v842, %v1106
        %s1115 = sld [smem:[#allocation2 + $0xb8]]
        %v1116 = vstv %s1115
        %v1117 = vmul.f32 %v1116, %v196
        %v1118 = vmul.f32 %v1116, %v197
        %v1119 = vmul.f32 %v1116, %v198
        %v1120 = vmul.f32 %v1116, %v199
        %v1121 = vmul.f32 %v1116, %v200
        %v1127 = vrot.slane %v1117, 1
        %v1128 = vrot.slane %v1118, 1
        %v1129 = vsel %vm709, %v1127, %v1128
        %v1130 = vrot.slane %v1119, 1
        %v1131 = vsel %vm709, %v1128, %v1130
        %v1132 = vrot.slane %v1120, 1
        %v1133 = vsel %vm709, %v1130, %v1132
        %v1134 = vrot.slane %v1121, 1
        %v1135 = vsel %vm709, %v1132, %v1134
        %1136 = vrot.lane.b32.xlu0 %v1129, 127
        %v1137 = vpop.permute.xlu0 %1136
        %1138 = vrot.lane.b32.xlu0 %v1131, 127
        %v1139 = vpop.permute.xlu0 %1138
        %1140 = vrot.lane.b32.xlu0 %v1133, 127
        %v1141 = vpop.permute.xlu0 %1140
        %1142 = vrot.lane.b32.xlu0 %v1135, 127
        %v1143 = vpop.permute.xlu0 %1142
        %v1148 = vadd.f32 %v868, %v1137
        %v1149 = vadd.f32 %v869, %v1139
        %v1150 = vadd.f32 %v870, %v1141
        %v1151 = vadd.f32 %v871, %v1143
        %s1152 = sld [smem:[#allocation2 + $0xdc]]
        %v1153 = vstv %s1152
        %v1154 = vmul.f32 %v1153, %v196
        %v1155 = vmul.f32 %v1153, %v197
        %v1156 = vmul.f32 %v1153, %v198
        %v1157 = vmul.f32 %v1153, %v199
        %v1158 = vmul.f32 %v1153, %v200
        %v1164 = vrot.slane %v1154, 1
        %v1165 = vrot.slane %v1155, 1
        %v1166 = vsel %vm709, %v1164, %v1165
        %v1167 = vrot.slane %v1156, 1
        %v1168 = vsel %vm709, %v1165, %v1167
        %v1169 = vrot.slane %v1157, 1
        %v1170 = vsel %vm709, %v1167, %v1169
        %v1171 = vrot.slane %v1158, 1
        %v1172 = vsel %vm709, %v1169, %v1171
        %1173 = vrot.lane.b32.xlu0 %v1166, 127
        %v1174 = vpop.permute.xlu0 %1173
        %1175 = vrot.lane.b32.xlu0 %v1168, 127
        %v1176 = vpop.permute.xlu0 %1175
        %1177 = vrot.lane.b32.xlu0 %v1170, 127
        %v1178 = vpop.permute.xlu0 %1177
        %1179 = vrot.lane.b32.xlu0 %v1172, 127
        %v1180 = vpop.permute.xlu0 %1179
        %v1185 = vadd.f32 %v897, %v1174
        %v1186 = vadd.f32 %v898, %v1176
        %v1187 = vadd.f32 %v899, %v1178
        %v1188 = vadd.f32 %v900, %v1180
        %s1189 = sld [smem:[#allocation2 + $0x100]]
        %v1190 = vstv %s1189
        %v1191 = vmul.f32 %v1190, %v196
        %v1192 = vmul.f32 %v1190, %v197
        %v1193 = vmul.f32 %v1190, %v198
        %v1194 = vmul.f32 %v1190, %v199
        %v1195 = vmul.f32 %v1190, %v200
        %v1201 = vrot.slane %v1191, 1
        %v1202 = vrot.slane %v1192, 1
        %v1203 = vsel %vm709, %v1201, %v1202
        %v1204 = vrot.slane %v1193, 1
        %v1205 = vsel %vm709, %v1202, %v1204
        %v1206 = vrot.slane %v1194, 1
        %v1207 = vsel %vm709, %v1204, %v1206
        %v1208 = vrot.slane %v1195, 1
        %v1209 = vsel %vm709, %v1206, %v1208
        %1210 = vrot.lane.b32.xlu0 %v1203, 127
        %v1211 = vpop.permute.xlu0 %1210
        %1212 = vrot.lane.b32.xlu0 %v1205, 127
        %v1213 = vpop.permute.xlu0 %1212
        %1214 = vrot.lane.b32.xlu0 %v1207, 127
        %v1215 = vpop.permute.xlu0 %1214
        %1216 = vrot.lane.b32.xlu0 %v1209, 127
        %v1217 = vpop.permute.xlu0 %1216
        %v1222 = vadd.f32 %v926, %v1211
        %v1223 = vadd.f32 %v927, %v1213
        %v1224 = vadd.f32 %v928, %v1215
        %v1225 = vadd.f32 %v929, %v1217
        %s1226 = sld [smem:[#allocation2 + $0x5]]
        %v1227 = vstv %s1226
        %v1228 = vmul.f32 %v1227, %v196
        %v1229 = vmul.f32 %v1227, %v197
        %v1230 = vmul.f32 %v1227, %v198
        %v1231 = vmul.f32 %v1227, %v199
        %v1232 = vmul.f32 %v1227, %v200
        %v1238 = vrot.slane %v1228, 1
        %v1239 = vrot.slane %v1229, 1
        %v1240 = vsel %vm709, %v1238, %v1239
        %v1241 = vrot.slane %v1230, 1
        %v1242 = vsel %vm709, %v1239, %v1241
        %v1243 = vrot.slane %v1231, 1
        %v1244 = vsel %vm709, %v1241, %v1243
        %v1245 = vrot.slane %v1232, 1
        %v1246 = vsel %vm709, %v1243, %v1245
        %1247 = vrot.lane.b32.xlu0 %v1240, 126
        %v1248 = vpop.permute.xlu0 %1247
        %1249 = vrot.lane.b32.xlu0 %v1242, 126
        %v1250 = vpop.permute.xlu0 %1249
        %1251 = vrot.lane.b32.xlu0 %v1244, 126
        %v1252 = vpop.permute.xlu0 %1251
        %1253 = vrot.lane.b32.xlu0 %v1246, 126
        %v1254 = vpop.permute.xlu0 %1253
        %v1259 = vadd.f32 %v963, %v1248
        %v1260 = vadd.f32 %v964, %v1250
        %v1261 = vadd.f32 %v965, %v1252
        %v1262 = vadd.f32 %v966, %v1254
        %s1263 = sld [smem:[#allocation2 + $0x29]]
        %v1264 = vstv %s1263
        %v1265 = vmul.f32 %v1264, %v196
        %v1266 = vmul.f32 %v1264, %v197
        %v1267 = vmul.f32 %v1264, %v198
        %v1268 = vmul.f32 %v1264, %v199
        %v1269 = vmul.f32 %v1264, %v200
        %v1275 = vrot.slane %v1265, 1
        %v1276 = vrot.slane %v1266, 1
        %v1277 = vsel %vm709, %v1275, %v1276
        %v1278 = vrot.slane %v1267, 1
        %v1279 = vsel %vm709, %v1276, %v1278
        %v1280 = vrot.slane %v1268, 1
        %v1281 = vsel %vm709, %v1278, %v1280
        %v1282 = vrot.slane %v1269, 1
        %v1283 = vsel %vm709, %v1280, %v1282
        %1284 = vrot.lane.b32.xlu0 %v1277, 126
        %v1285 = vpop.permute.xlu0 %1284
        %1286 = vrot.lane.b32.xlu0 %v1279, 126
        %v1287 = vpop.permute.xlu0 %1286
        %1288 = vrot.lane.b32.xlu0 %v1281, 126
        %v1289 = vpop.permute.xlu0 %1288
        %1290 = vrot.lane.b32.xlu0 %v1283, 126
        %v1291 = vpop.permute.xlu0 %1290
        %v1296 = vadd.f32 %v1000, %v1285
        %v1297 = vadd.f32 %v1001, %v1287
        %v1298 = vadd.f32 %v1002, %v1289
        %v1299 = vadd.f32 %v1003, %v1291
        %s1300 = sld [smem:[#allocation2 + $0x4d]]
        %v1301 = vstv %s1300
        %v1302 = vmul.f32 %v1301, %v196
        %v1303 = vmul.f32 %v1301, %v197
        %v1304 = vmul.f32 %v1301, %v198
        %v1305 = vmul.f32 %v1301, %v199
        %v1306 = vmul.f32 %v1301, %v200
        %v1312 = vrot.slane %v1302, 1
        %v1313 = vrot.slane %v1303, 1
        %v1314 = vsel %vm709, %v1312, %v1313
        %v1315 = vrot.slane %v1304, 1
        %v1316 = vsel %vm709, %v1313, %v1315
        %v1317 = vrot.slane %v1305, 1
        %v1318 = vsel %vm709, %v1315, %v1317
        %v1319 = vrot.slane %v1306, 1
        %v1320 = vsel %vm709, %v1317, %v1319
        %1321 = vrot.lane.b32.xlu0 %v1314, 126
        %v1322 = vpop.permute.xlu0 %1321
        %1323 = vrot.lane.b32.xlu0 %v1316, 126
        %v1324 = vpop.permute.xlu0 %1323
        %1325 = vrot.lane.b32.xlu0 %v1318, 126
        %v1326 = vpop.permute.xlu0 %1325
        %1327 = vrot.lane.b32.xlu0 %v1320, 126
        %v1328 = vpop.permute.xlu0 %1327
        %v1333 = vadd.f32 %v1037, %v1322
        %v1334 = vadd.f32 %v1038, %v1324
        %v1335 = vadd.f32 %v1039, %v1326
        %v1336 = vadd.f32 %v1040, %v1328
        %s1337 = sld [smem:[#allocation2 + $0x71]]
        %v1338 = vstv %s1337
        %v1339 = vmul.f32 %v1338, %v196
        %v1340 = vmul.f32 %v1338, %v197
        %v1341 = vmul.f32 %v1338, %v198
        %v1342 = vmul.f32 %v1338, %v199
        %v1343 = vmul.f32 %v1338, %v200
        %v1349 = vrot.slane %v1339, 1
        %v1350 = vrot.slane %v1340, 1
        %v1351 = vsel %vm709, %v1349, %v1350
        %v1352 = vrot.slane %v1341, 1
        %v1353 = vsel %vm709, %v1350, %v1352
        %v1354 = vrot.slane %v1342, 1
        %v1355 = vsel %vm709, %v1352, %v1354
        %v1356 = vrot.slane %v1343, 1
        %v1357 = vsel %vm709, %v1354, %v1356
        %1358 = vrot.lane.b32.xlu0 %v1351, 126
        %v1359 = vpop.permute.xlu0 %1358
        %1360 = vrot.lane.b32.xlu0 %v1353, 126
        %v1361 = vpop.permute.xlu0 %1360
        %1362 = vrot.lane.b32.xlu0 %v1355, 126
        %v1363 = vpop.permute.xlu0 %1362
        %1364 = vrot.lane.b32.xlu0 %v1357, 126
        %v1365 = vpop.permute.xlu0 %1364
        %v1370 = vadd.f32 %v1074, %v1359
        %v1371 = vadd.f32 %v1075, %v1361
        %v1372 = vadd.f32 %v1076, %v1363
        %v1373 = vadd.f32 %v1077, %v1365
        %s1374 = sld [smem:[#allocation2 + $0x95]]
        %v1375 = vstv %s1374
        %v1376 = vmul.f32 %v1375, %v196
        %v1377 = vmul.f32 %v1375, %v197
        %v1378 = vmul.f32 %v1375, %v198
        %v1379 = vmul.f32 %v1375, %v199
        %v1380 = vmul.f32 %v1375, %v200
        %v1386 = vrot.slane %v1376, 1
        %v1387 = vrot.slane %v1377, 1
        %v1388 = vsel %vm709, %v1386, %v1387
        %v1389 = vrot.slane %v1378, 1
        %v1390 = vsel %vm709, %v1387, %v1389
        %v1391 = vrot.slane %v1379, 1
        %v1392 = vsel %vm709, %v1389, %v1391
        %v1393 = vrot.slane %v1380, 1
        %v1394 = vsel %vm709, %v1391, %v1393
        %1395 = vrot.lane.b32.xlu0 %v1388, 126
        %v1396 = vpop.permute.xlu0 %1395
        %1397 = vrot.lane.b32.xlu0 %v1390, 126
        %v1398 = vpop.permute.xlu0 %1397
        %1399 = vrot.lane.b32.xlu0 %v1392, 126
        %v1400 = vpop.permute.xlu0 %1399
        %1401 = vrot.lane.b32.xlu0 %v1394, 126
        %v1402 = vpop.permute.xlu0 %1401
        %v1407 = vadd.f32 %v1111, %v1396
        %v1408 = vadd.f32 %v1112, %v1398
        %v1409 = vadd.f32 %v1113, %v1400
        %v1410 = vadd.f32 %v1114, %v1402
        %s1411 = sld [smem:[#allocation2 + $0xb9]]
        %v1412 = vstv %s1411
        %v1413 = vmul.f32 %v1412, %v196
        %v1414 = vmul.f32 %v1412, %v197
        %v1415 = vmul.f32 %v1412, %v198
        %v1416 = vmul.f32 %v1412, %v199
        %v1417 = vmul.f32 %v1412, %v200
        %v1423 = vrot.slane %v1413, 1
        %v1424 = vrot.slane %v1414, 1
        %v1425 = vsel %vm709, %v1423, %v1424
        %v1426 = vrot.slane %v1415, 1
        %v1427 = vsel %vm709, %v1424, %v1426
        %v1428 = vrot.slane %v1416, 1
        %v1429 = vsel %vm709, %v1426, %v1428
        %v1430 = vrot.slane %v1417, 1
        %v1431 = vsel %vm709, %v1428, %v1430
        %1432 = vrot.lane.b32.xlu0 %v1425, 126
        %v1433 = vpop.permute.xlu0 %1432
        %1434 = vrot.lane.b32.xlu0 %v1427, 126
        %v1435 = vpop.permute.xlu0 %1434
        %1436 = vrot.lane.b32.xlu0 %v1429, 126
        %v1437 = vpop.permute.xlu0 %1436
        %1438 = vrot.lane.b32.xlu0 %v1431, 126
        %v1439 = vpop.permute.xlu0 %1438
        %v1444 = vadd.f32 %v1148, %v1433
        %v1445 = vadd.f32 %v1149, %v1435
        %v1446 = vadd.f32 %v1150, %v1437
        %v1447 = vadd.f32 %v1151, %v1439
        %s1448 = sld [smem:[#allocation2 + $0xdd]]
        %v1449 = vstv %s1448
        %v1450 = vmul.f32 %v1449, %v196
        %v1451 = vmul.f32 %v1449, %v197
        %v1452 = vmul.f32 %v1449, %v198
        %v1453 = vmul.f32 %v1449, %v199
        %v1454 = vmul.f32 %v1449, %v200
        %v1460 = vrot.slane %v1450, 1
        %v1461 = vrot.slane %v1451, 1
        %v1462 = vsel %vm709, %v1460, %v1461
        %v1463 = vrot.slane %v1452, 1
        %v1464 = vsel %vm709, %v1461, %v1463
        %v1465 = vrot.slane %v1453, 1
        %v1466 = vsel %vm709, %v1463, %v1465
        %v1467 = vrot.slane %v1454, 1
        %v1468 = vsel %vm709, %v1465, %v1467
        %1469 = vrot.lane.b32.xlu0 %v1462, 126
        %v1470 = vpop.permute.xlu0 %1469
        %1471 = vrot.lane.b32.xlu0 %v1464, 126
        %v1472 = vpop.permute.xlu0 %1471
        %1473 = vrot.lane.b32.xlu0 %v1466, 126
        %v1474 = vpop.permute.xlu0 %1473
        %1475 = vrot.lane.b32.xlu0 %v1468, 126
        %v1476 = vpop.permute.xlu0 %1475
        %v1481 = vadd.f32 %v1185, %v1470
        %v1482 = vadd.f32 %v1186, %v1472
        %v1483 = vadd.f32 %v1187, %v1474
        %v1484 = vadd.f32 %v1188, %v1476
        %s1485 = sld [smem:[#allocation2 + $0x101]]
        %v1486 = vstv %s1485
        %v1487 = vmul.f32 %v1486, %v196
        %v1488 = vmul.f32 %v1486, %v197
        %v1489 = vmul.f32 %v1486, %v198
        %v1490 = vmul.f32 %v1486, %v199
        %v1491 = vmul.f32 %v1486, %v200
        %v1497 = vrot.slane %v1487, 1
        %v1498 = vrot.slane %v1488, 1
        %v1499 = vsel %vm709, %v1497, %v1498
        %v1500 = vrot.slane %v1489, 1
        %v1501 = vsel %vm709, %v1498, %v1500
        %v1502 = vrot.slane %v1490, 1
        %v1503 = vsel %vm709, %v1500, %v1502
        %v1504 = vrot.slane %v1491, 1
        %v1505 = vsel %vm709, %v1502, %v1504
        %1506 = vrot.lane.b32.xlu0 %v1499, 126
        %v1507 = vpop.permute.xlu0 %1506
        %1508 = vrot.lane.b32.xlu0 %v1501, 126
        %v1509 = vpop.permute.xlu0 %1508
        %1510 = vrot.lane.b32.xlu0 %v1503, 126
        %v1511 = vpop.permute.xlu0 %1510
        %1512 = vrot.lane.b32.xlu0 %v1505, 126
        %v1513 = vpop.permute.xlu0 %1512
        %v1518 = vadd.f32 %v1222, %v1507
        %v1519 = vadd.f32 %v1223, %v1509
        %v1520 = vadd.f32 %v1224, %v1511
        %v1521 = vadd.f32 %v1225, %v1513
        %s1522 = sld [smem:[#allocation2 + $0x6]]
        %v1523 = vstv %s1522
        %v1524 = vmul.f32 %v1523, %v196
        %v1525 = vmul.f32 %v1523, %v197
        %v1526 = vmul.f32 %v1523, %v198
        %v1527 = vmul.f32 %v1523, %v199
        %v1528 = vmul.f32 %v1523, %v200
        %vm1534 = vcmask 1045504
        %v1535 = vrot.slane %v1524, 2
        %v1536 = vrot.slane %v1525, 2
        %v1537 = vsel %vm1534, %v1535, %v1536
        %v1538 = vrot.slane %v1526, 2
        %v1539 = vsel %vm1534, %v1536, %v1538
        %v1540 = vrot.slane %v1527, 2
        %v1541 = vsel %vm1534, %v1538, %v1540
        %v1542 = vrot.slane %v1528, 2
        %v1543 = vsel %vm1534, %v1540, %v1542
        %v1548 = vadd.f32 %v1259, %v1537
        %v1549 = vadd.f32 %v1260, %v1539
        %v1550 = vadd.f32 %v1261, %v1541
        %v1551 = vadd.f32 %v1262, %v1543
        %s1552 = sld [smem:[#allocation2 + $0x2a]]
        %v1553 = vstv %s1552
        %v1554 = vmul.f32 %v1553, %v196
        %v1555 = vmul.f32 %v1553, %v197
        %v1556 = vmul.f32 %v1553, %v198
        %v1557 = vmul.f32 %v1553, %v199
        %v1558 = vmul.f32 %v1553, %v200
        %v1564 = vrot.slane %v1554, 2
        %v1565 = vrot.slane %v1555, 2
        %v1566 = vsel %vm1534, %v1564, %v1565
        %v1567 = vrot.slane %v1556, 2
        %v1568 = vsel %vm1534, %v1565, %v1567
        %v1569 = vrot.slane %v1557, 2
        %v1570 = vsel %vm1534, %v1567, %v1569
        %v1571 = vrot.slane %v1558, 2
        %v1572 = vsel %vm1534, %v1569, %v1571
        %v1577 = vadd.f32 %v1296, %v1566
        %v1578 = vadd.f32 %v1297, %v1568
        %v1579 = vadd.f32 %v1298, %v1570
        %v1580 = vadd.f32 %v1299, %v1572
        %s1581 = sld [smem:[#allocation2 + $0x4e]]
        %v1582 = vstv %s1581
        %v1583 = vmul.f32 %v1582, %v196
        %v1584 = vmul.f32 %v1582, %v197
        %v1585 = vmul.f32 %v1582, %v198
        %v1586 = vmul.f32 %v1582, %v199
        %v1587 = vmul.f32 %v1582, %v200
        %v1593 = vrot.slane %v1583, 2
        %v1594 = vrot.slane %v1584, 2
        %v1595 = vsel %vm1534, %v1593, %v1594
        %v1596 = vrot.slane %v1585, 2
        %v1597 = vsel %vm1534, %v1594, %v1596
        %v1598 = vrot.slane %v1586, 2
        %v1599 = vsel %vm1534, %v1596, %v1598
        %v1600 = vrot.slane %v1587, 2
        %v1601 = vsel %vm1534, %v1598, %v1600
        %v1606 = vadd.f32 %v1333, %v1595
        %v1607 = vadd.f32 %v1334, %v1597
        %v1608 = vadd.f32 %v1335, %v1599
        %v1609 = vadd.f32 %v1336, %v1601
        %s1610 = sld [smem:[#allocation2 + $0x72]]
        %v1611 = vstv %s1610
        %v1612 = vmul.f32 %v1611, %v196
        %v1613 = vmul.f32 %v1611, %v197
        %v1614 = vmul.f32 %v1611, %v198
        %v1615 = vmul.f32 %v1611, %v199
        %v1616 = vmul.f32 %v1611, %v200
        %v1622 = vrot.slane %v1612, 2
        %v1623 = vrot.slane %v1613, 2
        %v1624 = vsel %vm1534, %v1622, %v1623
        %v1625 = vrot.slane %v1614, 2
        %v1626 = vsel %vm1534, %v1623, %v1625
        %v1627 = vrot.slane %v1615, 2
        %v1628 = vsel %vm1534, %v1625, %v1627
        %v1629 = vrot.slane %v1616, 2
        %v1630 = vsel %vm1534, %v1627, %v1629
        %v1635 = vadd.f32 %v1370, %v1624
        %v1636 = vadd.f32 %v1371, %v1626
        %v1637 = vadd.f32 %v1372, %v1628
        %v1638 = vadd.f32 %v1373, %v1630
        %s1639 = sld [smem:[#allocation2 + $0x96]]
        %v1640 = vstv %s1639
        %v1641 = vmul.f32 %v1640, %v196
        %v1642 = vmul.f32 %v1640, %v197
        %v1643 = vmul.f32 %v1640, %v198
        %v1644 = vmul.f32 %v1640, %v199
        %v1645 = vmul.f32 %v1640, %v200
        %v1651 = vrot.slane %v1641, 2
        %v1652 = vrot.slane %v1642, 2
        %v1653 = vsel %vm1534, %v1651, %v1652
        %v1654 = vrot.slane %v1643, 2
        %v1655 = vsel %vm1534, %v1652, %v1654
        %v1656 = vrot.slane %v1644, 2
        %v1657 = vsel %vm1534, %v1654, %v1656
        %v1658 = vrot.slane %v1645, 2
        %v1659 = vsel %vm1534, %v1656, %v1658
        %v1664 = vadd.f32 %v1407, %v1653
        %v1665 = vadd.f32 %v1408, %v1655
        %v1666 = vadd.f32 %v1409, %v1657
        %v1667 = vadd.f32 %v1410, %v1659
        %s1668 = sld [smem:[#allocation2 + $0xba]]
        %v1669 = vstv %s1668
        %v1670 = vmul.f32 %v1669, %v196
        %v1671 = vmul.f32 %v1669, %v197
        %v1672 = vmul.f32 %v1669, %v198
        %v1673 = vmul.f32 %v1669, %v199
        %v1674 = vmul.f32 %v1669, %v200
        %v1680 = vrot.slane %v1670, 2
        %v1681 = vrot.slane %v1671, 2
        %v1682 = vsel %vm1534, %v1680, %v1681
        %v1683 = vrot.slane %v1672, 2
        %v1684 = vsel %vm1534, %v1681, %v1683
        %v1685 = vrot.slane %v1673, 2
        %v1686 = vsel %vm1534, %v1683, %v1685
        %v1687 = vrot.slane %v1674, 2
        %v1688 = vsel %vm1534, %v1685, %v1687
        %v1693 = vadd.f32 %v1444, %v1682
        %v1694 = vadd.f32 %v1445, %v1684
        %v1695 = vadd.f32 %v1446, %v1686
        %v1696 = vadd.f32 %v1447, %v1688
        %s1697 = sld [smem:[#allocation2 + $0xde]]
        %v1698 = vstv %s1697
        %v1699 = vmul.f32 %v1698, %v196
        %v1700 = vmul.f32 %v1698, %v197
        %v1701 = vmul.f32 %v1698, %v198
        %v1702 = vmul.f32 %v1698, %v199
        %v1703 = vmul.f32 %v1698, %v200
        %v1709 = vrot.slane %v1699, 2
        %v1710 = vrot.slane %v1700, 2
        %v1711 = vsel %vm1534, %v1709, %v1710
        %v1712 = vrot.slane %v1701, 2
        %v1713 = vsel %vm1534, %v1710, %v1712
        %v1714 = vrot.slane %v1702, 2
        %v1715 = vsel %vm1534, %v1712, %v1714
        %v1716 = vrot.slane %v1703, 2
        %v1717 = vsel %vm1534, %v1714, %v1716
        %v1722 = vadd.f32 %v1481, %v1711
        %v1723 = vadd.f32 %v1482, %v1713
        %v1724 = vadd.f32 %v1483, %v1715
        %v1725 = vadd.f32 %v1484, %v1717
        %s1726 = sld [smem:[#allocation2 + $0x102]]
        %v1727 = vstv %s1726
        %v1728 = vmul.f32 %v1727, %v196
        %v1729 = vmul.f32 %v1727, %v197
        %v1730 = vmul.f32 %v1727, %v198
        %v1731 = vmul.f32 %v1727, %v199
        %v1732 = vmul.f32 %v1727, %v200
        %v1738 = vrot.slane %v1728, 2
        %v1739 = vrot.slane %v1729, 2
        %v1740 = vsel %vm1534, %v1738, %v1739
        %v1741 = vrot.slane %v1730, 2
        %v1742 = vsel %vm1534, %v1739, %v1741
        %v1743 = vrot.slane %v1731, 2
        %v1744 = vsel %vm1534, %v1741, %v1743
        %v1745 = vrot.slane %v1732, 2
        %v1746 = vsel %vm1534, %v1743, %v1745
        %v1751 = vadd.f32 %v1518, %v1740
        %v1752 = vadd.f32 %v1519, %v1742
        %v1753 = vadd.f32 %v1520, %v1744
        %v1754 = vadd.f32 %v1521, %v1746
        %s1755 = sld [smem:[#allocation2 + $0x7]]
        %v1756 = vstv %s1755
        %v1757 = vmul.f32 %v1756, %v196
        %v1758 = vmul.f32 %v1756, %v197
        %v1759 = vmul.f32 %v1756, %v198
        %v1760 = vmul.f32 %v1756, %v199
        %v1761 = vmul.f32 %v1756, %v200
        %v1767 = vrot.slane %v1757, 2
        %v1768 = vrot.slane %v1758, 2
        %v1769 = vsel %vm1534, %v1767, %v1768
        %v1770 = vrot.slane %v1759, 2
        %v1771 = vsel %vm1534, %v1768, %v1770
        %v1772 = vrot.slane %v1760, 2
        %v1773 = vsel %vm1534, %v1770, %v1772
        %v1774 = vrot.slane %v1761, 2
        %v1775 = vsel %vm1534, %v1772, %v1774
        %1776 = vrot.lane.b32.xlu0 %v1769, 127
        %v1777 = vpop.permute.xlu0 %1776
        %1778 = vrot.lane.b32.xlu0 %v1771, 127
        %v1779 = vpop.permute.xlu0 %1778
        %1780 = vrot.lane.b32.xlu0 %v1773, 127
        %v1781 = vpop.permute.xlu0 %1780
        %1782 = vrot.lane.b32.xlu0 %v1775, 127
        %v1783 = vpop.permute.xlu0 %1782
        %v1788 = vadd.f32 %v1548, %v1777
        %v1789 = vadd.f32 %v1549, %v1779
        %v1790 = vadd.f32 %v1550, %v1781
        %v1791 = vadd.f32 %v1551, %v1783
        %s1792 = sld [smem:[#allocation2 + $0x2b]]
        %v1793 = vstv %s1792
        %v1794 = vmul.f32 %v1793, %v196
        %v1795 = vmul.f32 %v1793, %v197
        %v1796 = vmul.f32 %v1793, %v198
        %v1797 = vmul.f32 %v1793, %v199
        %v1798 = vmul.f32 %v1793, %v200
        %v1804 = vrot.slane %v1794, 2
        %v1805 = vrot.slane %v1795, 2
        %v1806 = vsel %vm1534, %v1804, %v1805
        %v1807 = vrot.slane %v1796, 2
        %v1808 = vsel %vm1534, %v1805, %v1807
        %v1809 = vrot.slane %v1797, 2
        %v1810 = vsel %vm1534, %v1807, %v1809
        %v1811 = vrot.slane %v1798, 2
        %v1812 = vsel %vm1534, %v1809, %v1811
        %1813 = vrot.lane.b32.xlu0 %v1806, 127
        %v1814 = vpop.permute.xlu0 %1813
        %1815 = vrot.lane.b32.xlu0 %v1808, 127
        %v1816 = vpop.permute.xlu0 %1815
        %1817 = vrot.lane.b32.xlu0 %v1810, 127
        %v1818 = vpop.permute.xlu0 %1817
        %1819 = vrot.lane.b32.xlu0 %v1812, 127
        %v1820 = vpop.permute.xlu0 %1819
        %v1825 = vadd.f32 %v1577, %v1814
        %v1826 = vadd.f32 %v1578, %v1816
        %v1827 = vadd.f32 %v1579, %v1818
        %v1828 = vadd.f32 %v1580, %v1820
        %s1829 = sld [smem:[#allocation2 + $0x4f]]
        %v1830 = vstv %s1829
        %v1831 = vmul.f32 %v1830, %v196
        %v1832 = vmul.f32 %v1830, %v197
        %v1833 = vmul.f32 %v1830, %v198
        %v1834 = vmul.f32 %v1830, %v199
        %v1835 = vmul.f32 %v1830, %v200
        %v1841 = vrot.slane %v1831, 2
        %v1842 = vrot.slane %v1832, 2
        %v1843 = vsel %vm1534, %v1841, %v1842
        %v1844 = vrot.slane %v1833, 2
        %v1845 = vsel %vm1534, %v1842, %v1844
        %v1846 = vrot.slane %v1834, 2
        %v1847 = vsel %vm1534, %v1844, %v1846
        %v1848 = vrot.slane %v1835, 2
        %v1849 = vsel %vm1534, %v1846, %v1848
        %1850 = vrot.lane.b32.xlu0 %v1843, 127
        %v1851 = vpop.permute.xlu0 %1850
        %1852 = vrot.lane.b32.xlu0 %v1845, 127
        %v1853 = vpop.permute.xlu0 %1852
        %1854 = vrot.lane.b32.xlu0 %v1847, 127
        %v1855 = vpop.permute.xlu0 %1854
        %1856 = vrot.lane.b32.xlu0 %v1849, 127
        %v1857 = vpop.permute.xlu0 %1856
        %v1862 = vadd.f32 %v1606, %v1851
        %v1863 = vadd.f32 %v1607, %v1853
        %v1864 = vadd.f32 %v1608, %v1855
        %v1865 = vadd.f32 %v1609, %v1857
        %s1866 = sld [smem:[#allocation2 + $0x73]]
        %v1867 = vstv %s1866
        %v1868 = vmul.f32 %v1867, %v196
        %v1869 = vmul.f32 %v1867, %v197
        %v1870 = vmul.f32 %v1867, %v198
        %v1871 = vmul.f32 %v1867, %v199
        %v1872 = vmul.f32 %v1867, %v200
        %v1878 = vrot.slane %v1868, 2
        %v1879 = vrot.slane %v1869, 2
        %v1880 = vsel %vm1534, %v1878, %v1879
        %v1881 = vrot.slane %v1870, 2
        %v1882 = vsel %vm1534, %v1879, %v1881
        %v1883 = vrot.slane %v1871, 2
        %v1884 = vsel %vm1534, %v1881, %v1883
        %v1885 = vrot.slane %v1872, 2
        %v1886 = vsel %vm1534, %v1883, %v1885
        %1887 = vrot.lane.b32.xlu0 %v1880, 127
        %v1888 = vpop.permute.xlu0 %1887
        %1889 = vrot.lane.b32.xlu0 %v1882, 127
        %v1890 = vpop.permute.xlu0 %1889
        %1891 = vrot.lane.b32.xlu0 %v1884, 127
        %v1892 = vpop.permute.xlu0 %1891
        %1893 = vrot.lane.b32.xlu0 %v1886, 127
        %v1894 = vpop.permute.xlu0 %1893
        %v1899 = vadd.f32 %v1635, %v1888
        %v1900 = vadd.f32 %v1636, %v1890
        %v1901 = vadd.f32 %v1637, %v1892
        %v1902 = vadd.f32 %v1638, %v1894
        %s1903 = sld [smem:[#allocation2 + $0x97]]
        %v1904 = vstv %s1903
        %v1905 = vmul.f32 %v1904, %v196
        %v1906 = vmul.f32 %v1904, %v197
        %v1907 = vmul.f32 %v1904, %v198
        %v1908 = vmul.f32 %v1904, %v199
        %v1909 = vmul.f32 %v1904, %v200
        %v1915 = vrot.slane %v1905, 2
        %v1916 = vrot.slane %v1906, 2
        %v1917 = vsel %vm1534, %v1915, %v1916
        %v1918 = vrot.slane %v1907, 2
        %v1919 = vsel %vm1534, %v1916, %v1918
        %v1920 = vrot.slane %v1908, 2
        %v1921 = vsel %vm1534, %v1918, %v1920
        %v1922 = vrot.slane %v1909, 2
        %v1923 = vsel %vm1534, %v1920, %v1922
        %1924 = vrot.lane.b32.xlu0 %v1917, 127
        %v1925 = vpop.permute.xlu0 %1924
        %1926 = vrot.lane.b32.xlu0 %v1919, 127
        %v1927 = vpop.permute.xlu0 %1926
        %1928 = vrot.lane.b32.xlu0 %v1921, 127
        %v1929 = vpop.permute.xlu0 %1928
        %1930 = vrot.lane.b32.xlu0 %v1923, 127
        %v1931 = vpop.permute.xlu0 %1930
        %v1936 = vadd.f32 %v1664, %v1925
        %v1937 = vadd.f32 %v1665, %v1927
        %v1938 = vadd.f32 %v1666, %v1929
        %v1939 = vadd.f32 %v1667, %v1931
        %s1940 = sld [smem:[#allocation2 + $0xbb]]
        %v1941 = vstv %s1940
        %v1942 = vmul.f32 %v1941, %v196
        %v1943 = vmul.f32 %v1941, %v197
        %v1944 = vmul.f32 %v1941, %v198
        %v1945 = vmul.f32 %v1941, %v199
        %v1946 = vmul.f32 %v1941, %v200
        %v1952 = vrot.slane %v1942, 2
        %v1953 = vrot.slane %v1943, 2
        %v1954 = vsel %vm1534, %v1952, %v1953
        %v1955 = vrot.slane %v1944, 2
        %v1956 = vsel %vm1534, %v1953, %v1955
        %v1957 = vrot.slane %v1945, 2
        %v1958 = vsel %vm1534, %v1955, %v1957
        %v1959 = vrot.slane %v1946, 2
        %v1960 = vsel %vm1534, %v1957, %v1959
        %1961 = vrot.lane.b32.xlu0 %v1954, 127
        %v1962 = vpop.permute.xlu0 %1961
        %1963 = vrot.lane.b32.xlu0 %v1956, 127
        %v1964 = vpop.permute.xlu0 %1963
        %1965 = vrot.lane.b32.xlu0 %v1958, 127
        %v1966 = vpop.permute.xlu0 %1965
        %1967 = vrot.lane.b32.xlu0 %v1960, 127
        %v1968 = vpop.permute.xlu0 %1967
        %v1973 = vadd.f32 %v1693, %v1962
        %v1974 = vadd.f32 %v1694, %v1964
        %v1975 = vadd.f32 %v1695, %v1966
        %v1976 = vadd.f32 %v1696, %v1968
        %s1977 = sld [smem:[#allocation2 + $0xdf]]
        %v1978 = vstv %s1977
        %v1979 = vmul.f32 %v1978, %v196
        %v1980 = vmul.f32 %v1978, %v197
        %v1981 = vmul.f32 %v1978, %v198
        %v1982 = vmul.f32 %v1978, %v199
        %v1983 = vmul.f32 %v1978, %v200
        %v1989 = vrot.slane %v1979, 2
        %v1990 = vrot.slane %v1980, 2
        %v1991 = vsel %vm1534, %v1989, %v1990
        %v1992 = vrot.slane %v1981, 2
        %v1993 = vsel %vm1534, %v1990, %v1992
        %v1994 = vrot.slane %v1982, 2
        %v1995 = vsel %vm1534, %v1992, %v1994
        %v1996 = vrot.slane %v1983, 2
        %v1997 = vsel %vm1534, %v1994, %v1996
        %1998 = vrot.lane.b32.xlu0 %v1991, 127
        %v1999 = vpop.permute.xlu0 %1998
        %2000 = vrot.lane.b32.xlu0 %v1993, 127
        %v2001 = vpop.permute.xlu0 %2000
        %2002 = vrot.lane.b32.xlu0 %v1995, 127
        %v2003 = vpop.permute.xlu0 %2002
        %2004 = vrot.lane.b32.xlu0 %v1997, 127
        %v2005 = vpop.permute.xlu0 %2004
        %v2010 = vadd.f32 %v1722, %v1999
        %v2011 = vadd.f32 %v1723, %v2001
        %v2012 = vadd.f32 %v1724, %v2003
        %v2013 = vadd.f32 %v1725, %v2005
        %s2014 = sld [smem:[#allocation2 + $0x103]]
        %v2015 = vstv %s2014
        %v2016 = vmul.f32 %v2015, %v196
        %v2017 = vmul.f32 %v2015, %v197
        %v2018 = vmul.f32 %v2015, %v198
        %v2019 = vmul.f32 %v2015, %v199
        %v2020 = vmul.f32 %v2015, %v200
        %v2026 = vrot.slane %v2016, 2
        %v2027 = vrot.slane %v2017, 2
        %v2028 = vsel %vm1534, %v2026, %v2027
        %v2029 = vrot.slane %v2018, 2
        %v2030 = vsel %vm1534, %v2027, %v2029
        %v2031 = vrot.slane %v2019, 2
        %v2032 = vsel %vm1534, %v2029, %v2031
        %v2033 = vrot.slane %v2020, 2
        %v2034 = vsel %vm1534, %v2031, %v2033
        %2035 = vrot.lane.b32.xlu0 %v2028, 127
        %v2036 = vpop.permute.xlu0 %2035
        %2037 = vrot.lane.b32.xlu0 %v2030, 127
        %v2038 = vpop.permute.xlu0 %2037
        %2039 = vrot.lane.b32.xlu0 %v2032, 127
        %v2040 = vpop.permute.xlu0 %2039
        %2041 = vrot.lane.b32.xlu0 %v2034, 127
        %v2042 = vpop.permute.xlu0 %2041
        %v2047 = vadd.f32 %v1751, %v2036
        %v2048 = vadd.f32 %v1752, %v2038
        %v2049 = vadd.f32 %v1753, %v2040
        %v2050 = vadd.f32 %v1754, %v2042
        %s2051 = sld [smem:[#allocation2 + $0x8]]
        %v2052 = vstv %s2051
        %v2053 = vmul.f32 %v2052, %v196
        %v2054 = vmul.f32 %v2052, %v197
        %v2055 = vmul.f32 %v2052, %v198
        %v2056 = vmul.f32 %v2052, %v199
        %v2057 = vmul.f32 %v2052, %v200
        %v2063 = vrot.slane %v2053, 2
        %v2064 = vrot.slane %v2054, 2
        %v2065 = vsel %vm1534, %v2063, %v2064
        %v2066 = vrot.slane %v2055, 2
        %v2067 = vsel %vm1534, %v2064, %v2066
        %v2068 = vrot.slane %v2056, 2
        %v2069 = vsel %vm1534, %v2066, %v2068
        %v2070 = vrot.slane %v2057, 2
        %v2071 = vsel %vm1534, %v2068, %v2070
        %2072 = vrot.lane.b32.xlu0 %v2065, 126
        %v2073 = vpop.permute.xlu0 %2072
        %2074 = vrot.lane.b32.xlu0 %v2067, 126
        %v2075 = vpop.permute.xlu0 %2074
        %2076 = vrot.lane.b32.xlu0 %v2069, 126
        %v2077 = vpop.permute.xlu0 %2076
        %2078 = vrot.lane.b32.xlu0 %v2071, 126
        %v2079 = vpop.permute.xlu0 %2078
        %v2084 = vadd.f32 %v1788, %v2073
        %v2085 = vadd.f32 %v1789, %v2075
        %v2086 = vadd.f32 %v1790, %v2077
        %v2087 = vadd.f32 %v1791, %v2079
        %s2088 = sld [smem:[#allocation2 + $0x2c]]
        %v2089 = vstv %s2088
        %v2090 = vmul.f32 %v2089, %v196
        %v2091 = vmul.f32 %v2089, %v197
        %v2092 = vmul.f32 %v2089, %v198
        %v2093 = vmul.f32 %v2089, %v199
        %v2094 = vmul.f32 %v2089, %v200
        %v2100 = vrot.slane %v2090, 2
        %v2101 = vrot.slane %v2091, 2
        %v2102 = vsel %vm1534, %v2100, %v2101
        %v2103 = vrot.slane %v2092, 2
        %v2104 = vsel %vm1534, %v2101, %v2103
        %v2105 = vrot.slane %v2093, 2
        %v2106 = vsel %vm1534, %v2103, %v2105
        %v2107 = vrot.slane %v2094, 2
        %v2108 = vsel %vm1534, %v2105, %v2107
        %2109 = vrot.lane.b32.xlu0 %v2102, 126
        %v2110 = vpop.permute.xlu0 %2109
        %2111 = vrot.lane.b32.xlu0 %v2104, 126
        %v2112 = vpop.permute.xlu0 %2111
        %2113 = vrot.lane.b32.xlu0 %v2106, 126
        %v2114 = vpop.permute.xlu0 %2113
        %2115 = vrot.lane.b32.xlu0 %v2108, 126
        %v2116 = vpop.permute.xlu0 %2115
        %v2121 = vadd.f32 %v1825, %v2110
        %v2122 = vadd.f32 %v1826, %v2112
        %v2123 = vadd.f32 %v1827, %v2114
        %v2124 = vadd.f32 %v1828, %v2116
        %s2125 = sld [smem:[#allocation2 + $0x50]]
        %v2126 = vstv %s2125
        %v2127 = vmul.f32 %v2126, %v196
        %v2128 = vmul.f32 %v2126, %v197
        %v2129 = vmul.f32 %v2126, %v198
        %v2130 = vmul.f32 %v2126, %v199
        %v2131 = vmul.f32 %v2126, %v200
        %v2137 = vrot.slane %v2127, 2
        %v2138 = vrot.slane %v2128, 2
        %v2139 = vsel %vm1534, %v2137, %v2138
        %v2140 = vrot.slane %v2129, 2
        %v2141 = vsel %vm1534, %v2138, %v2140
        %v2142 = vrot.slane %v2130, 2
        %v2143 = vsel %vm1534, %v2140, %v2142
        %v2144 = vrot.slane %v2131, 2
        %v2145 = vsel %vm1534, %v2142, %v2144
        %2146 = vrot.lane.b32.xlu0 %v2139, 126
        %v2147 = vpop.permute.xlu0 %2146
        %2148 = vrot.lane.b32.xlu0 %v2141, 126
        %v2149 = vpop.permute.xlu0 %2148
        %2150 = vrot.lane.b32.xlu0 %v2143, 126
        %v2151 = vpop.permute.xlu0 %2150
        %2152 = vrot.lane.b32.xlu0 %v2145, 126
        %v2153 = vpop.permute.xlu0 %2152
        %v2158 = vadd.f32 %v1862, %v2147
        %v2159 = vadd.f32 %v1863, %v2149
        %v2160 = vadd.f32 %v1864, %v2151
        %v2161 = vadd.f32 %v1865, %v2153
        %s2162 = sld [smem:[#allocation2 + $0x74]]
        %v2163 = vstv %s2162
        %v2164 = vmul.f32 %v2163, %v196
        %v2165 = vmul.f32 %v2163, %v197
        %v2166 = vmul.f32 %v2163, %v198
        %v2167 = vmul.f32 %v2163, %v199
        %v2168 = vmul.f32 %v2163, %v200
        %v2174 = vrot.slane %v2164, 2
        %v2175 = vrot.slane %v2165, 2
        %v2176 = vsel %vm1534, %v2174, %v2175
        %v2177 = vrot.slane %v2166, 2
        %v2178 = vsel %vm1534, %v2175, %v2177
        %v2179 = vrot.slane %v2167, 2
        %v2180 = vsel %vm1534, %v2177, %v2179
        %v2181 = vrot.slane %v2168, 2
        %v2182 = vsel %vm1534, %v2179, %v2181
        %2183 = vrot.lane.b32.xlu0 %v2176, 126
        %v2184 = vpop.permute.xlu0 %2183
        %2185 = vrot.lane.b32.xlu0 %v2178, 126
        %v2186 = vpop.permute.xlu0 %2185
        %2187 = vrot.lane.b32.xlu0 %v2180, 126
        %v2188 = vpop.permute.xlu0 %2187
        %2189 = vrot.lane.b32.xlu0 %v2182, 126
        %v2190 = vpop.permute.xlu0 %2189
        %v2195 = vadd.f32 %v1899, %v2184
        %v2196 = vadd.f32 %v1900, %v2186
        %v2197 = vadd.f32 %v1901, %v2188
        %v2198 = vadd.f32 %v1902, %v2190
        %s2199 = sld [smem:[#allocation2 + $0x98]]
        %v2200 = vstv %s2199
        %v2201 = vmul.f32 %v2200, %v196
        %v2202 = vmul.f32 %v2200, %v197
        %v2203 = vmul.f32 %v2200, %v198
        %v2204 = vmul.f32 %v2200, %v199
        %v2205 = vmul.f32 %v2200, %v200
        %v2211 = vrot.slane %v2201, 2
        %v2212 = vrot.slane %v2202, 2
        %v2213 = vsel %vm1534, %v2211, %v2212
        %v2214 = vrot.slane %v2203, 2
        %v2215 = vsel %vm1534, %v2212, %v2214
        %v2216 = vrot.slane %v2204, 2
        %v2217 = vsel %vm1534, %v2214, %v2216
        %v2218 = vrot.slane %v2205, 2
        %v2219 = vsel %vm1534, %v2216, %v2218
        %2220 = vrot.lane.b32.xlu0 %v2213, 126
        %v2221 = vpop.permute.xlu0 %2220
        %2222 = vrot.lane.b32.xlu0 %v2215, 126
        %v2223 = vpop.permute.xlu0 %2222
        %2224 = vrot.lane.b32.xlu0 %v2217, 126
        %v2225 = vpop.permute.xlu0 %2224
        %2226 = vrot.lane.b32.xlu0 %v2219, 126
        %v2227 = vpop.permute.xlu0 %2226
        %v2232 = vadd.f32 %v1936, %v2221
        %v2233 = vadd.f32 %v1937, %v2223
        %v2234 = vadd.f32 %v1938, %v2225
        %v2235 = vadd.f32 %v1939, %v2227
        %s2236 = sld [smem:[#allocation2 + $0xbc]]
        %v2237 = vstv %s2236
        %v2238 = vmul.f32 %v2237, %v196
        %v2239 = vmul.f32 %v2237, %v197
        %v2240 = vmul.f32 %v2237, %v198
        %v2241 = vmul.f32 %v2237, %v199
        %v2242 = vmul.f32 %v2237, %v200
        %v2248 = vrot.slane %v2238, 2
        %v2249 = vrot.slane %v2239, 2
        %v2250 = vsel %vm1534, %v2248, %v2249
        %v2251 = vrot.slane %v2240, 2
        %v2252 = vsel %vm1534, %v2249, %v2251
        %v2253 = vrot.slane %v2241, 2
        %v2254 = vsel %vm1534, %v2251, %v2253
        %v2255 = vrot.slane %v2242, 2
        %v2256 = vsel %vm1534, %v2253, %v2255
        %2257 = vrot.lane.b32.xlu0 %v2250, 126
        %v2258 = vpop.permute.xlu0 %2257
        %2259 = vrot.lane.b32.xlu0 %v2252, 126
        %v2260 = vpop.permute.xlu0 %2259
        %2261 = vrot.lane.b32.xlu0 %v2254, 126
        %v2262 = vpop.permute.xlu0 %2261
        %2263 = vrot.lane.b32.xlu0 %v2256, 126
        %v2264 = vpop.permute.xlu0 %2263
        %v2269 = vadd.f32 %v1973, %v2258
        %v2270 = vadd.f32 %v1974, %v2260
        %v2271 = vadd.f32 %v1975, %v2262
        %v2272 = vadd.f32 %v1976, %v2264
        %s2273 = sld [smem:[#allocation2 + $0xe0]]
        %v2274 = vstv %s2273
        %v2275 = vmul.f32 %v2274, %v196
        %v2276 = vmul.f32 %v2274, %v197
        %v2277 = vmul.f32 %v2274, %v198
        %v2278 = vmul.f32 %v2274, %v199
        %v2279 = vmul.f32 %v2274, %v200
        %v2285 = vrot.slane %v2275, 2
        %v2286 = vrot.slane %v2276, 2
        %v2287 = vsel %vm1534, %v2285, %v2286
        %v2288 = vrot.slane %v2277, 2
        %v2289 = vsel %vm1534, %v2286, %v2288
        %v2290 = vrot.slane %v2278, 2
        %v2291 = vsel %vm1534, %v2288, %v2290
        %v2292 = vrot.slane %v2279, 2
        %v2293 = vsel %vm1534, %v2290, %v2292
        %2294 = vrot.lane.b32.xlu0 %v2287, 126
        %v2295 = vpop.permute.xlu0 %2294
        %2296 = vrot.lane.b32.xlu0 %v2289, 126
        %v2297 = vpop.permute.xlu0 %2296
        %2298 = vrot.lane.b32.xlu0 %v2291, 126
        %v2299 = vpop.permute.xlu0 %2298
        %2300 = vrot.lane.b32.xlu0 %v2293, 126
        %v2301 = vpop.permute.xlu0 %2300
        %v2306 = vadd.f32 %v2010, %v2295
        %v2307 = vadd.f32 %v2011, %v2297
        %v2308 = vadd.f32 %v2012, %v2299
        %v2309 = vadd.f32 %v2013, %v2301
        %s2310 = sld [smem:[#allocation2 + $0x104]]
        %v2311 = vstv %s2310
        %v2312 = vmul.f32 %v2311, %v196
        %v2313 = vmul.f32 %v2311, %v197
        %v2314 = vmul.f32 %v2311, %v198
        %v2315 = vmul.f32 %v2311, %v199
        %v2316 = vmul.f32 %v2311, %v200
        %v2322 = vrot.slane %v2312, 2
        %v2323 = vrot.slane %v2313, 2
        %v2324 = vsel %vm1534, %v2322, %v2323
        %v2325 = vrot.slane %v2314, 2
        %v2326 = vsel %vm1534, %v2323, %v2325
        %v2327 = vrot.slane %v2315, 2
        %v2328 = vsel %vm1534, %v2325, %v2327
        %v2329 = vrot.slane %v2316, 2
        %v2330 = vsel %vm1534, %v2327, %v2329
        %2331 = vrot.lane.b32.xlu0 %v2324, 126
        %v2332 = vpop.permute.xlu0 %2331
        %2333 = vrot.lane.b32.xlu0 %v2326, 126
        %v2334 = vpop.permute.xlu0 %2333
        %2335 = vrot.lane.b32.xlu0 %v2328, 126
        %v2336 = vpop.permute.xlu0 %2335
        %2337 = vrot.lane.b32.xlu0 %v2330, 126
        %v2338 = vpop.permute.xlu0 %2337
        %v2343 = vadd.f32 %v2047, %v2332
        %v2344 = vadd.f32 %v2048, %v2334
        %v2345 = vadd.f32 %v2049, %v2336
        %v2346 = vadd.f32 %v2050, %v2338
        %s2347 = scalar_lea.vmem %s195, 40
        %v2348 = vld [vmem:[%s2347] sm:$0xff]
        %v2349 = vld [vmem:[%s2347 + $0x8] sm:$0xff]
        %v2350 = vld [vmem:[%s2347 + $0x10] sm:$0xff]
        %v2351 = vld [vmem:[%s2347 + $0x18] sm:$0xff]
        %v2352 = vld [vmem:[%s2347 + $0x20] sm:$0x3]
        %s2353 = sld [smem:[#allocation2 + $0x9]]
        %v2354 = vstv %s2353
        %v2355 = vmul.f32 %v2354, %v2348
        %v2356 = vmul.f32 %v2354, %v2349
        %v2357 = vmul.f32 %v2354, %v2350
        %v2358 = vmul.f32 %v2354, %v2351
        %v2359 = vadd.f32 %v2084, %v2355
        %v2360 = vadd.f32 %v2085, %v2356
        %v2361 = vadd.f32 %v2086, %v2357
        %v2362 = vadd.f32 %v2087, %v2358
        %s2363 = sld [smem:[#allocation2 + $0x2d]]
        %v2364 = vstv %s2363
        %v2365 = vmul.f32 %v2364, %v2348
        %v2366 = vmul.f32 %v2364, %v2349
        %v2367 = vmul.f32 %v2364, %v2350
        %v2368 = vmul.f32 %v2364, %v2351
        %v2369 = vadd.f32 %v2121, %v2365
        %v2370 = vadd.f32 %v2122, %v2366
        %v2371 = vadd.f32 %v2123, %v2367
        %v2372 = vadd.f32 %v2124, %v2368
        %s2373 = sld [smem:[#allocation2 + $0x51]]
        %v2374 = vstv %s2373
        %v2375 = vmul.f32 %v2374, %v2348
        %v2376 = vmul.f32 %v2374, %v2349
        %v2377 = vmul.f32 %v2374, %v2350
        %v2378 = vmul.f32 %v2374, %v2351
        %v2379 = vadd.f32 %v2158, %v2375
        %v2380 = vadd.f32 %v2159, %v2376
        %v2381 = vadd.f32 %v2160, %v2377
        %v2382 = vadd.f32 %v2161, %v2378
        %s2383 = sld [smem:[#allocation2 + $0x75]]
        %v2384 = vstv %s2383
        %v2385 = vmul.f32 %v2384, %v2348
        %v2386 = vmul.f32 %v2384, %v2349
        %v2387 = vmul.f32 %v2384, %v2350
        %v2388 = vmul.f32 %v2384, %v2351
        %v2389 = vadd.f32 %v2195, %v2385
        %v2390 = vadd.f32 %v2196, %v2386
        %v2391 = vadd.f32 %v2197, %v2387
        %v2392 = vadd.f32 %v2198, %v2388
        %s2393 = sld [smem:[#allocation2 + $0x99]]
        %v2394 = vstv %s2393
        %v2395 = vmul.f32 %v2394, %v2348
        %v2396 = vmul.f32 %v2394, %v2349
        %v2397 = vmul.f32 %v2394, %v2350
        %v2398 = vmul.f32 %v2394, %v2351
        %v2399 = vadd.f32 %v2232, %v2395
        %v2400 = vadd.f32 %v2233, %v2396
        %v2401 = vadd.f32 %v2234, %v2397
        %v2402 = vadd.f32 %v2235, %v2398
        %s2403 = sld [smem:[#allocation2 + $0xbd]]
        %v2404 = vstv %s2403
        %v2405 = vmul.f32 %v2404, %v2348
        %v2406 = vmul.f32 %v2404, %v2349
        %v2407 = vmul.f32 %v2404, %v2350
        %v2408 = vmul.f32 %v2404, %v2351
        %v2409 = vadd.f32 %v2269, %v2405
        %v2410 = vadd.f32 %v2270, %v2406
        %v2411 = vadd.f32 %v2271, %v2407
        %v2412 = vadd.f32 %v2272, %v2408
        %s2413 = sld [smem:[#allocation2 + $0xe1]]
        %v2414 = vstv %s2413
        %v2415 = vmul.f32 %v2414, %v2348
        %v2416 = vmul.f32 %v2414, %v2349
        %v2417 = vmul.f32 %v2414, %v2350
        %v2418 = vmul.f32 %v2414, %v2351
        %v2419 = vadd.f32 %v2306, %v2415
        %v2420 = vadd.f32 %v2307, %v2416
        %v2421 = vadd.f32 %v2308, %v2417
        %v2422 = vadd.f32 %v2309, %v2418
        %s2423 = sld [smem:[#allocation2 + $0x105]]
        %v2424 = vstv %s2423
        %v2425 = vmul.f32 %v2424, %v2348
        %v2426 = vmul.f32 %v2424, %v2349
        %v2427 = vmul.f32 %v2424, %v2350
        %v2428 = vmul.f32 %v2424, %v2351
        %v2429 = vadd.f32 %v2343, %v2425
        %v2430 = vadd.f32 %v2344, %v2426
        %v2431 = vadd.f32 %v2345, %v2427
        %v2432 = vadd.f32 %v2346, %v2428
        %s2433 = sld [smem:[#allocation2 + $0xa]]
        %v2434 = vstv %s2433
        %v2435 = vmul.f32 %v2434, %v2348
        %v2436 = vmul.f32 %v2434, %v2349
        %v2437 = vmul.f32 %v2434, %v2350
        %v2438 = vmul.f32 %v2434, %v2351
        %2443 = vrot.lane.b32.xlu0 %v2435, 127
        %v2444 = vpop.permute.xlu0 %2443
        %2445 = vrot.lane.b32.xlu0 %v2436, 127
        %v2446 = vpop.permute.xlu0 %2445
        %2447 = vrot.lane.b32.xlu0 %v2437, 127
        %v2448 = vpop.permute.xlu0 %2447
        %2449 = vrot.lane.b32.xlu0 %v2438, 127
        %v2450 = vpop.permute.xlu0 %2449
        %v2455 = vadd.f32 %v2359, %v2444
        %v2456 = vadd.f32 %v2360, %v2446
        %v2457 = vadd.f32 %v2361, %v2448
        %v2458 = vadd.f32 %v2362, %v2450
        %s2459 = sld [smem:[#allocation2 + $0x2e]]
        %v2460 = vstv %s2459
        %v2461 = vmul.f32 %v2460, %v2348
        %v2462 = vmul.f32 %v2460, %v2349
        %v2463 = vmul.f32 %v2460, %v2350
        %v2464 = vmul.f32 %v2460, %v2351
        %2469 = vrot.lane.b32.xlu0 %v2461, 127
        %v2470 = vpop.permute.xlu0 %2469
        %2471 = vrot.lane.b32.xlu0 %v2462, 127
        %v2472 = vpop.permute.xlu0 %2471
        %2473 = vrot.lane.b32.xlu0 %v2463, 127
        %v2474 = vpop.permute.xlu0 %2473
        %2475 = vrot.lane.b32.xlu0 %v2464, 127
        %v2476 = vpop.permute.xlu0 %2475
        %v2481 = vadd.f32 %v2369, %v2470
        %v2482 = vadd.f32 %v2370, %v2472
        %v2483 = vadd.f32 %v2371, %v2474
        %v2484 = vadd.f32 %v2372, %v2476
        %s2485 = sld [smem:[#allocation2 + $0x52]]
        %v2486 = vstv %s2485
        %v2487 = vmul.f32 %v2486, %v2348
        %v2488 = vmul.f32 %v2486, %v2349
        %v2489 = vmul.f32 %v2486, %v2350
        %v2490 = vmul.f32 %v2486, %v2351
        %2495 = vrot.lane.b32.xlu0 %v2487, 127
        %v2496 = vpop.permute.xlu0 %2495
        %2497 = vrot.lane.b32.xlu0 %v2488, 127
        %v2498 = vpop.permute.xlu0 %2497
        %2499 = vrot.lane.b32.xlu0 %v2489, 127
        %v2500 = vpop.permute.xlu0 %2499
        %2501 = vrot.lane.b32.xlu0 %v2490, 127
        %v2502 = vpop.permute.xlu0 %2501
        %v2507 = vadd.f32 %v2379, %v2496
        %v2508 = vadd.f32 %v2380, %v2498
        %v2509 = vadd.f32 %v2381, %v2500
        %v2510 = vadd.f32 %v2382, %v2502
        %s2511 = sld [smem:[#allocation2 + $0x76]]
        %v2512 = vstv %s2511
        %v2513 = vmul.f32 %v2512, %v2348
        %v2514 = vmul.f32 %v2512, %v2349
        %v2515 = vmul.f32 %v2512, %v2350
        %v2516 = vmul.f32 %v2512, %v2351
        %2521 = vrot.lane.b32.xlu0 %v2513, 127
        %v2522 = vpop.permute.xlu0 %2521
        %2523 = vrot.lane.b32.xlu0 %v2514, 127
        %v2524 = vpop.permute.xlu0 %2523
        %2525 = vrot.lane.b32.xlu0 %v2515, 127
        %v2526 = vpop.permute.xlu0 %2525
        %2527 = vrot.lane.b32.xlu0 %v2516, 127
        %v2528 = vpop.permute.xlu0 %2527
        %v2533 = vadd.f32 %v2389, %v2522
        %v2534 = vadd.f32 %v2390, %v2524
        %v2535 = vadd.f32 %v2391, %v2526
        %v2536 = vadd.f32 %v2392, %v2528
        %s2537 = sld [smem:[#allocation2 + $0x9a]]
        %v2538 = vstv %s2537
        %v2539 = vmul.f32 %v2538, %v2348
        %v2540 = vmul.f32 %v2538, %v2349
        %v2541 = vmul.f32 %v2538, %v2350
        %v2542 = vmul.f32 %v2538, %v2351
        %2547 = vrot.lane.b32.xlu0 %v2539, 127
        %v2548 = vpop.permute.xlu0 %2547
        %2549 = vrot.lane.b32.xlu0 %v2540, 127
        %v2550 = vpop.permute.xlu0 %2549
        %2551 = vrot.lane.b32.xlu0 %v2541, 127
        %v2552 = vpop.permute.xlu0 %2551
        %2553 = vrot.lane.b32.xlu0 %v2542, 127
        %v2554 = vpop.permute.xlu0 %2553
        %v2559 = vadd.f32 %v2399, %v2548
        %v2560 = vadd.f32 %v2400, %v2550
        %v2561 = vadd.f32 %v2401, %v2552
        %v2562 = vadd.f32 %v2402, %v2554
        %s2563 = sld [smem:[#allocation2 + $0xbe]]
        %v2564 = vstv %s2563
        %v2565 = vmul.f32 %v2564, %v2348
        %v2566 = vmul.f32 %v2564, %v2349
        %v2567 = vmul.f32 %v2564, %v2350
        %v2568 = vmul.f32 %v2564, %v2351
        %2573 = vrot.lane.b32.xlu0 %v2565, 127
        %v2574 = vpop.permute.xlu0 %2573
        %2575 = vrot.lane.b32.xlu0 %v2566, 127
        %v2576 = vpop.permute.xlu0 %2575
        %2577 = vrot.lane.b32.xlu0 %v2567, 127
        %v2578 = vpop.permute.xlu0 %2577
        %2579 = vrot.lane.b32.xlu0 %v2568, 127
        %v2580 = vpop.permute.xlu0 %2579
        %v2585 = vadd.f32 %v2409, %v2574
        %v2586 = vadd.f32 %v2410, %v2576
        %v2587 = vadd.f32 %v2411, %v2578
        %v2588 = vadd.f32 %v2412, %v2580
        %s2589 = sld [smem:[#allocation2 + $0xe2]]
        %v2590 = vstv %s2589
        %v2591 = vmul.f32 %v2590, %v2348
        %v2592 = vmul.f32 %v2590, %v2349
        %v2593 = vmul.f32 %v2590, %v2350
        %v2594 = vmul.f32 %v2590, %v2351
        %2599 = vrot.lane.b32.xlu0 %v2591, 127
        %v2600 = vpop.permute.xlu0 %2599
        %2601 = vrot.lane.b32.xlu0 %v2592, 127
        %v2602 = vpop.permute.xlu0 %2601
        %2603 = vrot.lane.b32.xlu0 %v2593, 127
        %v2604 = vpop.permute.xlu0 %2603
        %2605 = vrot.lane.b32.xlu0 %v2594, 127
        %v2606 = vpop.permute.xlu0 %2605
        %v2611 = vadd.f32 %v2419, %v2600
        %v2612 = vadd.f32 %v2420, %v2602
        %v2613 = vadd.f32 %v2421, %v2604
        %v2614 = vadd.f32 %v2422, %v2606
        %s2615 = sld [smem:[#allocation2 + $0x106]]
        %v2616 = vstv %s2615
        %v2617 = vmul.f32 %v2616, %v2348
        %v2618 = vmul.f32 %v2616, %v2349
        %v2619 = vmul.f32 %v2616, %v2350
        %v2620 = vmul.f32 %v2616, %v2351
        %2625 = vrot.lane.b32.xlu0 %v2617, 127
        %v2626 = vpop.permute.xlu0 %2625
        %2627 = vrot.lane.b32.xlu0 %v2618, 127
        %v2628 = vpop.permute.xlu0 %2627
        %2629 = vrot.lane.b32.xlu0 %v2619, 127
        %v2630 = vpop.permute.xlu0 %2629
        %2631 = vrot.lane.b32.xlu0 %v2620, 127
        %v2632 = vpop.permute.xlu0 %2631
        %v2637 = vadd.f32 %v2429, %v2626
        %v2638 = vadd.f32 %v2430, %v2628
        %v2639 = vadd.f32 %v2431, %v2630
        %v2640 = vadd.f32 %v2432, %v2632
        %s2641 = sld [smem:[#allocation2 + $0xb]]
        %v2642 = vstv %s2641
        %v2643 = vmul.f32 %v2642, %v2348
        %v2644 = vmul.f32 %v2642, %v2349
        %v2645 = vmul.f32 %v2642, %v2350
        %v2646 = vmul.f32 %v2642, %v2351
        %2651 = vrot.lane.b32.xlu0 %v2643, 126
        %v2652 = vpop.permute.xlu0 %2651
        %2653 = vrot.lane.b32.xlu0 %v2644, 126
        %v2654 = vpop.permute.xlu0 %2653
        %2655 = vrot.lane.b32.xlu0 %v2645, 126
        %v2656 = vpop.permute.xlu0 %2655
        %2657 = vrot.lane.b32.xlu0 %v2646, 126
        %v2658 = vpop.permute.xlu0 %2657
        %v2663 = vadd.f32 %v2455, %v2652
        %v2664 = vadd.f32 %v2456, %v2654
        %v2665 = vadd.f32 %v2457, %v2656
        %v2666 = vadd.f32 %v2458, %v2658
        %s2667 = sld [smem:[#allocation2 + $0x2f]]
        %v2668 = vstv %s2667
        %v2669 = vmul.f32 %v2668, %v2348
        %v2670 = vmul.f32 %v2668, %v2349
        %v2671 = vmul.f32 %v2668, %v2350
        %v2672 = vmul.f32 %v2668, %v2351
        %2677 = vrot.lane.b32.xlu0 %v2669, 126
        %v2678 = vpop.permute.xlu0 %2677
        %2679 = vrot.lane.b32.xlu0 %v2670, 126
        %v2680 = vpop.permute.xlu0 %2679
        %2681 = vrot.lane.b32.xlu0 %v2671, 126
        %v2682 = vpop.permute.xlu0 %2681
        %2683 = vrot.lane.b32.xlu0 %v2672, 126
        %v2684 = vpop.permute.xlu0 %2683
        %v2689 = vadd.f32 %v2481, %v2678
        %v2690 = vadd.f32 %v2482, %v2680
        %v2691 = vadd.f32 %v2483, %v2682
        %v2692 = vadd.f32 %v2484, %v2684
        %s2693 = sld [smem:[#allocation2 + $0x53]]
        %v2694 = vstv %s2693
        %v2695 = vmul.f32 %v2694, %v2348
        %v2696 = vmul.f32 %v2694, %v2349
        %v2697 = vmul.f32 %v2694, %v2350
        %v2698 = vmul.f32 %v2694, %v2351
        %2703 = vrot.lane.b32.xlu0 %v2695, 126
        %v2704 = vpop.permute.xlu0 %2703
        %2705 = vrot.lane.b32.xlu0 %v2696, 126
        %v2706 = vpop.permute.xlu0 %2705
        %2707 = vrot.lane.b32.xlu0 %v2697, 126
        %v2708 = vpop.permute.xlu0 %2707
        %2709 = vrot.lane.b32.xlu0 %v2698, 126
        %v2710 = vpop.permute.xlu0 %2709
        %v2715 = vadd.f32 %v2507, %v2704
        %v2716 = vadd.f32 %v2508, %v2706
        %v2717 = vadd.f32 %v2509, %v2708
        %v2718 = vadd.f32 %v2510, %v2710
        %s2719 = sld [smem:[#allocation2 + $0x77]]
        %v2720 = vstv %s2719
        %v2721 = vmul.f32 %v2720, %v2348
        %v2722 = vmul.f32 %v2720, %v2349
        %v2723 = vmul.f32 %v2720, %v2350
        %v2724 = vmul.f32 %v2720, %v2351
        %2729 = vrot.lane.b32.xlu0 %v2721, 126
        %v2730 = vpop.permute.xlu0 %2729
        %2731 = vrot.lane.b32.xlu0 %v2722, 126
        %v2732 = vpop.permute.xlu0 %2731
        %2733 = vrot.lane.b32.xlu0 %v2723, 126
        %v2734 = vpop.permute.xlu0 %2733
        %2735 = vrot.lane.b32.xlu0 %v2724, 126
        %v2736 = vpop.permute.xlu0 %2735
        %v2741 = vadd.f32 %v2533, %v2730
        %v2742 = vadd.f32 %v2534, %v2732
        %v2743 = vadd.f32 %v2535, %v2734
        %v2744 = vadd.f32 %v2536, %v2736
        %s2745 = sld [smem:[#allocation2 + $0x9b]]
        %v2746 = vstv %s2745
        %v2747 = vmul.f32 %v2746, %v2348
        %v2748 = vmul.f32 %v2746, %v2349
        %v2749 = vmul.f32 %v2746, %v2350
        %v2750 = vmul.f32 %v2746, %v2351
        %2755 = vrot.lane.b32.xlu0 %v2747, 126
        %v2756 = vpop.permute.xlu0 %2755
        %2757 = vrot.lane.b32.xlu0 %v2748, 126
        %v2758 = vpop.permute.xlu0 %2757
        %2759 = vrot.lane.b32.xlu0 %v2749, 126
        %v2760 = vpop.permute.xlu0 %2759
        %2761 = vrot.lane.b32.xlu0 %v2750, 126
        %v2762 = vpop.permute.xlu0 %2761
        %v2767 = vadd.f32 %v2559, %v2756
        %v2768 = vadd.f32 %v2560, %v2758
        %v2769 = vadd.f32 %v2561, %v2760
        %v2770 = vadd.f32 %v2562, %v2762
        %s2771 = sld [smem:[#allocation2 + $0xbf]]
        %v2772 = vstv %s2771
        %v2773 = vmul.f32 %v2772, %v2348
        %v2774 = vmul.f32 %v2772, %v2349
        %v2775 = vmul.f32 %v2772, %v2350
        %v2776 = vmul.f32 %v2772, %v2351
        %2781 = vrot.lane.b32.xlu0 %v2773, 126
        %v2782 = vpop.permute.xlu0 %2781
        %2783 = vrot.lane.b32.xlu0 %v2774, 126
        %v2784 = vpop.permute.xlu0 %2783
        %2785 = vrot.lane.b32.xlu0 %v2775, 126
        %v2786 = vpop.permute.xlu0 %2785
        %2787 = vrot.lane.b32.xlu0 %v2776, 126
        %v2788 = vpop.permute.xlu0 %2787
        %v2793 = vadd.f32 %v2585, %v2782
        %v2794 = vadd.f32 %v2586, %v2784
        %v2795 = vadd.f32 %v2587, %v2786
        %v2796 = vadd.f32 %v2588, %v2788
        %s2797 = sld [smem:[#allocation2 + $0xe3]]
        %v2798 = vstv %s2797
        %v2799 = vmul.f32 %v2798, %v2348
        %v2800 = vmul.f32 %v2798, %v2349
        %v2801 = vmul.f32 %v2798, %v2350
        %v2802 = vmul.f32 %v2798, %v2351
        %2807 = vrot.lane.b32.xlu0 %v2799, 126
        %v2808 = vpop.permute.xlu0 %2807
        %2809 = vrot.lane.b32.xlu0 %v2800, 126
        %v2810 = vpop.permute.xlu0 %2809
        %2811 = vrot.lane.b32.xlu0 %v2801, 126
        %v2812 = vpop.permute.xlu0 %2811
        %2813 = vrot.lane.b32.xlu0 %v2802, 126
        %v2814 = vpop.permute.xlu0 %2813
        %v2819 = vadd.f32 %v2611, %v2808
        %v2820 = vadd.f32 %v2612, %v2810
        %v2821 = vadd.f32 %v2613, %v2812
        %v2822 = vadd.f32 %v2614, %v2814
        %s2823 = sld [smem:[#allocation2 + $0x107]]
        %v2824 = vstv %s2823
        %v2825 = vmul.f32 %v2824, %v2348
        %v2826 = vmul.f32 %v2824, %v2349
        %v2827 = vmul.f32 %v2824, %v2350
        %v2828 = vmul.f32 %v2824, %v2351
        %2833 = vrot.lane.b32.xlu0 %v2825, 126
        %v2834 = vpop.permute.xlu0 %2833
        %2835 = vrot.lane.b32.xlu0 %v2826, 126
        %v2836 = vpop.permute.xlu0 %2835
        %2837 = vrot.lane.b32.xlu0 %v2827, 126
        %v2838 = vpop.permute.xlu0 %2837
        %2839 = vrot.lane.b32.xlu0 %v2828, 126
        %v2840 = vpop.permute.xlu0 %2839
        %v2845 = vadd.f32 %v2637, %v2834
        %v2846 = vadd.f32 %v2638, %v2836
        %v2847 = vadd.f32 %v2639, %v2838
        %v2848 = vadd.f32 %v2640, %v2840
        %s2849 = sld [smem:[#allocation2 + $0xc]]
        %v2850 = vstv %s2849
        %v2851 = vmul.f32 %v2850, %v2348
        %v2852 = vmul.f32 %v2850, %v2349
        %v2853 = vmul.f32 %v2850, %v2350
        %v2854 = vmul.f32 %v2850, %v2351
        %v2855 = vmul.f32 %v2850, %v2352
        %v2861 = vrot.slane %v2851, 1
        %v2862 = vrot.slane %v2852, 1
        %v2863 = vsel %vm709, %v2861, %v2862
        %v2864 = vrot.slane %v2853, 1
        %v2865 = vsel %vm709, %v2862, %v2864
        %v2866 = vrot.slane %v2854, 1
        %v2867 = vsel %vm709, %v2864, %v2866
        %v2868 = vrot.slane %v2855, 1
        %v2869 = vsel %vm709, %v2866, %v2868
        %v2874 = vadd.f32 %v2663, %v2863
        %v2875 = vadd.f32 %v2664, %v2865
        %v2876 = vadd.f32 %v2665, %v2867
        %v2877 = vadd.f32 %v2666, %v2869
        %s2878 = sld [smem:[#allocation2 + $0x30]]
        %v2879 = vstv %s2878
        %v2880 = vmul.f32 %v2879, %v2348
        %v2881 = vmul.f32 %v2879, %v2349
        %v2882 = vmul.f32 %v2879, %v2350
        %v2883 = vmul.f32 %v2879, %v2351
        %v2884 = vmul.f32 %v2879, %v2352
        %v2890 = vrot.slane %v2880, 1
        %v2891 = vrot.slane %v2881, 1
        %v2892 = vsel %vm709, %v2890, %v2891
        %v2893 = vrot.slane %v2882, 1
        %v2894 = vsel %vm709, %v2891, %v2893
        %v2895 = vrot.slane %v2883, 1
        %v2896 = vsel %vm709, %v2893, %v2895
        %v2897 = vrot.slane %v2884, 1
        %v2898 = vsel %vm709, %v2895, %v2897
        %v2903 = vadd.f32 %v2689, %v2892
        %v2904 = vadd.f32 %v2690, %v2894
        %v2905 = vadd.f32 %v2691, %v2896
        %v2906 = vadd.f32 %v2692, %v2898
        %s2907 = sld [smem:[#allocation2 + $0x54]]
        %v2908 = vstv %s2907
        %v2909 = vmul.f32 %v2908, %v2348
        %v2910 = vmul.f32 %v2908, %v2349
        %v2911 = vmul.f32 %v2908, %v2350
        %v2912 = vmul.f32 %v2908, %v2351
        %v2913 = vmul.f32 %v2908, %v2352
        %v2919 = vrot.slane %v2909, 1
        %v2920 = vrot.slane %v2910, 1
        %v2921 = vsel %vm709, %v2919, %v2920
        %v2922 = vrot.slane %v2911, 1
        %v2923 = vsel %vm709, %v2920, %v2922
        %v2924 = vrot.slane %v2912, 1
        %v2925 = vsel %vm709, %v2922, %v2924
        %v2926 = vrot.slane %v2913, 1
        %v2927 = vsel %vm709, %v2924, %v2926
        %v2932 = vadd.f32 %v2715, %v2921
        %v2933 = vadd.f32 %v2716, %v2923
        %v2934 = vadd.f32 %v2717, %v2925
        %v2935 = vadd.f32 %v2718, %v2927
        %s2936 = sld [smem:[#allocation2 + $0x78]]
        %v2937 = vstv %s2936
        %v2938 = vmul.f32 %v2937, %v2348
        %v2939 = vmul.f32 %v2937, %v2349
        %v2940 = vmul.f32 %v2937, %v2350
        %v2941 = vmul.f32 %v2937, %v2351
        %v2942 = vmul.f32 %v2937, %v2352
        %v2948 = vrot.slane %v2938, 1
        %v2949 = vrot.slane %v2939, 1
        %v2950 = vsel %vm709, %v2948, %v2949
        %v2951 = vrot.slane %v2940, 1
        %v2952 = vsel %vm709, %v2949, %v2951
        %v2953 = vrot.slane %v2941, 1
        %v2954 = vsel %vm709, %v2951, %v2953
        %v2955 = vrot.slane %v2942, 1
        %v2956 = vsel %vm709, %v2953, %v2955
        %v2961 = vadd.f32 %v2741, %v2950
        %v2962 = vadd.f32 %v2742, %v2952
        %v2963 = vadd.f32 %v2743, %v2954
        %v2964 = vadd.f32 %v2744, %v2956
        %s2965 = sld [smem:[#allocation2 + $0x9c]]
        %v2966 = vstv %s2965
        %v2967 = vmul.f32 %v2966, %v2348
        %v2968 = vmul.f32 %v2966, %v2349
        %v2969 = vmul.f32 %v2966, %v2350
        %v2970 = vmul.f32 %v2966, %v2351
        %v2971 = vmul.f32 %v2966, %v2352
        %v2977 = vrot.slane %v2967, 1
        %v2978 = vrot.slane %v2968, 1
        %v2979 = vsel %vm709, %v2977, %v2978
        %v2980 = vrot.slane %v2969, 1
        %v2981 = vsel %vm709, %v2978, %v2980
        %v2982 = vrot.slane %v2970, 1
        %v2983 = vsel %vm709, %v2980, %v2982
        %v2984 = vrot.slane %v2971, 1
        %v2985 = vsel %vm709, %v2982, %v2984
        %v2990 = vadd.f32 %v2767, %v2979
        %v2991 = vadd.f32 %v2768, %v2981
        %v2992 = vadd.f32 %v2769, %v2983
        %v2993 = vadd.f32 %v2770, %v2985
        %s2994 = sld [smem:[#allocation2 + $0xc0]]
        %v2995 = vstv %s2994
        %v2996 = vmul.f32 %v2995, %v2348
        %v2997 = vmul.f32 %v2995, %v2349
        %v2998 = vmul.f32 %v2995, %v2350
        %v2999 = vmul.f32 %v2995, %v2351
        %v3000 = vmul.f32 %v2995, %v2352
        %v3006 = vrot.slane %v2996, 1
        %v3007 = vrot.slane %v2997, 1
        %v3008 = vsel %vm709, %v3006, %v3007
        %v3009 = vrot.slane %v2998, 1
        %v3010 = vsel %vm709, %v3007, %v3009
        %v3011 = vrot.slane %v2999, 1
        %v3012 = vsel %vm709, %v3009, %v3011
        %v3013 = vrot.slane %v3000, 1
        %v3014 = vsel %vm709, %v3011, %v3013
        %v3019 = vadd.f32 %v2793, %v3008
        %v3020 = vadd.f32 %v2794, %v3010
        %v3021 = vadd.f32 %v2795, %v3012
        %v3022 = vadd.f32 %v2796, %v3014
        %s3023 = sld [smem:[#allocation2 + $0xe4]]
        %v3024 = vstv %s3023
        %v3025 = vmul.f32 %v3024, %v2348
        %v3026 = vmul.f32 %v3024, %v2349
        %v3027 = vmul.f32 %v3024, %v2350
        %v3028 = vmul.f32 %v3024, %v2351
        %v3029 = vmul.f32 %v3024, %v2352
        %v3035 = vrot.slane %v3025, 1
        %v3036 = vrot.slane %v3026, 1
        %v3037 = vsel %vm709, %v3035, %v3036
        %v3038 = vrot.slane %v3027, 1
        %v3039 = vsel %vm709, %v3036, %v3038
        %v3040 = vrot.slane %v3028, 1
        %v3041 = vsel %vm709, %v3038, %v3040
        %v3042 = vrot.slane %v3029, 1
        %v3043 = vsel %vm709, %v3040, %v3042
        %v3048 = vadd.f32 %v2819, %v3037
        %v3049 = vadd.f32 %v2820, %v3039
        %v3050 = vadd.f32 %v2821, %v3041
        %v3051 = vadd.f32 %v2822, %v3043
        %s3052 = sld [smem:[#allocation2 + $0x108]]
        %v3053 = vstv %s3052
        %v3054 = vmul.f32 %v3053, %v2348
        %v3055 = vmul.f32 %v3053, %v2349
        %v3056 = vmul.f32 %v3053, %v2350
        %v3057 = vmul.f32 %v3053, %v2351
        %v3058 = vmul.f32 %v3053, %v2352
        %v3064 = vrot.slane %v3054, 1
        %v3065 = vrot.slane %v3055, 1
        %v3066 = vsel %vm709, %v3064, %v3065
        %v3067 = vrot.slane %v3056, 1
        %v3068 = vsel %vm709, %v3065, %v3067
        %v3069 = vrot.slane %v3057, 1
        %v3070 = vsel %vm709, %v3067, %v3069
        %v3071 = vrot.slane %v3058, 1
        %v3072 = vsel %vm709, %v3069, %v3071
        %v3077 = vadd.f32 %v2845, %v3066
        %v3078 = vadd.f32 %v2846, %v3068
        %v3079 = vadd.f32 %v2847, %v3070
        %v3080 = vadd.f32 %v2848, %v3072
        %s3081 = sld [smem:[#allocation2 + $0xd]]
        %v3082 = vstv %s3081
        %v3083 = vmul.f32 %v3082, %v2348
        %v3084 = vmul.f32 %v3082, %v2349
        %v3085 = vmul.f32 %v3082, %v2350
        %v3086 = vmul.f32 %v3082, %v2351
        %v3087 = vmul.f32 %v3082, %v2352
        %v3093 = vrot.slane %v3083, 1
        %v3094 = vrot.slane %v3084, 1
        %v3095 = vsel %vm709, %v3093, %v3094
        %v3096 = vrot.slane %v3085, 1
        %v3097 = vsel %vm709, %v3094, %v3096
        %v3098 = vrot.slane %v3086, 1
        %v3099 = vsel %vm709, %v3096, %v3098
        %v3100 = vrot.slane %v3087, 1
        %v3101 = vsel %vm709, %v3098, %v3100
        %3102 = vrot.lane.b32.xlu0 %v3095, 127
        %v3103 = vpop.permute.xlu0 %3102
        %3104 = vrot.lane.b32.xlu0 %v3097, 127
        %v3105 = vpop.permute.xlu0 %3104
        %3106 = vrot.lane.b32.xlu0 %v3099, 127
        %v3107 = vpop.permute.xlu0 %3106
        %3108 = vrot.lane.b32.xlu0 %v3101, 127
        %v3109 = vpop.permute.xlu0 %3108
        %v3114 = vadd.f32 %v2874, %v3103
        %v3115 = vadd.f32 %v2875, %v3105
        %v3116 = vadd.f32 %v2876, %v3107
        %v3117 = vadd.f32 %v2877, %v3109
        %s3118 = sld [smem:[#allocation2 + $0x31]]
        %v3119 = vstv %s3118
        %v3120 = vmul.f32 %v3119, %v2348
        %v3121 = vmul.f32 %v3119, %v2349
        %v3122 = vmul.f32 %v3119, %v2350
        %v3123 = vmul.f32 %v3119, %v2351
        %v3124 = vmul.f32 %v3119, %v2352
        %v3130 = vrot.slane %v3120, 1
        %v3131 = vrot.slane %v3121, 1
        %v3132 = vsel %vm709, %v3130, %v3131
        %v3133 = vrot.slane %v3122, 1
        %v3134 = vsel %vm709, %v3131, %v3133
        %v3135 = vrot.slane %v3123, 1
        %v3136 = vsel %vm709, %v3133, %v3135
        %v3137 = vrot.slane %v3124, 1
        %v3138 = vsel %vm709, %v3135, %v3137
        %3139 = vrot.lane.b32.xlu0 %v3132, 127
        %v3140 = vpop.permute.xlu0 %3139
        %3141 = vrot.lane.b32.xlu0 %v3134, 127
        %v3142 = vpop.permute.xlu0 %3141
        %3143 = vrot.lane.b32.xlu0 %v3136, 127
        %v3144 = vpop.permute.xlu0 %3143
        %3145 = vrot.lane.b32.xlu0 %v3138, 127
        %v3146 = vpop.permute.xlu0 %3145
        %v3151 = vadd.f32 %v2903, %v3140
        %v3152 = vadd.f32 %v2904, %v3142
        %v3153 = vadd.f32 %v2905, %v3144
        %v3154 = vadd.f32 %v2906, %v3146
        %s3155 = sld [smem:[#allocation2 + $0x55]]
        %v3156 = vstv %s3155
        %v3157 = vmul.f32 %v3156, %v2348
        %v3158 = vmul.f32 %v3156, %v2349
        %v3159 = vmul.f32 %v3156, %v2350
        %v3160 = vmul.f32 %v3156, %v2351
        %v3161 = vmul.f32 %v3156, %v2352
        %v3167 = vrot.slane %v3157, 1
        %v3168 = vrot.slane %v3158, 1
        %v3169 = vsel %vm709, %v3167, %v3168
        %v3170 = vrot.slane %v3159, 1
        %v3171 = vsel %vm709, %v3168, %v3170
        %v3172 = vrot.slane %v3160, 1
        %v3173 = vsel %vm709, %v3170, %v3172
        %v3174 = vrot.slane %v3161, 1
        %v3175 = vsel %vm709, %v3172, %v3174
        %3176 = vrot.lane.b32.xlu0 %v3169, 127
        %v3177 = vpop.permute.xlu0 %3176
        %3178 = vrot.lane.b32.xlu0 %v3171, 127
        %v3179 = vpop.permute.xlu0 %3178
        %3180 = vrot.lane.b32.xlu0 %v3173, 127
        %v3181 = vpop.permute.xlu0 %3180
        %3182 = vrot.lane.b32.xlu0 %v3175, 127
        %v3183 = vpop.permute.xlu0 %3182
        %v3188 = vadd.f32 %v2932, %v3177
        %v3189 = vadd.f32 %v2933, %v3179
        %v3190 = vadd.f32 %v2934, %v3181
        %v3191 = vadd.f32 %v2935, %v3183
        %s3192 = sld [smem:[#allocation2 + $0x79]]
        %v3193 = vstv %s3192
        %v3194 = vmul.f32 %v3193, %v2348
        %v3195 = vmul.f32 %v3193, %v2349
        %v3196 = vmul.f32 %v3193, %v2350
        %v3197 = vmul.f32 %v3193, %v2351
        %v3198 = vmul.f32 %v3193, %v2352
        %v3204 = vrot.slane %v3194, 1
        %v3205 = vrot.slane %v3195, 1
        %v3206 = vsel %vm709, %v3204, %v3205
        %v3207 = vrot.slane %v3196, 1
        %v3208 = vsel %vm709, %v3205, %v3207
        %v3209 = vrot.slane %v3197, 1
        %v3210 = vsel %vm709, %v3207, %v3209
        %v3211 = vrot.slane %v3198, 1
        %v3212 = vsel %vm709, %v3209, %v3211
        %3213 = vrot.lane.b32.xlu0 %v3206, 127
        %v3214 = vpop.permute.xlu0 %3213
        %3215 = vrot.lane.b32.xlu0 %v3208, 127
        %v3216 = vpop.permute.xlu0 %3215
        %3217 = vrot.lane.b32.xlu0 %v3210, 127
        %v3218 = vpop.permute.xlu0 %3217
        %3219 = vrot.lane.b32.xlu0 %v3212, 127
        %v3220 = vpop.permute.xlu0 %3219
        %v3225 = vadd.f32 %v2961, %v3214
        %v3226 = vadd.f32 %v2962, %v3216
        %v3227 = vadd.f32 %v2963, %v3218
        %v3228 = vadd.f32 %v2964, %v3220
        %s3229 = sld [smem:[#allocation2 + $0x9d]]
        %v3230 = vstv %s3229
        %v3231 = vmul.f32 %v3230, %v2348
        %v3232 = vmul.f32 %v3230, %v2349
        %v3233 = vmul.f32 %v3230, %v2350
        %v3234 = vmul.f32 %v3230, %v2351
        %v3235 = vmul.f32 %v3230, %v2352
        %v3241 = vrot.slane %v3231, 1
        %v3242 = vrot.slane %v3232, 1
        %v3243 = vsel %vm709, %v3241, %v3242
        %v3244 = vrot.slane %v3233, 1
        %v3245 = vsel %vm709, %v3242, %v3244
        %v3246 = vrot.slane %v3234, 1
        %v3247 = vsel %vm709, %v3244, %v3246
        %v3248 = vrot.slane %v3235, 1
        %v3249 = vsel %vm709, %v3246, %v3248
        %3250 = vrot.lane.b32.xlu0 %v3243, 127
        %v3251 = vpop.permute.xlu0 %3250
        %3252 = vrot.lane.b32.xlu0 %v3245, 127
        %v3253 = vpop.permute.xlu0 %3252
        %3254 = vrot.lane.b32.xlu0 %v3247, 127
        %v3255 = vpop.permute.xlu0 %3254
        %3256 = vrot.lane.b32.xlu0 %v3249, 127
        %v3257 = vpop.permute.xlu0 %3256
        %v3262 = vadd.f32 %v2990, %v3251
        %v3263 = vadd.f32 %v2991, %v3253
        %v3264 = vadd.f32 %v2992, %v3255
        %v3265 = vadd.f32 %v2993, %v3257
        %s3266 = sld [smem:[#allocation2 + $0xc1]]
        %v3267 = vstv %s3266
        %v3268 = vmul.f32 %v3267, %v2348
        %v3269 = vmul.f32 %v3267, %v2349
        %v3270 = vmul.f32 %v3267, %v2350
        %v3271 = vmul.f32 %v3267, %v2351
        %v3272 = vmul.f32 %v3267, %v2352
        %v3278 = vrot.slane %v3268, 1
        %v3279 = vrot.slane %v3269, 1
        %v3280 = vsel %vm709, %v3278, %v3279
        %v3281 = vrot.slane %v3270, 1
        %v3282 = vsel %vm709, %v3279, %v3281
        %v3283 = vrot.slane %v3271, 1
        %v3284 = vsel %vm709, %v3281, %v3283
        %v3285 = vrot.slane %v3272, 1
        %v3286 = vsel %vm709, %v3283, %v3285
        %3287 = vrot.lane.b32.xlu0 %v3280, 127
        %v3288 = vpop.permute.xlu0 %3287
        %3289 = vrot.lane.b32.xlu0 %v3282, 127
        %v3290 = vpop.permute.xlu0 %3289
        %3291 = vrot.lane.b32.xlu0 %v3284, 127
        %v3292 = vpop.permute.xlu0 %3291
        %3293 = vrot.lane.b32.xlu0 %v3286, 127
        %v3294 = vpop.permute.xlu0 %3293
        %v3299 = vadd.f32 %v3019, %v3288
        %v3300 = vadd.f32 %v3020, %v3290
        %v3301 = vadd.f32 %v3021, %v3292
        %v3302 = vadd.f32 %v3022, %v3294
        %s3303 = sld [smem:[#allocation2 + $0xe5]]
        %v3304 = vstv %s3303
        %v3305 = vmul.f32 %v3304, %v2348
        %v3306 = vmul.f32 %v3304, %v2349
        %v3307 = vmul.f32 %v3304, %v2350
        %v3308 = vmul.f32 %v3304, %v2351
        %v3309 = vmul.f32 %v3304, %v2352
        %v3315 = vrot.slane %v3305, 1
        %v3316 = vrot.slane %v3306, 1
        %v3317 = vsel %vm709, %v3315, %v3316
        %v3318 = vrot.slane %v3307, 1
        %v3319 = vsel %vm709, %v3316, %v3318
        %v3320 = vrot.slane %v3308, 1
        %v3321 = vsel %vm709, %v3318, %v3320
        %v3322 = vrot.slane %v3309, 1
        %v3323 = vsel %vm709, %v3320, %v3322
        %3324 = vrot.lane.b32.xlu0 %v3317, 127
        %v3325 = vpop.permute.xlu0 %3324
        %3326 = vrot.lane.b32.xlu0 %v3319, 127
        %v3327 = vpop.permute.xlu0 %3326
        %3328 = vrot.lane.b32.xlu0 %v3321, 127
        %v3329 = vpop.permute.xlu0 %3328
        %3330 = vrot.lane.b32.xlu0 %v3323, 127
        %v3331 = vpop.permute.xlu0 %3330
        %v3336 = vadd.f32 %v3048, %v3325
        %v3337 = vadd.f32 %v3049, %v3327
        %v3338 = vadd.f32 %v3050, %v3329
        %v3339 = vadd.f32 %v3051, %v3331
        %s3340 = sld [smem:[#allocation2 + $0x109]]
        %v3341 = vstv %s3340
        %v3342 = vmul.f32 %v3341, %v2348
        %v3343 = vmul.f32 %v3341, %v2349
        %v3344 = vmul.f32 %v3341, %v2350
        %v3345 = vmul.f32 %v3341, %v2351
        %v3346 = vmul.f32 %v3341, %v2352
        %v3352 = vrot.slane %v3342, 1
        %v3353 = vrot.slane %v3343, 1
        %v3354 = vsel %vm709, %v3352, %v3353
        %v3355 = vrot.slane %v3344, 1
        %v3356 = vsel %vm709, %v3353, %v3355
        %v3357 = vrot.slane %v3345, 1
        %v3358 = vsel %vm709, %v3355, %v3357
        %v3359 = vrot.slane %v3346, 1
        %v3360 = vsel %vm709, %v3357, %v3359
        %3361 = vrot.lane.b32.xlu0 %v3354, 127
        %v3362 = vpop.permute.xlu0 %3361
        %3363 = vrot.lane.b32.xlu0 %v3356, 127
        %v3364 = vpop.permute.xlu0 %3363
        %3365 = vrot.lane.b32.xlu0 %v3358, 127
        %v3366 = vpop.permute.xlu0 %3365
        %3367 = vrot.lane.b32.xlu0 %v3360, 127
        %v3368 = vpop.permute.xlu0 %3367
        %v3373 = vadd.f32 %v3077, %v3362
        %v3374 = vadd.f32 %v3078, %v3364
        %v3375 = vadd.f32 %v3079, %v3366
        %v3376 = vadd.f32 %v3080, %v3368
        %s3377 = sld [smem:[#allocation2 + $0xe]]
        %v3378 = vstv %s3377
        %v3379 = vmul.f32 %v3378, %v2348
        %v3380 = vmul.f32 %v3378, %v2349
        %v3381 = vmul.f32 %v3378, %v2350
        %v3382 = vmul.f32 %v3378, %v2351
        %v3383 = vmul.f32 %v3378, %v2352
        %v3389 = vrot.slane %v3379, 1
        %v3390 = vrot.slane %v3380, 1
        %v3391 = vsel %vm709, %v3389, %v3390
        %v3392 = vrot.slane %v3381, 1
        %v3393 = vsel %vm709, %v3390, %v3392
        %v3394 = vrot.slane %v3382, 1
        %v3395 = vsel %vm709, %v3392, %v3394
        %v3396 = vrot.slane %v3383, 1
        %v3397 = vsel %vm709, %v3394, %v3396
        %3398 = vrot.lane.b32.xlu0 %v3391, 126
        %v3399 = vpop.permute.xlu0 %3398
        %3400 = vrot.lane.b32.xlu0 %v3393, 126
        %v3401 = vpop.permute.xlu0 %3400
        %3402 = vrot.lane.b32.xlu0 %v3395, 126
        %v3403 = vpop.permute.xlu0 %3402
        %3404 = vrot.lane.b32.xlu0 %v3397, 126
        %v3405 = vpop.permute.xlu0 %3404
        %v3410 = vadd.f32 %v3114, %v3399
        %v3411 = vadd.f32 %v3115, %v3401
        %v3412 = vadd.f32 %v3116, %v3403
        %v3413 = vadd.f32 %v3117, %v3405
        %s3414 = sld [smem:[#allocation2 + $0x32]]
        %v3415 = vstv %s3414
        %v3416 = vmul.f32 %v3415, %v2348
        %v3417 = vmul.f32 %v3415, %v2349
        %v3418 = vmul.f32 %v3415, %v2350
        %v3419 = vmul.f32 %v3415, %v2351
        %v3420 = vmul.f32 %v3415, %v2352
        %v3426 = vrot.slane %v3416, 1
        %v3427 = vrot.slane %v3417, 1
        %v3428 = vsel %vm709, %v3426, %v3427
        %v3429 = vrot.slane %v3418, 1
        %v3430 = vsel %vm709, %v3427, %v3429
        %v3431 = vrot.slane %v3419, 1
        %v3432 = vsel %vm709, %v3429, %v3431
        %v3433 = vrot.slane %v3420, 1
        %v3434 = vsel %vm709, %v3431, %v3433
        %3435 = vrot.lane.b32.xlu0 %v3428, 126
        %v3436 = vpop.permute.xlu0 %3435
        %3437 = vrot.lane.b32.xlu0 %v3430, 126
        %v3438 = vpop.permute.xlu0 %3437
        %3439 = vrot.lane.b32.xlu0 %v3432, 126
        %v3440 = vpop.permute.xlu0 %3439
        %3441 = vrot.lane.b32.xlu0 %v3434, 126
        %v3442 = vpop.permute.xlu0 %3441
        %v3447 = vadd.f32 %v3151, %v3436
        %v3448 = vadd.f32 %v3152, %v3438
        %v3449 = vadd.f32 %v3153, %v3440
        %v3450 = vadd.f32 %v3154, %v3442
        %s3451 = sld [smem:[#allocation2 + $0x56]]
        %v3452 = vstv %s3451
        %v3453 = vmul.f32 %v3452, %v2348
        %v3454 = vmul.f32 %v3452, %v2349
        %v3455 = vmul.f32 %v3452, %v2350
        %v3456 = vmul.f32 %v3452, %v2351
        %v3457 = vmul.f32 %v3452, %v2352
        %v3463 = vrot.slane %v3453, 1
        %v3464 = vrot.slane %v3454, 1
        %v3465 = vsel %vm709, %v3463, %v3464
        %v3466 = vrot.slane %v3455, 1
        %v3467 = vsel %vm709, %v3464, %v3466
        %v3468 = vrot.slane %v3456, 1
        %v3469 = vsel %vm709, %v3466, %v3468
        %v3470 = vrot.slane %v3457, 1
        %v3471 = vsel %vm709, %v3468, %v3470
        %3472 = vrot.lane.b32.xlu0 %v3465, 126
        %v3473 = vpop.permute.xlu0 %3472
        %3474 = vrot.lane.b32.xlu0 %v3467, 126
        %v3475 = vpop.permute.xlu0 %3474
        %3476 = vrot.lane.b32.xlu0 %v3469, 126
        %v3477 = vpop.permute.xlu0 %3476
        %3478 = vrot.lane.b32.xlu0 %v3471, 126
        %v3479 = vpop.permute.xlu0 %3478
        %v3484 = vadd.f32 %v3188, %v3473
        %v3485 = vadd.f32 %v3189, %v3475
        %v3486 = vadd.f32 %v3190, %v3477
        %v3487 = vadd.f32 %v3191, %v3479
        %s3488 = sld [smem:[#allocation2 + $0x7a]]
        %v3489 = vstv %s3488
        %v3490 = vmul.f32 %v3489, %v2348
        %v3491 = vmul.f32 %v3489, %v2349
        %v3492 = vmul.f32 %v3489, %v2350
        %v3493 = vmul.f32 %v3489, %v2351
        %v3494 = vmul.f32 %v3489, %v2352
        %v3500 = vrot.slane %v3490, 1
        %v3501 = vrot.slane %v3491, 1
        %v3502 = vsel %vm709, %v3500, %v3501
        %v3503 = vrot.slane %v3492, 1
        %v3504 = vsel %vm709, %v3501, %v3503
        %v3505 = vrot.slane %v3493, 1
        %v3506 = vsel %vm709, %v3503, %v3505
        %v3507 = vrot.slane %v3494, 1
        %v3508 = vsel %vm709, %v3505, %v3507
        %3509 = vrot.lane.b32.xlu0 %v3502, 126
        %v3510 = vpop.permute.xlu0 %3509
        %3511 = vrot.lane.b32.xlu0 %v3504, 126
        %v3512 = vpop.permute.xlu0 %3511
        %3513 = vrot.lane.b32.xlu0 %v3506, 126
        %v3514 = vpop.permute.xlu0 %3513
        %3515 = vrot.lane.b32.xlu0 %v3508, 126
        %v3516 = vpop.permute.xlu0 %3515
        %v3521 = vadd.f32 %v3225, %v3510
        %v3522 = vadd.f32 %v3226, %v3512
        %v3523 = vadd.f32 %v3227, %v3514
        %v3524 = vadd.f32 %v3228, %v3516
        %s3525 = sld [smem:[#allocation2 + $0x9e]]
        %v3526 = vstv %s3525
        %v3527 = vmul.f32 %v3526, %v2348
        %v3528 = vmul.f32 %v3526, %v2349
        %v3529 = vmul.f32 %v3526, %v2350
        %v3530 = vmul.f32 %v3526, %v2351
        %v3531 = vmul.f32 %v3526, %v2352
        %v3537 = vrot.slane %v3527, 1
        %v3538 = vrot.slane %v3528, 1
        %v3539 = vsel %vm709, %v3537, %v3538
        %v3540 = vrot.slane %v3529, 1
        %v3541 = vsel %vm709, %v3538, %v3540
        %v3542 = vrot.slane %v3530, 1
        %v3543 = vsel %vm709, %v3540, %v3542
        %v3544 = vrot.slane %v3531, 1
        %v3545 = vsel %vm709, %v3542, %v3544
        %3546 = vrot.lane.b32.xlu0 %v3539, 126
        %v3547 = vpop.permute.xlu0 %3546
        %3548 = vrot.lane.b32.xlu0 %v3541, 126
        %v3549 = vpop.permute.xlu0 %3548
        %3550 = vrot.lane.b32.xlu0 %v3543, 126
        %v3551 = vpop.permute.xlu0 %3550
        %3552 = vrot.lane.b32.xlu0 %v3545, 126
        %v3553 = vpop.permute.xlu0 %3552
        %v3558 = vadd.f32 %v3262, %v3547
        %v3559 = vadd.f32 %v3263, %v3549
        %v3560 = vadd.f32 %v3264, %v3551
        %v3561 = vadd.f32 %v3265, %v3553
        %s3562 = sld [smem:[#allocation2 + $0xc2]]
        %v3563 = vstv %s3562
        %v3564 = vmul.f32 %v3563, %v2348
        %v3565 = vmul.f32 %v3563, %v2349
        %v3566 = vmul.f32 %v3563, %v2350
        %v3567 = vmul.f32 %v3563, %v2351
        %v3568 = vmul.f32 %v3563, %v2352
        %v3574 = vrot.slane %v3564, 1
        %v3575 = vrot.slane %v3565, 1
        %v3576 = vsel %vm709, %v3574, %v3575
        %v3577 = vrot.slane %v3566, 1
        %v3578 = vsel %vm709, %v3575, %v3577
        %v3579 = vrot.slane %v3567, 1
        %v3580 = vsel %vm709, %v3577, %v3579
        %v3581 = vrot.slane %v3568, 1
        %v3582 = vsel %vm709, %v3579, %v3581
        %3583 = vrot.lane.b32.xlu0 %v3576, 126
        %v3584 = vpop.permute.xlu0 %3583
        %3585 = vrot.lane.b32.xlu0 %v3578, 126
        %v3586 = vpop.permute.xlu0 %3585
        %3587 = vrot.lane.b32.xlu0 %v3580, 126
        %v3588 = vpop.permute.xlu0 %3587
        %3589 = vrot.lane.b32.xlu0 %v3582, 126
        %v3590 = vpop.permute.xlu0 %3589
        %v3595 = vadd.f32 %v3299, %v3584
        %v3596 = vadd.f32 %v3300, %v3586
        %v3597 = vadd.f32 %v3301, %v3588
        %v3598 = vadd.f32 %v3302, %v3590
        %s3599 = sld [smem:[#allocation2 + $0xe6]]
        %v3600 = vstv %s3599
        %v3601 = vmul.f32 %v3600, %v2348
        %v3602 = vmul.f32 %v3600, %v2349
        %v3603 = vmul.f32 %v3600, %v2350
        %v3604 = vmul.f32 %v3600, %v2351
        %v3605 = vmul.f32 %v3600, %v2352
        %v3611 = vrot.slane %v3601, 1
        %v3612 = vrot.slane %v3602, 1
        %v3613 = vsel %vm709, %v3611, %v3612
        %v3614 = vrot.slane %v3603, 1
        %v3615 = vsel %vm709, %v3612, %v3614
        %v3616 = vrot.slane %v3604, 1
        %v3617 = vsel %vm709, %v3614, %v3616
        %v3618 = vrot.slane %v3605, 1
        %v3619 = vsel %vm709, %v3616, %v3618
        %3620 = vrot.lane.b32.xlu0 %v3613, 126
        %v3621 = vpop.permute.xlu0 %3620
        %3622 = vrot.lane.b32.xlu0 %v3615, 126
        %v3623 = vpop.permute.xlu0 %3622
        %3624 = vrot.lane.b32.xlu0 %v3617, 126
        %v3625 = vpop.permute.xlu0 %3624
        %3626 = vrot.lane.b32.xlu0 %v3619, 126
        %v3627 = vpop.permute.xlu0 %3626
        %v3632 = vadd.f32 %v3336, %v3621
        %v3633 = vadd.f32 %v3337, %v3623
        %v3634 = vadd.f32 %v3338, %v3625
        %v3635 = vadd.f32 %v3339, %v3627
        %s3636 = sld [smem:[#allocation2 + $0x10a]]
        %v3637 = vstv %s3636
        %v3638 = vmul.f32 %v3637, %v2348
        %v3639 = vmul.f32 %v3637, %v2349
        %v3640 = vmul.f32 %v3637, %v2350
        %v3641 = vmul.f32 %v3637, %v2351
        %v3642 = vmul.f32 %v3637, %v2352
        %v3648 = vrot.slane %v3638, 1
        %v3649 = vrot.slane %v3639, 1
        %v3650 = vsel %vm709, %v3648, %v3649
        %v3651 = vrot.slane %v3640, 1
        %v3652 = vsel %vm709, %v3649, %v3651
        %v3653 = vrot.slane %v3641, 1
        %v3654 = vsel %vm709, %v3651, %v3653
        %v3655 = vrot.slane %v3642, 1
        %v3656 = vsel %vm709, %v3653, %v3655
        %3657 = vrot.lane.b32.xlu0 %v3650, 126
        %v3658 = vpop.permute.xlu0 %3657
        %3659 = vrot.lane.b32.xlu0 %v3652, 126
        %v3660 = vpop.permute.xlu0 %3659
        %3661 = vrot.lane.b32.xlu0 %v3654, 126
        %v3662 = vpop.permute.xlu0 %3661
        %3663 = vrot.lane.b32.xlu0 %v3656, 126
        %v3664 = vpop.permute.xlu0 %3663
        %v3669 = vadd.f32 %v3373, %v3658
        %v3670 = vadd.f32 %v3374, %v3660
        %v3671 = vadd.f32 %v3375, %v3662
        %v3672 = vadd.f32 %v3376, %v3664
        %s3673 = sld [smem:[#allocation2 + $0xf]]
        %v3674 = vstv %s3673
        %v3675 = vmul.f32 %v3674, %v2348
        %v3676 = vmul.f32 %v3674, %v2349
        %v3677 = vmul.f32 %v3674, %v2350
        %v3678 = vmul.f32 %v3674, %v2351
        %v3679 = vmul.f32 %v3674, %v2352
        %v3685 = vrot.slane %v3675, 2
        %v3686 = vrot.slane %v3676, 2
        %v3687 = vsel %vm1534, %v3685, %v3686
        %v3688 = vrot.slane %v3677, 2
        %v3689 = vsel %vm1534, %v3686, %v3688
        %v3690 = vrot.slane %v3678, 2
        %v3691 = vsel %vm1534, %v3688, %v3690
        %v3692 = vrot.slane %v3679, 2
        %v3693 = vsel %vm1534, %v3690, %v3692
        %v3698 = vadd.f32 %v3410, %v3687
        %v3699 = vadd.f32 %v3411, %v3689
        %v3700 = vadd.f32 %v3412, %v3691
        %v3701 = vadd.f32 %v3413, %v3693
        %s3702 = sld [smem:[#allocation2 + $0x33]]
        %v3703 = vstv %s3702
        %v3704 = vmul.f32 %v3703, %v2348
        %v3705 = vmul.f32 %v3703, %v2349
        %v3706 = vmul.f32 %v3703, %v2350
        %v3707 = vmul.f32 %v3703, %v2351
        %v3708 = vmul.f32 %v3703, %v2352
        %v3714 = vrot.slane %v3704, 2
        %v3715 = vrot.slane %v3705, 2
        %v3716 = vsel %vm1534, %v3714, %v3715
        %v3717 = vrot.slane %v3706, 2
        %v3718 = vsel %vm1534, %v3715, %v3717
        %v3719 = vrot.slane %v3707, 2
        %v3720 = vsel %vm1534, %v3717, %v3719
        %v3721 = vrot.slane %v3708, 2
        %v3722 = vsel %vm1534, %v3719, %v3721
        %v3727 = vadd.f32 %v3447, %v3716
        %v3728 = vadd.f32 %v3448, %v3718
        %v3729 = vadd.f32 %v3449, %v3720
        %v3730 = vadd.f32 %v3450, %v3722
        %s3731 = sld [smem:[#allocation2 + $0x57]]
        %v3732 = vstv %s3731
        %v3733 = vmul.f32 %v3732, %v2348
        %v3734 = vmul.f32 %v3732, %v2349
        %v3735 = vmul.f32 %v3732, %v2350
        %v3736 = vmul.f32 %v3732, %v2351
        %v3737 = vmul.f32 %v3732, %v2352
        %v3743 = vrot.slane %v3733, 2
        %v3744 = vrot.slane %v3734, 2
        %v3745 = vsel %vm1534, %v3743, %v3744
        %v3746 = vrot.slane %v3735, 2
        %v3747 = vsel %vm1534, %v3744, %v3746
        %v3748 = vrot.slane %v3736, 2
        %v3749 = vsel %vm1534, %v3746, %v3748
        %v3750 = vrot.slane %v3737, 2
        %v3751 = vsel %vm1534, %v3748, %v3750
        %v3756 = vadd.f32 %v3484, %v3745
        %v3757 = vadd.f32 %v3485, %v3747
        %v3758 = vadd.f32 %v3486, %v3749
        %v3759 = vadd.f32 %v3487, %v3751
        %s3760 = sld [smem:[#allocation2 + $0x7b]]
        %v3761 = vstv %s3760
        %v3762 = vmul.f32 %v3761, %v2348
        %v3763 = vmul.f32 %v3761, %v2349
        %v3764 = vmul.f32 %v3761, %v2350
        %v3765 = vmul.f32 %v3761, %v2351
        %v3766 = vmul.f32 %v3761, %v2352
        %v3772 = vrot.slane %v3762, 2
        %v3773 = vrot.slane %v3763, 2
        %v3774 = vsel %vm1534, %v3772, %v3773
        %v3775 = vrot.slane %v3764, 2
        %v3776 = vsel %vm1534, %v3773, %v3775
        %v3777 = vrot.slane %v3765, 2
        %v3778 = vsel %vm1534, %v3775, %v3777
        %v3779 = vrot.slane %v3766, 2
        %v3780 = vsel %vm1534, %v3777, %v3779
        %v3785 = vadd.f32 %v3521, %v3774
        %v3786 = vadd.f32 %v3522, %v3776
        %v3787 = vadd.f32 %v3523, %v3778
        %v3788 = vadd.f32 %v3524, %v3780
        %s3789 = sld [smem:[#allocation2 + $0x9f]]
        %v3790 = vstv %s3789
        %v3791 = vmul.f32 %v3790, %v2348
        %v3792 = vmul.f32 %v3790, %v2349
        %v3793 = vmul.f32 %v3790, %v2350
        %v3794 = vmul.f32 %v3790, %v2351
        %v3795 = vmul.f32 %v3790, %v2352
        %v3801 = vrot.slane %v3791, 2
        %v3802 = vrot.slane %v3792, 2
        %v3803 = vsel %vm1534, %v3801, %v3802
        %v3804 = vrot.slane %v3793, 2
        %v3805 = vsel %vm1534, %v3802, %v3804
        %v3806 = vrot.slane %v3794, 2
        %v3807 = vsel %vm1534, %v3804, %v3806
        %v3808 = vrot.slane %v3795, 2
        %v3809 = vsel %vm1534, %v3806, %v3808
        %v3814 = vadd.f32 %v3558, %v3803
        %v3815 = vadd.f32 %v3559, %v3805
        %v3816 = vadd.f32 %v3560, %v3807
        %v3817 = vadd.f32 %v3561, %v3809
        %s3818 = sld [smem:[#allocation2 + $0xc3]]
        %v3819 = vstv %s3818
        %v3820 = vmul.f32 %v3819, %v2348
        %v3821 = vmul.f32 %v3819, %v2349
        %v3822 = vmul.f32 %v3819, %v2350
        %v3823 = vmul.f32 %v3819, %v2351
        %v3824 = vmul.f32 %v3819, %v2352
        %v3830 = vrot.slane %v3820, 2
        %v3831 = vrot.slane %v3821, 2
        %v3832 = vsel %vm1534, %v3830, %v3831
        %v3833 = vrot.slane %v3822, 2
        %v3834 = vsel %vm1534, %v3831, %v3833
        %v3835 = vrot.slane %v3823, 2
        %v3836 = vsel %vm1534, %v3833, %v3835
        %v3837 = vrot.slane %v3824, 2
        %v3838 = vsel %vm1534, %v3835, %v3837
        %v3843 = vadd.f32 %v3595, %v3832
        %v3844 = vadd.f32 %v3596, %v3834
        %v3845 = vadd.f32 %v3597, %v3836
        %v3846 = vadd.f32 %v3598, %v3838
        %s3847 = sld [smem:[#allocation2 + $0xe7]]
        %v3848 = vstv %s3847
        %v3849 = vmul.f32 %v3848, %v2348
        %v3850 = vmul.f32 %v3848, %v2349
        %v3851 = vmul.f32 %v3848, %v2350
        %v3852 = vmul.f32 %v3848, %v2351
        %v3853 = vmul.f32 %v3848, %v2352
        %v3859 = vrot.slane %v3849, 2
        %v3860 = vrot.slane %v3850, 2
        %v3861 = vsel %vm1534, %v3859, %v3860
        %v3862 = vrot.slane %v3851, 2
        %v3863 = vsel %vm1534, %v3860, %v3862
        %v3864 = vrot.slane %v3852, 2
        %v3865 = vsel %vm1534, %v3862, %v3864
        %v3866 = vrot.slane %v3853, 2
        %v3867 = vsel %vm1534, %v3864, %v3866
        %v3872 = vadd.f32 %v3632, %v3861
        %v3873 = vadd.f32 %v3633, %v3863
        %v3874 = vadd.f32 %v3634, %v3865
        %v3875 = vadd.f32 %v3635, %v3867
        %s3876 = sld [smem:[#allocation2 + $0x10b]]
        %v3877 = vstv %s3876
        %v3878 = vmul.f32 %v3877, %v2348
        %v3879 = vmul.f32 %v3877, %v2349
        %v3880 = vmul.f32 %v3877, %v2350
        %v3881 = vmul.f32 %v3877, %v2351
        %v3882 = vmul.f32 %v3877, %v2352
        %v3888 = vrot.slane %v3878, 2
        %v3889 = vrot.slane %v3879, 2
        %v3890 = vsel %vm1534, %v3888, %v3889
        %v3891 = vrot.slane %v3880, 2
        %v3892 = vsel %vm1534, %v3889, %v3891
        %v3893 = vrot.slane %v3881, 2
        %v3894 = vsel %vm1534, %v3891, %v3893
        %v3895 = vrot.slane %v3882, 2
        %v3896 = vsel %vm1534, %v3893, %v3895
        %v3901 = vadd.f32 %v3669, %v3890
        %v3902 = vadd.f32 %v3670, %v3892
        %v3903 = vadd.f32 %v3671, %v3894
        %v3904 = vadd.f32 %v3672, %v3896
        %s3905 = sld [smem:[#allocation2 + $0x10]]
        %v3906 = vstv %s3905
        %v3907 = vmul.f32 %v3906, %v2348
        %v3908 = vmul.f32 %v3906, %v2349
        %v3909 = vmul.f32 %v3906, %v2350
        %v3910 = vmul.f32 %v3906, %v2351
        %v3911 = vmul.f32 %v3906, %v2352
        %v3917 = vrot.slane %v3907, 2
        %v3918 = vrot.slane %v3908, 2
        %v3919 = vsel %vm1534, %v3917, %v3918
        %v3920 = vrot.slane %v3909, 2
        %v3921 = vsel %vm1534, %v3918, %v3920
        %v3922 = vrot.slane %v3910, 2
        %v3923 = vsel %vm1534, %v3920, %v3922
        %v3924 = vrot.slane %v3911, 2
        %v3925 = vsel %vm1534, %v3922, %v3924
        %3926 = vrot.lane.b32.xlu0 %v3919, 127
        %v3927 = vpop.permute.xlu0 %3926
        %3928 = vrot.lane.b32.xlu0 %v3921, 127
        %v3929 = vpop.permute.xlu0 %3928
        %3930 = vrot.lane.b32.xlu0 %v3923, 127
        %v3931 = vpop.permute.xlu0 %3930
        %3932 = vrot.lane.b32.xlu0 %v3925, 127
        %v3933 = vpop.permute.xlu0 %3932
        %v3938 = vadd.f32 %v3698, %v3927
        %v3939 = vadd.f32 %v3699, %v3929
        %v3940 = vadd.f32 %v3700, %v3931
        %v3941 = vadd.f32 %v3701, %v3933
        %s3942 = sld [smem:[#allocation2 + $0x34]]
        %v3943 = vstv %s3942
        %v3944 = vmul.f32 %v3943, %v2348
        %v3945 = vmul.f32 %v3943, %v2349
        %v3946 = vmul.f32 %v3943, %v2350
        %v3947 = vmul.f32 %v3943, %v2351
        %v3948 = vmul.f32 %v3943, %v2352
        %v3954 = vrot.slane %v3944, 2
        %v3955 = vrot.slane %v3945, 2
        %v3956 = vsel %vm1534, %v3954, %v3955
        %v3957 = vrot.slane %v3946, 2
        %v3958 = vsel %vm1534, %v3955, %v3957
        %v3959 = vrot.slane %v3947, 2
        %v3960 = vsel %vm1534, %v3957, %v3959
        %v3961 = vrot.slane %v3948, 2
        %v3962 = vsel %vm1534, %v3959, %v3961
        %3963 = vrot.lane.b32.xlu0 %v3956, 127
        %v3964 = vpop.permute.xlu0 %3963
        %3965 = vrot.lane.b32.xlu0 %v3958, 127
        %v3966 = vpop.permute.xlu0 %3965
        %3967 = vrot.lane.b32.xlu0 %v3960, 127
        %v3968 = vpop.permute.xlu0 %3967
        %3969 = vrot.lane.b32.xlu0 %v3962, 127
        %v3970 = vpop.permute.xlu0 %3969
        %v3975 = vadd.f32 %v3727, %v3964
        %v3976 = vadd.f32 %v3728, %v3966
        %v3977 = vadd.f32 %v3729, %v3968
        %v3978 = vadd.f32 %v3730, %v3970
        %s3979 = sld [smem:[#allocation2 + $0x58]]
        %v3980 = vstv %s3979
        %v3981 = vmul.f32 %v3980, %v2348
        %v3982 = vmul.f32 %v3980, %v2349
        %v3983 = vmul.f32 %v3980, %v2350
        %v3984 = vmul.f32 %v3980, %v2351
        %v3985 = vmul.f32 %v3980, %v2352
        %v3991 = vrot.slane %v3981, 2
        %v3992 = vrot.slane %v3982, 2
        %v3993 = vsel %vm1534, %v3991, %v3992
        %v3994 = vrot.slane %v3983, 2
        %v3995 = vsel %vm1534, %v3992, %v3994
        %v3996 = vrot.slane %v3984, 2
        %v3997 = vsel %vm1534, %v3994, %v3996
        %v3998 = vrot.slane %v3985, 2
        %v3999 = vsel %vm1534, %v3996, %v3998
        %4000 = vrot.lane.b32.xlu0 %v3993, 127
        %v4001 = vpop.permute.xlu0 %4000
        %4002 = vrot.lane.b32.xlu0 %v3995, 127
        %v4003 = vpop.permute.xlu0 %4002
        %4004 = vrot.lane.b32.xlu0 %v3997, 127
        %v4005 = vpop.permute.xlu0 %4004
        %4006 = vrot.lane.b32.xlu0 %v3999, 127
        %v4007 = vpop.permute.xlu0 %4006
        %v4012 = vadd.f32 %v3756, %v4001
        %v4013 = vadd.f32 %v3757, %v4003
        %v4014 = vadd.f32 %v3758, %v4005
        %v4015 = vadd.f32 %v3759, %v4007
        %s4016 = sld [smem:[#allocation2 + $0x7c]]
        %v4017 = vstv %s4016
        %v4018 = vmul.f32 %v4017, %v2348
        %v4019 = vmul.f32 %v4017, %v2349
        %v4020 = vmul.f32 %v4017, %v2350
        %v4021 = vmul.f32 %v4017, %v2351
        %v4022 = vmul.f32 %v4017, %v2352
        %v4028 = vrot.slane %v4018, 2
        %v4029 = vrot.slane %v4019, 2
        %v4030 = vsel %vm1534, %v4028, %v4029
        %v4031 = vrot.slane %v4020, 2
        %v4032 = vsel %vm1534, %v4029, %v4031
        %v4033 = vrot.slane %v4021, 2
        %v4034 = vsel %vm1534, %v4031, %v4033
        %v4035 = vrot.slane %v4022, 2
        %v4036 = vsel %vm1534, %v4033, %v4035
        %4037 = vrot.lane.b32.xlu0 %v4030, 127
        %v4038 = vpop.permute.xlu0 %4037
        %4039 = vrot.lane.b32.xlu0 %v4032, 127
        %v4040 = vpop.permute.xlu0 %4039
        %4041 = vrot.lane.b32.xlu0 %v4034, 127
        %v4042 = vpop.permute.xlu0 %4041
        %4043 = vrot.lane.b32.xlu0 %v4036, 127
        %v4044 = vpop.permute.xlu0 %4043
        %v4049 = vadd.f32 %v3785, %v4038
        %v4050 = vadd.f32 %v3786, %v4040
        %v4051 = vadd.f32 %v3787, %v4042
        %v4052 = vadd.f32 %v3788, %v4044
        %s4053 = sld [smem:[#allocation2 + $0xa0]]
        %v4054 = vstv %s4053
        %v4055 = vmul.f32 %v4054, %v2348
        %v4056 = vmul.f32 %v4054, %v2349
        %v4057 = vmul.f32 %v4054, %v2350
        %v4058 = vmul.f32 %v4054, %v2351
        %v4059 = vmul.f32 %v4054, %v2352
        %v4065 = vrot.slane %v4055, 2
        %v4066 = vrot.slane %v4056, 2
        %v4067 = vsel %vm1534, %v4065, %v4066
        %v4068 = vrot.slane %v4057, 2
        %v4069 = vsel %vm1534, %v4066, %v4068
        %v4070 = vrot.slane %v4058, 2
        %v4071 = vsel %vm1534, %v4068, %v4070
        %v4072 = vrot.slane %v4059, 2
        %v4073 = vsel %vm1534, %v4070, %v4072
        %4074 = vrot.lane.b32.xlu0 %v4067, 127
        %v4075 = vpop.permute.xlu0 %4074
        %4076 = vrot.lane.b32.xlu0 %v4069, 127
        %v4077 = vpop.permute.xlu0 %4076
        %4078 = vrot.lane.b32.xlu0 %v4071, 127
        %v4079 = vpop.permute.xlu0 %4078
        %4080 = vrot.lane.b32.xlu0 %v4073, 127
        %v4081 = vpop.permute.xlu0 %4080
        %v4086 = vadd.f32 %v3814, %v4075
        %v4087 = vadd.f32 %v3815, %v4077
        %v4088 = vadd.f32 %v3816, %v4079
        %v4089 = vadd.f32 %v3817, %v4081
        %s4090 = sld [smem:[#allocation2 + $0xc4]]
        %v4091 = vstv %s4090
        %v4092 = vmul.f32 %v4091, %v2348
        %v4093 = vmul.f32 %v4091, %v2349
        %v4094 = vmul.f32 %v4091, %v2350
        %v4095 = vmul.f32 %v4091, %v2351
        %v4096 = vmul.f32 %v4091, %v2352
        %v4102 = vrot.slane %v4092, 2
        %v4103 = vrot.slane %v4093, 2
        %v4104 = vsel %vm1534, %v4102, %v4103
        %v4105 = vrot.slane %v4094, 2
        %v4106 = vsel %vm1534, %v4103, %v4105
        %v4107 = vrot.slane %v4095, 2
        %v4108 = vsel %vm1534, %v4105, %v4107
        %v4109 = vrot.slane %v4096, 2
        %v4110 = vsel %vm1534, %v4107, %v4109
        %4111 = vrot.lane.b32.xlu0 %v4104, 127
        %v4112 = vpop.permute.xlu0 %4111
        %4113 = vrot.lane.b32.xlu0 %v4106, 127
        %v4114 = vpop.permute.xlu0 %4113
        %4115 = vrot.lane.b32.xlu0 %v4108, 127
        %v4116 = vpop.permute.xlu0 %4115
        %4117 = vrot.lane.b32.xlu0 %v4110, 127
        %v4118 = vpop.permute.xlu0 %4117
        %v4123 = vadd.f32 %v3843, %v4112
        %v4124 = vadd.f32 %v3844, %v4114
        %v4125 = vadd.f32 %v3845, %v4116
        %v4126 = vadd.f32 %v3846, %v4118
        %s4127 = sld [smem:[#allocation2 + $0xe8]]
        %v4128 = vstv %s4127
        %v4129 = vmul.f32 %v4128, %v2348
        %v4130 = vmul.f32 %v4128, %v2349
        %v4131 = vmul.f32 %v4128, %v2350
        %v4132 = vmul.f32 %v4128, %v2351
        %v4133 = vmul.f32 %v4128, %v2352
        %v4139 = vrot.slane %v4129, 2
        %v4140 = vrot.slane %v4130, 2
        %v4141 = vsel %vm1534, %v4139, %v4140
        %v4142 = vrot.slane %v4131, 2
        %v4143 = vsel %vm1534, %v4140, %v4142
        %v4144 = vrot.slane %v4132, 2
        %v4145 = vsel %vm1534, %v4142, %v4144
        %v4146 = vrot.slane %v4133, 2
        %v4147 = vsel %vm1534, %v4144, %v4146
        %4148 = vrot.lane.b32.xlu0 %v4141, 127
        %v4149 = vpop.permute.xlu0 %4148
        %4150 = vrot.lane.b32.xlu0 %v4143, 127
        %v4151 = vpop.permute.xlu0 %4150
        %4152 = vrot.lane.b32.xlu0 %v4145, 127
        %v4153 = vpop.permute.xlu0 %4152
        %4154 = vrot.lane.b32.xlu0 %v4147, 127
        %v4155 = vpop.permute.xlu0 %4154
        %v4160 = vadd.f32 %v3872, %v4149
        %v4161 = vadd.f32 %v3873, %v4151
        %v4162 = vadd.f32 %v3874, %v4153
        %v4163 = vadd.f32 %v3875, %v4155
        %s4164 = sld [smem:[#allocation2 + $0x10c]]
        %v4165 = vstv %s4164
        %v4166 = vmul.f32 %v4165, %v2348
        %v4167 = vmul.f32 %v4165, %v2349
        %v4168 = vmul.f32 %v4165, %v2350
        %v4169 = vmul.f32 %v4165, %v2351
        %v4170 = vmul.f32 %v4165, %v2352
        %v4176 = vrot.slane %v4166, 2
        %v4177 = vrot.slane %v4167, 2
        %v4178 = vsel %vm1534, %v4176, %v4177
        %v4179 = vrot.slane %v4168, 2
        %v4180 = vsel %vm1534, %v4177, %v4179
        %v4181 = vrot.slane %v4169, 2
        %v4182 = vsel %vm1534, %v4179, %v4181
        %v4183 = vrot.slane %v4170, 2
        %v4184 = vsel %vm1534, %v4181, %v4183
        %4185 = vrot.lane.b32.xlu0 %v4178, 127
        %v4186 = vpop.permute.xlu0 %4185
        %4187 = vrot.lane.b32.xlu0 %v4180, 127
        %v4188 = vpop.permute.xlu0 %4187
        %4189 = vrot.lane.b32.xlu0 %v4182, 127
        %v4190 = vpop.permute.xlu0 %4189
        %4191 = vrot.lane.b32.xlu0 %v4184, 127
        %v4192 = vpop.permute.xlu0 %4191
        %v4197 = vadd.f32 %v3901, %v4186
        %v4198 = vadd.f32 %v3902, %v4188
        %v4199 = vadd.f32 %v3903, %v4190
        %v4200 = vadd.f32 %v3904, %v4192
        %s4201 = sld [smem:[#allocation2 + $0x11]]
        %v4202 = vstv %s4201
        %v4203 = vmul.f32 %v4202, %v2348
        %v4204 = vmul.f32 %v4202, %v2349
        %v4205 = vmul.f32 %v4202, %v2350
        %v4206 = vmul.f32 %v4202, %v2351
        %v4207 = vmul.f32 %v4202, %v2352
        %v4213 = vrot.slane %v4203, 2
        %v4214 = vrot.slane %v4204, 2
        %v4215 = vsel %vm1534, %v4213, %v4214
        %v4216 = vrot.slane %v4205, 2
        %v4217 = vsel %vm1534, %v4214, %v4216
        %v4218 = vrot.slane %v4206, 2
        %v4219 = vsel %vm1534, %v4216, %v4218
        %v4220 = vrot.slane %v4207, 2
        %v4221 = vsel %vm1534, %v4218, %v4220
        %4222 = vrot.lane.b32.xlu0 %v4215, 126
        %v4223 = vpop.permute.xlu0 %4222
        %4224 = vrot.lane.b32.xlu0 %v4217, 126
        %v4225 = vpop.permute.xlu0 %4224
        %4226 = vrot.lane.b32.xlu0 %v4219, 126
        %v4227 = vpop.permute.xlu0 %4226
        %4228 = vrot.lane.b32.xlu0 %v4221, 126
        %v4229 = vpop.permute.xlu0 %4228
        %v4234 = vadd.f32 %v3938, %v4223
        %v4235 = vadd.f32 %v3939, %v4225
        %v4236 = vadd.f32 %v3940, %v4227
        %v4237 = vadd.f32 %v3941, %v4229
        %s4238 = sld [smem:[#allocation2 + $0x35]]
        %v4239 = vstv %s4238
        %v4240 = vmul.f32 %v4239, %v2348
        %v4241 = vmul.f32 %v4239, %v2349
        %v4242 = vmul.f32 %v4239, %v2350
        %v4243 = vmul.f32 %v4239, %v2351
        %v4244 = vmul.f32 %v4239, %v2352
        %v4250 = vrot.slane %v4240, 2
        %v4251 = vrot.slane %v4241, 2
        %v4252 = vsel %vm1534, %v4250, %v4251
        %v4253 = vrot.slane %v4242, 2
        %v4254 = vsel %vm1534, %v4251, %v4253
        %v4255 = vrot.slane %v4243, 2
        %v4256 = vsel %vm1534, %v4253, %v4255
        %v4257 = vrot.slane %v4244, 2
        %v4258 = vsel %vm1534, %v4255, %v4257
        %4259 = vrot.lane.b32.xlu0 %v4252, 126
        %v4260 = vpop.permute.xlu0 %4259
        %4261 = vrot.lane.b32.xlu0 %v4254, 126
        %v4262 = vpop.permute.xlu0 %4261
        %4263 = vrot.lane.b32.xlu0 %v4256, 126
        %v4264 = vpop.permute.xlu0 %4263
        %4265 = vrot.lane.b32.xlu0 %v4258, 126
        %v4266 = vpop.permute.xlu0 %4265
        %v4271 = vadd.f32 %v3975, %v4260
        %v4272 = vadd.f32 %v3976, %v4262
        %v4273 = vadd.f32 %v3977, %v4264
        %v4274 = vadd.f32 %v3978, %v4266
        %s4275 = sld [smem:[#allocation2 + $0x59]]
        %v4276 = vstv %s4275
        %v4277 = vmul.f32 %v4276, %v2348
        %v4278 = vmul.f32 %v4276, %v2349
        %v4279 = vmul.f32 %v4276, %v2350
        %v4280 = vmul.f32 %v4276, %v2351
        %v4281 = vmul.f32 %v4276, %v2352
        %v4287 = vrot.slane %v4277, 2
        %v4288 = vrot.slane %v4278, 2
        %v4289 = vsel %vm1534, %v4287, %v4288
        %v4290 = vrot.slane %v4279, 2
        %v4291 = vsel %vm1534, %v4288, %v4290
        %v4292 = vrot.slane %v4280, 2
        %v4293 = vsel %vm1534, %v4290, %v4292
        %v4294 = vrot.slane %v4281, 2
        %v4295 = vsel %vm1534, %v4292, %v4294
        %4296 = vrot.lane.b32.xlu0 %v4289, 126
        %v4297 = vpop.permute.xlu0 %4296
        %4298 = vrot.lane.b32.xlu0 %v4291, 126
        %v4299 = vpop.permute.xlu0 %4298
        %4300 = vrot.lane.b32.xlu0 %v4293, 126
        %v4301 = vpop.permute.xlu0 %4300
        %4302 = vrot.lane.b32.xlu0 %v4295, 126
        %v4303 = vpop.permute.xlu0 %4302
        %v4308 = vadd.f32 %v4012, %v4297
        %v4309 = vadd.f32 %v4013, %v4299
        %v4310 = vadd.f32 %v4014, %v4301
        %v4311 = vadd.f32 %v4015, %v4303
        %s4312 = sld [smem:[#allocation2 + $0x7d]]
        %v4313 = vstv %s4312
        %v4314 = vmul.f32 %v4313, %v2348
        %v4315 = vmul.f32 %v4313, %v2349
        %v4316 = vmul.f32 %v4313, %v2350
        %v4317 = vmul.f32 %v4313, %v2351
        %v4318 = vmul.f32 %v4313, %v2352
        %v4324 = vrot.slane %v4314, 2
        %v4325 = vrot.slane %v4315, 2
        %v4326 = vsel %vm1534, %v4324, %v4325
        %v4327 = vrot.slane %v4316, 2
        %v4328 = vsel %vm1534, %v4325, %v4327
        %v4329 = vrot.slane %v4317, 2
        %v4330 = vsel %vm1534, %v4327, %v4329
        %v4331 = vrot.slane %v4318, 2
        %v4332 = vsel %vm1534, %v4329, %v4331
        %4333 = vrot.lane.b32.xlu0 %v4326, 126
        %v4334 = vpop.permute.xlu0 %4333
        %4335 = vrot.lane.b32.xlu0 %v4328, 126
        %v4336 = vpop.permute.xlu0 %4335
        %4337 = vrot.lane.b32.xlu0 %v4330, 126
        %v4338 = vpop.permute.xlu0 %4337
        %4339 = vrot.lane.b32.xlu0 %v4332, 126
        %v4340 = vpop.permute.xlu0 %4339
        %v4345 = vadd.f32 %v4049, %v4334
        %v4346 = vadd.f32 %v4050, %v4336
        %v4347 = vadd.f32 %v4051, %v4338
        %v4348 = vadd.f32 %v4052, %v4340
        %s4349 = sld [smem:[#allocation2 + $0xa1]]
        %v4350 = vstv %s4349
        %v4351 = vmul.f32 %v4350, %v2348
        %v4352 = vmul.f32 %v4350, %v2349
        %v4353 = vmul.f32 %v4350, %v2350
        %v4354 = vmul.f32 %v4350, %v2351
        %v4355 = vmul.f32 %v4350, %v2352
        %v4361 = vrot.slane %v4351, 2
        %v4362 = vrot.slane %v4352, 2
        %v4363 = vsel %vm1534, %v4361, %v4362
        %v4364 = vrot.slane %v4353, 2
        %v4365 = vsel %vm1534, %v4362, %v4364
        %v4366 = vrot.slane %v4354, 2
        %v4367 = vsel %vm1534, %v4364, %v4366
        %v4368 = vrot.slane %v4355, 2
        %v4369 = vsel %vm1534, %v4366, %v4368
        %4370 = vrot.lane.b32.xlu0 %v4363, 126
        %v4371 = vpop.permute.xlu0 %4370
        %4372 = vrot.lane.b32.xlu0 %v4365, 126
        %v4373 = vpop.permute.xlu0 %4372
        %4374 = vrot.lane.b32.xlu0 %v4367, 126
        %v4375 = vpop.permute.xlu0 %4374
        %4376 = vrot.lane.b32.xlu0 %v4369, 126
        %v4377 = vpop.permute.xlu0 %4376
        %v4382 = vadd.f32 %v4086, %v4371
        %v4383 = vadd.f32 %v4087, %v4373
        %v4384 = vadd.f32 %v4088, %v4375
        %v4385 = vadd.f32 %v4089, %v4377
        %s4386 = sld [smem:[#allocation2 + $0xc5]]
        %v4387 = vstv %s4386
        %v4388 = vmul.f32 %v4387, %v2348
        %v4389 = vmul.f32 %v4387, %v2349
        %v4390 = vmul.f32 %v4387, %v2350
        %v4391 = vmul.f32 %v4387, %v2351
        %v4392 = vmul.f32 %v4387, %v2352
        %v4398 = vrot.slane %v4388, 2
        %v4399 = vrot.slane %v4389, 2
        %v4400 = vsel %vm1534, %v4398, %v4399
        %v4401 = vrot.slane %v4390, 2
        %v4402 = vsel %vm1534, %v4399, %v4401
        %v4403 = vrot.slane %v4391, 2
        %v4404 = vsel %vm1534, %v4401, %v4403
        %v4405 = vrot.slane %v4392, 2
        %v4406 = vsel %vm1534, %v4403, %v4405
        %4407 = vrot.lane.b32.xlu0 %v4400, 126
        %v4408 = vpop.permute.xlu0 %4407
        %4409 = vrot.lane.b32.xlu0 %v4402, 126
        %v4410 = vpop.permute.xlu0 %4409
        %4411 = vrot.lane.b32.xlu0 %v4404, 126
        %v4412 = vpop.permute.xlu0 %4411
        %4413 = vrot.lane.b32.xlu0 %v4406, 126
        %v4414 = vpop.permute.xlu0 %4413
        %v4419 = vadd.f32 %v4123, %v4408
        %v4420 = vadd.f32 %v4124, %v4410
        %v4421 = vadd.f32 %v4125, %v4412
        %v4422 = vadd.f32 %v4126, %v4414
        %s4423 = sld [smem:[#allocation2 + $0xe9]]
        %v4424 = vstv %s4423
        %v4425 = vmul.f32 %v4424, %v2348
        %v4426 = vmul.f32 %v4424, %v2349
        %v4427 = vmul.f32 %v4424, %v2350
        %v4428 = vmul.f32 %v4424, %v2351
        %v4429 = vmul.f32 %v4424, %v2352
        %v4435 = vrot.slane %v4425, 2
        %v4436 = vrot.slane %v4426, 2
        %v4437 = vsel %vm1534, %v4435, %v4436
        %v4438 = vrot.slane %v4427, 2
        %v4439 = vsel %vm1534, %v4436, %v4438
        %v4440 = vrot.slane %v4428, 2
        %v4441 = vsel %vm1534, %v4438, %v4440
        %v4442 = vrot.slane %v4429, 2
        %v4443 = vsel %vm1534, %v4440, %v4442
        %4444 = vrot.lane.b32.xlu0 %v4437, 126
        %v4445 = vpop.permute.xlu0 %4444
        %4446 = vrot.lane.b32.xlu0 %v4439, 126
        %v4447 = vpop.permute.xlu0 %4446
        %4448 = vrot.lane.b32.xlu0 %v4441, 126
        %v4449 = vpop.permute.xlu0 %4448
        %4450 = vrot.lane.b32.xlu0 %v4443, 126
        %v4451 = vpop.permute.xlu0 %4450
        %v4456 = vadd.f32 %v4160, %v4445
        %v4457 = vadd.f32 %v4161, %v4447
        %v4458 = vadd.f32 %v4162, %v4449
        %v4459 = vadd.f32 %v4163, %v4451
        %s4460 = sld [smem:[#allocation2 + $0x10d]]
        %v4461 = vstv %s4460
        %v4462 = vmul.f32 %v4461, %v2348
        %v4463 = vmul.f32 %v4461, %v2349
        %v4464 = vmul.f32 %v4461, %v2350
        %v4465 = vmul.f32 %v4461, %v2351
        %v4466 = vmul.f32 %v4461, %v2352
        %v4472 = vrot.slane %v4462, 2
        %v4473 = vrot.slane %v4463, 2
        %v4474 = vsel %vm1534, %v4472, %v4473
        %v4475 = vrot.slane %v4464, 2
        %v4476 = vsel %vm1534, %v4473, %v4475
        %v4477 = vrot.slane %v4465, 2
        %v4478 = vsel %vm1534, %v4475, %v4477
        %v4479 = vrot.slane %v4466, 2
        %v4480 = vsel %vm1534, %v4477, %v4479
        %4481 = vrot.lane.b32.xlu0 %v4474, 126
        %v4482 = vpop.permute.xlu0 %4481
        %4483 = vrot.lane.b32.xlu0 %v4476, 126
        %v4484 = vpop.permute.xlu0 %4483
        %4485 = vrot.lane.b32.xlu0 %v4478, 126
        %v4486 = vpop.permute.xlu0 %4485
        %4487 = vrot.lane.b32.xlu0 %v4480, 126
        %v4488 = vpop.permute.xlu0 %4487
        %v4493 = vadd.f32 %v4197, %v4482
        %v4494 = vadd.f32 %v4198, %v4484
        %v4495 = vadd.f32 %v4199, %v4486
        %v4496 = vadd.f32 %v4200, %v4488
        %s4497 = scalar_lea.vmem %s195, 80
        %v4498 = vld [vmem:[%s4497] sm:$0xff]
        %v4499 = vld [vmem:[%s4497 + $0x8] sm:$0xff]
        %v4500 = vld [vmem:[%s4497 + $0x10] sm:$0xff]
        %v4501 = vld [vmem:[%s4497 + $0x18] sm:$0xff]
        %v4502 = vld [vmem:[%s4497 + $0x20] sm:$0x3]
        %s4503 = sld [smem:[#allocation2 + $0x12]]
        %v4504 = vstv %s4503
        %v4505 = vmul.f32 %v4504, %v4498
        %v4506 = vmul.f32 %v4504, %v4499
        %v4507 = vmul.f32 %v4504, %v4500
        %v4508 = vmul.f32 %v4504, %v4501
        %v4509 = vadd.f32 %v4234, %v4505
        %v4510 = vadd.f32 %v4235, %v4506
        %v4511 = vadd.f32 %v4236, %v4507
        %v4512 = vadd.f32 %v4237, %v4508
        %s4513 = sld [smem:[#allocation2 + $0x36]]
        %v4514 = vstv %s4513
        %v4515 = vmul.f32 %v4514, %v4498
        %v4516 = vmul.f32 %v4514, %v4499
        %v4517 = vmul.f32 %v4514, %v4500
        %v4518 = vmul.f32 %v4514, %v4501
        %v4519 = vadd.f32 %v4271, %v4515
        %v4520 = vadd.f32 %v4272, %v4516
        %v4521 = vadd.f32 %v4273, %v4517
        %v4522 = vadd.f32 %v4274, %v4518
        %s4523 = sld [smem:[#allocation2 + $0x5a]]
        %v4524 = vstv %s4523
        %v4525 = vmul.f32 %v4524, %v4498
        %v4526 = vmul.f32 %v4524, %v4499
        %v4527 = vmul.f32 %v4524, %v4500
        %v4528 = vmul.f32 %v4524, %v4501
        %v4529 = vadd.f32 %v4308, %v4525
        %v4530 = vadd.f32 %v4309, %v4526
        %v4531 = vadd.f32 %v4310, %v4527
        %v4532 = vadd.f32 %v4311, %v4528
        %s4533 = sld [smem:[#allocation2 + $0x7e]]
        %v4534 = vstv %s4533
        %v4535 = vmul.f32 %v4534, %v4498
        %v4536 = vmul.f32 %v4534, %v4499
        %v4537 = vmul.f32 %v4534, %v4500
        %v4538 = vmul.f32 %v4534, %v4501
        %v4539 = vadd.f32 %v4345, %v4535
        %v4540 = vadd.f32 %v4346, %v4536
        %v4541 = vadd.f32 %v4347, %v4537
        %v4542 = vadd.f32 %v4348, %v4538
        %s4543 = sld [smem:[#allocation2 + $0xa2]]
        %v4544 = vstv %s4543
        %v4545 = vmul.f32 %v4544, %v4498
        %v4546 = vmul.f32 %v4544, %v4499
        %v4547 = vmul.f32 %v4544, %v4500
        %v4548 = vmul.f32 %v4544, %v4501
        %v4549 = vadd.f32 %v4382, %v4545
        %v4550 = vadd.f32 %v4383, %v4546
        %v4551 = vadd.f32 %v4384, %v4547
        %v4552 = vadd.f32 %v4385, %v4548
        %s4553 = sld [smem:[#allocation2 + $0xc6]]
        %v4554 = vstv %s4553
        %v4555 = vmul.f32 %v4554, %v4498
        %v4556 = vmul.f32 %v4554, %v4499
        %v4557 = vmul.f32 %v4554, %v4500
        %v4558 = vmul.f32 %v4554, %v4501
        %v4559 = vadd.f32 %v4419, %v4555
        %v4560 = vadd.f32 %v4420, %v4556
        %v4561 = vadd.f32 %v4421, %v4557
        %v4562 = vadd.f32 %v4422, %v4558
        %s4563 = sld [smem:[#allocation2 + $0xea]]
        %v4564 = vstv %s4563
        %v4565 = vmul.f32 %v4564, %v4498
        %v4566 = vmul.f32 %v4564, %v4499
        %v4567 = vmul.f32 %v4564, %v4500
        %v4568 = vmul.f32 %v4564, %v4501
        %v4569 = vadd.f32 %v4456, %v4565
        %v4570 = vadd.f32 %v4457, %v4566
        %v4571 = vadd.f32 %v4458, %v4567
        %v4572 = vadd.f32 %v4459, %v4568
        %s4573 = sld [smem:[#allocation2 + $0x10e]]
        %v4574 = vstv %s4573
        %v4575 = vmul.f32 %v4574, %v4498
        %v4576 = vmul.f32 %v4574, %v4499
        %v4577 = vmul.f32 %v4574, %v4500
        %v4578 = vmul.f32 %v4574, %v4501
        %v4579 = vadd.f32 %v4493, %v4575
        %v4580 = vadd.f32 %v4494, %v4576
        %v4581 = vadd.f32 %v4495, %v4577
        %v4582 = vadd.f32 %v4496, %v4578
        %s4583 = sld [smem:[#allocation2 + $0x13]]
        %v4584 = vstv %s4583
        %v4585 = vmul.f32 %v4584, %v4498
        %v4586 = vmul.f32 %v4584, %v4499
        %v4587 = vmul.f32 %v4584, %v4500
        %v4588 = vmul.f32 %v4584, %v4501
        %4593 = vrot.lane.b32.xlu0 %v4585, 127
        %v4594 = vpop.permute.xlu0 %4593
        %4595 = vrot.lane.b32.xlu0 %v4586, 127
        %v4596 = vpop.permute.xlu0 %4595
        %4597 = vrot.lane.b32.xlu0 %v4587, 127
        %v4598 = vpop.permute.xlu0 %4597
        %4599 = vrot.lane.b32.xlu0 %v4588, 127
        %v4600 = vpop.permute.xlu0 %4599
        %v4605 = vadd.f32 %v4509, %v4594
        %v4606 = vadd.f32 %v4510, %v4596
        %v4607 = vadd.f32 %v4511, %v4598
        %v4608 = vadd.f32 %v4512, %v4600
        %s4609 = sld [smem:[#allocation2 + $0x37]]
        %v4610 = vstv %s4609
        %v4611 = vmul.f32 %v4610, %v4498
        %v4612 = vmul.f32 %v4610, %v4499
        %v4613 = vmul.f32 %v4610, %v4500
        %v4614 = vmul.f32 %v4610, %v4501
        %4619 = vrot.lane.b32.xlu0 %v4611, 127
        %v4620 = vpop.permute.xlu0 %4619
        %4621 = vrot.lane.b32.xlu0 %v4612, 127
        %v4622 = vpop.permute.xlu0 %4621
        %4623 = vrot.lane.b32.xlu0 %v4613, 127
        %v4624 = vpop.permute.xlu0 %4623
        %4625 = vrot.lane.b32.xlu0 %v4614, 127
        %v4626 = vpop.permute.xlu0 %4625
        %v4631 = vadd.f32 %v4519, %v4620
        %v4632 = vadd.f32 %v4520, %v4622
        %v4633 = vadd.f32 %v4521, %v4624
        %v4634 = vadd.f32 %v4522, %v4626
        %s4635 = sld [smem:[#allocation2 + $0x5b]]
        %v4636 = vstv %s4635
        %v4637 = vmul.f32 %v4636, %v4498
        %v4638 = vmul.f32 %v4636, %v4499
        %v4639 = vmul.f32 %v4636, %v4500
        %v4640 = vmul.f32 %v4636, %v4501
        %4645 = vrot.lane.b32.xlu0 %v4637, 127
        %v4646 = vpop.permute.xlu0 %4645
        %4647 = vrot.lane.b32.xlu0 %v4638, 127
        %v4648 = vpop.permute.xlu0 %4647
        %4649 = vrot.lane.b32.xlu0 %v4639, 127
        %v4650 = vpop.permute.xlu0 %4649
        %4651 = vrot.lane.b32.xlu0 %v4640, 127
        %v4652 = vpop.permute.xlu0 %4651
        %v4657 = vadd.f32 %v4529, %v4646
        %v4658 = vadd.f32 %v4530, %v4648
        %v4659 = vadd.f32 %v4531, %v4650
        %v4660 = vadd.f32 %v4532, %v4652
        %s4661 = sld [smem:[#allocation2 + $0x7f]]
        %v4662 = vstv %s4661
        %v4663 = vmul.f32 %v4662, %v4498
        %v4664 = vmul.f32 %v4662, %v4499
        %v4665 = vmul.f32 %v4662, %v4500
        %v4666 = vmul.f32 %v4662, %v4501
        %4671 = vrot.lane.b32.xlu0 %v4663, 127
        %v4672 = vpop.permute.xlu0 %4671
        %4673 = vrot.lane.b32.xlu0 %v4664, 127
        %v4674 = vpop.permute.xlu0 %4673
        %4675 = vrot.lane.b32.xlu0 %v4665, 127
        %v4676 = vpop.permute.xlu0 %4675
        %4677 = vrot.lane.b32.xlu0 %v4666, 127
        %v4678 = vpop.permute.xlu0 %4677
        %v4683 = vadd.f32 %v4539, %v4672
        %v4684 = vadd.f32 %v4540, %v4674
        %v4685 = vadd.f32 %v4541, %v4676
        %v4686 = vadd.f32 %v4542, %v4678
        %s4687 = sld [smem:[#allocation2 + $0xa3]]
        %v4688 = vstv %s4687
        %v4689 = vmul.f32 %v4688, %v4498
        %v4690 = vmul.f32 %v4688, %v4499
        %v4691 = vmul.f32 %v4688, %v4500
        %v4692 = vmul.f32 %v4688, %v4501
        %4697 = vrot.lane.b32.xlu0 %v4689, 127
        %v4698 = vpop.permute.xlu0 %4697
        %4699 = vrot.lane.b32.xlu0 %v4690, 127
        %v4700 = vpop.permute.xlu0 %4699
        %4701 = vrot.lane.b32.xlu0 %v4691, 127
        %v4702 = vpop.permute.xlu0 %4701
        %4703 = vrot.lane.b32.xlu0 %v4692, 127
        %v4704 = vpop.permute.xlu0 %4703
        %v4709 = vadd.f32 %v4549, %v4698
        %v4710 = vadd.f32 %v4550, %v4700
        %v4711 = vadd.f32 %v4551, %v4702
        %v4712 = vadd.f32 %v4552, %v4704
        %s4713 = sld [smem:[#allocation2 + $0xc7]]
        %v4714 = vstv %s4713
        %v4715 = vmul.f32 %v4714, %v4498
        %v4716 = vmul.f32 %v4714, %v4499
        %v4717 = vmul.f32 %v4714, %v4500
        %v4718 = vmul.f32 %v4714, %v4501
        %4723 = vrot.lane.b32.xlu0 %v4715, 127
        %v4724 = vpop.permute.xlu0 %4723
        %4725 = vrot.lane.b32.xlu0 %v4716, 127
        %v4726 = vpop.permute.xlu0 %4725
        %4727 = vrot.lane.b32.xlu0 %v4717, 127
        %v4728 = vpop.permute.xlu0 %4727
        %4729 = vrot.lane.b32.xlu0 %v4718, 127
        %v4730 = vpop.permute.xlu0 %4729
        %v4735 = vadd.f32 %v4559, %v4724
        %v4736 = vadd.f32 %v4560, %v4726
        %v4737 = vadd.f32 %v4561, %v4728
        %v4738 = vadd.f32 %v4562, %v4730
        %s4739 = sld [smem:[#allocation2 + $0xeb]]
        %v4740 = vstv %s4739
        %v4741 = vmul.f32 %v4740, %v4498
        %v4742 = vmul.f32 %v4740, %v4499
        %v4743 = vmul.f32 %v4740, %v4500
        %v4744 = vmul.f32 %v4740, %v4501
        %4749 = vrot.lane.b32.xlu0 %v4741, 127
        %v4750 = vpop.permute.xlu0 %4749
        %4751 = vrot.lane.b32.xlu0 %v4742, 127
        %v4752 = vpop.permute.xlu0 %4751
        %4753 = vrot.lane.b32.xlu0 %v4743, 127
        %v4754 = vpop.permute.xlu0 %4753
        %4755 = vrot.lane.b32.xlu0 %v4744, 127
        %v4756 = vpop.permute.xlu0 %4755
        %v4761 = vadd.f32 %v4569, %v4750
        %v4762 = vadd.f32 %v4570, %v4752
        %v4763 = vadd.f32 %v4571, %v4754
        %v4764 = vadd.f32 %v4572, %v4756
        %s4765 = sld [smem:[#allocation2 + $0x10f]]
        %v4766 = vstv %s4765
        %v4767 = vmul.f32 %v4766, %v4498
        %v4768 = vmul.f32 %v4766, %v4499
        %v4769 = vmul.f32 %v4766, %v4500
        %v4770 = vmul.f32 %v4766, %v4501
        %4775 = vrot.lane.b32.xlu0 %v4767, 127
        %v4776 = vpop.permute.xlu0 %4775
        %4777 = vrot.lane.b32.xlu0 %v4768, 127
        %v4778 = vpop.permute.xlu0 %4777
        %4779 = vrot.lane.b32.xlu0 %v4769, 127
        %v4780 = vpop.permute.xlu0 %4779
        %4781 = vrot.lane.b32.xlu0 %v4770, 127
        %v4782 = vpop.permute.xlu0 %4781
        %v4787 = vadd.f32 %v4579, %v4776
        %v4788 = vadd.f32 %v4580, %v4778
        %v4789 = vadd.f32 %v4581, %v4780
        %v4790 = vadd.f32 %v4582, %v4782
        %s4791 = sld [smem:[#allocation2 + $0x14]]
        %v4792 = vstv %s4791
        %v4793 = vmul.f32 %v4792, %v4498
        %v4794 = vmul.f32 %v4792, %v4499
        %v4795 = vmul.f32 %v4792, %v4500
        %v4796 = vmul.f32 %v4792, %v4501
        %4801 = vrot.lane.b32.xlu0 %v4793, 126
        %v4802 = vpop.permute.xlu0 %4801
        %4803 = vrot.lane.b32.xlu0 %v4794, 126
        %v4804 = vpop.permute.xlu0 %4803
        %4805 = vrot.lane.b32.xlu0 %v4795, 126
        %v4806 = vpop.permute.xlu0 %4805
        %4807 = vrot.lane.b32.xlu0 %v4796, 126
        %v4808 = vpop.permute.xlu0 %4807
        %v4813 = vadd.f32 %v4605, %v4802
        %v4814 = vadd.f32 %v4606, %v4804
        %v4815 = vadd.f32 %v4607, %v4806
        %v4816 = vadd.f32 %v4608, %v4808
        %s4817 = sld [smem:[#allocation2 + $0x38]]
        %v4818 = vstv %s4817
        %v4819 = vmul.f32 %v4818, %v4498
        %v4820 = vmul.f32 %v4818, %v4499
        %v4821 = vmul.f32 %v4818, %v4500
        %v4822 = vmul.f32 %v4818, %v4501
        %4827 = vrot.lane.b32.xlu0 %v4819, 126
        %v4828 = vpop.permute.xlu0 %4827
        %4829 = vrot.lane.b32.xlu0 %v4820, 126
        %v4830 = vpop.permute.xlu0 %4829
        %4831 = vrot.lane.b32.xlu0 %v4821, 126
        %v4832 = vpop.permute.xlu0 %4831
        %4833 = vrot.lane.b32.xlu0 %v4822, 126
        %v4834 = vpop.permute.xlu0 %4833
        %v4839 = vadd.f32 %v4631, %v4828
        %v4840 = vadd.f32 %v4632, %v4830
        %v4841 = vadd.f32 %v4633, %v4832
        %v4842 = vadd.f32 %v4634, %v4834
        %s4843 = sld [smem:[#allocation2 + $0x5c]]
        %v4844 = vstv %s4843
        %v4845 = vmul.f32 %v4844, %v4498
        %v4846 = vmul.f32 %v4844, %v4499
        %v4847 = vmul.f32 %v4844, %v4500
        %v4848 = vmul.f32 %v4844, %v4501
        %4853 = vrot.lane.b32.xlu0 %v4845, 126
        %v4854 = vpop.permute.xlu0 %4853
        %4855 = vrot.lane.b32.xlu0 %v4846, 126
        %v4856 = vpop.permute.xlu0 %4855
        %4857 = vrot.lane.b32.xlu0 %v4847, 126
        %v4858 = vpop.permute.xlu0 %4857
        %4859 = vrot.lane.b32.xlu0 %v4848, 126
        %v4860 = vpop.permute.xlu0 %4859
        %v4865 = vadd.f32 %v4657, %v4854
        %v4866 = vadd.f32 %v4658, %v4856
        %v4867 = vadd.f32 %v4659, %v4858
        %v4868 = vadd.f32 %v4660, %v4860
        %s4869 = sld [smem:[#allocation2 + $0x80]]
        %v4870 = vstv %s4869
        %v4871 = vmul.f32 %v4870, %v4498
        %v4872 = vmul.f32 %v4870, %v4499
        %v4873 = vmul.f32 %v4870, %v4500
        %v4874 = vmul.f32 %v4870, %v4501
        %4879 = vrot.lane.b32.xlu0 %v4871, 126
        %v4880 = vpop.permute.xlu0 %4879
        %4881 = vrot.lane.b32.xlu0 %v4872, 126
        %v4882 = vpop.permute.xlu0 %4881
        %4883 = vrot.lane.b32.xlu0 %v4873, 126
        %v4884 = vpop.permute.xlu0 %4883
        %4885 = vrot.lane.b32.xlu0 %v4874, 126
        %v4886 = vpop.permute.xlu0 %4885
        %v4891 = vadd.f32 %v4683, %v4880
        %v4892 = vadd.f32 %v4684, %v4882
        %v4893 = vadd.f32 %v4685, %v4884
        %v4894 = vadd.f32 %v4686, %v4886
        %s4895 = sld [smem:[#allocation2 + $0xa4]]
        %v4896 = vstv %s4895
        %v4897 = vmul.f32 %v4896, %v4498
        %v4898 = vmul.f32 %v4896, %v4499
        %v4899 = vmul.f32 %v4896, %v4500
        %v4900 = vmul.f32 %v4896, %v4501
        %4905 = vrot.lane.b32.xlu0 %v4897, 126
        %v4906 = vpop.permute.xlu0 %4905
        %4907 = vrot.lane.b32.xlu0 %v4898, 126
        %v4908 = vpop.permute.xlu0 %4907
        %4909 = vrot.lane.b32.xlu0 %v4899, 126
        %v4910 = vpop.permute.xlu0 %4909
        %4911 = vrot.lane.b32.xlu0 %v4900, 126
        %v4912 = vpop.permute.xlu0 %4911
        %v4917 = vadd.f32 %v4709, %v4906
        %v4918 = vadd.f32 %v4710, %v4908
        %v4919 = vadd.f32 %v4711, %v4910
        %v4920 = vadd.f32 %v4712, %v4912
        %s4921 = sld [smem:[#allocation2 + $0xc8]]
        %v4922 = vstv %s4921
        %v4923 = vmul.f32 %v4922, %v4498
        %v4924 = vmul.f32 %v4922, %v4499
        %v4925 = vmul.f32 %v4922, %v4500
        %v4926 = vmul.f32 %v4922, %v4501
        %4931 = vrot.lane.b32.xlu0 %v4923, 126
        %v4932 = vpop.permute.xlu0 %4931
        %4933 = vrot.lane.b32.xlu0 %v4924, 126
        %v4934 = vpop.permute.xlu0 %4933
        %4935 = vrot.lane.b32.xlu0 %v4925, 126
        %v4936 = vpop.permute.xlu0 %4935
        %4937 = vrot.lane.b32.xlu0 %v4926, 126
        %v4938 = vpop.permute.xlu0 %4937
        %v4943 = vadd.f32 %v4735, %v4932
        %v4944 = vadd.f32 %v4736, %v4934
        %v4945 = vadd.f32 %v4737, %v4936
        %v4946 = vadd.f32 %v4738, %v4938
        %s4947 = sld [smem:[#allocation2 + $0xec]]
        %v4948 = vstv %s4947
        %v4949 = vmul.f32 %v4948, %v4498
        %v4950 = vmul.f32 %v4948, %v4499
        %v4951 = vmul.f32 %v4948, %v4500
        %v4952 = vmul.f32 %v4948, %v4501
        %4957 = vrot.lane.b32.xlu0 %v4949, 126
        %v4958 = vpop.permute.xlu0 %4957
        %4959 = vrot.lane.b32.xlu0 %v4950, 126
        %v4960 = vpop.permute.xlu0 %4959
        %4961 = vrot.lane.b32.xlu0 %v4951, 126
        %v4962 = vpop.permute.xlu0 %4961
        %4963 = vrot.lane.b32.xlu0 %v4952, 126
        %v4964 = vpop.permute.xlu0 %4963
        %v4969 = vadd.f32 %v4761, %v4958
        %v4970 = vadd.f32 %v4762, %v4960
        %v4971 = vadd.f32 %v4763, %v4962
        %v4972 = vadd.f32 %v4764, %v4964
        %s4973 = sld [smem:[#allocation2 + $0x110]]
        %v4974 = vstv %s4973
        %v4975 = vmul.f32 %v4974, %v4498
        %v4976 = vmul.f32 %v4974, %v4499
        %v4977 = vmul.f32 %v4974, %v4500
        %v4978 = vmul.f32 %v4974, %v4501
        %4983 = vrot.lane.b32.xlu0 %v4975, 126
        %v4984 = vpop.permute.xlu0 %4983
        %4985 = vrot.lane.b32.xlu0 %v4976, 126
        %v4986 = vpop.permute.xlu0 %4985
        %4987 = vrot.lane.b32.xlu0 %v4977, 126
        %v4988 = vpop.permute.xlu0 %4987
        %4989 = vrot.lane.b32.xlu0 %v4978, 126
        %v4990 = vpop.permute.xlu0 %4989
        %v4995 = vadd.f32 %v4787, %v4984
        %v4996 = vadd.f32 %v4788, %v4986
        %v4997 = vadd.f32 %v4789, %v4988
        %v4998 = vadd.f32 %v4790, %v4990
        %s4999 = sld [smem:[#allocation2 + $0x15]]
        %v5000 = vstv %s4999
        %v5001 = vmul.f32 %v5000, %v4498
        %v5002 = vmul.f32 %v5000, %v4499
        %v5003 = vmul.f32 %v5000, %v4500
        %v5004 = vmul.f32 %v5000, %v4501
        %v5005 = vmul.f32 %v5000, %v4502
        %v5011 = vrot.slane %v5001, 1
        %v5012 = vrot.slane %v5002, 1
        %v5013 = vsel %vm709, %v5011, %v5012
        %v5014 = vrot.slane %v5003, 1
        %v5015 = vsel %vm709, %v5012, %v5014
        %v5016 = vrot.slane %v5004, 1
        %v5017 = vsel %vm709, %v5014, %v5016
        %v5018 = vrot.slane %v5005, 1
        %v5019 = vsel %vm709, %v5016, %v5018
        %v5024 = vadd.f32 %v4813, %v5013
        %v5025 = vadd.f32 %v4814, %v5015
        %v5026 = vadd.f32 %v4815, %v5017
        %v5027 = vadd.f32 %v4816, %v5019
        %s5028 = sld [smem:[#allocation2 + $0x39]]
        %v5029 = vstv %s5028
        %v5030 = vmul.f32 %v5029, %v4498
        %v5031 = vmul.f32 %v5029, %v4499
        %v5032 = vmul.f32 %v5029, %v4500
        %v5033 = vmul.f32 %v5029, %v4501
        %v5034 = vmul.f32 %v5029, %v4502
        %v5040 = vrot.slane %v5030, 1
        %v5041 = vrot.slane %v5031, 1
        %v5042 = vsel %vm709, %v5040, %v5041
        %v5043 = vrot.slane %v5032, 1
        %v5044 = vsel %vm709, %v5041, %v5043
        %v5045 = vrot.slane %v5033, 1
        %v5046 = vsel %vm709, %v5043, %v5045
        %v5047 = vrot.slane %v5034, 1
        %v5048 = vsel %vm709, %v5045, %v5047
        %v5053 = vadd.f32 %v4839, %v5042
        %v5054 = vadd.f32 %v4840, %v5044
        %v5055 = vadd.f32 %v4841, %v5046
        %v5056 = vadd.f32 %v4842, %v5048
        %s5057 = sld [smem:[#allocation2 + $0x5d]]
        %v5058 = vstv %s5057
        %v5059 = vmul.f32 %v5058, %v4498
        %v5060 = vmul.f32 %v5058, %v4499
        %v5061 = vmul.f32 %v5058, %v4500
        %v5062 = vmul.f32 %v5058, %v4501
        %v5063 = vmul.f32 %v5058, %v4502
        %v5069 = vrot.slane %v5059, 1
        %v5070 = vrot.slane %v5060, 1
        %v5071 = vsel %vm709, %v5069, %v5070
        %v5072 = vrot.slane %v5061, 1
        %v5073 = vsel %vm709, %v5070, %v5072
        %v5074 = vrot.slane %v5062, 1
        %v5075 = vsel %vm709, %v5072, %v5074
        %v5076 = vrot.slane %v5063, 1
        %v5077 = vsel %vm709, %v5074, %v5076
        %v5082 = vadd.f32 %v4865, %v5071
        %v5083 = vadd.f32 %v4866, %v5073
        %v5084 = vadd.f32 %v4867, %v5075
        %v5085 = vadd.f32 %v4868, %v5077
        %s5086 = sld [smem:[#allocation2 + $0x81]]
        %v5087 = vstv %s5086
        %v5088 = vmul.f32 %v5087, %v4498
        %v5089 = vmul.f32 %v5087, %v4499
        %v5090 = vmul.f32 %v5087, %v4500
        %v5091 = vmul.f32 %v5087, %v4501
        %v5092 = vmul.f32 %v5087, %v4502
        %v5098 = vrot.slane %v5088, 1
        %v5099 = vrot.slane %v5089, 1
        %v5100 = vsel %vm709, %v5098, %v5099
        %v5101 = vrot.slane %v5090, 1
        %v5102 = vsel %vm709, %v5099, %v5101
        %v5103 = vrot.slane %v5091, 1
        %v5104 = vsel %vm709, %v5101, %v5103
        %v5105 = vrot.slane %v5092, 1
        %v5106 = vsel %vm709, %v5103, %v5105
        %v5111 = vadd.f32 %v4891, %v5100
        %v5112 = vadd.f32 %v4892, %v5102
        %v5113 = vadd.f32 %v4893, %v5104
        %v5114 = vadd.f32 %v4894, %v5106
        %s5115 = sld [smem:[#allocation2 + $0xa5]]
        %v5116 = vstv %s5115
        %v5117 = vmul.f32 %v5116, %v4498
        %v5118 = vmul.f32 %v5116, %v4499
        %v5119 = vmul.f32 %v5116, %v4500
        %v5120 = vmul.f32 %v5116, %v4501
        %v5121 = vmul.f32 %v5116, %v4502
        %v5127 = vrot.slane %v5117, 1
        %v5128 = vrot.slane %v5118, 1
        %v5129 = vsel %vm709, %v5127, %v5128
        %v5130 = vrot.slane %v5119, 1
        %v5131 = vsel %vm709, %v5128, %v5130
        %v5132 = vrot.slane %v5120, 1
        %v5133 = vsel %vm709, %v5130, %v5132
        %v5134 = vrot.slane %v5121, 1
        %v5135 = vsel %vm709, %v5132, %v5134
        %v5140 = vadd.f32 %v4917, %v5129
        %v5141 = vadd.f32 %v4918, %v5131
        %v5142 = vadd.f32 %v4919, %v5133
        %v5143 = vadd.f32 %v4920, %v5135
        %s5144 = sld [smem:[#allocation2 + $0xc9]]
        %v5145 = vstv %s5144
        %v5146 = vmul.f32 %v5145, %v4498
        %v5147 = vmul.f32 %v5145, %v4499
        %v5148 = vmul.f32 %v5145, %v4500
        %v5149 = vmul.f32 %v5145, %v4501
        %v5150 = vmul.f32 %v5145, %v4502
        %v5156 = vrot.slane %v5146, 1
        %v5157 = vrot.slane %v5147, 1
        %v5158 = vsel %vm709, %v5156, %v5157
        %v5159 = vrot.slane %v5148, 1
        %v5160 = vsel %vm709, %v5157, %v5159
        %v5161 = vrot.slane %v5149, 1
        %v5162 = vsel %vm709, %v5159, %v5161
        %v5163 = vrot.slane %v5150, 1
        %v5164 = vsel %vm709, %v5161, %v5163
        %v5169 = vadd.f32 %v4943, %v5158
        %v5170 = vadd.f32 %v4944, %v5160
        %v5171 = vadd.f32 %v4945, %v5162
        %v5172 = vadd.f32 %v4946, %v5164
        %s5173 = sld [smem:[#allocation2 + $0xed]]
        %v5174 = vstv %s5173
        %v5175 = vmul.f32 %v5174, %v4498
        %v5176 = vmul.f32 %v5174, %v4499
        %v5177 = vmul.f32 %v5174, %v4500
        %v5178 = vmul.f32 %v5174, %v4501
        %v5179 = vmul.f32 %v5174, %v4502
        %v5185 = vrot.slane %v5175, 1
        %v5186 = vrot.slane %v5176, 1
        %v5187 = vsel %vm709, %v5185, %v5186
        %v5188 = vrot.slane %v5177, 1
        %v5189 = vsel %vm709, %v5186, %v5188
        %v5190 = vrot.slane %v5178, 1
        %v5191 = vsel %vm709, %v5188, %v5190
        %v5192 = vrot.slane %v5179, 1
        %v5193 = vsel %vm709, %v5190, %v5192
        %v5198 = vadd.f32 %v4969, %v5187
        %v5199 = vadd.f32 %v4970, %v5189
        %v5200 = vadd.f32 %v4971, %v5191
        %v5201 = vadd.f32 %v4972, %v5193
        %s5202 = sld [smem:[#allocation2 + $0x111]]
        %v5203 = vstv %s5202
        %v5204 = vmul.f32 %v5203, %v4498
        %v5205 = vmul.f32 %v5203, %v4499
        %v5206 = vmul.f32 %v5203, %v4500
        %v5207 = vmul.f32 %v5203, %v4501
        %v5208 = vmul.f32 %v5203, %v4502
        %v5214 = vrot.slane %v5204, 1
        %v5215 = vrot.slane %v5205, 1
        %v5216 = vsel %vm709, %v5214, %v5215
        %v5217 = vrot.slane %v5206, 1
        %v5218 = vsel %vm709, %v5215, %v5217
        %v5219 = vrot.slane %v5207, 1
        %v5220 = vsel %vm709, %v5217, %v5219
        %v5221 = vrot.slane %v5208, 1
        %v5222 = vsel %vm709, %v5219, %v5221
        %v5227 = vadd.f32 %v4995, %v5216
        %v5228 = vadd.f32 %v4996, %v5218
        %v5229 = vadd.f32 %v4997, %v5220
        %v5230 = vadd.f32 %v4998, %v5222
        %s5231 = sld [smem:[#allocation2 + $0x16]]
        %v5232 = vstv %s5231
        %v5233 = vmul.f32 %v5232, %v4498
        %v5234 = vmul.f32 %v5232, %v4499
        %v5235 = vmul.f32 %v5232, %v4500
        %v5236 = vmul.f32 %v5232, %v4501
        %v5237 = vmul.f32 %v5232, %v4502
        %v5243 = vrot.slane %v5233, 1
        %v5244 = vrot.slane %v5234, 1
        %v5245 = vsel %vm709, %v5243, %v5244
        %v5246 = vrot.slane %v5235, 1
        %v5247 = vsel %vm709, %v5244, %v5246
        %v5248 = vrot.slane %v5236, 1
        %v5249 = vsel %vm709, %v5246, %v5248
        %v5250 = vrot.slane %v5237, 1
        %v5251 = vsel %vm709, %v5248, %v5250
        %5252 = vrot.lane.b32.xlu0 %v5245, 127
        %v5253 = vpop.permute.xlu0 %5252
        %5254 = vrot.lane.b32.xlu0 %v5247, 127
        %v5255 = vpop.permute.xlu0 %5254
        %5256 = vrot.lane.b32.xlu0 %v5249, 127
        %v5257 = vpop.permute.xlu0 %5256
        %5258 = vrot.lane.b32.xlu0 %v5251, 127
        %v5259 = vpop.permute.xlu0 %5258
        %v5264 = vadd.f32 %v5024, %v5253
        %v5265 = vadd.f32 %v5025, %v5255
        %v5266 = vadd.f32 %v5026, %v5257
        %v5267 = vadd.f32 %v5027, %v5259
        %s5268 = sld [smem:[#allocation2 + $0x3a]]
        %v5269 = vstv %s5268
        %v5270 = vmul.f32 %v5269, %v4498
        %v5271 = vmul.f32 %v5269, %v4499
        %v5272 = vmul.f32 %v5269, %v4500
        %v5273 = vmul.f32 %v5269, %v4501
        %v5274 = vmul.f32 %v5269, %v4502
        %v5280 = vrot.slane %v5270, 1
        %v5281 = vrot.slane %v5271, 1
        %v5282 = vsel %vm709, %v5280, %v5281
        %v5283 = vrot.slane %v5272, 1
        %v5284 = vsel %vm709, %v5281, %v5283
        %v5285 = vrot.slane %v5273, 1
        %v5286 = vsel %vm709, %v5283, %v5285
        %v5287 = vrot.slane %v5274, 1
        %v5288 = vsel %vm709, %v5285, %v5287
        %5289 = vrot.lane.b32.xlu0 %v5282, 127
        %v5290 = vpop.permute.xlu0 %5289
        %5291 = vrot.lane.b32.xlu0 %v5284, 127
        %v5292 = vpop.permute.xlu0 %5291
        %5293 = vrot.lane.b32.xlu0 %v5286, 127
        %v5294 = vpop.permute.xlu0 %5293
        %5295 = vrot.lane.b32.xlu0 %v5288, 127
        %v5296 = vpop.permute.xlu0 %5295
        %v5301 = vadd.f32 %v5053, %v5290
        %v5302 = vadd.f32 %v5054, %v5292
        %v5303 = vadd.f32 %v5055, %v5294
        %v5304 = vadd.f32 %v5056, %v5296
        %s5305 = sld [smem:[#allocation2 + $0x5e]]
        %v5306 = vstv %s5305
        %v5307 = vmul.f32 %v5306, %v4498
        %v5308 = vmul.f32 %v5306, %v4499
        %v5309 = vmul.f32 %v5306, %v4500
        %v5310 = vmul.f32 %v5306, %v4501
        %v5311 = vmul.f32 %v5306, %v4502
        %v5317 = vrot.slane %v5307, 1
        %v5318 = vrot.slane %v5308, 1
        %v5319 = vsel %vm709, %v5317, %v5318
        %v5320 = vrot.slane %v5309, 1
        %v5321 = vsel %vm709, %v5318, %v5320
        %v5322 = vrot.slane %v5310, 1
        %v5323 = vsel %vm709, %v5320, %v5322
        %v5324 = vrot.slane %v5311, 1
        %v5325 = vsel %vm709, %v5322, %v5324
        %5326 = vrot.lane.b32.xlu0 %v5319, 127
        %v5327 = vpop.permute.xlu0 %5326
        %5328 = vrot.lane.b32.xlu0 %v5321, 127
        %v5329 = vpop.permute.xlu0 %5328
        %5330 = vrot.lane.b32.xlu0 %v5323, 127
        %v5331 = vpop.permute.xlu0 %5330
        %5332 = vrot.lane.b32.xlu0 %v5325, 127
        %v5333 = vpop.permute.xlu0 %5332
        %v5338 = vadd.f32 %v5082, %v5327
        %v5339 = vadd.f32 %v5083, %v5329
        %v5340 = vadd.f32 %v5084, %v5331
        %v5341 = vadd.f32 %v5085, %v5333
        %s5342 = sld [smem:[#allocation2 + $0x82]]
        %v5343 = vstv %s5342
        %v5344 = vmul.f32 %v5343, %v4498
        %v5345 = vmul.f32 %v5343, %v4499
        %v5346 = vmul.f32 %v5343, %v4500
        %v5347 = vmul.f32 %v5343, %v4501
        %v5348 = vmul.f32 %v5343, %v4502
        %v5354 = vrot.slane %v5344, 1
        %v5355 = vrot.slane %v5345, 1
        %v5356 = vsel %vm709, %v5354, %v5355
        %v5357 = vrot.slane %v5346, 1
        %v5358 = vsel %vm709, %v5355, %v5357
        %v5359 = vrot.slane %v5347, 1
        %v5360 = vsel %vm709, %v5357, %v5359
        %v5361 = vrot.slane %v5348, 1
        %v5362 = vsel %vm709, %v5359, %v5361
        %5363 = vrot.lane.b32.xlu0 %v5356, 127
        %v5364 = vpop.permute.xlu0 %5363
        %5365 = vrot.lane.b32.xlu0 %v5358, 127
        %v5366 = vpop.permute.xlu0 %5365
        %5367 = vrot.lane.b32.xlu0 %v5360, 127
        %v5368 = vpop.permute.xlu0 %5367
        %5369 = vrot.lane.b32.xlu0 %v5362, 127
        %v5370 = vpop.permute.xlu0 %5369
        %v5375 = vadd.f32 %v5111, %v5364
        %v5376 = vadd.f32 %v5112, %v5366
        %v5377 = vadd.f32 %v5113, %v5368
        %v5378 = vadd.f32 %v5114, %v5370
        %s5379 = sld [smem:[#allocation2 + $0xa6]]
        %v5380 = vstv %s5379
        %v5381 = vmul.f32 %v5380, %v4498
        %v5382 = vmul.f32 %v5380, %v4499
        %v5383 = vmul.f32 %v5380, %v4500
        %v5384 = vmul.f32 %v5380, %v4501
        %v5385 = vmul.f32 %v5380, %v4502
        %v5391 = vrot.slane %v5381, 1
        %v5392 = vrot.slane %v5382, 1
        %v5393 = vsel %vm709, %v5391, %v5392
        %v5394 = vrot.slane %v5383, 1
        %v5395 = vsel %vm709, %v5392, %v5394
        %v5396 = vrot.slane %v5384, 1
        %v5397 = vsel %vm709, %v5394, %v5396
        %v5398 = vrot.slane %v5385, 1
        %v5399 = vsel %vm709, %v5396, %v5398
        %5400 = vrot.lane.b32.xlu0 %v5393, 127
        %v5401 = vpop.permute.xlu0 %5400
        %5402 = vrot.lane.b32.xlu0 %v5395, 127
        %v5403 = vpop.permute.xlu0 %5402
        %5404 = vrot.lane.b32.xlu0 %v5397, 127
        %v5405 = vpop.permute.xlu0 %5404
        %5406 = vrot.lane.b32.xlu0 %v5399, 127
        %v5407 = vpop.permute.xlu0 %5406
        %v5412 = vadd.f32 %v5140, %v5401
        %v5413 = vadd.f32 %v5141, %v5403
        %v5414 = vadd.f32 %v5142, %v5405
        %v5415 = vadd.f32 %v5143, %v5407
        %s5416 = sld [smem:[#allocation2 + $0xca]]
        %v5417 = vstv %s5416
        %v5418 = vmul.f32 %v5417, %v4498
        %v5419 = vmul.f32 %v5417, %v4499
        %v5420 = vmul.f32 %v5417, %v4500
        %v5421 = vmul.f32 %v5417, %v4501
        %v5422 = vmul.f32 %v5417, %v4502
        %v5428 = vrot.slane %v5418, 1
        %v5429 = vrot.slane %v5419, 1
        %v5430 = vsel %vm709, %v5428, %v5429
        %v5431 = vrot.slane %v5420, 1
        %v5432 = vsel %vm709, %v5429, %v5431
        %v5433 = vrot.slane %v5421, 1
        %v5434 = vsel %vm709, %v5431, %v5433
        %v5435 = vrot.slane %v5422, 1
        %v5436 = vsel %vm709, %v5433, %v5435
        %5437 = vrot.lane.b32.xlu0 %v5430, 127
        %v5438 = vpop.permute.xlu0 %5437
        %5439 = vrot.lane.b32.xlu0 %v5432, 127
        %v5440 = vpop.permute.xlu0 %5439
        %5441 = vrot.lane.b32.xlu0 %v5434, 127
        %v5442 = vpop.permute.xlu0 %5441
        %5443 = vrot.lane.b32.xlu0 %v5436, 127
        %v5444 = vpop.permute.xlu0 %5443
        %v5449 = vadd.f32 %v5169, %v5438
        %v5450 = vadd.f32 %v5170, %v5440
        %v5451 = vadd.f32 %v5171, %v5442
        %v5452 = vadd.f32 %v5172, %v5444
        %s5453 = sld [smem:[#allocation2 + $0xee]]
        %v5454 = vstv %s5453
        %v5455 = vmul.f32 %v5454, %v4498
        %v5456 = vmul.f32 %v5454, %v4499
        %v5457 = vmul.f32 %v5454, %v4500
        %v5458 = vmul.f32 %v5454, %v4501
        %v5459 = vmul.f32 %v5454, %v4502
        %v5465 = vrot.slane %v5455, 1
        %v5466 = vrot.slane %v5456, 1
        %v5467 = vsel %vm709, %v5465, %v5466
        %v5468 = vrot.slane %v5457, 1
        %v5469 = vsel %vm709, %v5466, %v5468
        %v5470 = vrot.slane %v5458, 1
        %v5471 = vsel %vm709, %v5468, %v5470
        %v5472 = vrot.slane %v5459, 1
        %v5473 = vsel %vm709, %v5470, %v5472
        %5474 = vrot.lane.b32.xlu0 %v5467, 127
        %v5475 = vpop.permute.xlu0 %5474
        %5476 = vrot.lane.b32.xlu0 %v5469, 127
        %v5477 = vpop.permute.xlu0 %5476
        %5478 = vrot.lane.b32.xlu0 %v5471, 127
        %v5479 = vpop.permute.xlu0 %5478
        %5480 = vrot.lane.b32.xlu0 %v5473, 127
        %v5481 = vpop.permute.xlu0 %5480
        %v5486 = vadd.f32 %v5198, %v5475
        %v5487 = vadd.f32 %v5199, %v5477
        %v5488 = vadd.f32 %v5200, %v5479
        %v5489 = vadd.f32 %v5201, %v5481
        %s5490 = sld [smem:[#allocation2 + $0x112]]
        %v5491 = vstv %s5490
        %v5492 = vmul.f32 %v5491, %v4498
        %v5493 = vmul.f32 %v5491, %v4499
        %v5494 = vmul.f32 %v5491, %v4500
        %v5495 = vmul.f32 %v5491, %v4501
        %v5496 = vmul.f32 %v5491, %v4502
        %v5502 = vrot.slane %v5492, 1
        %v5503 = vrot.slane %v5493, 1
        %v5504 = vsel %vm709, %v5502, %v5503
        %v5505 = vrot.slane %v5494, 1
        %v5506 = vsel %vm709, %v5503, %v5505
        %v5507 = vrot.slane %v5495, 1
        %v5508 = vsel %vm709, %v5505, %v5507
        %v5509 = vrot.slane %v5496, 1
        %v5510 = vsel %vm709, %v5507, %v5509
        %5511 = vrot.lane.b32.xlu0 %v5504, 127
        %v5512 = vpop.permute.xlu0 %5511
        %5513 = vrot.lane.b32.xlu0 %v5506, 127
        %v5514 = vpop.permute.xlu0 %5513
        %5515 = vrot.lane.b32.xlu0 %v5508, 127
        %v5516 = vpop.permute.xlu0 %5515
        %5517 = vrot.lane.b32.xlu0 %v5510, 127
        %v5518 = vpop.permute.xlu0 %5517
        %v5523 = vadd.f32 %v5227, %v5512
        %v5524 = vadd.f32 %v5228, %v5514
        %v5525 = vadd.f32 %v5229, %v5516
        %v5526 = vadd.f32 %v5230, %v5518
        %s5527 = sld [smem:[#allocation2 + $0x17]]
        %v5528 = vstv %s5527
        %v5529 = vmul.f32 %v5528, %v4498
        %v5530 = vmul.f32 %v5528, %v4499
        %v5531 = vmul.f32 %v5528, %v4500
        %v5532 = vmul.f32 %v5528, %v4501
        %v5533 = vmul.f32 %v5528, %v4502
        %v5539 = vrot.slane %v5529, 1
        %v5540 = vrot.slane %v5530, 1
        %v5541 = vsel %vm709, %v5539, %v5540
        %v5542 = vrot.slane %v5531, 1
        %v5543 = vsel %vm709, %v5540, %v5542
        %v5544 = vrot.slane %v5532, 1
        %v5545 = vsel %vm709, %v5542, %v5544
        %v5546 = vrot.slane %v5533, 1
        %v5547 = vsel %vm709, %v5544, %v5546
        %5548 = vrot.lane.b32.xlu0 %v5541, 126
        %v5549 = vpop.permute.xlu0 %5548
        %5550 = vrot.lane.b32.xlu0 %v5543, 126
        %v5551 = vpop.permute.xlu0 %5550
        %5552 = vrot.lane.b32.xlu0 %v5545, 126
        %v5553 = vpop.permute.xlu0 %5552
        %5554 = vrot.lane.b32.xlu0 %v5547, 126
        %v5555 = vpop.permute.xlu0 %5554
        %v5560 = vadd.f32 %v5264, %v5549
        %v5561 = vadd.f32 %v5265, %v5551
        %v5562 = vadd.f32 %v5266, %v5553
        %v5563 = vadd.f32 %v5267, %v5555
        %s5564 = sld [smem:[#allocation2 + $0x3b]]
        %v5565 = vstv %s5564
        %v5566 = vmul.f32 %v5565, %v4498
        %v5567 = vmul.f32 %v5565, %v4499
        %v5568 = vmul.f32 %v5565, %v4500
        %v5569 = vmul.f32 %v5565, %v4501
        %v5570 = vmul.f32 %v5565, %v4502
        %v5576 = vrot.slane %v5566, 1
        %v5577 = vrot.slane %v5567, 1
        %v5578 = vsel %vm709, %v5576, %v5577
        %v5579 = vrot.slane %v5568, 1
        %v5580 = vsel %vm709, %v5577, %v5579
        %v5581 = vrot.slane %v5569, 1
        %v5582 = vsel %vm709, %v5579, %v5581
        %v5583 = vrot.slane %v5570, 1
        %v5584 = vsel %vm709, %v5581, %v5583
        %5585 = vrot.lane.b32.xlu0 %v5578, 126
        %v5586 = vpop.permute.xlu0 %5585
        %5587 = vrot.lane.b32.xlu0 %v5580, 126
        %v5588 = vpop.permute.xlu0 %5587
        %5589 = vrot.lane.b32.xlu0 %v5582, 126
        %v5590 = vpop.permute.xlu0 %5589
        %5591 = vrot.lane.b32.xlu0 %v5584, 126
        %v5592 = vpop.permute.xlu0 %5591
        %v5597 = vadd.f32 %v5301, %v5586
        %v5598 = vadd.f32 %v5302, %v5588
        %v5599 = vadd.f32 %v5303, %v5590
        %v5600 = vadd.f32 %v5304, %v5592
        %s5601 = sld [smem:[#allocation2 + $0x5f]]
        %v5602 = vstv %s5601
        %v5603 = vmul.f32 %v5602, %v4498
        %v5604 = vmul.f32 %v5602, %v4499
        %v5605 = vmul.f32 %v5602, %v4500
        %v5606 = vmul.f32 %v5602, %v4501
        %v5607 = vmul.f32 %v5602, %v4502
        %v5613 = vrot.slane %v5603, 1
        %v5614 = vrot.slane %v5604, 1
        %v5615 = vsel %vm709, %v5613, %v5614
        %v5616 = vrot.slane %v5605, 1
        %v5617 = vsel %vm709, %v5614, %v5616
        %v5618 = vrot.slane %v5606, 1
        %v5619 = vsel %vm709, %v5616, %v5618
        %v5620 = vrot.slane %v5607, 1
        %v5621 = vsel %vm709, %v5618, %v5620
        %5622 = vrot.lane.b32.xlu0 %v5615, 126
        %v5623 = vpop.permute.xlu0 %5622
        %5624 = vrot.lane.b32.xlu0 %v5617, 126
        %v5625 = vpop.permute.xlu0 %5624
        %5626 = vrot.lane.b32.xlu0 %v5619, 126
        %v5627 = vpop.permute.xlu0 %5626
        %5628 = vrot.lane.b32.xlu0 %v5621, 126
        %v5629 = vpop.permute.xlu0 %5628
        %v5634 = vadd.f32 %v5338, %v5623
        %v5635 = vadd.f32 %v5339, %v5625
        %v5636 = vadd.f32 %v5340, %v5627
        %v5637 = vadd.f32 %v5341, %v5629
        %s5638 = sld [smem:[#allocation2 + $0x83]]
        %v5639 = vstv %s5638
        %v5640 = vmul.f32 %v5639, %v4498
        %v5641 = vmul.f32 %v5639, %v4499
        %v5642 = vmul.f32 %v5639, %v4500
        %v5643 = vmul.f32 %v5639, %v4501
        %v5644 = vmul.f32 %v5639, %v4502
        %v5650 = vrot.slane %v5640, 1
        %v5651 = vrot.slane %v5641, 1
        %v5652 = vsel %vm709, %v5650, %v5651
        %v5653 = vrot.slane %v5642, 1
        %v5654 = vsel %vm709, %v5651, %v5653
        %v5655 = vrot.slane %v5643, 1
        %v5656 = vsel %vm709, %v5653, %v5655
        %v5657 = vrot.slane %v5644, 1
        %v5658 = vsel %vm709, %v5655, %v5657
        %5659 = vrot.lane.b32.xlu0 %v5652, 126
        %v5660 = vpop.permute.xlu0 %5659
        %5661 = vrot.lane.b32.xlu0 %v5654, 126
        %v5662 = vpop.permute.xlu0 %5661
        %5663 = vrot.lane.b32.xlu0 %v5656, 126
        %v5664 = vpop.permute.xlu0 %5663
        %5665 = vrot.lane.b32.xlu0 %v5658, 126
        %v5666 = vpop.permute.xlu0 %5665
        %v5671 = vadd.f32 %v5375, %v5660
        %v5672 = vadd.f32 %v5376, %v5662
        %v5673 = vadd.f32 %v5377, %v5664
        %v5674 = vadd.f32 %v5378, %v5666
        %s5675 = sld [smem:[#allocation2 + $0xa7]]
        %v5676 = vstv %s5675
        %v5677 = vmul.f32 %v5676, %v4498
        %v5678 = vmul.f32 %v5676, %v4499
        %v5679 = vmul.f32 %v5676, %v4500
        %v5680 = vmul.f32 %v5676, %v4501
        %v5681 = vmul.f32 %v5676, %v4502
        %v5687 = vrot.slane %v5677, 1
        %v5688 = vrot.slane %v5678, 1
        %v5689 = vsel %vm709, %v5687, %v5688
        %v5690 = vrot.slane %v5679, 1
        %v5691 = vsel %vm709, %v5688, %v5690
        %v5692 = vrot.slane %v5680, 1
        %v5693 = vsel %vm709, %v5690, %v5692
        %v5694 = vrot.slane %v5681, 1
        %v5695 = vsel %vm709, %v5692, %v5694
        %5696 = vrot.lane.b32.xlu0 %v5689, 126
        %v5697 = vpop.permute.xlu0 %5696
        %5698 = vrot.lane.b32.xlu0 %v5691, 126
        %v5699 = vpop.permute.xlu0 %5698
        %5700 = vrot.lane.b32.xlu0 %v5693, 126
        %v5701 = vpop.permute.xlu0 %5700
        %5702 = vrot.lane.b32.xlu0 %v5695, 126
        %v5703 = vpop.permute.xlu0 %5702
        %v5708 = vadd.f32 %v5412, %v5697
        %v5709 = vadd.f32 %v5413, %v5699
        %v5710 = vadd.f32 %v5414, %v5701
        %v5711 = vadd.f32 %v5415, %v5703
        %s5712 = sld [smem:[#allocation2 + $0xcb]]
        %v5713 = vstv %s5712
        %v5714 = vmul.f32 %v5713, %v4498
        %v5715 = vmul.f32 %v5713, %v4499
        %v5716 = vmul.f32 %v5713, %v4500
        %v5717 = vmul.f32 %v5713, %v4501
        %v5718 = vmul.f32 %v5713, %v4502
        %v5724 = vrot.slane %v5714, 1
        %v5725 = vrot.slane %v5715, 1
        %v5726 = vsel %vm709, %v5724, %v5725
        %v5727 = vrot.slane %v5716, 1
        %v5728 = vsel %vm709, %v5725, %v5727
        %v5729 = vrot.slane %v5717, 1
        %v5730 = vsel %vm709, %v5727, %v5729
        %v5731 = vrot.slane %v5718, 1
        %v5732 = vsel %vm709, %v5729, %v5731
        %5733 = vrot.lane.b32.xlu0 %v5726, 126
        %v5734 = vpop.permute.xlu0 %5733
        %5735 = vrot.lane.b32.xlu0 %v5728, 126
        %v5736 = vpop.permute.xlu0 %5735
        %5737 = vrot.lane.b32.xlu0 %v5730, 126
        %v5738 = vpop.permute.xlu0 %5737
        %5739 = vrot.lane.b32.xlu0 %v5732, 126
        %v5740 = vpop.permute.xlu0 %5739
        %v5745 = vadd.f32 %v5449, %v5734
        %v5746 = vadd.f32 %v5450, %v5736
        %v5747 = vadd.f32 %v5451, %v5738
        %v5748 = vadd.f32 %v5452, %v5740
        %s5749 = sld [smem:[#allocation2 + $0xef]]
        %v5750 = vstv %s5749
        %v5751 = vmul.f32 %v5750, %v4498
        %v5752 = vmul.f32 %v5750, %v4499
        %v5753 = vmul.f32 %v5750, %v4500
        %v5754 = vmul.f32 %v5750, %v4501
        %v5755 = vmul.f32 %v5750, %v4502
        %v5761 = vrot.slane %v5751, 1
        %v5762 = vrot.slane %v5752, 1
        %v5763 = vsel %vm709, %v5761, %v5762
        %v5764 = vrot.slane %v5753, 1
        %v5765 = vsel %vm709, %v5762, %v5764
        %v5766 = vrot.slane %v5754, 1
        %v5767 = vsel %vm709, %v5764, %v5766
        %v5768 = vrot.slane %v5755, 1
        %v5769 = vsel %vm709, %v5766, %v5768
        %5770 = vrot.lane.b32.xlu0 %v5763, 126
        %v5771 = vpop.permute.xlu0 %5770
        %5772 = vrot.lane.b32.xlu0 %v5765, 126
        %v5773 = vpop.permute.xlu0 %5772
        %5774 = vrot.lane.b32.xlu0 %v5767, 126
        %v5775 = vpop.permute.xlu0 %5774
        %5776 = vrot.lane.b32.xlu0 %v5769, 126
        %v5777 = vpop.permute.xlu0 %5776
        %v5782 = vadd.f32 %v5486, %v5771
        %v5783 = vadd.f32 %v5487, %v5773
        %v5784 = vadd.f32 %v5488, %v5775
        %v5785 = vadd.f32 %v5489, %v5777
        %s5786 = sld [smem:[#allocation2 + $0x113]]
        %v5787 = vstv %s5786
        %v5788 = vmul.f32 %v5787, %v4498
        %v5789 = vmul.f32 %v5787, %v4499
        %v5790 = vmul.f32 %v5787, %v4500
        %v5791 = vmul.f32 %v5787, %v4501
        %v5792 = vmul.f32 %v5787, %v4502
        %v5798 = vrot.slane %v5788, 1
        %v5799 = vrot.slane %v5789, 1
        %v5800 = vsel %vm709, %v5798, %v5799
        %v5801 = vrot.slane %v5790, 1
        %v5802 = vsel %vm709, %v5799, %v5801
        %v5803 = vrot.slane %v5791, 1
        %v5804 = vsel %vm709, %v5801, %v5803
        %v5805 = vrot.slane %v5792, 1
        %v5806 = vsel %vm709, %v5803, %v5805
        %5807 = vrot.lane.b32.xlu0 %v5800, 126
        %v5808 = vpop.permute.xlu0 %5807
        %5809 = vrot.lane.b32.xlu0 %v5802, 126
        %v5810 = vpop.permute.xlu0 %5809
        %5811 = vrot.lane.b32.xlu0 %v5804, 126
        %v5812 = vpop.permute.xlu0 %5811
        %5813 = vrot.lane.b32.xlu0 %v5806, 126
        %v5814 = vpop.permute.xlu0 %5813
        %v5819 = vadd.f32 %v5523, %v5808
        %v5820 = vadd.f32 %v5524, %v5810
        %v5821 = vadd.f32 %v5525, %v5812
        %v5822 = vadd.f32 %v5526, %v5814
        %s5823 = sld [smem:[#allocation2 + $0x18]]
        %v5824 = vstv %s5823
        %v5825 = vmul.f32 %v5824, %v4498
        %v5826 = vmul.f32 %v5824, %v4499
        %v5827 = vmul.f32 %v5824, %v4500
        %v5828 = vmul.f32 %v5824, %v4501
        %v5829 = vmul.f32 %v5824, %v4502
        %v5835 = vrot.slane %v5825, 2
        %v5836 = vrot.slane %v5826, 2
        %v5837 = vsel %vm1534, %v5835, %v5836
        %v5838 = vrot.slane %v5827, 2
        %v5839 = vsel %vm1534, %v5836, %v5838
        %v5840 = vrot.slane %v5828, 2
        %v5841 = vsel %vm1534, %v5838, %v5840
        %v5842 = vrot.slane %v5829, 2
        %v5843 = vsel %vm1534, %v5840, %v5842
        %v5848 = vadd.f32 %v5560, %v5837
        %v5849 = vadd.f32 %v5561, %v5839
        %v5850 = vadd.f32 %v5562, %v5841
        %v5851 = vadd.f32 %v5563, %v5843
        %s5852 = sld [smem:[#allocation2 + $0x3c]]
        %v5853 = vstv %s5852
        %v5854 = vmul.f32 %v5853, %v4498
        %v5855 = vmul.f32 %v5853, %v4499
        %v5856 = vmul.f32 %v5853, %v4500
        %v5857 = vmul.f32 %v5853, %v4501
        %v5858 = vmul.f32 %v5853, %v4502
        %v5864 = vrot.slane %v5854, 2
        %v5865 = vrot.slane %v5855, 2
        %v5866 = vsel %vm1534, %v5864, %v5865
        %v5867 = vrot.slane %v5856, 2
        %v5868 = vsel %vm1534, %v5865, %v5867
        %v5869 = vrot.slane %v5857, 2
        %v5870 = vsel %vm1534, %v5867, %v5869
        %v5871 = vrot.slane %v5858, 2
        %v5872 = vsel %vm1534, %v5869, %v5871
        %v5877 = vadd.f32 %v5597, %v5866
        %v5878 = vadd.f32 %v5598, %v5868
        %v5879 = vadd.f32 %v5599, %v5870
        %v5880 = vadd.f32 %v5600, %v5872
        %s5881 = sld [smem:[#allocation2 + $0x60]]
        %v5882 = vstv %s5881
        %v5883 = vmul.f32 %v5882, %v4498
        %v5884 = vmul.f32 %v5882, %v4499
        %v5885 = vmul.f32 %v5882, %v4500
        %v5886 = vmul.f32 %v5882, %v4501
        %v5887 = vmul.f32 %v5882, %v4502
        %v5893 = vrot.slane %v5883, 2
        %v5894 = vrot.slane %v5884, 2
        %v5895 = vsel %vm1534, %v5893, %v5894
        %v5896 = vrot.slane %v5885, 2
        %v5897 = vsel %vm1534, %v5894, %v5896
        %v5898 = vrot.slane %v5886, 2
        %v5899 = vsel %vm1534, %v5896, %v5898
        %v5900 = vrot.slane %v5887, 2
        %v5901 = vsel %vm1534, %v5898, %v5900
        %v5906 = vadd.f32 %v5634, %v5895
        %v5907 = vadd.f32 %v5635, %v5897
        %v5908 = vadd.f32 %v5636, %v5899
        %v5909 = vadd.f32 %v5637, %v5901
        %s5910 = sld [smem:[#allocation2 + $0x84]]
        %v5911 = vstv %s5910
        %v5912 = vmul.f32 %v5911, %v4498
        %v5913 = vmul.f32 %v5911, %v4499
        %v5914 = vmul.f32 %v5911, %v4500
        %v5915 = vmul.f32 %v5911, %v4501
        %v5916 = vmul.f32 %v5911, %v4502
        %v5922 = vrot.slane %v5912, 2
        %v5923 = vrot.slane %v5913, 2
        %v5924 = vsel %vm1534, %v5922, %v5923
        %v5925 = vrot.slane %v5914, 2
        %v5926 = vsel %vm1534, %v5923, %v5925
        %v5927 = vrot.slane %v5915, 2
        %v5928 = vsel %vm1534, %v5925, %v5927
        %v5929 = vrot.slane %v5916, 2
        %v5930 = vsel %vm1534, %v5927, %v5929
        %v5935 = vadd.f32 %v5671, %v5924
        %v5936 = vadd.f32 %v5672, %v5926
        %v5937 = vadd.f32 %v5673, %v5928
        %v5938 = vadd.f32 %v5674, %v5930
        %s5939 = sld [smem:[#allocation2 + $0xa8]]
        %v5940 = vstv %s5939
        %v5941 = vmul.f32 %v5940, %v4498
        %v5942 = vmul.f32 %v5940, %v4499
        %v5943 = vmul.f32 %v5940, %v4500
        %v5944 = vmul.f32 %v5940, %v4501
        %v5945 = vmul.f32 %v5940, %v4502
        %v5951 = vrot.slane %v5941, 2
        %v5952 = vrot.slane %v5942, 2
        %v5953 = vsel %vm1534, %v5951, %v5952
        %v5954 = vrot.slane %v5943, 2
        %v5955 = vsel %vm1534, %v5952, %v5954
        %v5956 = vrot.slane %v5944, 2
        %v5957 = vsel %vm1534, %v5954, %v5956
        %v5958 = vrot.slane %v5945, 2
        %v5959 = vsel %vm1534, %v5956, %v5958
        %v5964 = vadd.f32 %v5708, %v5953
        %v5965 = vadd.f32 %v5709, %v5955
        %v5966 = vadd.f32 %v5710, %v5957
        %v5967 = vadd.f32 %v5711, %v5959
        %s5968 = sld [smem:[#allocation2 + $0xcc]]
        %v5969 = vstv %s5968
        %v5970 = vmul.f32 %v5969, %v4498
        %v5971 = vmul.f32 %v5969, %v4499
        %v5972 = vmul.f32 %v5969, %v4500
        %v5973 = vmul.f32 %v5969, %v4501
        %v5974 = vmul.f32 %v5969, %v4502
        %v5980 = vrot.slane %v5970, 2
        %v5981 = vrot.slane %v5971, 2
        %v5982 = vsel %vm1534, %v5980, %v5981
        %v5983 = vrot.slane %v5972, 2
        %v5984 = vsel %vm1534, %v5981, %v5983
        %v5985 = vrot.slane %v5973, 2
        %v5986 = vsel %vm1534, %v5983, %v5985
        %v5987 = vrot.slane %v5974, 2
        %v5988 = vsel %vm1534, %v5985, %v5987
        %v5993 = vadd.f32 %v5745, %v5982
        %v5994 = vadd.f32 %v5746, %v5984
        %v5995 = vadd.f32 %v5747, %v5986
        %v5996 = vadd.f32 %v5748, %v5988
        %s5997 = sld [smem:[#allocation2 + $0xf0]]
        %v5998 = vstv %s5997
        %v5999 = vmul.f32 %v5998, %v4498
        %v6000 = vmul.f32 %v5998, %v4499
        %v6001 = vmul.f32 %v5998, %v4500
        %v6002 = vmul.f32 %v5998, %v4501
        %v6003 = vmul.f32 %v5998, %v4502
        %v6009 = vrot.slane %v5999, 2
        %v6010 = vrot.slane %v6000, 2
        %v6011 = vsel %vm1534, %v6009, %v6010
        %v6012 = vrot.slane %v6001, 2
        %v6013 = vsel %vm1534, %v6010, %v6012
        %v6014 = vrot.slane %v6002, 2
        %v6015 = vsel %vm1534, %v6012, %v6014
        %v6016 = vrot.slane %v6003, 2
        %v6017 = vsel %vm1534, %v6014, %v6016
        %v6022 = vadd.f32 %v5782, %v6011
        %v6023 = vadd.f32 %v5783, %v6013
        %v6024 = vadd.f32 %v5784, %v6015
        %v6025 = vadd.f32 %v5785, %v6017
        %s6026 = sld [smem:[#allocation2 + $0x114]]
        %v6027 = vstv %s6026
        %v6028 = vmul.f32 %v6027, %v4498
        %v6029 = vmul.f32 %v6027, %v4499
        %v6030 = vmul.f32 %v6027, %v4500
        %v6031 = vmul.f32 %v6027, %v4501
        %v6032 = vmul.f32 %v6027, %v4502
        %v6038 = vrot.slane %v6028, 2
        %v6039 = vrot.slane %v6029, 2
        %v6040 = vsel %vm1534, %v6038, %v6039
        %v6041 = vrot.slane %v6030, 2
        %v6042 = vsel %vm1534, %v6039, %v6041
        %v6043 = vrot.slane %v6031, 2
        %v6044 = vsel %vm1534, %v6041, %v6043
        %v6045 = vrot.slane %v6032, 2
        %v6046 = vsel %vm1534, %v6043, %v6045
        %v6051 = vadd.f32 %v5819, %v6040
        %v6052 = vadd.f32 %v5820, %v6042
        %v6053 = vadd.f32 %v5821, %v6044
        %v6054 = vadd.f32 %v5822, %v6046
        %s6055 = sld [smem:[#allocation2 + $0x19]]
        %v6056 = vstv %s6055
        %v6057 = vmul.f32 %v6056, %v4498
        %v6058 = vmul.f32 %v6056, %v4499
        %v6059 = vmul.f32 %v6056, %v4500
        %v6060 = vmul.f32 %v6056, %v4501
        %v6061 = vmul.f32 %v6056, %v4502
        %v6067 = vrot.slane %v6057, 2
        %v6068 = vrot.slane %v6058, 2
        %v6069 = vsel %vm1534, %v6067, %v6068
        %v6070 = vrot.slane %v6059, 2
        %v6071 = vsel %vm1534, %v6068, %v6070
        %v6072 = vrot.slane %v6060, 2
        %v6073 = vsel %vm1534, %v6070, %v6072
        %v6074 = vrot.slane %v6061, 2
        %v6075 = vsel %vm1534, %v6072, %v6074
        %6076 = vrot.lane.b32.xlu0 %v6069, 127
        %v6077 = vpop.permute.xlu0 %6076
        %6078 = vrot.lane.b32.xlu0 %v6071, 127
        %v6079 = vpop.permute.xlu0 %6078
        %6080 = vrot.lane.b32.xlu0 %v6073, 127
        %v6081 = vpop.permute.xlu0 %6080
        %6082 = vrot.lane.b32.xlu0 %v6075, 127
        %v6083 = vpop.permute.xlu0 %6082
        %v6088 = vadd.f32 %v5848, %v6077
        %v6089 = vadd.f32 %v5849, %v6079
        %v6090 = vadd.f32 %v5850, %v6081
        %v6091 = vadd.f32 %v5851, %v6083
        %s6092 = sld [smem:[#allocation2 + $0x3d]]
        %v6093 = vstv %s6092
        %v6094 = vmul.f32 %v6093, %v4498
        %v6095 = vmul.f32 %v6093, %v4499
        %v6096 = vmul.f32 %v6093, %v4500
        %v6097 = vmul.f32 %v6093, %v4501
        %v6098 = vmul.f32 %v6093, %v4502
        %v6104 = vrot.slane %v6094, 2
        %v6105 = vrot.slane %v6095, 2
        %v6106 = vsel %vm1534, %v6104, %v6105
        %v6107 = vrot.slane %v6096, 2
        %v6108 = vsel %vm1534, %v6105, %v6107
        %v6109 = vrot.slane %v6097, 2
        %v6110 = vsel %vm1534, %v6107, %v6109
        %v6111 = vrot.slane %v6098, 2
        %v6112 = vsel %vm1534, %v6109, %v6111
        %6113 = vrot.lane.b32.xlu0 %v6106, 127
        %v6114 = vpop.permute.xlu0 %6113
        %6115 = vrot.lane.b32.xlu0 %v6108, 127
        %v6116 = vpop.permute.xlu0 %6115
        %6117 = vrot.lane.b32.xlu0 %v6110, 127
        %v6118 = vpop.permute.xlu0 %6117
        %6119 = vrot.lane.b32.xlu0 %v6112, 127
        %v6120 = vpop.permute.xlu0 %6119
        %v6125 = vadd.f32 %v5877, %v6114
        %v6126 = vadd.f32 %v5878, %v6116
        %v6127 = vadd.f32 %v5879, %v6118
        %v6128 = vadd.f32 %v5880, %v6120
        %s6129 = sld [smem:[#allocation2 + $0x61]]
        %v6130 = vstv %s6129
        %v6131 = vmul.f32 %v6130, %v4498
        %v6132 = vmul.f32 %v6130, %v4499
        %v6133 = vmul.f32 %v6130, %v4500
        %v6134 = vmul.f32 %v6130, %v4501
        %v6135 = vmul.f32 %v6130, %v4502
        %v6141 = vrot.slane %v6131, 2
        %v6142 = vrot.slane %v6132, 2
        %v6143 = vsel %vm1534, %v6141, %v6142
        %v6144 = vrot.slane %v6133, 2
        %v6145 = vsel %vm1534, %v6142, %v6144
        %v6146 = vrot.slane %v6134, 2
        %v6147 = vsel %vm1534, %v6144, %v6146
        %v6148 = vrot.slane %v6135, 2
        %v6149 = vsel %vm1534, %v6146, %v6148
        %6150 = vrot.lane.b32.xlu0 %v6143, 127
        %v6151 = vpop.permute.xlu0 %6150
        %6152 = vrot.lane.b32.xlu0 %v6145, 127
        %v6153 = vpop.permute.xlu0 %6152
        %6154 = vrot.lane.b32.xlu0 %v6147, 127
        %v6155 = vpop.permute.xlu0 %6154
        %6156 = vrot.lane.b32.xlu0 %v6149, 127
        %v6157 = vpop.permute.xlu0 %6156
        %v6162 = vadd.f32 %v5906, %v6151
        %v6163 = vadd.f32 %v5907, %v6153
        %v6164 = vadd.f32 %v5908, %v6155
        %v6165 = vadd.f32 %v5909, %v6157
        %s6166 = sld [smem:[#allocation2 + $0x85]]
        %v6167 = vstv %s6166
        %v6168 = vmul.f32 %v6167, %v4498
        %v6169 = vmul.f32 %v6167, %v4499
        %v6170 = vmul.f32 %v6167, %v4500
        %v6171 = vmul.f32 %v6167, %v4501
        %v6172 = vmul.f32 %v6167, %v4502
        %v6178 = vrot.slane %v6168, 2
        %v6179 = vrot.slane %v6169, 2
        %v6180 = vsel %vm1534, %v6178, %v6179
        %v6181 = vrot.slane %v6170, 2
        %v6182 = vsel %vm1534, %v6179, %v6181
        %v6183 = vrot.slane %v6171, 2
        %v6184 = vsel %vm1534, %v6181, %v6183
        %v6185 = vrot.slane %v6172, 2
        %v6186 = vsel %vm1534, %v6183, %v6185
        %6187 = vrot.lane.b32.xlu0 %v6180, 127
        %v6188 = vpop.permute.xlu0 %6187
        %6189 = vrot.lane.b32.xlu0 %v6182, 127
        %v6190 = vpop.permute.xlu0 %6189
        %6191 = vrot.lane.b32.xlu0 %v6184, 127
        %v6192 = vpop.permute.xlu0 %6191
        %6193 = vrot.lane.b32.xlu0 %v6186, 127
        %v6194 = vpop.permute.xlu0 %6193
        %v6199 = vadd.f32 %v5935, %v6188
        %v6200 = vadd.f32 %v5936, %v6190
        %v6201 = vadd.f32 %v5937, %v6192
        %v6202 = vadd.f32 %v5938, %v6194
        %s6203 = sld [smem:[#allocation2 + $0xa9]]
        %v6204 = vstv %s6203
        %v6205 = vmul.f32 %v6204, %v4498
        %v6206 = vmul.f32 %v6204, %v4499
        %v6207 = vmul.f32 %v6204, %v4500
        %v6208 = vmul.f32 %v6204, %v4501
        %v6209 = vmul.f32 %v6204, %v4502
        %v6215 = vrot.slane %v6205, 2
        %v6216 = vrot.slane %v6206, 2
        %v6217 = vsel %vm1534, %v6215, %v6216
        %v6218 = vrot.slane %v6207, 2
        %v6219 = vsel %vm1534, %v6216, %v6218
        %v6220 = vrot.slane %v6208, 2
        %v6221 = vsel %vm1534, %v6218, %v6220
        %v6222 = vrot.slane %v6209, 2
        %v6223 = vsel %vm1534, %v6220, %v6222
        %6224 = vrot.lane.b32.xlu0 %v6217, 127
        %v6225 = vpop.permute.xlu0 %6224
        %6226 = vrot.lane.b32.xlu0 %v6219, 127
        %v6227 = vpop.permute.xlu0 %6226
        %6228 = vrot.lane.b32.xlu0 %v6221, 127
        %v6229 = vpop.permute.xlu0 %6228
        %6230 = vrot.lane.b32.xlu0 %v6223, 127
        %v6231 = vpop.permute.xlu0 %6230
        %v6236 = vadd.f32 %v5964, %v6225
        %v6237 = vadd.f32 %v5965, %v6227
        %v6238 = vadd.f32 %v5966, %v6229
        %v6239 = vadd.f32 %v5967, %v6231
        %s6240 = sld [smem:[#allocation2 + $0xcd]]
        %v6241 = vstv %s6240
        %v6242 = vmul.f32 %v6241, %v4498
        %v6243 = vmul.f32 %v6241, %v4499
        %v6244 = vmul.f32 %v6241, %v4500
        %v6245 = vmul.f32 %v6241, %v4501
        %v6246 = vmul.f32 %v6241, %v4502
        %v6252 = vrot.slane %v6242, 2
        %v6253 = vrot.slane %v6243, 2
        %v6254 = vsel %vm1534, %v6252, %v6253
        %v6255 = vrot.slane %v6244, 2
        %v6256 = vsel %vm1534, %v6253, %v6255
        %v6257 = vrot.slane %v6245, 2
        %v6258 = vsel %vm1534, %v6255, %v6257
        %v6259 = vrot.slane %v6246, 2
        %v6260 = vsel %vm1534, %v6257, %v6259
        %6261 = vrot.lane.b32.xlu0 %v6254, 127
        %v6262 = vpop.permute.xlu0 %6261
        %6263 = vrot.lane.b32.xlu0 %v6256, 127
        %v6264 = vpop.permute.xlu0 %6263
        %6265 = vrot.lane.b32.xlu0 %v6258, 127
        %v6266 = vpop.permute.xlu0 %6265
        %6267 = vrot.lane.b32.xlu0 %v6260, 127
        %v6268 = vpop.permute.xlu0 %6267
        %v6273 = vadd.f32 %v5993, %v6262
        %v6274 = vadd.f32 %v5994, %v6264
        %v6275 = vadd.f32 %v5995, %v6266
        %v6276 = vadd.f32 %v5996, %v6268
        %s6277 = sld [smem:[#allocation2 + $0xf1]]
        %v6278 = vstv %s6277
        %v6279 = vmul.f32 %v6278, %v4498
        %v6280 = vmul.f32 %v6278, %v4499
        %v6281 = vmul.f32 %v6278, %v4500
        %v6282 = vmul.f32 %v6278, %v4501
        %v6283 = vmul.f32 %v6278, %v4502
        %v6289 = vrot.slane %v6279, 2
        %v6290 = vrot.slane %v6280, 2
        %v6291 = vsel %vm1534, %v6289, %v6290
        %v6292 = vrot.slane %v6281, 2
        %v6293 = vsel %vm1534, %v6290, %v6292
        %v6294 = vrot.slane %v6282, 2
        %v6295 = vsel %vm1534, %v6292, %v6294
        %v6296 = vrot.slane %v6283, 2
        %v6297 = vsel %vm1534, %v6294, %v6296
        %6298 = vrot.lane.b32.xlu0 %v6291, 127
        %v6299 = vpop.permute.xlu0 %6298
        %6300 = vrot.lane.b32.xlu0 %v6293, 127
        %v6301 = vpop.permute.xlu0 %6300
        %6302 = vrot.lane.b32.xlu0 %v6295, 127
        %v6303 = vpop.permute.xlu0 %6302
        %6304 = vrot.lane.b32.xlu0 %v6297, 127
        %v6305 = vpop.permute.xlu0 %6304
        %v6310 = vadd.f32 %v6022, %v6299
        %v6311 = vadd.f32 %v6023, %v6301
        %v6312 = vadd.f32 %v6024, %v6303
        %v6313 = vadd.f32 %v6025, %v6305
        %s6314 = sld [smem:[#allocation2 + $0x115]]
        %v6315 = vstv %s6314
        %v6316 = vmul.f32 %v6315, %v4498
        %v6317 = vmul.f32 %v6315, %v4499
        %v6318 = vmul.f32 %v6315, %v4500
        %v6319 = vmul.f32 %v6315, %v4501
        %v6320 = vmul.f32 %v6315, %v4502
        %v6326 = vrot.slane %v6316, 2
        %v6327 = vrot.slane %v6317, 2
        %v6328 = vsel %vm1534, %v6326, %v6327
        %v6329 = vrot.slane %v6318, 2
        %v6330 = vsel %vm1534, %v6327, %v6329
        %v6331 = vrot.slane %v6319, 2
        %v6332 = vsel %vm1534, %v6329, %v6331
        %v6333 = vrot.slane %v6320, 2
        %v6334 = vsel %vm1534, %v6331, %v6333
        %6335 = vrot.lane.b32.xlu0 %v6328, 127
        %v6336 = vpop.permute.xlu0 %6335
        %6337 = vrot.lane.b32.xlu0 %v6330, 127
        %v6338 = vpop.permute.xlu0 %6337
        %6339 = vrot.lane.b32.xlu0 %v6332, 127
        %v6340 = vpop.permute.xlu0 %6339
        %6341 = vrot.lane.b32.xlu0 %v6334, 127
        %v6342 = vpop.permute.xlu0 %6341
        %v6347 = vadd.f32 %v6051, %v6336
        %v6348 = vadd.f32 %v6052, %v6338
        %v6349 = vadd.f32 %v6053, %v6340
        %v6350 = vadd.f32 %v6054, %v6342
        %s6351 = sld [smem:[#allocation2 + $0x1a]]
        %v6352 = vstv %s6351
        %v6353 = vmul.f32 %v6352, %v4498
        %v6354 = vmul.f32 %v6352, %v4499
        %v6355 = vmul.f32 %v6352, %v4500
        %v6356 = vmul.f32 %v6352, %v4501
        %v6357 = vmul.f32 %v6352, %v4502
        %v6363 = vrot.slane %v6353, 2
        %v6364 = vrot.slane %v6354, 2
        %v6365 = vsel %vm1534, %v6363, %v6364
        %v6366 = vrot.slane %v6355, 2
        %v6367 = vsel %vm1534, %v6364, %v6366
        %v6368 = vrot.slane %v6356, 2
        %v6369 = vsel %vm1534, %v6366, %v6368
        %v6370 = vrot.slane %v6357, 2
        %v6371 = vsel %vm1534, %v6368, %v6370
        %6372 = vrot.lane.b32.xlu0 %v6365, 126
        %v6373 = vpop.permute.xlu0 %6372
        %6374 = vrot.lane.b32.xlu0 %v6367, 126
        %v6375 = vpop.permute.xlu0 %6374
        %6376 = vrot.lane.b32.xlu0 %v6369, 126
        %v6377 = vpop.permute.xlu0 %6376
        %6378 = vrot.lane.b32.xlu0 %v6371, 126
        %v6379 = vpop.permute.xlu0 %6378
        %v6384 = vadd.f32 %v6088, %v6373
        %v6385 = vadd.f32 %v6089, %v6375
        %v6386 = vadd.f32 %v6090, %v6377
        %v6387 = vadd.f32 %v6091, %v6379
        %s6388 = sld [smem:[#allocation2 + $0x3e]]
        %v6389 = vstv %s6388
        %v6390 = vmul.f32 %v6389, %v4498
        %v6391 = vmul.f32 %v6389, %v4499
        %v6392 = vmul.f32 %v6389, %v4500
        %v6393 = vmul.f32 %v6389, %v4501
        %v6394 = vmul.f32 %v6389, %v4502
        %v6400 = vrot.slane %v6390, 2
        %v6401 = vrot.slane %v6391, 2
        %v6402 = vsel %vm1534, %v6400, %v6401
        %v6403 = vrot.slane %v6392, 2
        %v6404 = vsel %vm1534, %v6401, %v6403
        %v6405 = vrot.slane %v6393, 2
        %v6406 = vsel %vm1534, %v6403, %v6405
        %v6407 = vrot.slane %v6394, 2
        %v6408 = vsel %vm1534, %v6405, %v6407
        %6409 = vrot.lane.b32.xlu0 %v6402, 126
        %v6410 = vpop.permute.xlu0 %6409
        %6411 = vrot.lane.b32.xlu0 %v6404, 126
        %v6412 = vpop.permute.xlu0 %6411
        %6413 = vrot.lane.b32.xlu0 %v6406, 126
        %v6414 = vpop.permute.xlu0 %6413
        %6415 = vrot.lane.b32.xlu0 %v6408, 126
        %v6416 = vpop.permute.xlu0 %6415
        %v6421 = vadd.f32 %v6125, %v6410
        %v6422 = vadd.f32 %v6126, %v6412
        %v6423 = vadd.f32 %v6127, %v6414
        %v6424 = vadd.f32 %v6128, %v6416
        %s6425 = sld [smem:[#allocation2 + $0x62]]
        %v6426 = vstv %s6425
        %v6427 = vmul.f32 %v6426, %v4498
        %v6428 = vmul.f32 %v6426, %v4499
        %v6429 = vmul.f32 %v6426, %v4500
        %v6430 = vmul.f32 %v6426, %v4501
        %v6431 = vmul.f32 %v6426, %v4502
        %v6437 = vrot.slane %v6427, 2
        %v6438 = vrot.slane %v6428, 2
        %v6439 = vsel %vm1534, %v6437, %v6438
        %v6440 = vrot.slane %v6429, 2
        %v6441 = vsel %vm1534, %v6438, %v6440
        %v6442 = vrot.slane %v6430, 2
        %v6443 = vsel %vm1534, %v6440, %v6442
        %v6444 = vrot.slane %v6431, 2
        %v6445 = vsel %vm1534, %v6442, %v6444
        %6446 = vrot.lane.b32.xlu0 %v6439, 126
        %v6447 = vpop.permute.xlu0 %6446
        %6448 = vrot.lane.b32.xlu0 %v6441, 126
        %v6449 = vpop.permute.xlu0 %6448
        %6450 = vrot.lane.b32.xlu0 %v6443, 126
        %v6451 = vpop.permute.xlu0 %6450
        %6452 = vrot.lane.b32.xlu0 %v6445, 126
        %v6453 = vpop.permute.xlu0 %6452
        %v6458 = vadd.f32 %v6162, %v6447
        %v6459 = vadd.f32 %v6163, %v6449
        %v6460 = vadd.f32 %v6164, %v6451
        %v6461 = vadd.f32 %v6165, %v6453
        %s6462 = sld [smem:[#allocation2 + $0x86]]
        %v6463 = vstv %s6462
        %v6464 = vmul.f32 %v6463, %v4498
        %v6465 = vmul.f32 %v6463, %v4499
        %v6466 = vmul.f32 %v6463, %v4500
        %v6467 = vmul.f32 %v6463, %v4501
        %v6468 = vmul.f32 %v6463, %v4502
        %v6474 = vrot.slane %v6464, 2
        %v6475 = vrot.slane %v6465, 2
        %v6476 = vsel %vm1534, %v6474, %v6475
        %v6477 = vrot.slane %v6466, 2
        %v6478 = vsel %vm1534, %v6475, %v6477
        %v6479 = vrot.slane %v6467, 2
        %v6480 = vsel %vm1534, %v6477, %v6479
        %v6481 = vrot.slane %v6468, 2
        %v6482 = vsel %vm1534, %v6479, %v6481
        %6483 = vrot.lane.b32.xlu0 %v6476, 126
        %v6484 = vpop.permute.xlu0 %6483
        %6485 = vrot.lane.b32.xlu0 %v6478, 126
        %v6486 = vpop.permute.xlu0 %6485
        %6487 = vrot.lane.b32.xlu0 %v6480, 126
        %v6488 = vpop.permute.xlu0 %6487
        %6489 = vrot.lane.b32.xlu0 %v6482, 126
        %v6490 = vpop.permute.xlu0 %6489
        %v6495 = vadd.f32 %v6199, %v6484
        %v6496 = vadd.f32 %v6200, %v6486
        %v6497 = vadd.f32 %v6201, %v6488
        %v6498 = vadd.f32 %v6202, %v6490
        %s6499 = sld [smem:[#allocation2 + $0xaa]]
        %v6500 = vstv %s6499
        %v6501 = vmul.f32 %v6500, %v4498
        %v6502 = vmul.f32 %v6500, %v4499
        %v6503 = vmul.f32 %v6500, %v4500
        %v6504 = vmul.f32 %v6500, %v4501
        %v6505 = vmul.f32 %v6500, %v4502
        %v6511 = vrot.slane %v6501, 2
        %v6512 = vrot.slane %v6502, 2
        %v6513 = vsel %vm1534, %v6511, %v6512
        %v6514 = vrot.slane %v6503, 2
        %v6515 = vsel %vm1534, %v6512, %v6514
        %v6516 = vrot.slane %v6504, 2
        %v6517 = vsel %vm1534, %v6514, %v6516
        %v6518 = vrot.slane %v6505, 2
        %v6519 = vsel %vm1534, %v6516, %v6518
        %6520 = vrot.lane.b32.xlu0 %v6513, 126
        %v6521 = vpop.permute.xlu0 %6520
        %6522 = vrot.lane.b32.xlu0 %v6515, 126
        %v6523 = vpop.permute.xlu0 %6522
        %6524 = vrot.lane.b32.xlu0 %v6517, 126
        %v6525 = vpop.permute.xlu0 %6524
        %6526 = vrot.lane.b32.xlu0 %v6519, 126
        %v6527 = vpop.permute.xlu0 %6526
        %v6532 = vadd.f32 %v6236, %v6521
        %v6533 = vadd.f32 %v6237, %v6523
        %v6534 = vadd.f32 %v6238, %v6525
        %v6535 = vadd.f32 %v6239, %v6527
        %s6536 = sld [smem:[#allocation2 + $0xce]]
        %v6537 = vstv %s6536
        %v6538 = vmul.f32 %v6537, %v4498
        %v6539 = vmul.f32 %v6537, %v4499
        %v6540 = vmul.f32 %v6537, %v4500
        %v6541 = vmul.f32 %v6537, %v4501
        %v6542 = vmul.f32 %v6537, %v4502
        %v6548 = vrot.slane %v6538, 2
        %v6549 = vrot.slane %v6539, 2
        %v6550 = vsel %vm1534, %v6548, %v6549
        %v6551 = vrot.slane %v6540, 2
        %v6552 = vsel %vm1534, %v6549, %v6551
        %v6553 = vrot.slane %v6541, 2
        %v6554 = vsel %vm1534, %v6551, %v6553
        %v6555 = vrot.slane %v6542, 2
        %v6556 = vsel %vm1534, %v6553, %v6555
        %6557 = vrot.lane.b32.xlu0 %v6550, 126
        %v6558 = vpop.permute.xlu0 %6557
        %6559 = vrot.lane.b32.xlu0 %v6552, 126
        %v6560 = vpop.permute.xlu0 %6559
        %6561 = vrot.lane.b32.xlu0 %v6554, 126
        %v6562 = vpop.permute.xlu0 %6561
        %6563 = vrot.lane.b32.xlu0 %v6556, 126
        %v6564 = vpop.permute.xlu0 %6563
        %v6569 = vadd.f32 %v6273, %v6558
        %v6570 = vadd.f32 %v6274, %v6560
        %v6571 = vadd.f32 %v6275, %v6562
        %v6572 = vadd.f32 %v6276, %v6564
        %s6573 = sld [smem:[#allocation2 + $0xf2]]
        %v6574 = vstv %s6573
        %v6575 = vmul.f32 %v6574, %v4498
        %v6576 = vmul.f32 %v6574, %v4499
        %v6577 = vmul.f32 %v6574, %v4500
        %v6578 = vmul.f32 %v6574, %v4501
        %v6579 = vmul.f32 %v6574, %v4502
        %v6585 = vrot.slane %v6575, 2
        %v6586 = vrot.slane %v6576, 2
        %v6587 = vsel %vm1534, %v6585, %v6586
        %v6588 = vrot.slane %v6577, 2
        %v6589 = vsel %vm1534, %v6586, %v6588
        %v6590 = vrot.slane %v6578, 2
        %v6591 = vsel %vm1534, %v6588, %v6590
        %v6592 = vrot.slane %v6579, 2
        %v6593 = vsel %vm1534, %v6590, %v6592
        %6594 = vrot.lane.b32.xlu0 %v6587, 126
        %v6595 = vpop.permute.xlu0 %6594
        %6596 = vrot.lane.b32.xlu0 %v6589, 126
        %v6597 = vpop.permute.xlu0 %6596
        %6598 = vrot.lane.b32.xlu0 %v6591, 126
        %v6599 = vpop.permute.xlu0 %6598
        %6600 = vrot.lane.b32.xlu0 %v6593, 126
        %v6601 = vpop.permute.xlu0 %6600
        %v6606 = vadd.f32 %v6310, %v6595
        %v6607 = vadd.f32 %v6311, %v6597
        %v6608 = vadd.f32 %v6312, %v6599
        %v6609 = vadd.f32 %v6313, %v6601
        %s6610 = sld [smem:[#allocation2 + $0x116]]
        %v6611 = vstv %s6610
        %v6612 = vmul.f32 %v6611, %v4498
        %v6613 = vmul.f32 %v6611, %v4499
        %v6614 = vmul.f32 %v6611, %v4500
        %v6615 = vmul.f32 %v6611, %v4501
        %v6616 = vmul.f32 %v6611, %v4502
        %v6622 = vrot.slane %v6612, 2
        %v6623 = vrot.slane %v6613, 2
        %v6624 = vsel %vm1534, %v6622, %v6623
        %v6625 = vrot.slane %v6614, 2
        %v6626 = vsel %vm1534, %v6623, %v6625
        %v6627 = vrot.slane %v6615, 2
        %v6628 = vsel %vm1534, %v6625, %v6627
        %v6629 = vrot.slane %v6616, 2
        %v6630 = vsel %vm1534, %v6627, %v6629
        %6631 = vrot.lane.b32.xlu0 %v6624, 126
        %v6632 = vpop.permute.xlu0 %6631
        %6633 = vrot.lane.b32.xlu0 %v6626, 126
        %v6634 = vpop.permute.xlu0 %6633
        %6635 = vrot.lane.b32.xlu0 %v6628, 126
        %v6636 = vpop.permute.xlu0 %6635
        %6637 = vrot.lane.b32.xlu0 %v6630, 126
        %v6638 = vpop.permute.xlu0 %6637
        %v6643 = vadd.f32 %v6347, %v6632
        %v6644 = vadd.f32 %v6348, %v6634
        %v6645 = vadd.f32 %v6349, %v6636
        %v6646 = vadd.f32 %v6350, %v6638
        %s6647 = scalar_lea.vmem %s195, 120
        %v6648 = vld [vmem:[%s6647] sm:$0xff]
        %v6649 = vld [vmem:[%s6647 + $0x8] sm:$0xff]
        %v6650 = vld [vmem:[%s6647 + $0x10] sm:$0xff]
        %v6651 = vld [vmem:[%s6647 + $0x18] sm:$0xff]
        %v6652 = vld [vmem:[%s6647 + $0x20] sm:$0x3]
        %s6653 = sld [smem:[#allocation2 + $0x1b]]
        %v6654 = vstv %s6653
        %v6655 = vmul.f32 %v6654, %v6648
        %v6656 = vmul.f32 %v6654, %v6649
        %v6657 = vmul.f32 %v6654, %v6650
        %v6658 = vmul.f32 %v6654, %v6651
        %v6659 = vadd.f32 %v6384, %v6655
        %v6660 = vadd.f32 %v6385, %v6656
        %v6661 = vadd.f32 %v6386, %v6657
        %v6662 = vadd.f32 %v6387, %v6658
        %s6663 = sld [smem:[#allocation2 + $0x3f]]
        %v6664 = vstv %s6663
        %v6665 = vmul.f32 %v6664, %v6648
        %v6666 = vmul.f32 %v6664, %v6649
        %v6667 = vmul.f32 %v6664, %v6650
        %v6668 = vmul.f32 %v6664, %v6651
        %v6669 = vadd.f32 %v6421, %v6665
        %v6670 = vadd.f32 %v6422, %v6666
        %v6671 = vadd.f32 %v6423, %v6667
        %v6672 = vadd.f32 %v6424, %v6668
        %s6673 = sld [smem:[#allocation2 + $0x63]]
        %v6674 = vstv %s6673
        %v6675 = vmul.f32 %v6674, %v6648
        %v6676 = vmul.f32 %v6674, %v6649
        %v6677 = vmul.f32 %v6674, %v6650
        %v6678 = vmul.f32 %v6674, %v6651
        %v6679 = vadd.f32 %v6458, %v6675
        %v6680 = vadd.f32 %v6459, %v6676
        %v6681 = vadd.f32 %v6460, %v6677
        %v6682 = vadd.f32 %v6461, %v6678
        %s6683 = sld [smem:[#allocation2 + $0x87]]
        %v6684 = vstv %s6683
        %v6685 = vmul.f32 %v6684, %v6648
        %v6686 = vmul.f32 %v6684, %v6649
        %v6687 = vmul.f32 %v6684, %v6650
        %v6688 = vmul.f32 %v6684, %v6651
        %v6689 = vadd.f32 %v6495, %v6685
        %v6690 = vadd.f32 %v6496, %v6686
        %v6691 = vadd.f32 %v6497, %v6687
        %v6692 = vadd.f32 %v6498, %v6688
        %s6693 = sld [smem:[#allocation2 + $0xab]]
        %v6694 = vstv %s6693
        %v6695 = vmul.f32 %v6694, %v6648
        %v6696 = vmul.f32 %v6694, %v6649
        %v6697 = vmul.f32 %v6694, %v6650
        %v6698 = vmul.f32 %v6694, %v6651
        %v6699 = vadd.f32 %v6532, %v6695
        %v6700 = vadd.f32 %v6533, %v6696
        %v6701 = vadd.f32 %v6534, %v6697
        %v6702 = vadd.f32 %v6535, %v6698
        %s6703 = sld [smem:[#allocation2 + $0xcf]]
        %v6704 = vstv %s6703
        %v6705 = vmul.f32 %v6704, %v6648
        %v6706 = vmul.f32 %v6704, %v6649
        %v6707 = vmul.f32 %v6704, %v6650
        %v6708 = vmul.f32 %v6704, %v6651
        %v6709 = vadd.f32 %v6569, %v6705
        %v6710 = vadd.f32 %v6570, %v6706
        %v6711 = vadd.f32 %v6571, %v6707
        %v6712 = vadd.f32 %v6572, %v6708
        %s6713 = sld [smem:[#allocation2 + $0xf3]]
        %v6714 = vstv %s6713
        %v6715 = vmul.f32 %v6714, %v6648
        %v6716 = vmul.f32 %v6714, %v6649
        %v6717 = vmul.f32 %v6714, %v6650
        %v6718 = vmul.f32 %v6714, %v6651
        %v6719 = vadd.f32 %v6606, %v6715
        %v6720 = vadd.f32 %v6607, %v6716
        %v6721 = vadd.f32 %v6608, %v6717
        %v6722 = vadd.f32 %v6609, %v6718
        %s6723 = sld [smem:[#allocation2 + $0x117]]
        %v6724 = vstv %s6723
        %v6725 = vmul.f32 %v6724, %v6648
        %v6726 = vmul.f32 %v6724, %v6649
        %v6727 = vmul.f32 %v6724, %v6650
        %v6728 = vmul.f32 %v6724, %v6651
        %v6729 = vadd.f32 %v6643, %v6725
        %v6730 = vadd.f32 %v6644, %v6726
        %v6731 = vadd.f32 %v6645, %v6727
        %v6732 = vadd.f32 %v6646, %v6728
        %s6733 = sld [smem:[#allocation2 + $0x1c]]
        %v6734 = vstv %s6733
        %v6735 = vmul.f32 %v6734, %v6648
        %v6736 = vmul.f32 %v6734, %v6649
        %v6737 = vmul.f32 %v6734, %v6650
        %v6738 = vmul.f32 %v6734, %v6651
        %6743 = vrot.lane.b32.xlu0 %v6735, 127
        %v6744 = vpop.permute.xlu0 %6743
        %6745 = vrot.lane.b32.xlu0 %v6736, 127
        %v6746 = vpop.permute.xlu0 %6745
        %6747 = vrot.lane.b32.xlu0 %v6737, 127
        %v6748 = vpop.permute.xlu0 %6747
        %6749 = vrot.lane.b32.xlu0 %v6738, 127
        %v6750 = vpop.permute.xlu0 %6749
        %v6755 = vadd.f32 %v6659, %v6744
        %v6756 = vadd.f32 %v6660, %v6746
        %v6757 = vadd.f32 %v6661, %v6748
        %v6758 = vadd.f32 %v6662, %v6750
        %s6759 = sld [smem:[#allocation2 + $0x40]]
        %v6760 = vstv %s6759
        %v6761 = vmul.f32 %v6760, %v6648
        %v6762 = vmul.f32 %v6760, %v6649
        %v6763 = vmul.f32 %v6760, %v6650
        %v6764 = vmul.f32 %v6760, %v6651
        %6769 = vrot.lane.b32.xlu0 %v6761, 127
        %v6770 = vpop.permute.xlu0 %6769
        %6771 = vrot.lane.b32.xlu0 %v6762, 127
        %v6772 = vpop.permute.xlu0 %6771
        %6773 = vrot.lane.b32.xlu0 %v6763, 127
        %v6774 = vpop.permute.xlu0 %6773
        %6775 = vrot.lane.b32.xlu0 %v6764, 127
        %v6776 = vpop.permute.xlu0 %6775
        %v6781 = vadd.f32 %v6669, %v6770
        %v6782 = vadd.f32 %v6670, %v6772
        %v6783 = vadd.f32 %v6671, %v6774
        %v6784 = vadd.f32 %v6672, %v6776
        %s6785 = sld [smem:[#allocation2 + $0x64]]
        %v6786 = vstv %s6785
        %v6787 = vmul.f32 %v6786, %v6648
        %v6788 = vmul.f32 %v6786, %v6649
        %v6789 = vmul.f32 %v6786, %v6650
        %v6790 = vmul.f32 %v6786, %v6651
        %6795 = vrot.lane.b32.xlu0 %v6787, 127
        %v6796 = vpop.permute.xlu0 %6795
        %6797 = vrot.lane.b32.xlu0 %v6788, 127
        %v6798 = vpop.permute.xlu0 %6797
        %6799 = vrot.lane.b32.xlu0 %v6789, 127
        %v6800 = vpop.permute.xlu0 %6799
        %6801 = vrot.lane.b32.xlu0 %v6790, 127
        %v6802 = vpop.permute.xlu0 %6801
        %v6807 = vadd.f32 %v6679, %v6796
        %v6808 = vadd.f32 %v6680, %v6798
        %v6809 = vadd.f32 %v6681, %v6800
        %v6810 = vadd.f32 %v6682, %v6802
        %s6811 = sld [smem:[#allocation2 + $0x88]]
        %v6812 = vstv %s6811
        %v6813 = vmul.f32 %v6812, %v6648
        %v6814 = vmul.f32 %v6812, %v6649
        %v6815 = vmul.f32 %v6812, %v6650
        %v6816 = vmul.f32 %v6812, %v6651
        %6821 = vrot.lane.b32.xlu0 %v6813, 127
        %v6822 = vpop.permute.xlu0 %6821
        %6823 = vrot.lane.b32.xlu0 %v6814, 127
        %v6824 = vpop.permute.xlu0 %6823
        %6825 = vrot.lane.b32.xlu0 %v6815, 127
        %v6826 = vpop.permute.xlu0 %6825
        %6827 = vrot.lane.b32.xlu0 %v6816, 127
        %v6828 = vpop.permute.xlu0 %6827
        %v6833 = vadd.f32 %v6689, %v6822
        %v6834 = vadd.f32 %v6690, %v6824
        %v6835 = vadd.f32 %v6691, %v6826
        %v6836 = vadd.f32 %v6692, %v6828
        %s6837 = sld [smem:[#allocation2 + $0xac]]
        %v6838 = vstv %s6837
        %v6839 = vmul.f32 %v6838, %v6648
        %v6840 = vmul.f32 %v6838, %v6649
        %v6841 = vmul.f32 %v6838, %v6650
        %v6842 = vmul.f32 %v6838, %v6651
        %6847 = vrot.lane.b32.xlu0 %v6839, 127
        %v6848 = vpop.permute.xlu0 %6847
        %6849 = vrot.lane.b32.xlu0 %v6840, 127
        %v6850 = vpop.permute.xlu0 %6849
        %6851 = vrot.lane.b32.xlu0 %v6841, 127
        %v6852 = vpop.permute.xlu0 %6851
        %6853 = vrot.lane.b32.xlu0 %v6842, 127
        %v6854 = vpop.permute.xlu0 %6853
        %v6859 = vadd.f32 %v6699, %v6848
        %v6860 = vadd.f32 %v6700, %v6850
        %v6861 = vadd.f32 %v6701, %v6852
        %v6862 = vadd.f32 %v6702, %v6854
        %s6863 = sld [smem:[#allocation2 + $0xd0]]
        %v6864 = vstv %s6863
        %v6865 = vmul.f32 %v6864, %v6648
        %v6866 = vmul.f32 %v6864, %v6649
        %v6867 = vmul.f32 %v6864, %v6650
        %v6868 = vmul.f32 %v6864, %v6651
        %6873 = vrot.lane.b32.xlu0 %v6865, 127
        %v6874 = vpop.permute.xlu0 %6873
        %6875 = vrot.lane.b32.xlu0 %v6866, 127
        %v6876 = vpop.permute.xlu0 %6875
        %6877 = vrot.lane.b32.xlu0 %v6867, 127
        %v6878 = vpop.permute.xlu0 %6877
        %6879 = vrot.lane.b32.xlu0 %v6868, 127
        %v6880 = vpop.permute.xlu0 %6879
        %v6885 = vadd.f32 %v6709, %v6874
        %v6886 = vadd.f32 %v6710, %v6876
        %v6887 = vadd.f32 %v6711, %v6878
        %v6888 = vadd.f32 %v6712, %v6880
        %s6889 = sld [smem:[#allocation2 + $0xf4]]
        %v6890 = vstv %s6889
        %v6891 = vmul.f32 %v6890, %v6648
        %v6892 = vmul.f32 %v6890, %v6649
        %v6893 = vmul.f32 %v6890, %v6650
        %v6894 = vmul.f32 %v6890, %v6651
        %6899 = vrot.lane.b32.xlu0 %v6891, 127
        %v6900 = vpop.permute.xlu0 %6899
        %6901 = vrot.lane.b32.xlu0 %v6892, 127
        %v6902 = vpop.permute.xlu0 %6901
        %6903 = vrot.lane.b32.xlu0 %v6893, 127
        %v6904 = vpop.permute.xlu0 %6903
        %6905 = vrot.lane.b32.xlu0 %v6894, 127
        %v6906 = vpop.permute.xlu0 %6905
        %v6911 = vadd.f32 %v6719, %v6900
        %v6912 = vadd.f32 %v6720, %v6902
        %v6913 = vadd.f32 %v6721, %v6904
        %v6914 = vadd.f32 %v6722, %v6906
        %s6915 = sld [smem:[#allocation2 + $0x118]]
        %v6916 = vstv %s6915
        %v6917 = vmul.f32 %v6916, %v6648
        %v6918 = vmul.f32 %v6916, %v6649
        %v6919 = vmul.f32 %v6916, %v6650
        %v6920 = vmul.f32 %v6916, %v6651
        %6925 = vrot.lane.b32.xlu0 %v6917, 127
        %v6926 = vpop.permute.xlu0 %6925
        %6927 = vrot.lane.b32.xlu0 %v6918, 127
        %v6928 = vpop.permute.xlu0 %6927
        %6929 = vrot.lane.b32.xlu0 %v6919, 127
        %v6930 = vpop.permute.xlu0 %6929
        %6931 = vrot.lane.b32.xlu0 %v6920, 127
        %v6932 = vpop.permute.xlu0 %6931
        %v6937 = vadd.f32 %v6729, %v6926
        %v6938 = vadd.f32 %v6730, %v6928
        %v6939 = vadd.f32 %v6731, %v6930
        %v6940 = vadd.f32 %v6732, %v6932
        %s6941 = sld [smem:[#allocation2 + $0x1d]]
        %v6942 = vstv %s6941
        %v6943 = vmul.f32 %v6942, %v6648
        %v6944 = vmul.f32 %v6942, %v6649
        %v6945 = vmul.f32 %v6942, %v6650
        %v6946 = vmul.f32 %v6942, %v6651
        %6951 = vrot.lane.b32.xlu0 %v6943, 126
        %v6952 = vpop.permute.xlu0 %6951
        %6953 = vrot.lane.b32.xlu0 %v6944, 126
        %v6954 = vpop.permute.xlu0 %6953
        %6955 = vrot.lane.b32.xlu0 %v6945, 126
        %v6956 = vpop.permute.xlu0 %6955
        %6957 = vrot.lane.b32.xlu0 %v6946, 126
        %v6958 = vpop.permute.xlu0 %6957
        %v6963 = vadd.f32 %v6755, %v6952
        %v6964 = vadd.f32 %v6756, %v6954
        %v6965 = vadd.f32 %v6757, %v6956
        %v6966 = vadd.f32 %v6758, %v6958
        %s6967 = sld [smem:[#allocation2 + $0x41]]
        %v6968 = vstv %s6967
        %v6969 = vmul.f32 %v6968, %v6648
        %v6970 = vmul.f32 %v6968, %v6649
        %v6971 = vmul.f32 %v6968, %v6650
        %v6972 = vmul.f32 %v6968, %v6651
        %6977 = vrot.lane.b32.xlu0 %v6969, 126
        %v6978 = vpop.permute.xlu0 %6977
        %6979 = vrot.lane.b32.xlu0 %v6970, 126
        %v6980 = vpop.permute.xlu0 %6979
        %6981 = vrot.lane.b32.xlu0 %v6971, 126
        %v6982 = vpop.permute.xlu0 %6981
        %6983 = vrot.lane.b32.xlu0 %v6972, 126
        %v6984 = vpop.permute.xlu0 %6983
        %v6989 = vadd.f32 %v6781, %v6978
        %v6990 = vadd.f32 %v6782, %v6980
        %v6991 = vadd.f32 %v6783, %v6982
        %v6992 = vadd.f32 %v6784, %v6984
        %s6993 = sld [smem:[#allocation2 + $0x65]]
        %v6994 = vstv %s6993
        %v6995 = vmul.f32 %v6994, %v6648
        %v6996 = vmul.f32 %v6994, %v6649
        %v6997 = vmul.f32 %v6994, %v6650
        %v6998 = vmul.f32 %v6994, %v6651
        %7003 = vrot.lane.b32.xlu0 %v6995, 126
        %v7004 = vpop.permute.xlu0 %7003
        %7005 = vrot.lane.b32.xlu0 %v6996, 126
        %v7006 = vpop.permute.xlu0 %7005
        %7007 = vrot.lane.b32.xlu0 %v6997, 126
        %v7008 = vpop.permute.xlu0 %7007
        %7009 = vrot.lane.b32.xlu0 %v6998, 126
        %v7010 = vpop.permute.xlu0 %7009
        %v7015 = vadd.f32 %v6807, %v7004
        %v7016 = vadd.f32 %v6808, %v7006
        %v7017 = vadd.f32 %v6809, %v7008
        %v7018 = vadd.f32 %v6810, %v7010
        %s7019 = sld [smem:[#allocation2 + $0x89]]
        %v7020 = vstv %s7019
        %v7021 = vmul.f32 %v7020, %v6648
        %v7022 = vmul.f32 %v7020, %v6649
        %v7023 = vmul.f32 %v7020, %v6650
        %v7024 = vmul.f32 %v7020, %v6651
        %7029 = vrot.lane.b32.xlu0 %v7021, 126
        %v7030 = vpop.permute.xlu0 %7029
        %7031 = vrot.lane.b32.xlu0 %v7022, 126
        %v7032 = vpop.permute.xlu0 %7031
        %7033 = vrot.lane.b32.xlu0 %v7023, 126
        %v7034 = vpop.permute.xlu0 %7033
        %7035 = vrot.lane.b32.xlu0 %v7024, 126
        %v7036 = vpop.permute.xlu0 %7035
        %v7041 = vadd.f32 %v6833, %v7030
        %v7042 = vadd.f32 %v6834, %v7032
        %v7043 = vadd.f32 %v6835, %v7034
        %v7044 = vadd.f32 %v6836, %v7036
        %s7045 = sld [smem:[#allocation2 + $0xad]]
        %v7046 = vstv %s7045
        %v7047 = vmul.f32 %v7046, %v6648
        %v7048 = vmul.f32 %v7046, %v6649
        %v7049 = vmul.f32 %v7046, %v6650
        %v7050 = vmul.f32 %v7046, %v6651
        %7055 = vrot.lane.b32.xlu0 %v7047, 126
        %v7056 = vpop.permute.xlu0 %7055
        %7057 = vrot.lane.b32.xlu0 %v7048, 126
        %v7058 = vpop.permute.xlu0 %7057
        %7059 = vrot.lane.b32.xlu0 %v7049, 126
        %v7060 = vpop.permute.xlu0 %7059
        %7061 = vrot.lane.b32.xlu0 %v7050, 126
        %v7062 = vpop.permute.xlu0 %7061
        %v7067 = vadd.f32 %v6859, %v7056
        %v7068 = vadd.f32 %v6860, %v7058
        %v7069 = vadd.f32 %v6861, %v7060
        %v7070 = vadd.f32 %v6862, %v7062
        %s7071 = sld [smem:[#allocation2 + $0xd1]]
        %v7072 = vstv %s7071
        %v7073 = vmul.f32 %v7072, %v6648
        %v7074 = vmul.f32 %v7072, %v6649
        %v7075 = vmul.f32 %v7072, %v6650
        %v7076 = vmul.f32 %v7072, %v6651
        %7081 = vrot.lane.b32.xlu0 %v7073, 126
        %v7082 = vpop.permute.xlu0 %7081
        %7083 = vrot.lane.b32.xlu0 %v7074, 126
        %v7084 = vpop.permute.xlu0 %7083
        %7085 = vrot.lane.b32.xlu0 %v7075, 126
        %v7086 = vpop.permute.xlu0 %7085
        %7087 = vrot.lane.b32.xlu0 %v7076, 126
        %v7088 = vpop.permute.xlu0 %7087
        %v7093 = vadd.f32 %v6885, %v7082
        %v7094 = vadd.f32 %v6886, %v7084
        %v7095 = vadd.f32 %v6887, %v7086
        %v7096 = vadd.f32 %v6888, %v7088
        %s7097 = sld [smem:[#allocation2 + $0xf5]]
        %v7098 = vstv %s7097
        %v7099 = vmul.f32 %v7098, %v6648
        %v7100 = vmul.f32 %v7098, %v6649
        %v7101 = vmul.f32 %v7098, %v6650
        %v7102 = vmul.f32 %v7098, %v6651
        %7107 = vrot.lane.b32.xlu0 %v7099, 126
        %v7108 = vpop.permute.xlu0 %7107
        %7109 = vrot.lane.b32.xlu0 %v7100, 126
        %v7110 = vpop.permute.xlu0 %7109
        %7111 = vrot.lane.b32.xlu0 %v7101, 126
        %v7112 = vpop.permute.xlu0 %7111
        %7113 = vrot.lane.b32.xlu0 %v7102, 126
        %v7114 = vpop.permute.xlu0 %7113
        %v7119 = vadd.f32 %v6911, %v7108
        %v7120 = vadd.f32 %v6912, %v7110
        %v7121 = vadd.f32 %v6913, %v7112
        %v7122 = vadd.f32 %v6914, %v7114
        %s7123 = sld [smem:[#allocation2 + $0x119]]
        %v7124 = vstv %s7123
        %v7125 = vmul.f32 %v7124, %v6648
        %v7126 = vmul.f32 %v7124, %v6649
        %v7127 = vmul.f32 %v7124, %v6650
        %v7128 = vmul.f32 %v7124, %v6651
        %7133 = vrot.lane.b32.xlu0 %v7125, 126
        %v7134 = vpop.permute.xlu0 %7133
        %7135 = vrot.lane.b32.xlu0 %v7126, 126
        %v7136 = vpop.permute.xlu0 %7135
        %7137 = vrot.lane.b32.xlu0 %v7127, 126
        %v7138 = vpop.permute.xlu0 %7137
        %7139 = vrot.lane.b32.xlu0 %v7128, 126
        %v7140 = vpop.permute.xlu0 %7139
        %v7145 = vadd.f32 %v6937, %v7134
        %v7146 = vadd.f32 %v6938, %v7136
        %v7147 = vadd.f32 %v6939, %v7138
        %v7148 = vadd.f32 %v6940, %v7140
        %s7149 = sld [smem:[#allocation2 + $0x1e]]
        %v7150 = vstv %s7149
        %v7151 = vmul.f32 %v7150, %v6648
        %v7152 = vmul.f32 %v7150, %v6649
        %v7153 = vmul.f32 %v7150, %v6650
        %v7154 = vmul.f32 %v7150, %v6651
        %v7155 = vmul.f32 %v7150, %v6652
        %v7161 = vrot.slane %v7151, 1
        %v7162 = vrot.slane %v7152, 1
        %v7163 = vsel %vm709, %v7161, %v7162
        %v7164 = vrot.slane %v7153, 1
        %v7165 = vsel %vm709, %v7162, %v7164
        %v7166 = vrot.slane %v7154, 1
        %v7167 = vsel %vm709, %v7164, %v7166
        %v7168 = vrot.slane %v7155, 1
        %v7169 = vsel %vm709, %v7166, %v7168
        %v7174 = vadd.f32 %v6963, %v7163
        %v7175 = vadd.f32 %v6964, %v7165
        %v7176 = vadd.f32 %v6965, %v7167
        %v7177 = vadd.f32 %v6966, %v7169
        %s7178 = sld [smem:[#allocation2 + $0x42]]
        %v7179 = vstv %s7178
        %v7180 = vmul.f32 %v7179, %v6648
        %v7181 = vmul.f32 %v7179, %v6649
        %v7182 = vmul.f32 %v7179, %v6650
        %v7183 = vmul.f32 %v7179, %v6651
        %v7184 = vmul.f32 %v7179, %v6652
        %v7190 = vrot.slane %v7180, 1
        %v7191 = vrot.slane %v7181, 1
        %v7192 = vsel %vm709, %v7190, %v7191
        %v7193 = vrot.slane %v7182, 1
        %v7194 = vsel %vm709, %v7191, %v7193
        %v7195 = vrot.slane %v7183, 1
        %v7196 = vsel %vm709, %v7193, %v7195
        %v7197 = vrot.slane %v7184, 1
        %v7198 = vsel %vm709, %v7195, %v7197
        %v7203 = vadd.f32 %v6989, %v7192
        %v7204 = vadd.f32 %v6990, %v7194
        %v7205 = vadd.f32 %v6991, %v7196
        %v7206 = vadd.f32 %v6992, %v7198
        %s7207 = sld [smem:[#allocation2 + $0x66]]
        %v7208 = vstv %s7207
        %v7209 = vmul.f32 %v7208, %v6648
        %v7210 = vmul.f32 %v7208, %v6649
        %v7211 = vmul.f32 %v7208, %v6650
        %v7212 = vmul.f32 %v7208, %v6651
        %v7213 = vmul.f32 %v7208, %v6652
        %v7219 = vrot.slane %v7209, 1
        %v7220 = vrot.slane %v7210, 1
        %v7221 = vsel %vm709, %v7219, %v7220
        %v7222 = vrot.slane %v7211, 1
        %v7223 = vsel %vm709, %v7220, %v7222
        %v7224 = vrot.slane %v7212, 1
        %v7225 = vsel %vm709, %v7222, %v7224
        %v7226 = vrot.slane %v7213, 1
        %v7227 = vsel %vm709, %v7224, %v7226
        %v7232 = vadd.f32 %v7015, %v7221
        %v7233 = vadd.f32 %v7016, %v7223
        %v7234 = vadd.f32 %v7017, %v7225
        %v7235 = vadd.f32 %v7018, %v7227
        %s7236 = sld [smem:[#allocation2 + $0x8a]]
        %v7237 = vstv %s7236
        %v7238 = vmul.f32 %v7237, %v6648
        %v7239 = vmul.f32 %v7237, %v6649
        %v7240 = vmul.f32 %v7237, %v6650
        %v7241 = vmul.f32 %v7237, %v6651
        %v7242 = vmul.f32 %v7237, %v6652
        %v7248 = vrot.slane %v7238, 1
        %v7249 = vrot.slane %v7239, 1
        %v7250 = vsel %vm709, %v7248, %v7249
        %v7251 = vrot.slane %v7240, 1
        %v7252 = vsel %vm709, %v7249, %v7251
        %v7253 = vrot.slane %v7241, 1
        %v7254 = vsel %vm709, %v7251, %v7253
        %v7255 = vrot.slane %v7242, 1
        %v7256 = vsel %vm709, %v7253, %v7255
        %v7261 = vadd.f32 %v7041, %v7250
        %v7262 = vadd.f32 %v7042, %v7252
        %v7263 = vadd.f32 %v7043, %v7254
        %v7264 = vadd.f32 %v7044, %v7256
        %s7265 = sld [smem:[#allocation2 + $0xae]]
        %v7266 = vstv %s7265
        %v7267 = vmul.f32 %v7266, %v6648
        %v7268 = vmul.f32 %v7266, %v6649
        %v7269 = vmul.f32 %v7266, %v6650
        %v7270 = vmul.f32 %v7266, %v6651
        %v7271 = vmul.f32 %v7266, %v6652
        %v7277 = vrot.slane %v7267, 1
        %v7278 = vrot.slane %v7268, 1
        %v7279 = vsel %vm709, %v7277, %v7278
        %v7280 = vrot.slane %v7269, 1
        %v7281 = vsel %vm709, %v7278, %v7280
        %v7282 = vrot.slane %v7270, 1
        %v7283 = vsel %vm709, %v7280, %v7282
        %v7284 = vrot.slane %v7271, 1
        %v7285 = vsel %vm709, %v7282, %v7284
        %v7290 = vadd.f32 %v7067, %v7279
        %v7291 = vadd.f32 %v7068, %v7281
        %v7292 = vadd.f32 %v7069, %v7283
        %v7293 = vadd.f32 %v7070, %v7285
        %s7294 = sld [smem:[#allocation2 + $0xd2]]
        %v7295 = vstv %s7294
        %v7296 = vmul.f32 %v7295, %v6648
        %v7297 = vmul.f32 %v7295, %v6649
        %v7298 = vmul.f32 %v7295, %v6650
        %v7299 = vmul.f32 %v7295, %v6651
        %v7300 = vmul.f32 %v7295, %v6652
        %v7306 = vrot.slane %v7296, 1
        %v7307 = vrot.slane %v7297, 1
        %v7308 = vsel %vm709, %v7306, %v7307
        %v7309 = vrot.slane %v7298, 1
        %v7310 = vsel %vm709, %v7307, %v7309
        %v7311 = vrot.slane %v7299, 1
        %v7312 = vsel %vm709, %v7309, %v7311
        %v7313 = vrot.slane %v7300, 1
        %v7314 = vsel %vm709, %v7311, %v7313
        %v7319 = vadd.f32 %v7093, %v7308
        %v7320 = vadd.f32 %v7094, %v7310
        %v7321 = vadd.f32 %v7095, %v7312
        %v7322 = vadd.f32 %v7096, %v7314
        %s7323 = sld [smem:[#allocation2 + $0xf6]]
        %v7324 = vstv %s7323
        %v7325 = vmul.f32 %v7324, %v6648
        %v7326 = vmul.f32 %v7324, %v6649
        %v7327 = vmul.f32 %v7324, %v6650
        %v7328 = vmul.f32 %v7324, %v6651
        %v7329 = vmul.f32 %v7324, %v6652
        %v7335 = vrot.slane %v7325, 1
        %v7336 = vrot.slane %v7326, 1
        %v7337 = vsel %vm709, %v7335, %v7336
        %v7338 = vrot.slane %v7327, 1
        %v7339 = vsel %vm709, %v7336, %v7338
        %v7340 = vrot.slane %v7328, 1
        %v7341 = vsel %vm709, %v7338, %v7340
        %v7342 = vrot.slane %v7329, 1
        %v7343 = vsel %vm709, %v7340, %v7342
        %v7348 = vadd.f32 %v7119, %v7337
        %v7349 = vadd.f32 %v7120, %v7339
        %v7350 = vadd.f32 %v7121, %v7341
        %v7351 = vadd.f32 %v7122, %v7343
        %s7352 = sld [smem:[#allocation2 + $0x11a]]
        %v7353 = vstv %s7352
        %v7354 = vmul.f32 %v7353, %v6648
        %v7355 = vmul.f32 %v7353, %v6649
        %v7356 = vmul.f32 %v7353, %v6650
        %v7357 = vmul.f32 %v7353, %v6651
        %v7358 = vmul.f32 %v7353, %v6652
        %v7364 = vrot.slane %v7354, 1
        %v7365 = vrot.slane %v7355, 1
        %v7366 = vsel %vm709, %v7364, %v7365
        %v7367 = vrot.slane %v7356, 1
        %v7368 = vsel %vm709, %v7365, %v7367
        %v7369 = vrot.slane %v7357, 1
        %v7370 = vsel %vm709, %v7367, %v7369
        %v7371 = vrot.slane %v7358, 1
        %v7372 = vsel %vm709, %v7369, %v7371
        %v7377 = vadd.f32 %v7145, %v7366
        %v7378 = vadd.f32 %v7146, %v7368
        %v7379 = vadd.f32 %v7147, %v7370
        %v7380 = vadd.f32 %v7148, %v7372
        %s7381 = sld [smem:[#allocation2 + $0x1f]]
        %v7382 = vstv %s7381
        %v7383 = vmul.f32 %v7382, %v6648
        %v7384 = vmul.f32 %v7382, %v6649
        %v7385 = vmul.f32 %v7382, %v6650
        %v7386 = vmul.f32 %v7382, %v6651
        %v7387 = vmul.f32 %v7382, %v6652
        %v7393 = vrot.slane %v7383, 1
        %v7394 = vrot.slane %v7384, 1
        %v7395 = vsel %vm709, %v7393, %v7394
        %v7396 = vrot.slane %v7385, 1
        %v7397 = vsel %vm709, %v7394, %v7396
        %v7398 = vrot.slane %v7386, 1
        %v7399 = vsel %vm709, %v7396, %v7398
        %v7400 = vrot.slane %v7387, 1
        %v7401 = vsel %vm709, %v7398, %v7400
        %7402 = vrot.lane.b32.xlu0 %v7395, 127
        %v7403 = vpop.permute.xlu0 %7402
        %7404 = vrot.lane.b32.xlu0 %v7397, 127
        %v7405 = vpop.permute.xlu0 %7404
        %7406 = vrot.lane.b32.xlu0 %v7399, 127
        %v7407 = vpop.permute.xlu0 %7406
        %7408 = vrot.lane.b32.xlu0 %v7401, 127
        %v7409 = vpop.permute.xlu0 %7408
        %v7414 = vadd.f32 %v7174, %v7403
        %v7415 = vadd.f32 %v7175, %v7405
        %v7416 = vadd.f32 %v7176, %v7407
        %v7417 = vadd.f32 %v7177, %v7409
        %s7418 = sld [smem:[#allocation2 + $0x43]]
        %v7419 = vstv %s7418
        %v7420 = vmul.f32 %v7419, %v6648
        %v7421 = vmul.f32 %v7419, %v6649
        %v7422 = vmul.f32 %v7419, %v6650
        %v7423 = vmul.f32 %v7419, %v6651
        %v7424 = vmul.f32 %v7419, %v6652
        %v7430 = vrot.slane %v7420, 1
        %v7431 = vrot.slane %v7421, 1
        %v7432 = vsel %vm709, %v7430, %v7431
        %v7433 = vrot.slane %v7422, 1
        %v7434 = vsel %vm709, %v7431, %v7433
        %v7435 = vrot.slane %v7423, 1
        %v7436 = vsel %vm709, %v7433, %v7435
        %v7437 = vrot.slane %v7424, 1
        %v7438 = vsel %vm709, %v7435, %v7437
        %7439 = vrot.lane.b32.xlu0 %v7432, 127
        %v7440 = vpop.permute.xlu0 %7439
        %7441 = vrot.lane.b32.xlu0 %v7434, 127
        %v7442 = vpop.permute.xlu0 %7441
        %7443 = vrot.lane.b32.xlu0 %v7436, 127
        %v7444 = vpop.permute.xlu0 %7443
        %7445 = vrot.lane.b32.xlu0 %v7438, 127
        %v7446 = vpop.permute.xlu0 %7445
        %v7451 = vadd.f32 %v7203, %v7440
        %v7452 = vadd.f32 %v7204, %v7442
        %v7453 = vadd.f32 %v7205, %v7444
        %v7454 = vadd.f32 %v7206, %v7446
        %s7455 = sld [smem:[#allocation2 + $0x67]]
        %v7456 = vstv %s7455
        %v7457 = vmul.f32 %v7456, %v6648
        %v7458 = vmul.f32 %v7456, %v6649
        %v7459 = vmul.f32 %v7456, %v6650
        %v7460 = vmul.f32 %v7456, %v6651
        %v7461 = vmul.f32 %v7456, %v6652
        %v7467 = vrot.slane %v7457, 1
        %v7468 = vrot.slane %v7458, 1
        %v7469 = vsel %vm709, %v7467, %v7468
        %v7470 = vrot.slane %v7459, 1
        %v7471 = vsel %vm709, %v7468, %v7470
        %v7472 = vrot.slane %v7460, 1
        %v7473 = vsel %vm709, %v7470, %v7472
        %v7474 = vrot.slane %v7461, 1
        %v7475 = vsel %vm709, %v7472, %v7474
        %7476 = vrot.lane.b32.xlu0 %v7469, 127
        %v7477 = vpop.permute.xlu0 %7476
        %7478 = vrot.lane.b32.xlu0 %v7471, 127
        %v7479 = vpop.permute.xlu0 %7478
        %7480 = vrot.lane.b32.xlu0 %v7473, 127
        %v7481 = vpop.permute.xlu0 %7480
        %7482 = vrot.lane.b32.xlu0 %v7475, 127
        %v7483 = vpop.permute.xlu0 %7482
        %v7488 = vadd.f32 %v7232, %v7477
        %v7489 = vadd.f32 %v7233, %v7479
        %v7490 = vadd.f32 %v7234, %v7481
        %v7491 = vadd.f32 %v7235, %v7483
        %s7492 = sld [smem:[#allocation2 + $0x8b]]
        %v7493 = vstv %s7492
        %v7494 = vmul.f32 %v7493, %v6648
        %v7495 = vmul.f32 %v7493, %v6649
        %v7496 = vmul.f32 %v7493, %v6650
        %v7497 = vmul.f32 %v7493, %v6651
        %v7498 = vmul.f32 %v7493, %v6652
        %v7504 = vrot.slane %v7494, 1
        %v7505 = vrot.slane %v7495, 1
        %v7506 = vsel %vm709, %v7504, %v7505
        %v7507 = vrot.slane %v7496, 1
        %v7508 = vsel %vm709, %v7505, %v7507
        %v7509 = vrot.slane %v7497, 1
        %v7510 = vsel %vm709, %v7507, %v7509
        %v7511 = vrot.slane %v7498, 1
        %v7512 = vsel %vm709, %v7509, %v7511
        %7513 = vrot.lane.b32.xlu0 %v7506, 127
        %v7514 = vpop.permute.xlu0 %7513
        %7515 = vrot.lane.b32.xlu0 %v7508, 127
        %v7516 = vpop.permute.xlu0 %7515
        %7517 = vrot.lane.b32.xlu0 %v7510, 127
        %v7518 = vpop.permute.xlu0 %7517
        %7519 = vrot.lane.b32.xlu0 %v7512, 127
        %v7520 = vpop.permute.xlu0 %7519
        %v7525 = vadd.f32 %v7261, %v7514
        %v7526 = vadd.f32 %v7262, %v7516
        %v7527 = vadd.f32 %v7263, %v7518
        %v7528 = vadd.f32 %v7264, %v7520
        %s7529 = sld [smem:[#allocation2 + $0xaf]]
        %v7530 = vstv %s7529
        %v7531 = vmul.f32 %v7530, %v6648
        %v7532 = vmul.f32 %v7530, %v6649
        %v7533 = vmul.f32 %v7530, %v6650
        %v7534 = vmul.f32 %v7530, %v6651
        %v7535 = vmul.f32 %v7530, %v6652
        %v7541 = vrot.slane %v7531, 1
        %v7542 = vrot.slane %v7532, 1
        %v7543 = vsel %vm709, %v7541, %v7542
        %v7544 = vrot.slane %v7533, 1
        %v7545 = vsel %vm709, %v7542, %v7544
        %v7546 = vrot.slane %v7534, 1
        %v7547 = vsel %vm709, %v7544, %v7546
        %v7548 = vrot.slane %v7535, 1
        %v7549 = vsel %vm709, %v7546, %v7548
        %7550 = vrot.lane.b32.xlu0 %v7543, 127
        %v7551 = vpop.permute.xlu0 %7550
        %7552 = vrot.lane.b32.xlu0 %v7545, 127
        %v7553 = vpop.permute.xlu0 %7552
        %7554 = vrot.lane.b32.xlu0 %v7547, 127
        %v7555 = vpop.permute.xlu0 %7554
        %7556 = vrot.lane.b32.xlu0 %v7549, 127
        %v7557 = vpop.permute.xlu0 %7556
        %v7562 = vadd.f32 %v7290, %v7551
        %v7563 = vadd.f32 %v7291, %v7553
        %v7564 = vadd.f32 %v7292, %v7555
        %v7565 = vadd.f32 %v7293, %v7557
        %s7566 = sld [smem:[#allocation2 + $0xd3]]
        %v7567 = vstv %s7566
        %v7568 = vmul.f32 %v7567, %v6648
        %v7569 = vmul.f32 %v7567, %v6649
        %v7570 = vmul.f32 %v7567, %v6650
        %v7571 = vmul.f32 %v7567, %v6651
        %v7572 = vmul.f32 %v7567, %v6652
        %v7578 = vrot.slane %v7568, 1
        %v7579 = vrot.slane %v7569, 1
        %v7580 = vsel %vm709, %v7578, %v7579
        %v7581 = vrot.slane %v7570, 1
        %v7582 = vsel %vm709, %v7579, %v7581
        %v7583 = vrot.slane %v7571, 1
        %v7584 = vsel %vm709, %v7581, %v7583
        %v7585 = vrot.slane %v7572, 1
        %v7586 = vsel %vm709, %v7583, %v7585
        %7587 = vrot.lane.b32.xlu0 %v7580, 127
        %v7588 = vpop.permute.xlu0 %7587
        %7589 = vrot.lane.b32.xlu0 %v7582, 127
        %v7590 = vpop.permute.xlu0 %7589
        %7591 = vrot.lane.b32.xlu0 %v7584, 127
        %v7592 = vpop.permute.xlu0 %7591
        %7593 = vrot.lane.b32.xlu0 %v7586, 127
        %v7594 = vpop.permute.xlu0 %7593
        %v7599 = vadd.f32 %v7319, %v7588
        %v7600 = vadd.f32 %v7320, %v7590
        %v7601 = vadd.f32 %v7321, %v7592
        %v7602 = vadd.f32 %v7322, %v7594
        %s7603 = sld [smem:[#allocation2 + $0xf7]]
        %v7604 = vstv %s7603
        %v7605 = vmul.f32 %v7604, %v6648
        %v7606 = vmul.f32 %v7604, %v6649
        %v7607 = vmul.f32 %v7604, %v6650
        %v7608 = vmul.f32 %v7604, %v6651
        %v7609 = vmul.f32 %v7604, %v6652
        %v7615 = vrot.slane %v7605, 1
        %v7616 = vrot.slane %v7606, 1
        %v7617 = vsel %vm709, %v7615, %v7616
        %v7618 = vrot.slane %v7607, 1
        %v7619 = vsel %vm709, %v7616, %v7618
        %v7620 = vrot.slane %v7608, 1
        %v7621 = vsel %vm709, %v7618, %v7620
        %v7622 = vrot.slane %v7609, 1
        %v7623 = vsel %vm709, %v7620, %v7622
        %7624 = vrot.lane.b32.xlu0 %v7617, 127
        %v7625 = vpop.permute.xlu0 %7624
        %7626 = vrot.lane.b32.xlu0 %v7619, 127
        %v7627 = vpop.permute.xlu0 %7626
        %7628 = vrot.lane.b32.xlu0 %v7621, 127
        %v7629 = vpop.permute.xlu0 %7628
        %7630 = vrot.lane.b32.xlu0 %v7623, 127
        %v7631 = vpop.permute.xlu0 %7630
        %v7636 = vadd.f32 %v7348, %v7625
        %v7637 = vadd.f32 %v7349, %v7627
        %v7638 = vadd.f32 %v7350, %v7629
        %v7639 = vadd.f32 %v7351, %v7631
        %s7640 = sld [smem:[#allocation2 + $0x11b]]
        %v7641 = vstv %s7640
        %v7642 = vmul.f32 %v7641, %v6648
        %v7643 = vmul.f32 %v7641, %v6649
        %v7644 = vmul.f32 %v7641, %v6650
        %v7645 = vmul.f32 %v7641, %v6651
        %v7646 = vmul.f32 %v7641, %v6652
        %v7652 = vrot.slane %v7642, 1
        %v7653 = vrot.slane %v7643, 1
        %v7654 = vsel %vm709, %v7652, %v7653
        %v7655 = vrot.slane %v7644, 1
        %v7656 = vsel %vm709, %v7653, %v7655
        %v7657 = vrot.slane %v7645, 1
        %v7658 = vsel %vm709, %v7655, %v7657
        %v7659 = vrot.slane %v7646, 1
        %v7660 = vsel %vm709, %v7657, %v7659
        %7661 = vrot.lane.b32.xlu0 %v7654, 127
        %v7662 = vpop.permute.xlu0 %7661
        %7663 = vrot.lane.b32.xlu0 %v7656, 127
        %v7664 = vpop.permute.xlu0 %7663
        %7665 = vrot.lane.b32.xlu0 %v7658, 127
        %v7666 = vpop.permute.xlu0 %7665
        %7667 = vrot.lane.b32.xlu0 %v7660, 127
        %v7668 = vpop.permute.xlu0 %7667
        %v7673 = vadd.f32 %v7377, %v7662
        %v7674 = vadd.f32 %v7378, %v7664
        %v7675 = vadd.f32 %v7379, %v7666
        %v7676 = vadd.f32 %v7380, %v7668
        %s7677 = sld [smem:[#allocation2 + $0x20]]
        %v7678 = vstv %s7677
        %v7679 = vmul.f32 %v7678, %v6648
        %v7680 = vmul.f32 %v7678, %v6649
        %v7681 = vmul.f32 %v7678, %v6650
        %v7682 = vmul.f32 %v7678, %v6651
        %v7683 = vmul.f32 %v7678, %v6652
        %v7689 = vrot.slane %v7679, 1
        %v7690 = vrot.slane %v7680, 1
        %v7691 = vsel %vm709, %v7689, %v7690
        %v7692 = vrot.slane %v7681, 1
        %v7693 = vsel %vm709, %v7690, %v7692
        %v7694 = vrot.slane %v7682, 1
        %v7695 = vsel %vm709, %v7692, %v7694
        %v7696 = vrot.slane %v7683, 1
        %v7697 = vsel %vm709, %v7694, %v7696
        %7698 = vrot.lane.b32.xlu0 %v7691, 126
        %v7699 = vpop.permute.xlu0 %7698
        %7700 = vrot.lane.b32.xlu0 %v7693, 126
        %v7701 = vpop.permute.xlu0 %7700
        %7702 = vrot.lane.b32.xlu0 %v7695, 126
        %v7703 = vpop.permute.xlu0 %7702
        %7704 = vrot.lane.b32.xlu0 %v7697, 126
        %v7705 = vpop.permute.xlu0 %7704
        %v7710 = vadd.f32 %v7414, %v7699
        %v7711 = vadd.f32 %v7415, %v7701
        %v7712 = vadd.f32 %v7416, %v7703
        %v7713 = vadd.f32 %v7417, %v7705
        %s7714 = sld [smem:[#allocation2 + $0x44]]
        %v7715 = vstv %s7714
        %v7716 = vmul.f32 %v7715, %v6648
        %v7717 = vmul.f32 %v7715, %v6649
        %v7718 = vmul.f32 %v7715, %v6650
        %v7719 = vmul.f32 %v7715, %v6651
        %v7720 = vmul.f32 %v7715, %v6652
        %v7726 = vrot.slane %v7716, 1
        %v7727 = vrot.slane %v7717, 1
        %v7728 = vsel %vm709, %v7726, %v7727
        %v7729 = vrot.slane %v7718, 1
        %v7730 = vsel %vm709, %v7727, %v7729
        %v7731 = vrot.slane %v7719, 1
        %v7732 = vsel %vm709, %v7729, %v7731
        %v7733 = vrot.slane %v7720, 1
        %v7734 = vsel %vm709, %v7731, %v7733
        %7735 = vrot.lane.b32.xlu0 %v7728, 126
        %v7736 = vpop.permute.xlu0 %7735
        %7737 = vrot.lane.b32.xlu0 %v7730, 126
        %v7738 = vpop.permute.xlu0 %7737
        %7739 = vrot.lane.b32.xlu0 %v7732, 126
        %v7740 = vpop.permute.xlu0 %7739
        %7741 = vrot.lane.b32.xlu0 %v7734, 126
        %v7742 = vpop.permute.xlu0 %7741
        %v7747 = vadd.f32 %v7451, %v7736
        %v7748 = vadd.f32 %v7452, %v7738
        %v7749 = vadd.f32 %v7453, %v7740
        %v7750 = vadd.f32 %v7454, %v7742
        %s7751 = sld [smem:[#allocation2 + $0x68]]
        %v7752 = vstv %s7751
        %v7753 = vmul.f32 %v7752, %v6648
        %v7754 = vmul.f32 %v7752, %v6649
        %v7755 = vmul.f32 %v7752, %v6650
        %v7756 = vmul.f32 %v7752, %v6651
        %v7757 = vmul.f32 %v7752, %v6652
        %v7763 = vrot.slane %v7753, 1
        %v7764 = vrot.slane %v7754, 1
        %v7765 = vsel %vm709, %v7763, %v7764
        %v7766 = vrot.slane %v7755, 1
        %v7767 = vsel %vm709, %v7764, %v7766
        %v7768 = vrot.slane %v7756, 1
        %v7769 = vsel %vm709, %v7766, %v7768
        %v7770 = vrot.slane %v7757, 1
        %v7771 = vsel %vm709, %v7768, %v7770
        %7772 = vrot.lane.b32.xlu0 %v7765, 126
        %v7773 = vpop.permute.xlu0 %7772
        %7774 = vrot.lane.b32.xlu0 %v7767, 126
        %v7775 = vpop.permute.xlu0 %7774
        %7776 = vrot.lane.b32.xlu0 %v7769, 126
        %v7777 = vpop.permute.xlu0 %7776
        %7778 = vrot.lane.b32.xlu0 %v7771, 126
        %v7779 = vpop.permute.xlu0 %7778
        %v7784 = vadd.f32 %v7488, %v7773
        %v7785 = vadd.f32 %v7489, %v7775
        %v7786 = vadd.f32 %v7490, %v7777
        %v7787 = vadd.f32 %v7491, %v7779
        %s7788 = sld [smem:[#allocation2 + $0x8c]]
        %v7789 = vstv %s7788
        %v7790 = vmul.f32 %v7789, %v6648
        %v7791 = vmul.f32 %v7789, %v6649
        %v7792 = vmul.f32 %v7789, %v6650
        %v7793 = vmul.f32 %v7789, %v6651
        %v7794 = vmul.f32 %v7789, %v6652
        %v7800 = vrot.slane %v7790, 1
        %v7801 = vrot.slane %v7791, 1
        %v7802 = vsel %vm709, %v7800, %v7801
        %v7803 = vrot.slane %v7792, 1
        %v7804 = vsel %vm709, %v7801, %v7803
        %v7805 = vrot.slane %v7793, 1
        %v7806 = vsel %vm709, %v7803, %v7805
        %v7807 = vrot.slane %v7794, 1
        %v7808 = vsel %vm709, %v7805, %v7807
        %7809 = vrot.lane.b32.xlu0 %v7802, 126
        %v7810 = vpop.permute.xlu0 %7809
        %7811 = vrot.lane.b32.xlu0 %v7804, 126
        %v7812 = vpop.permute.xlu0 %7811
        %7813 = vrot.lane.b32.xlu0 %v7806, 126
        %v7814 = vpop.permute.xlu0 %7813
        %7815 = vrot.lane.b32.xlu0 %v7808, 126
        %v7816 = vpop.permute.xlu0 %7815
        %v7821 = vadd.f32 %v7525, %v7810
        %v7822 = vadd.f32 %v7526, %v7812
        %v7823 = vadd.f32 %v7527, %v7814
        %v7824 = vadd.f32 %v7528, %v7816
        %s7825 = sld [smem:[#allocation2 + $0xb0]]
        %v7826 = vstv %s7825
        %v7827 = vmul.f32 %v7826, %v6648
        %v7828 = vmul.f32 %v7826, %v6649
        %v7829 = vmul.f32 %v7826, %v6650
        %v7830 = vmul.f32 %v7826, %v6651
        %v7831 = vmul.f32 %v7826, %v6652
        %v7837 = vrot.slane %v7827, 1
        %v7838 = vrot.slane %v7828, 1
        %v7839 = vsel %vm709, %v7837, %v7838
        %v7840 = vrot.slane %v7829, 1
        %v7841 = vsel %vm709, %v7838, %v7840
        %v7842 = vrot.slane %v7830, 1
        %v7843 = vsel %vm709, %v7840, %v7842
        %v7844 = vrot.slane %v7831, 1
        %v7845 = vsel %vm709, %v7842, %v7844
        %7846 = vrot.lane.b32.xlu0 %v7839, 126
        %v7847 = vpop.permute.xlu0 %7846
        %7848 = vrot.lane.b32.xlu0 %v7841, 126
        %v7849 = vpop.permute.xlu0 %7848
        %7850 = vrot.lane.b32.xlu0 %v7843, 126
        %v7851 = vpop.permute.xlu0 %7850
        %7852 = vrot.lane.b32.xlu0 %v7845, 126
        %v7853 = vpop.permute.xlu0 %7852
        %v7858 = vadd.f32 %v7562, %v7847
        %v7859 = vadd.f32 %v7563, %v7849
        %v7860 = vadd.f32 %v7564, %v7851
        %v7861 = vadd.f32 %v7565, %v7853
        %s7862 = sld [smem:[#allocation2 + $0xd4]]
        %v7863 = vstv %s7862
        %v7864 = vmul.f32 %v7863, %v6648
        %v7865 = vmul.f32 %v7863, %v6649
        %v7866 = vmul.f32 %v7863, %v6650
        %v7867 = vmul.f32 %v7863, %v6651
        %v7868 = vmul.f32 %v7863, %v6652
        %v7874 = vrot.slane %v7864, 1
        %v7875 = vrot.slane %v7865, 1
        %v7876 = vsel %vm709, %v7874, %v7875
        %v7877 = vrot.slane %v7866, 1
        %v7878 = vsel %vm709, %v7875, %v7877
        %v7879 = vrot.slane %v7867, 1
        %v7880 = vsel %vm709, %v7877, %v7879
        %v7881 = vrot.slane %v7868, 1
        %v7882 = vsel %vm709, %v7879, %v7881
        %7883 = vrot.lane.b32.xlu0 %v7876, 126
        %v7884 = vpop.permute.xlu0 %7883
        %7885 = vrot.lane.b32.xlu0 %v7878, 126
        %v7886 = vpop.permute.xlu0 %7885
        %7887 = vrot.lane.b32.xlu0 %v7880, 126
        %v7888 = vpop.permute.xlu0 %7887
        %7889 = vrot.lane.b32.xlu0 %v7882, 126
        %v7890 = vpop.permute.xlu0 %7889
        %v7895 = vadd.f32 %v7599, %v7884
        %v7896 = vadd.f32 %v7600, %v7886
        %v7897 = vadd.f32 %v7601, %v7888
        %v7898 = vadd.f32 %v7602, %v7890
        %s7899 = sld [smem:[#allocation2 + $0xf8]]
        %v7900 = vstv %s7899
        %v7901 = vmul.f32 %v7900, %v6648
        %v7902 = vmul.f32 %v7900, %v6649
        %v7903 = vmul.f32 %v7900, %v6650
        %v7904 = vmul.f32 %v7900, %v6651
        %v7905 = vmul.f32 %v7900, %v6652
        %v7911 = vrot.slane %v7901, 1
        %v7912 = vrot.slane %v7902, 1
        %v7913 = vsel %vm709, %v7911, %v7912
        %v7914 = vrot.slane %v7903, 1
        %v7915 = vsel %vm709, %v7912, %v7914
        %v7916 = vrot.slane %v7904, 1
        %v7917 = vsel %vm709, %v7914, %v7916
        %v7918 = vrot.slane %v7905, 1
        %v7919 = vsel %vm709, %v7916, %v7918
        %7920 = vrot.lane.b32.xlu0 %v7913, 126
        %v7921 = vpop.permute.xlu0 %7920
        %7922 = vrot.lane.b32.xlu0 %v7915, 126
        %v7923 = vpop.permute.xlu0 %7922
        %7924 = vrot.lane.b32.xlu0 %v7917, 126
        %v7925 = vpop.permute.xlu0 %7924
        %7926 = vrot.lane.b32.xlu0 %v7919, 126
        %v7927 = vpop.permute.xlu0 %7926
        %v7932 = vadd.f32 %v7636, %v7921
        %v7933 = vadd.f32 %v7637, %v7923
        %v7934 = vadd.f32 %v7638, %v7925
        %v7935 = vadd.f32 %v7639, %v7927
        %s7936 = sld [smem:[#allocation2 + $0x11c]]
        %v7937 = vstv %s7936
        %v7938 = vmul.f32 %v7937, %v6648
        %v7939 = vmul.f32 %v7937, %v6649
        %v7940 = vmul.f32 %v7937, %v6650
        %v7941 = vmul.f32 %v7937, %v6651
        %v7942 = vmul.f32 %v7937, %v6652
        %v7948 = vrot.slane %v7938, 1
        %v7949 = vrot.slane %v7939, 1
        %v7950 = vsel %vm709, %v7948, %v7949
        %v7951 = vrot.slane %v7940, 1
        %v7952 = vsel %vm709, %v7949, %v7951
        %v7953 = vrot.slane %v7941, 1
        %v7954 = vsel %vm709, %v7951, %v7953
        %v7955 = vrot.slane %v7942, 1
        %v7956 = vsel %vm709, %v7953, %v7955
        %7957 = vrot.lane.b32.xlu0 %v7950, 126
        %v7958 = vpop.permute.xlu0 %7957
        %7959 = vrot.lane.b32.xlu0 %v7952, 126
        %v7960 = vpop.permute.xlu0 %7959
        %7961 = vrot.lane.b32.xlu0 %v7954, 126
        %v7962 = vpop.permute.xlu0 %7961
        %7963 = vrot.lane.b32.xlu0 %v7956, 126
        %v7964 = vpop.permute.xlu0 %7963
        %v7969 = vadd.f32 %v7673, %v7958
        %v7970 = vadd.f32 %v7674, %v7960
        %v7971 = vadd.f32 %v7675, %v7962
        %v7972 = vadd.f32 %v7676, %v7964
        %s7973 = sld [smem:[#allocation2 + $0x21]]
        %v7974 = vstv %s7973
        %v7975 = vmul.f32 %v7974, %v6648
        %v7976 = vmul.f32 %v7974, %v6649
        %v7977 = vmul.f32 %v7974, %v6650
        %v7978 = vmul.f32 %v7974, %v6651
        %v7979 = vmul.f32 %v7974, %v6652
        %v7985 = vrot.slane %v7975, 2
        %v7986 = vrot.slane %v7976, 2
        %v7987 = vsel %vm1534, %v7985, %v7986
        %v7988 = vrot.slane %v7977, 2
        %v7989 = vsel %vm1534, %v7986, %v7988
        %v7990 = vrot.slane %v7978, 2
        %v7991 = vsel %vm1534, %v7988, %v7990
        %v7992 = vrot.slane %v7979, 2
        %v7993 = vsel %vm1534, %v7990, %v7992
        %v7998 = vadd.f32 %v7710, %v7987
        %v7999 = vadd.f32 %v7711, %v7989
        %v8000 = vadd.f32 %v7712, %v7991
        %v8001 = vadd.f32 %v7713, %v7993
        %s8002 = sld [smem:[#allocation2 + $0x45]]
        %v8003 = vstv %s8002
        %v8004 = vmul.f32 %v8003, %v6648
        %v8005 = vmul.f32 %v8003, %v6649
        %v8006 = vmul.f32 %v8003, %v6650
        %v8007 = vmul.f32 %v8003, %v6651
        %v8008 = vmul.f32 %v8003, %v6652
        %v8014 = vrot.slane %v8004, 2
        %v8015 = vrot.slane %v8005, 2
        %v8016 = vsel %vm1534, %v8014, %v8015
        %v8017 = vrot.slane %v8006, 2
        %v8018 = vsel %vm1534, %v8015, %v8017
        %v8019 = vrot.slane %v8007, 2
        %v8020 = vsel %vm1534, %v8017, %v8019
        %v8021 = vrot.slane %v8008, 2
        %v8022 = vsel %vm1534, %v8019, %v8021
        %v8027 = vadd.f32 %v7747, %v8016
        %v8028 = vadd.f32 %v7748, %v8018
        %v8029 = vadd.f32 %v7749, %v8020
        %v8030 = vadd.f32 %v7750, %v8022
        %s8031 = sld [smem:[#allocation2 + $0x69]]
        %v8032 = vstv %s8031
        %v8033 = vmul.f32 %v8032, %v6648
        %v8034 = vmul.f32 %v8032, %v6649
        %v8035 = vmul.f32 %v8032, %v6650
        %v8036 = vmul.f32 %v8032, %v6651
        %v8037 = vmul.f32 %v8032, %v6652
        %v8043 = vrot.slane %v8033, 2
        %v8044 = vrot.slane %v8034, 2
        %v8045 = vsel %vm1534, %v8043, %v8044
        %v8046 = vrot.slane %v8035, 2
        %v8047 = vsel %vm1534, %v8044, %v8046
        %v8048 = vrot.slane %v8036, 2
        %v8049 = vsel %vm1534, %v8046, %v8048
        %v8050 = vrot.slane %v8037, 2
        %v8051 = vsel %vm1534, %v8048, %v8050
        %v8056 = vadd.f32 %v7784, %v8045
        %v8057 = vadd.f32 %v7785, %v8047
        %v8058 = vadd.f32 %v7786, %v8049
        %v8059 = vadd.f32 %v7787, %v8051
        %s8060 = sld [smem:[#allocation2 + $0x8d]]
        %v8061 = vstv %s8060
        %v8062 = vmul.f32 %v8061, %v6648
        %v8063 = vmul.f32 %v8061, %v6649
        %v8064 = vmul.f32 %v8061, %v6650
        %v8065 = vmul.f32 %v8061, %v6651
        %v8066 = vmul.f32 %v8061, %v6652
        %v8072 = vrot.slane %v8062, 2
        %v8073 = vrot.slane %v8063, 2
        %v8074 = vsel %vm1534, %v8072, %v8073
        %v8075 = vrot.slane %v8064, 2
        %v8076 = vsel %vm1534, %v8073, %v8075
        %v8077 = vrot.slane %v8065, 2
        %v8078 = vsel %vm1534, %v8075, %v8077
        %v8079 = vrot.slane %v8066, 2
        %v8080 = vsel %vm1534, %v8077, %v8079
        %v8085 = vadd.f32 %v7821, %v8074
        %v8086 = vadd.f32 %v7822, %v8076
        %v8087 = vadd.f32 %v7823, %v8078
        %v8088 = vadd.f32 %v7824, %v8080
        %s8089 = sld [smem:[#allocation2 + $0xb1]]
        %v8090 = vstv %s8089
        %v8091 = vmul.f32 %v8090, %v6648
        %v8092 = vmul.f32 %v8090, %v6649
        %v8093 = vmul.f32 %v8090, %v6650
        %v8094 = vmul.f32 %v8090, %v6651
        %v8095 = vmul.f32 %v8090, %v6652
        %v8101 = vrot.slane %v8091, 2
        %v8102 = vrot.slane %v8092, 2
        %v8103 = vsel %vm1534, %v8101, %v8102
        %v8104 = vrot.slane %v8093, 2
        %v8105 = vsel %vm1534, %v8102, %v8104
        %v8106 = vrot.slane %v8094, 2
        %v8107 = vsel %vm1534, %v8104, %v8106
        %v8108 = vrot.slane %v8095, 2
        %v8109 = vsel %vm1534, %v8106, %v8108
        %v8114 = vadd.f32 %v7858, %v8103
        %v8115 = vadd.f32 %v7859, %v8105
        %v8116 = vadd.f32 %v7860, %v8107
        %v8117 = vadd.f32 %v7861, %v8109
        %s8118 = sld [smem:[#allocation2 + $0xd5]]
        %v8119 = vstv %s8118
        %v8120 = vmul.f32 %v8119, %v6648
        %v8121 = vmul.f32 %v8119, %v6649
        %v8122 = vmul.f32 %v8119, %v6650
        %v8123 = vmul.f32 %v8119, %v6651
        %v8124 = vmul.f32 %v8119, %v6652
        %v8130 = vrot.slane %v8120, 2
        %v8131 = vrot.slane %v8121, 2
        %v8132 = vsel %vm1534, %v8130, %v8131
        %v8133 = vrot.slane %v8122, 2
        %v8134 = vsel %vm1534, %v8131, %v8133
        %v8135 = vrot.slane %v8123, 2
        %v8136 = vsel %vm1534, %v8133, %v8135
        %v8137 = vrot.slane %v8124, 2
        %v8138 = vsel %vm1534, %v8135, %v8137
        %v8143 = vadd.f32 %v7895, %v8132
        %v8144 = vadd.f32 %v7896, %v8134
        %v8145 = vadd.f32 %v7897, %v8136
        %v8146 = vadd.f32 %v7898, %v8138
        %s8147 = sld [smem:[#allocation2 + $0xf9]]
        %v8148 = vstv %s8147
        %v8149 = vmul.f32 %v8148, %v6648
        %v8150 = vmul.f32 %v8148, %v6649
        %v8151 = vmul.f32 %v8148, %v6650
        %v8152 = vmul.f32 %v8148, %v6651
        %v8153 = vmul.f32 %v8148, %v6652
        %v8159 = vrot.slane %v8149, 2
        %v8160 = vrot.slane %v8150, 2
        %v8161 = vsel %vm1534, %v8159, %v8160
        %v8162 = vrot.slane %v8151, 2
        %v8163 = vsel %vm1534, %v8160, %v8162
        %v8164 = vrot.slane %v8152, 2
        %v8165 = vsel %vm1534, %v8162, %v8164
        %v8166 = vrot.slane %v8153, 2
        %v8167 = vsel %vm1534, %v8164, %v8166
        %v8172 = vadd.f32 %v7932, %v8161
        %v8173 = vadd.f32 %v7933, %v8163
        %v8174 = vadd.f32 %v7934, %v8165
        %v8175 = vadd.f32 %v7935, %v8167
        %s8176 = sld [smem:[#allocation2 + $0x11d]]
        %v8177 = vstv %s8176
        %v8178 = vmul.f32 %v8177, %v6648
        %v8179 = vmul.f32 %v8177, %v6649
        %v8180 = vmul.f32 %v8177, %v6650
        %v8181 = vmul.f32 %v8177, %v6651
        %v8182 = vmul.f32 %v8177, %v6652
        %v8188 = vrot.slane %v8178, 2
        %v8189 = vrot.slane %v8179, 2
        %v8190 = vsel %vm1534, %v8188, %v8189
        %v8191 = vrot.slane %v8180, 2
        %v8192 = vsel %vm1534, %v8189, %v8191
        %v8193 = vrot.slane %v8181, 2
        %v8194 = vsel %vm1534, %v8191, %v8193
        %v8195 = vrot.slane %v8182, 2
        %v8196 = vsel %vm1534, %v8193, %v8195
        %v8201 = vadd.f32 %v7969, %v8190
        %v8202 = vadd.f32 %v7970, %v8192
        %v8203 = vadd.f32 %v7971, %v8194
        %v8204 = vadd.f32 %v7972, %v8196
        %s8205 = sld [smem:[#allocation2 + $0x22]]
        %v8206 = vstv %s8205
        %v8207 = vmul.f32 %v8206, %v6648
        %v8208 = vmul.f32 %v8206, %v6649
        %v8209 = vmul.f32 %v8206, %v6650
        %v8210 = vmul.f32 %v8206, %v6651
        %v8211 = vmul.f32 %v8206, %v6652
        %v8217 = vrot.slane %v8207, 2
        %v8218 = vrot.slane %v8208, 2
        %v8219 = vsel %vm1534, %v8217, %v8218
        %v8220 = vrot.slane %v8209, 2
        %v8221 = vsel %vm1534, %v8218, %v8220
        %v8222 = vrot.slane %v8210, 2
        %v8223 = vsel %vm1534, %v8220, %v8222
        %v8224 = vrot.slane %v8211, 2
        %v8225 = vsel %vm1534, %v8222, %v8224
        %8226 = vrot.lane.b32.xlu0 %v8219, 127
        %v8227 = vpop.permute.xlu0 %8226
        %8228 = vrot.lane.b32.xlu0 %v8221, 127
        %v8229 = vpop.permute.xlu0 %8228
        %8230 = vrot.lane.b32.xlu0 %v8223, 127
        %v8231 = vpop.permute.xlu0 %8230
        %8232 = vrot.lane.b32.xlu0 %v8225, 127
        %v8233 = vpop.permute.xlu0 %8232
        %v8238 = vadd.f32 %v7998, %v8227
        %v8239 = vadd.f32 %v7999, %v8229
        %v8240 = vadd.f32 %v8000, %v8231
        %v8241 = vadd.f32 %v8001, %v8233
        %s8242 = sld [smem:[#allocation2 + $0x46]]
        %v8243 = vstv %s8242
        %v8244 = vmul.f32 %v8243, %v6648
        %v8245 = vmul.f32 %v8243, %v6649
        %v8246 = vmul.f32 %v8243, %v6650
        %v8247 = vmul.f32 %v8243, %v6651
        %v8248 = vmul.f32 %v8243, %v6652
        %v8254 = vrot.slane %v8244, 2
        %v8255 = vrot.slane %v8245, 2
        %v8256 = vsel %vm1534, %v8254, %v8255
        %v8257 = vrot.slane %v8246, 2
        %v8258 = vsel %vm1534, %v8255, %v8257
        %v8259 = vrot.slane %v8247, 2
        %v8260 = vsel %vm1534, %v8257, %v8259
        %v8261 = vrot.slane %v8248, 2
        %v8262 = vsel %vm1534, %v8259, %v8261
        %8263 = vrot.lane.b32.xlu0 %v8256, 127
        %v8264 = vpop.permute.xlu0 %8263
        %8265 = vrot.lane.b32.xlu0 %v8258, 127
        %v8266 = vpop.permute.xlu0 %8265
        %8267 = vrot.lane.b32.xlu0 %v8260, 127
        %v8268 = vpop.permute.xlu0 %8267
        %8269 = vrot.lane.b32.xlu0 %v8262, 127
        %v8270 = vpop.permute.xlu0 %8269
        %v8275 = vadd.f32 %v8027, %v8264
        %v8276 = vadd.f32 %v8028, %v8266
        %v8277 = vadd.f32 %v8029, %v8268
        %v8278 = vadd.f32 %v8030, %v8270
        %s8279 = sld [smem:[#allocation2 + $0x6a]]
        %v8280 = vstv %s8279
        %v8281 = vmul.f32 %v8280, %v6648
        %v8282 = vmul.f32 %v8280, %v6649
        %v8283 = vmul.f32 %v8280, %v6650
        %v8284 = vmul.f32 %v8280, %v6651
        %v8285 = vmul.f32 %v8280, %v6652
        %v8291 = vrot.slane %v8281, 2
        %v8292 = vrot.slane %v8282, 2
        %v8293 = vsel %vm1534, %v8291, %v8292
        %v8294 = vrot.slane %v8283, 2
        %v8295 = vsel %vm1534, %v8292, %v8294
        %v8296 = vrot.slane %v8284, 2
        %v8297 = vsel %vm1534, %v8294, %v8296
        %v8298 = vrot.slane %v8285, 2
        %v8299 = vsel %vm1534, %v8296, %v8298
        %8300 = vrot.lane.b32.xlu0 %v8293, 127
        %v8301 = vpop.permute.xlu0 %8300
        %8302 = vrot.lane.b32.xlu0 %v8295, 127
        %v8303 = vpop.permute.xlu0 %8302
        %8304 = vrot.lane.b32.xlu0 %v8297, 127
        %v8305 = vpop.permute.xlu0 %8304
        %8306 = vrot.lane.b32.xlu0 %v8299, 127
        %v8307 = vpop.permute.xlu0 %8306
        %v8312 = vadd.f32 %v8056, %v8301
        %v8313 = vadd.f32 %v8057, %v8303
        %v8314 = vadd.f32 %v8058, %v8305
        %v8315 = vadd.f32 %v8059, %v8307
        %s8316 = sld [smem:[#allocation2 + $0x8e]]
        %v8317 = vstv %s8316
        %v8318 = vmul.f32 %v8317, %v6648
        %v8319 = vmul.f32 %v8317, %v6649
        %v8320 = vmul.f32 %v8317, %v6650
        %v8321 = vmul.f32 %v8317, %v6651
        %v8322 = vmul.f32 %v8317, %v6652
        %v8328 = vrot.slane %v8318, 2
        %v8329 = vrot.slane %v8319, 2
        %v8330 = vsel %vm1534, %v8328, %v8329
        %v8331 = vrot.slane %v8320, 2
        %v8332 = vsel %vm1534, %v8329, %v8331
        %v8333 = vrot.slane %v8321, 2
        %v8334 = vsel %vm1534, %v8331, %v8333
        %v8335 = vrot.slane %v8322, 2
        %v8336 = vsel %vm1534, %v8333, %v8335
        %8337 = vrot.lane.b32.xlu0 %v8330, 127
        %v8338 = vpop.permute.xlu0 %8337
        %8339 = vrot.lane.b32.xlu0 %v8332, 127
        %v8340 = vpop.permute.xlu0 %8339
        %8341 = vrot.lane.b32.xlu0 %v8334, 127
        %v8342 = vpop.permute.xlu0 %8341
        %8343 = vrot.lane.b32.xlu0 %v8336, 127
        %v8344 = vpop.permute.xlu0 %8343
        %v8349 = vadd.f32 %v8085, %v8338
        %v8350 = vadd.f32 %v8086, %v8340
        %v8351 = vadd.f32 %v8087, %v8342
        %v8352 = vadd.f32 %v8088, %v8344
        %s8353 = sld [smem:[#allocation2 + $0xb2]]
        %v8354 = vstv %s8353
        %v8355 = vmul.f32 %v8354, %v6648
        %v8356 = vmul.f32 %v8354, %v6649
        %v8357 = vmul.f32 %v8354, %v6650
        %v8358 = vmul.f32 %v8354, %v6651
        %v8359 = vmul.f32 %v8354, %v6652
        %v8365 = vrot.slane %v8355, 2
        %v8366 = vrot.slane %v8356, 2
        %v8367 = vsel %vm1534, %v8365, %v8366
        %v8368 = vrot.slane %v8357, 2
        %v8369 = vsel %vm1534, %v8366, %v8368
        %v8370 = vrot.slane %v8358, 2
        %v8371 = vsel %vm1534, %v8368, %v8370
        %v8372 = vrot.slane %v8359, 2
        %v8373 = vsel %vm1534, %v8370, %v8372
        %8374 = vrot.lane.b32.xlu0 %v8367, 127
        %v8375 = vpop.permute.xlu0 %8374
        %8376 = vrot.lane.b32.xlu0 %v8369, 127
        %v8377 = vpop.permute.xlu0 %8376
        %8378 = vrot.lane.b32.xlu0 %v8371, 127
        %v8379 = vpop.permute.xlu0 %8378
        %8380 = vrot.lane.b32.xlu0 %v8373, 127
        %v8381 = vpop.permute.xlu0 %8380
        %v8386 = vadd.f32 %v8114, %v8375
        %v8387 = vadd.f32 %v8115, %v8377
        %v8388 = vadd.f32 %v8116, %v8379
        %v8389 = vadd.f32 %v8117, %v8381
        %s8390 = sld [smem:[#allocation2 + $0xd6]]
        %v8391 = vstv %s8390
        %v8392 = vmul.f32 %v8391, %v6648
        %v8393 = vmul.f32 %v8391, %v6649
        %v8394 = vmul.f32 %v8391, %v6650
        %v8395 = vmul.f32 %v8391, %v6651
        %v8396 = vmul.f32 %v8391, %v6652
        %v8402 = vrot.slane %v8392, 2
        %v8403 = vrot.slane %v8393, 2
        %v8404 = vsel %vm1534, %v8402, %v8403
        %v8405 = vrot.slane %v8394, 2
        %v8406 = vsel %vm1534, %v8403, %v8405
        %v8407 = vrot.slane %v8395, 2
        %v8408 = vsel %vm1534, %v8405, %v8407
        %v8409 = vrot.slane %v8396, 2
        %v8410 = vsel %vm1534, %v8407, %v8409
        %8411 = vrot.lane.b32.xlu0 %v8404, 127
        %v8412 = vpop.permute.xlu0 %8411
        %8413 = vrot.lane.b32.xlu0 %v8406, 127
        %v8414 = vpop.permute.xlu0 %8413
        %8415 = vrot.lane.b32.xlu0 %v8408, 127
        %v8416 = vpop.permute.xlu0 %8415
        %8417 = vrot.lane.b32.xlu0 %v8410, 127
        %v8418 = vpop.permute.xlu0 %8417
        %v8423 = vadd.f32 %v8143, %v8412
        %v8424 = vadd.f32 %v8144, %v8414
        %v8425 = vadd.f32 %v8145, %v8416
        %v8426 = vadd.f32 %v8146, %v8418
        %s8427 = sld [smem:[#allocation2 + $0xfa]]
        %v8428 = vstv %s8427
        %v8429 = vmul.f32 %v8428, %v6648
        %v8430 = vmul.f32 %v8428, %v6649
        %v8431 = vmul.f32 %v8428, %v6650
        %v8432 = vmul.f32 %v8428, %v6651
        %v8433 = vmul.f32 %v8428, %v6652
        %v8439 = vrot.slane %v8429, 2
        %v8440 = vrot.slane %v8430, 2
        %v8441 = vsel %vm1534, %v8439, %v8440
        %v8442 = vrot.slane %v8431, 2
        %v8443 = vsel %vm1534, %v8440, %v8442
        %v8444 = vrot.slane %v8432, 2
        %v8445 = vsel %vm1534, %v8442, %v8444
        %v8446 = vrot.slane %v8433, 2
        %v8447 = vsel %vm1534, %v8444, %v8446
        %8448 = vrot.lane.b32.xlu0 %v8441, 127
        %v8449 = vpop.permute.xlu0 %8448
        %8450 = vrot.lane.b32.xlu0 %v8443, 127
        %v8451 = vpop.permute.xlu0 %8450
        %8452 = vrot.lane.b32.xlu0 %v8445, 127
        %v8453 = vpop.permute.xlu0 %8452
        %8454 = vrot.lane.b32.xlu0 %v8447, 127
        %v8455 = vpop.permute.xlu0 %8454
        %v8460 = vadd.f32 %v8172, %v8449
        %v8461 = vadd.f32 %v8173, %v8451
        %v8462 = vadd.f32 %v8174, %v8453
        %v8463 = vadd.f32 %v8175, %v8455
        %s8464 = sld [smem:[#allocation2 + $0x11e]]
        %v8465 = vstv %s8464
        %v8466 = vmul.f32 %v8465, %v6648
        %v8467 = vmul.f32 %v8465, %v6649
        %v8468 = vmul.f32 %v8465, %v6650
        %v8469 = vmul.f32 %v8465, %v6651
        %v8470 = vmul.f32 %v8465, %v6652
        %v8476 = vrot.slane %v8466, 2
        %v8477 = vrot.slane %v8467, 2
        %v8478 = vsel %vm1534, %v8476, %v8477
        %v8479 = vrot.slane %v8468, 2
        %v8480 = vsel %vm1534, %v8477, %v8479
        %v8481 = vrot.slane %v8469, 2
        %v8482 = vsel %vm1534, %v8479, %v8481
        %v8483 = vrot.slane %v8470, 2
        %v8484 = vsel %vm1534, %v8481, %v8483
        %8485 = vrot.lane.b32.xlu0 %v8478, 127
        %v8486 = vpop.permute.xlu0 %8485
        %8487 = vrot.lane.b32.xlu0 %v8480, 127
        %v8488 = vpop.permute.xlu0 %8487
        %8489 = vrot.lane.b32.xlu0 %v8482, 127
        %v8490 = vpop.permute.xlu0 %8489
        %8491 = vrot.lane.b32.xlu0 %v8484, 127
        %v8492 = vpop.permute.xlu0 %8491
        %v8497 = vadd.f32 %v8201, %v8486
        %v8498 = vadd.f32 %v8202, %v8488
        %v8499 = vadd.f32 %v8203, %v8490
        %v8500 = vadd.f32 %v8204, %v8492
        %s8501 = sld [smem:[#allocation2 + $0x23]]
        %v8502 = vstv %s8501
        %v8503 = vmul.f32 %v8502, %v6648
        %v8504 = vmul.f32 %v8502, %v6649
        %v8505 = vmul.f32 %v8502, %v6650
        %v8506 = vmul.f32 %v8502, %v6651
        %v8507 = vmul.f32 %v8502, %v6652
        %v8513 = vrot.slane %v8503, 2
        %v8514 = vrot.slane %v8504, 2
        %v8515 = vsel %vm1534, %v8513, %v8514
        %v8516 = vrot.slane %v8505, 2
        %v8517 = vsel %vm1534, %v8514, %v8516
        %v8518 = vrot.slane %v8506, 2
        %v8519 = vsel %vm1534, %v8516, %v8518
        %v8520 = vrot.slane %v8507, 2
        %v8521 = vsel %vm1534, %v8518, %v8520
        %8522 = vrot.lane.b32.xlu0 %v8515, 126
        %v8523 = vpop.permute.xlu0 %8522
        %8524 = vrot.lane.b32.xlu0 %v8517, 126
        %v8525 = vpop.permute.xlu0 %8524
        %8526 = vrot.lane.b32.xlu0 %v8519, 126
        %v8527 = vpop.permute.xlu0 %8526
        %8528 = vrot.lane.b32.xlu0 %v8521, 126
        %v8529 = vpop.permute.xlu0 %8528
        %v8534 = vadd.f32 %v8238, %v8523
        %v8535 = vadd.f32 %v8239, %v8525
        %v8536 = vadd.f32 %v8240, %v8527
        %v8537 = vadd.f32 %v8241, %v8529
        %s8538 = sld [smem:[#allocation2 + $0x47]]
        %v8539 = vstv %s8538
        %v8540 = vmul.f32 %v8539, %v6648
        %v8541 = vmul.f32 %v8539, %v6649
        %v8542 = vmul.f32 %v8539, %v6650
        %v8543 = vmul.f32 %v8539, %v6651
        %v8544 = vmul.f32 %v8539, %v6652
        %v8550 = vrot.slane %v8540, 2
        %v8551 = vrot.slane %v8541, 2
        %v8552 = vsel %vm1534, %v8550, %v8551
        %v8553 = vrot.slane %v8542, 2
        %v8554 = vsel %vm1534, %v8551, %v8553
        %v8555 = vrot.slane %v8543, 2
        %v8556 = vsel %vm1534, %v8553, %v8555
        %v8557 = vrot.slane %v8544, 2
        %v8558 = vsel %vm1534, %v8555, %v8557
        %8559 = vrot.lane.b32.xlu0 %v8552, 126
        %v8560 = vpop.permute.xlu0 %8559
        %8561 = vrot.lane.b32.xlu0 %v8554, 126
        %v8562 = vpop.permute.xlu0 %8561
        %8563 = vrot.lane.b32.xlu0 %v8556, 126
        %v8564 = vpop.permute.xlu0 %8563
        %8565 = vrot.lane.b32.xlu0 %v8558, 126
        %v8566 = vpop.permute.xlu0 %8565
        %v8571 = vadd.f32 %v8275, %v8560
        %v8572 = vadd.f32 %v8276, %v8562
        %v8573 = vadd.f32 %v8277, %v8564
        %v8574 = vadd.f32 %v8278, %v8566
        %s8575 = sld [smem:[#allocation2 + $0x6b]]
        %v8576 = vstv %s8575
        %v8577 = vmul.f32 %v8576, %v6648
        %v8578 = vmul.f32 %v8576, %v6649
        %v8579 = vmul.f32 %v8576, %v6650
        %v8580 = vmul.f32 %v8576, %v6651
        %v8581 = vmul.f32 %v8576, %v6652
        %v8587 = vrot.slane %v8577, 2
        %v8588 = vrot.slane %v8578, 2
        %v8589 = vsel %vm1534, %v8587, %v8588
        %v8590 = vrot.slane %v8579, 2
        %v8591 = vsel %vm1534, %v8588, %v8590
        %v8592 = vrot.slane %v8580, 2
        %v8593 = vsel %vm1534, %v8590, %v8592
        %v8594 = vrot.slane %v8581, 2
        %v8595 = vsel %vm1534, %v8592, %v8594
        %8596 = vrot.lane.b32.xlu0 %v8589, 126
        %v8597 = vpop.permute.xlu0 %8596
        %8598 = vrot.lane.b32.xlu0 %v8591, 126
        %v8599 = vpop.permute.xlu0 %8598
        %8600 = vrot.lane.b32.xlu0 %v8593, 126
        %v8601 = vpop.permute.xlu0 %8600
        %8602 = vrot.lane.b32.xlu0 %v8595, 126
        %v8603 = vpop.permute.xlu0 %8602
        %v8608 = vadd.f32 %v8312, %v8597
        %v8609 = vadd.f32 %v8313, %v8599
        %v8610 = vadd.f32 %v8314, %v8601
        %v8611 = vadd.f32 %v8315, %v8603
        %s8612 = sld [smem:[#allocation2 + $0x8f]]
        %v8613 = vstv %s8612
        %v8614 = vmul.f32 %v8613, %v6648
        %v8615 = vmul.f32 %v8613, %v6649
        %v8616 = vmul.f32 %v8613, %v6650
        %v8617 = vmul.f32 %v8613, %v6651
        %v8618 = vmul.f32 %v8613, %v6652
        %v8624 = vrot.slane %v8614, 2
        %v8625 = vrot.slane %v8615, 2
        %v8626 = vsel %vm1534, %v8624, %v8625
        %v8627 = vrot.slane %v8616, 2
        %v8628 = vsel %vm1534, %v8625, %v8627
        %v8629 = vrot.slane %v8617, 2
        %v8630 = vsel %vm1534, %v8627, %v8629
        %v8631 = vrot.slane %v8618, 2
        %v8632 = vsel %vm1534, %v8629, %v8631
        %8633 = vrot.lane.b32.xlu0 %v8626, 126
        %v8634 = vpop.permute.xlu0 %8633
        %8635 = vrot.lane.b32.xlu0 %v8628, 126
        %v8636 = vpop.permute.xlu0 %8635
        %8637 = vrot.lane.b32.xlu0 %v8630, 126
        %v8638 = vpop.permute.xlu0 %8637
        %8639 = vrot.lane.b32.xlu0 %v8632, 126
        %v8640 = vpop.permute.xlu0 %8639
        %v8645 = vadd.f32 %v8349, %v8634
        %v8646 = vadd.f32 %v8350, %v8636
        %v8647 = vadd.f32 %v8351, %v8638
        %v8648 = vadd.f32 %v8352, %v8640
        %s8649 = sld [smem:[#allocation2 + $0xb3]]
        %v8650 = vstv %s8649
        %v8651 = vmul.f32 %v8650, %v6648
        %v8652 = vmul.f32 %v8650, %v6649
        %v8653 = vmul.f32 %v8650, %v6650
        %v8654 = vmul.f32 %v8650, %v6651
        %v8655 = vmul.f32 %v8650, %v6652
        %v8661 = vrot.slane %v8651, 2
        %v8662 = vrot.slane %v8652, 2
        %v8663 = vsel %vm1534, %v8661, %v8662
        %v8664 = vrot.slane %v8653, 2
        %v8665 = vsel %vm1534, %v8662, %v8664
        %v8666 = vrot.slane %v8654, 2
        %v8667 = vsel %vm1534, %v8664, %v8666
        %v8668 = vrot.slane %v8655, 2
        %v8669 = vsel %vm1534, %v8666, %v8668
        %8670 = vrot.lane.b32.xlu0 %v8663, 126
        %v8671 = vpop.permute.xlu0 %8670
        %8672 = vrot.lane.b32.xlu0 %v8665, 126
        %v8673 = vpop.permute.xlu0 %8672
        %8674 = vrot.lane.b32.xlu0 %v8667, 126
        %v8675 = vpop.permute.xlu0 %8674
        %8676 = vrot.lane.b32.xlu0 %v8669, 126
        %v8677 = vpop.permute.xlu0 %8676
        %v8682 = vadd.f32 %v8386, %v8671
        %v8683 = vadd.f32 %v8387, %v8673
        %v8684 = vadd.f32 %v8388, %v8675
        %v8685 = vadd.f32 %v8389, %v8677
        %s8686 = sld [smem:[#allocation2 + $0xd7]]
        %v8687 = vstv %s8686
        %v8688 = vmul.f32 %v8687, %v6648
        %v8689 = vmul.f32 %v8687, %v6649
        %v8690 = vmul.f32 %v8687, %v6650
        %v8691 = vmul.f32 %v8687, %v6651
        %v8692 = vmul.f32 %v8687, %v6652
        %v8698 = vrot.slane %v8688, 2
        %v8699 = vrot.slane %v8689, 2
        %v8700 = vsel %vm1534, %v8698, %v8699
        %v8701 = vrot.slane %v8690, 2
        %v8702 = vsel %vm1534, %v8699, %v8701
        %v8703 = vrot.slane %v8691, 2
        %v8704 = vsel %vm1534, %v8701, %v8703
        %v8705 = vrot.slane %v8692, 2
        %v8706 = vsel %vm1534, %v8703, %v8705
        %8707 = vrot.lane.b32.xlu0 %v8700, 126
        %v8708 = vpop.permute.xlu0 %8707
        %8709 = vrot.lane.b32.xlu0 %v8702, 126
        %v8710 = vpop.permute.xlu0 %8709
        %8711 = vrot.lane.b32.xlu0 %v8704, 126
        %v8712 = vpop.permute.xlu0 %8711
        %8713 = vrot.lane.b32.xlu0 %v8706, 126
        %v8714 = vpop.permute.xlu0 %8713
        %v8719 = vadd.f32 %v8423, %v8708
        %v8720 = vadd.f32 %v8424, %v8710
        %v8721 = vadd.f32 %v8425, %v8712
        %v8722 = vadd.f32 %v8426, %v8714
        %s8723 = sld [smem:[#allocation2 + $0xfb]]
        %v8724 = vstv %s8723
        %v8725 = vmul.f32 %v8724, %v6648
        %v8726 = vmul.f32 %v8724, %v6649
        %v8727 = vmul.f32 %v8724, %v6650
        %v8728 = vmul.f32 %v8724, %v6651
        %v8729 = vmul.f32 %v8724, %v6652
        %v8735 = vrot.slane %v8725, 2
        %v8736 = vrot.slane %v8726, 2
        %v8737 = vsel %vm1534, %v8735, %v8736
        %v8738 = vrot.slane %v8727, 2
        %v8739 = vsel %vm1534, %v8736, %v8738
        %v8740 = vrot.slane %v8728, 2
        %v8741 = vsel %vm1534, %v8738, %v8740
        %v8742 = vrot.slane %v8729, 2
        %v8743 = vsel %vm1534, %v8740, %v8742
        %8744 = vrot.lane.b32.xlu0 %v8737, 126
        %v8745 = vpop.permute.xlu0 %8744
        %8746 = vrot.lane.b32.xlu0 %v8739, 126
        %v8747 = vpop.permute.xlu0 %8746
        %8748 = vrot.lane.b32.xlu0 %v8741, 126
        %v8749 = vpop.permute.xlu0 %8748
        %8750 = vrot.lane.b32.xlu0 %v8743, 126
        %v8751 = vpop.permute.xlu0 %8750
        %v8756 = vadd.f32 %v8460, %v8745
        %v8757 = vadd.f32 %v8461, %v8747
        %v8758 = vadd.f32 %v8462, %v8749
        %v8759 = vadd.f32 %v8463, %v8751
        %s8760 = sld [smem:[#allocation2 + $0x11f]]
        %v8761 = vstv %s8760
        %v8762 = vmul.f32 %v8761, %v6648
        %v8763 = vmul.f32 %v8761, %v6649
        %v8764 = vmul.f32 %v8761, %v6650
        %v8765 = vmul.f32 %v8761, %v6651
        %v8766 = vmul.f32 %v8761, %v6652
        %v8772 = vrot.slane %v8762, 2
        %v8773 = vrot.slane %v8763, 2
        %v8774 = vsel %vm1534, %v8772, %v8773
        %v8775 = vrot.slane %v8764, 2
        %v8776 = vsel %vm1534, %v8773, %v8775
        %v8777 = vrot.slane %v8765, 2
        %v8778 = vsel %vm1534, %v8775, %v8777
        %v8779 = vrot.slane %v8766, 2
        %v8780 = vsel %vm1534, %v8777, %v8779
        %8781 = vrot.lane.b32.xlu0 %v8774, 126
        %v8782 = vpop.permute.xlu0 %8781
        %8783 = vrot.lane.b32.xlu0 %v8776, 126
        %v8784 = vpop.permute.xlu0 %8783
        %8785 = vrot.lane.b32.xlu0 %v8778, 126
        %v8786 = vpop.permute.xlu0 %8785
        %8787 = vrot.lane.b32.xlu0 %v8780, 126
        %v8788 = vpop.permute.xlu0 %8787
        %v8793 = vadd.f32 %v8497, %v8782
        %v8794 = vadd.f32 %v8498, %v8784
        %v8795 = vadd.f32 %v8499, %v8786
        %v8796 = vadd.f32 %v8500, %v8788
        %s8797 = sld [smem:[#allocation5]]
        %v8798 = vstv %s8797
        %v8799 = vadd.f32 %v8534, %v8798
        %v8800 = vadd.f32 %v8535, %v8798
        %v8801 = vadd.f32 %v8536, %v8798
        %v8802 = vadd.f32 %v8537, %v8798
        %vm8803 = vcmask 261120
        %8804 = vst.msk [vmem:[%s190] sm:$0xff] %vm8803, %v8799
        %8805 = vst.msk [vmem:[%s190 + $0x8] sm:$0xff] %vm8803, %v8800
        %8806 = vst.msk [vmem:[%s190 + $0x10] sm:$0xff] %vm8803, %v8801
        %8807 = vst.msk [vmem:[%s190 + $0x18] sm:$0xff] %vm8803, %v8802
        %s8808 = sld [smem:[#allocation5 + $0x1]]
        %v8809 = vstv %s8808
        %v8810 = vadd.f32 %v8571, %v8809
        %v8811 = vadd.f32 %v8572, %v8809
        %v8812 = vadd.f32 %v8573, %v8809
        %v8813 = vadd.f32 %v8574, %v8809
        %s8814 = scalar_lea.vmem %s190, 32 [#allocation7]
        %8815 = vst.msk [vmem:[%s8814] sm:$0xff] %vm8803, %v8810
        %8816 = vst.msk [vmem:[%s8814 + $0x8] sm:$0xff] %vm8803, %v8811
        %8817 = vst.msk [vmem:[%s8814 + $0x10] sm:$0xff] %vm8803, %v8812
        %8818 = vst.msk [vmem:[%s8814 + $0x18] sm:$0xff] %vm8803, %v8813
        %s8819 = sld [smem:[#allocation5 + $0x2]]
        %v8820 = vstv %s8819
        %v8821 = vadd.f32 %v8608, %v8820
        %v8822 = vadd.f32 %v8609, %v8820
        %v8823 = vadd.f32 %v8610, %v8820
        %v8824 = vadd.f32 %v8611, %v8820
        %s8825 = scalar_lea.vmem %s190, 64 [#allocation7]
        %8826 = vst.msk [vmem:[%s8825] sm:$0xff] %vm8803, %v8821
        %8827 = vst.msk [vmem:[%s8825 + $0x8] sm:$0xff] %vm8803, %v8822
        %8828 = vst.msk [vmem:[%s8825 + $0x10] sm:$0xff] %vm8803, %v8823
        %8829 = vst.msk [vmem:[%s8825 + $0x18] sm:$0xff] %vm8803, %v8824
        %s8830 = sld [smem:[#allocation5 + $0x3]]
        %v8831 = vstv %s8830
        %v8832 = vadd.f32 %v8645, %v8831
        %v8833 = vadd.f32 %v8646, %v8831
        %v8834 = vadd.f32 %v8647, %v8831
        %v8835 = vadd.f32 %v8648, %v8831
        %s8836 = scalar_lea.vmem %s190, 96 [#allocation7]
        %8837 = vst.msk [vmem:[%s8836] sm:$0xff] %vm8803, %v8832
        %8838 = vst.msk [vmem:[%s8836 + $0x8] sm:$0xff] %vm8803, %v8833
        %8839 = vst.msk [vmem:[%s8836 + $0x10] sm:$0xff] %vm8803, %v8834
        %8840 = vst.msk [vmem:[%s8836 + $0x18] sm:$0xff] %vm8803, %v8835
        %s8841 = sld [smem:[#allocation5 + $0x4]]
        %v8842 = vstv %s8841
        %v8843 = vadd.f32 %v8682, %v8842
        %v8844 = vadd.f32 %v8683, %v8842
        %v8845 = vadd.f32 %v8684, %v8842
        %v8846 = vadd.f32 %v8685, %v8842
        %s8847 = scalar_lea.vmem %s190, 128 [#allocation7]
        %8848 = vst.msk [vmem:[%s8847] sm:$0xff] %vm8803, %v8843
        %8849 = vst.msk [vmem:[%s8847 + $0x8] sm:$0xff] %vm8803, %v8844
        %8850 = vst.msk [vmem:[%s8847 + $0x10] sm:$0xff] %vm8803, %v8845
        %8851 = vst.msk [vmem:[%s8847 + $0x18] sm:$0xff] %vm8803, %v8846
        %s8852 = sld [smem:[#allocation5 + $0x5]]
        %v8853 = vstv %s8852
        %v8854 = vadd.f32 %v8719, %v8853
        %v8855 = vadd.f32 %v8720, %v8853
        %v8856 = vadd.f32 %v8721, %v8853
        %v8857 = vadd.f32 %v8722, %v8853
        %s8858 = scalar_lea.vmem %s190, 160 [#allocation7]
        %8859 = vst.msk [vmem:[%s8858] sm:$0xff] %vm8803, %v8854
        %8860 = vst.msk [vmem:[%s8858 + $0x8] sm:$0xff] %vm8803, %v8855
        %8861 = vst.msk [vmem:[%s8858 + $0x10] sm:$0xff] %vm8803, %v8856
        %8862 = vst.msk [vmem:[%s8858 + $0x18] sm:$0xff] %vm8803, %v8857
        %s8863 = sld [smem:[#allocation5 + $0x6]]
        %v8864 = vstv %s8863
        %v8865 = vadd.f32 %v8756, %v8864
        %v8866 = vadd.f32 %v8757, %v8864
        %v8867 = vadd.f32 %v8758, %v8864
        %v8868 = vadd.f32 %v8759, %v8864
        %s8869 = scalar_lea.vmem %s190, 192 [#allocation7]
        %8870 = vst.msk [vmem:[%s8869] sm:$0xff] %vm8803, %v8865
        %8871 = vst.msk [vmem:[%s8869 + $0x8] sm:$0xff] %vm8803, %v8866
        %8872 = vst.msk [vmem:[%s8869 + $0x10] sm:$0xff] %vm8803, %v8867
        %8873 = vst.msk [vmem:[%s8869 + $0x18] sm:$0xff] %vm8803, %v8868
        %s8874 = sld [smem:[#allocation5 + $0x7]]
        %v8875 = vstv %s8874
        %v8876 = vadd.f32 %v8793, %v8875
        %v8877 = vadd.f32 %v8794, %v8875
        %v8878 = vadd.f32 %v8795, %v8875
        %v8879 = vadd.f32 %v8796, %v8875
        %s8880 = scalar_lea.vmem %s190, 224 [#allocation7]
        %8881 = vst.msk [vmem:[%s8880] sm:$0xff] %vm8803, %v8876
        %8882 = vst.msk [vmem:[%s8880 + $0x8] sm:$0xff] %vm8803, %v8877
        %8883 = vst.msk [vmem:[%s8880 + $0x10] sm:$0xff] %vm8803, %v8878
        %8884 = vst.msk [vmem:[%s8880 + $0x18] sm:$0xff] %vm8803, %v8879
        %s8885 = sand.u32 %s95, 1
        %s8886 = scalar_lea.sflag [#allocation3], %s8885
        %s8887 = sand.u32 %s95, 1
        %s8888 = smul.addr %s8887, 256
        %s8889 = scalar_lea.vmem [#allocation7], %s8888
        // Predicated region
        $region41: #{tpu_custom_call.1} parent=31 // pred_check
          %p8890 = pneg %p105
        $region42: #{tpu_custom_call.1} parent=31 // pred_check_branch
          %8892 = sbr.rel (%p8890) target = $region44
        $region43: #{tpu_custom_call.1} parent=31 // pred_region
          %s8894 = ssub.s32 4096, 4096
          %8895 = vsyncadd %s8886, %s8894
          %s8896 = smul.addr %s19, 32
          %s8897 = smul.addr %s8896, 128
          %s8898 = scalar_lea.hbm %s3, %s8897
          %s8899 = sshll.u32 %s8889, 4
          %s8900 = int_to_ptr.vmem [resolvable:$true] %s8899
          %8905 = dma.vmem_to_hbm [thread:$0]  %s8900, 4096, %s8898, %s8886, 128, 128, 8
        $region44: #{tpu_custom_call.1} parent=31 // pred_fallthru
          _
      $region32: #{tpu_custom_call.1} parent=5 // pred_fallthru
        _
      %p8906 = scmp.le.s32.totalorder 2, %s14
      // Predicated region
      $region45: #{tpu_custom_call.1} parent=5 // pred_check
        %p8907 = pneg %p8906
      $region46: #{tpu_custom_call.1} parent=5 // pred_check_branch
        %8909 = sbr.rel (%p8907) target = $region48
      $region47: #{tpu_custom_call.1} parent=5 // pred_region
        %s8910 = ssub.s32 %s14, 2
        // Predicated region
        $region49: #{tpu_custom_call.1} parent=47 // pred_check
          %p8911 = pneg %p111
        $region50: #{tpu_custom_call.1} parent=47 // pred_check_branch
          %8913 = sbr.rel (%p8911) target = $region52
        $region51: #{tpu_custom_call.1} parent=47 // pred_region
          %s8914 = sand.u32 %s96, 1
          %s8915 = scalar_lea.sflag [#allocation3], %s8914
          %s8916 = sand.u32 %s96, 1
          %s8917 = smul.addr %s8916, 256
          %s8918 = scalar_lea.vmem [#allocation7], %s8917
          %8919 = dma.done %s8915, 4096
        $region52: #{tpu_custom_call.1} parent=47 // pred_fallthru
          _
      $region48: #{tpu_custom_call.1} parent=5 // pred_fallthru
        _
    $region6: #{tpu_custom_call.1} parent=1 // loop_footer
      %s18 = sadd.s32 1, %s14
    $region7: #{tpu_custom_call.1} parent=1 // loop_footer_branch
      %13 = sbr.rel target = $region3
    $region8: #{tpu_custom_call.1} parent=1 // loop_exit
      _
    %8920 = vsyncpa [#allocation3], 1
    %s8921 = scalar_lea.sflag [#allocation3], 1
    %8922 = vsyncpa %s8921, 1
    %8923 = vsyncpa [#allocation4], 1
    %s8924 = scalar_lea.sflag [#allocation4], 1
    %8925 = vsyncpa %s8924, 1
    %8926 = vsyncpa [#allocation6], 1

</llo_original>
